<compile_context>
chip_gen: v6e
topology: v6e:2x2x1
jax: 0.10.0
libtpu: 0.0.40
codegen_flags: <defaults>
</compile_context>

<pallas_src>
import jax
import jax.numpy as jnp
import numpy as np
from jax.experimental import pallas as pl
from jax.experimental.pallas import tpu as pltpu


# ----------------------------------------------------------------------------
# Fused RCAB kernel
# ----------------------------------------------------------------------------
def _rcab_kernel(x_ref, w1_ref, b1_ref, w2_ref, b2_ref,
                 wd_ref, bd_ref, wu_ref, bu_ref, o_ref,
                 pad_ref, col_ref):
    # x_ref   : (1, C, N) f32   -- one batch element, channel-major (free NCHW reshape)
    # w1/w2   : (9C, C)  bf16   -- concatenated 3x3 taps, rows = (tap, Cin), cols = Cout
    # b1/b2   : (1, C)   f32
    # wd      : (C, Cr)  f32, bd: (1, Cr)  -- CALayer squeeze (1x1 conv)
    # wu      : (Cr, C)  f32, bu: (1, C)   -- CALayer excite  (1x1 conv)
    # o_ref   : (1, C, N) f32   -- lane-dense output, maps straight to NCHW
    # pad_ref : (H+2, W+2, C) bf16 VMEM scratch with zero halo
    # col_ref : (N, 9C)       bf16 VMEM im2col scratch
    Hp, Wp, C = pad_ref.shape
    H, W = Hp - 2, Wp - 2
    N = H * W

    # Zero the staging buffer (incl. halo ring) exactly once: every staging
    # store overwrites the full interior and the halo is never written.
    @pl.when(pl.program_id(0) == 0)
    def _zero_halo():
        pad_ref[...] = jnp.zeros_like(pad_ref)

    def stage_cols():
        # Gather the 9 shifted taps into the (N, 9C) im2col buffer.
        for t in range(9):
            dy, dx = t // 3, t % 3
            patch = pad_ref[pl.ds(dy, H), pl.ds(dx, W), :]        # (H, W, C) bf16
            col_ref[:, t * C:(t + 1) * C] = patch.reshape(N, C)

    # ---- conv1: stage input (cast to bf16 once), im2col, one MXU matmul ----
    pad_ref[pl.ds(1, H), pl.ds(1, W), :] = (
        x_ref[0].T.reshape(H, W, C).astype(jnp.bfloat16))
    stage_cols()
    y1 = jnp.dot(col_ref[...], w1_ref[...],
                 preferred_element_type=jnp.float32) + b1_ref[...]    # (N, C) f32

    # ---- conv2: ReLU + bf16 cast fused into the staging store ----
    pad_ref[pl.ds(1, H), pl.ds(1, W), :] = (
        jnp.maximum(y1, 0.0).astype(jnp.bfloat16).reshape(H, W, C))
    stage_cols()
    res = jnp.dot(col_ref[...], w2_ref[...],
                  preferred_element_type=jnp.float32) + b2_ref[...]   # (N, C) f32

    # ---- CALayer: global avg pool -> 1x1 down -> ReLU -> 1x1 up -> sigmoid ----
    pooled = jnp.mean(res, axis=0, keepdims=True)                               # (1, C)
    z = jnp.dot(pooled, wd_ref[...], preferred_element_type=jnp.float32) + bd_ref[...]
    z = jnp.maximum(z, 0.0)                                                     # (1, Cr)
    g = jnp.dot(z, wu_ref[...], preferred_element_type=jnp.float32) + bu_ref[...]
    gate = 1.0 / (1.0 + jnp.exp(-g))                                            # (1, C)

    # ---- channel scale + residual, done in the lane-dense (C, N) layout ----
    o_ref[0] = (res * gate).T + x_ref[0]


# ----------------------------------------------------------------------------
# Wrapper (only metadata reshapes / tiny weight re-layouts outside the kernel)
# ----------------------------------------------------------------------------
def _ceil_to(v, m):
    return -(-v // m) * m


def rcab_forward(x_nchw, params):
    """RCAB forward: x (B, C, H, W) f32 -> (B, C, H, W) f32."""
    B, C, H, W = x_nchw.shape
    N = H * W
    Cr = params["wd"].shape[0]

    def taps_cat(w_oihw):
        # (Cout, Cin, 3, 3) -> (3, 3, Cin, Cout) -> (9*Cin, Cout), bf16 for the MXU.
        return jnp.transpose(w_oihw, (2, 3, 1, 0)).reshape(9 * C, C).astype(jnp.bfloat16)

    w1 = taps_cat(params["w1"])
    w2 = taps_cat(params["w2"])
    wd = params["wd"][:, :, 0, 0].T                     # (C, Cr) f32
    wu = params["wu"][:, :, 0, 0].T                     # (Cr, C) f32

    x_cn = x_nchw.reshape(B, C, N)                      # free reshape, no relayout

    # Explicit VMEM budget: scratches + double-buffered I/O blocks + live temps.
    bf16, f32 = 2, 4
    pad_bytes = (H + 2) * _ceil_to(W + 2, 8) * _ceil_to(C, 128) * bf16
    col_bytes = _ceil_to(N, 8) * _ceil_to(9 * C, 128) * bf16
    io_bytes = 2 * 2 * _ceil_to(C, 8) * _ceil_to(N, 128) * f32         # in + out, double-buffered
    w_bytes = 2 * 2 * _ceil_to(9 * C, 8) * _ceil_to(C, 128) * bf16     # w1 + w2, double-buffered
    tmp_bytes = 3 * _ceil_to(N, 8) * _ceil_to(C, 128) * f32            # y1 / res / gated f32 temps
    misc_bytes = 1 << 20                                               # biases, CA weights, slack
    est = pad_bytes + col_bytes + io_bytes + w_bytes + tmp_bytes + misc_bytes
    vmem_limit = int(min(max(2 * est, 32 << 20), 60 << 20))            # headroom under v7x 64 MiB

    out_cn = pl.pallas_call(
        _rcab_kernel,
        out_shape=jax.ShapeDtypeStruct((B, C, N), jnp.float32),
        grid=(B,),
        in_specs=[
            pl.BlockSpec((1, C, N), lambda b: (b, 0, 0)),
            pl.BlockSpec((9 * C, C), lambda b: (0, 0)),
            pl.BlockSpec((1, C), lambda b: (0, 0)),
            pl.BlockSpec((9 * C, C), lambda b: (0, 0)),
            pl.BlockSpec((1, C), lambda b: (0, 0)),
            pl.BlockSpec((C, Cr), lambda b: (0, 0)),
            pl.BlockSpec((1, Cr), lambda b: (0, 0)),
            pl.BlockSpec((Cr, C), lambda b: (0, 0)),
            pl.BlockSpec((1, C), lambda b: (0, 0)),
        ],
        out_specs=pl.BlockSpec((1, C, N), lambda b: (b, 0, 0)),
        scratch_shapes=[
            pltpu.VMEM((H + 2, W + 2, C), jnp.bfloat16),   # zero-halo staging buffer
            pltpu.VMEM((N, 9 * C), jnp.bfloat16),          # im2col buffer
        ],
        compiler_params=pltpu.CompilerParams(
            dimension_semantics=("parallel",),
            vmem_limit_bytes=vmem_limit),
    )(x_cn, w1, params["b1"].reshape(1, C), w2, params["b2"].reshape(1, C),
      wd, params["bd"].reshape(1, Cr), wu, params["bu"].reshape(1, C))

    return out_cn.reshape(B, C, H, W)


# ----------------------------------------------------------------------------
# Pure-JAX f32 reference (for validation)
# ----------------------------------------------------------------------------
def ref_forward(x, P):
    hp = jax.lax.Precision.HIGHEST
    dn = ("NCHW", "OIHW", "NCHW")
    y = jax.lax.conv_general_dilated(x, P["w1"], (1, 1), ((1, 1), (1, 1)),
                                     dimension_numbers=dn, precision=hp)
    y = jnp.maximum(y + P["b1"][None, :, None, None], 0.0)
    res = jax.lax.conv_general_dilated(y, P["w2"], (1, 1), ((1, 1), (1, 1)),
                                       dimension_numbers=dn, precision=hp)
    res = res + P["b2"][None, :, None, None]
    p = jnp.mean(res, axis=(2, 3), keepdims=True)                        # (B, C, 1, 1)
    z = jnp.einsum("oi,bijk->bojk", P["wd"][:, :, 0, 0], p, precision=hp)
    z = jnp.maximum(z + P["bd"][None, :, None, None], 0.0)
    s = jnp.einsum("oi,bijk->bojk", P["wu"][:, :, 0, 0], z, precision=hp)
    s = jax.nn.sigmoid(s + P["bu"][None, :, None, None])
    return res * s + x


# ----------------------------------------------------------------------------
# Deterministic parameter init (shapes per RCAB.__init__ / CALayer.__init__)
# ----------------------------------------------------------------------------
def init_params(key, n_feat, reduction):
    cr = n_feat // reduction
    ks = iter(jax.random.split(key, 16))

    def nrm(shape, scale=0.1):
        return scale * jax.random.normal(next(ks), shape, jnp.float32)

    return dict(
        w1=nrm((n_feat, n_feat, 3, 3)), b1=nrm((n_feat,)),
        w2=nrm((n_feat, n_feat, 3, 3)), b2=nrm((n_feat,)),
        wd=nrm((cr, n_feat, 1, 1)), bd=nrm((cr,)),
        wu=nrm((n_feat, cr, 1, 1)), bu=nrm((n_feat,)),
    )


if __name__ == "__main__":
    key = jax.random.PRNGKey(0)
    kx, kp = jax.random.split(key)
    B, C, H, W = 2, 32, 16, 16        # n_feat=32, reduction=16 -> Cr=2, N=256
    reduction = 16
    x = jax.random.normal(kx, (B, C, H, W), jnp.float32)
    P = init_params(kp, C, reduction)

    out = jax.block_until_ready(rcab_forward(x, P))
    ref = jax.block_until_ready(ref_forward(x, P))

    # bf16-in / f32-acc conv matmuls vs. f32-highest reference.
    np.testing.assert_allclose(np.asarray(out), np.asarray(ref), rtol=2e-2, atol=5e-2)
    assert out.shape == (B, C, H, W)
    print("KERNEL_OK")
</pallas_src>

<mosaic_0001>
module attributes {stable_mosaic.version = 11 : i64} {
  func.func @_rcab_kernel(%arg0: i32, %arg1: memref<1x32x256xf32, #tpu.memory_space<vmem>>, %arg2: memref<288x32xbf16, #tpu.memory_space<vmem>>, %arg3: memref<1x32xf32, #tpu.memory_space<vmem>>, %arg4: memref<288x32xbf16, #tpu.memory_space<vmem>>, %arg5: memref<1x32xf32, #tpu.memory_space<vmem>>, %arg6: memref<32x2xf32, #tpu.memory_space<vmem>>, %arg7: memref<1x2xf32, #tpu.memory_space<vmem>>, %arg8: memref<2x32xf32, #tpu.memory_space<vmem>>, %arg9: memref<1x32xf32, #tpu.memory_space<vmem>>, %arg10: memref<1x32x256xf32, #tpu.memory_space<vmem>>, %arg11: memref<18x18x32xbf16, #tpu.memory_space<vmem>>, %arg12: memref<256x288xbf16, #tpu.memory_space<vmem>>) attributes {dimension_semantics = [#tpu.dimension_semantics<parallel>], iteration_bounds = array<i64: 2>, scalar_prefetch = 0 : i64, scratch_operands = 2 : i64, tpu.core_type = #tpu.core_type<tc>, window_params = [{transform_indices = @transform_0, window_bounds = array<i64: 1, 32, 256>}, {pipeline_mode = #tpu.pipeline_mode<synchronous>, transform_indices = @transform_1, window_bounds = array<i64: 288, 32>}, {pipeline_mode = #tpu.pipeline_mode<synchronous>, transform_indices = @transform_2, window_bounds = array<i64: 1, 32>}, {pipeline_mode = #tpu.pipeline_mode<synchronous>, transform_indices = @transform_3, window_bounds = array<i64: 288, 32>}, {pipeline_mode = #tpu.pipeline_mode<synchronous>, transform_indices = @transform_4, window_bounds = array<i64: 1, 32>}, {pipeline_mode = #tpu.pipeline_mode<synchronous>, transform_indices = @transform_5, window_bounds = array<i64: 32, 2>}, {pipeline_mode = #tpu.pipeline_mode<synchronous>, transform_indices = @transform_6, window_bounds = array<i64: 1, 2>}, {pipeline_mode = #tpu.pipeline_mode<synchronous>, transform_indices = @transform_7, window_bounds = array<i64: 2, 32>}, {pipeline_mode = #tpu.pipeline_mode<synchronous>, transform_indices = @transform_8, window_bounds = array<i64: 1, 32>}, {transform_indices = @transform_9, window_bounds = array<i64: 1, 32, 256>}]} {
    %c0_i32 = arith.constant 0 : i32
    %0 = arith.cmpi eq, %arg0, %c0_i32 : i32
    %1 = arith.extui %0 : i1 to i32
    %c0_i32_0 = arith.constant 0 : i32
    %2 = arith.cmpi ne, %1, %c0_i32_0 : i32
    scf.if %2 {
      %cst_125 = arith.constant 0.000000e+00 : bf16
      %110 = vector.broadcast %cst_125 : bf16 to vector<18x18x32xbf16>
      %c0_126 = arith.constant 0 : index
      %c0_127 = arith.constant 0 : index
      %c0_128 = arith.constant 0 : index
      %111 = vector.load %arg11[%c0_126, %c0_127, %c0_128] : memref<18x18x32xbf16, #tpu.memory_space<vmem>>, vector<18x18x32xbf16>
      tpu.vector_store %arg11[%c0_126, %c0_127, %c0_128], %110 {strides = array<i32>} : memref<18x18x32xbf16, #tpu.memory_space<vmem>>, vector<18x18x32xbf16>,
    } else {
    }
    %c0 = arith.constant 0 : index
    %c0_1 = arith.constant 0 : index
    %c0_2 = arith.constant 0 : index
    %3 = vector.load %arg1[%c0, %c0_1, %c0_2] : memref<1x32x256xf32, #tpu.memory_space<vmem>>, vector<1x32x256xf32>
    %4 = vector.shape_cast %3 : vector<1x32x256xf32> to vector<32x256xf32>
    %5 = tpu.transpose %4, [1, 0] : vector<32x256xf32> -> vector<256x32xf32>
    %6 = vector.shape_cast %5 : vector<256x32xf32> to vector<16x16x32xf32>
    %7 = arith.truncf %6 : vector<16x16x32xf32> to vector<16x16x32xbf16>
    %c1 = arith.constant 1 : index
    %c1_3 = arith.constant 1 : index
    %c0_4 = arith.constant 0 : index
    %8 = vector.load %arg11[%c1, %c1_3, %c0_4] : memref<18x18x32xbf16, #tpu.memory_space<vmem>>, vector<16x16x32xbf16>
    tpu.vector_store %arg11[%c1, %c1_3, %c0_4], %7 {strides = array<i32>} : memref<18x18x32xbf16, #tpu.memory_space<vmem>>, vector<16x16x32xbf16>,
    %c0_5 = arith.constant 0 : index
    %c0_6 = arith.constant 0 : index
    %c0_7 = arith.constant 0 : index
    %9 = vector.load %arg11[%c0_5, %c0_6, %c0_7] : memref<18x18x32xbf16, #tpu.memory_space<vmem>>, vector<16x16x32xbf16>
    %10 = vector.shape_cast %9 : vector<16x16x32xbf16> to vector<256x32xbf16>
    %c0_8 = arith.constant 0 : index
    %c0_9 = arith.constant 0 : index
    %11 = vector.load %arg12[%c0_8, %c0_9] : memref<256x288xbf16, #tpu.memory_space<vmem>>, vector<256x32xbf16>
    tpu.vector_store %arg12[%c0_8, %c0_9], %10 {strides = array<i32>} : memref<256x288xbf16, #tpu.memory_space<vmem>>, vector<256x32xbf16>,
    %c0_10 = arith.constant 0 : index
    %c1_11 = arith.constant 1 : index
    %c0_12 = arith.constant 0 : index
    %12 = vector.load %arg11[%c0_10, %c1_11, %c0_12] : memref<18x18x32xbf16, #tpu.memory_space<vmem>>, vector<16x16x32xbf16>
    %13 = vector.shape_cast %12 : vector<16x16x32xbf16> to vector<256x32xbf16>
    %c0_13 = arith.constant 0 : index
    %c32 = arith.constant 32 : index
    %14 = vector.load %arg12[%c0_13, %c32] : memref<256x288xbf16, #tpu.memory_space<vmem>>, vector<256x32xbf16>
    tpu.vector_store %arg12[%c0_13, %c32], %13 {strides = array<i32>} : memref<256x288xbf16, #tpu.memory_space<vmem>>, vector<256x32xbf16>,
    %c0_14 = arith.constant 0 : index
    %c2 = arith.constant 2 : index
    %c0_15 = arith.constant 0 : index
    %15 = vector.load %arg11[%c0_14, %c2, %c0_15] : memref<18x18x32xbf16, #tpu.memory_space<vmem>>, vector<16x16x32xbf16>
    %16 = vector.shape_cast %15 : vector<16x16x32xbf16> to vector<256x32xbf16>
    %c0_16 = arith.constant 0 : index
    %c64 = arith.constant 64 : index
    %17 = vector.load %arg12[%c0_16, %c64] : memref<256x288xbf16, #tpu.memory_space<vmem>>, vector<256x32xbf16>
    tpu.vector_store %arg12[%c0_16, %c64], %16 {strides = array<i32>} : memref<256x288xbf16, #tpu.memory_space<vmem>>, vector<256x32xbf16>,
    %c1_17 = arith.constant 1 : index
    %c0_18 = arith.constant 0 : index
    %c0_19 = arith.constant 0 : index
    %18 = vector.load %arg11[%c1_17, %c0_18, %c0_19] : memref<18x18x32xbf16, #tpu.memory_space<vmem>>, vector<16x16x32xbf16>
    %19 = vector.shape_cast %18 : vector<16x16x32xbf16> to vector<256x32xbf16>
    %c0_20 = arith.constant 0 : index
    %c96 = arith.constant 96 : index
    %20 = vector.load %arg12[%c0_20, %c96] : memref<256x288xbf16, #tpu.memory_space<vmem>>, vector<256x32xbf16>
    tpu.vector_store %arg12[%c0_20, %c96], %19 {strides = array<i32>} : memref<256x288xbf16, #tpu.memory_space<vmem>>, vector<256x32xbf16>,
    %c1_21 = arith.constant 1 : index
    %c1_22 = arith.constant 1 : index
    %c0_23 = arith.constant 0 : index
    %21 = vector.load %arg11[%c1_21, %c1_22, %c0_23] : memref<18x18x32xbf16, #tpu.memory_space<vmem>>, vector<16x16x32xbf16>
    %22 = vector.shape_cast %21 : vector<16x16x32xbf16> to vector<256x32xbf16>
    %c0_24 = arith.constant 0 : index
    %c128 = arith.constant 128 : index
    %23 = vector.load %arg12[%c0_24, %c128] : memref<256x288xbf16, #tpu.memory_space<vmem>>, vector<256x32xbf16>
    tpu.vector_store %arg12[%c0_24, %c128], %22 {strides = array<i32>} : memref<256x288xbf16, #tpu.memory_space<vmem>>, vector<256x32xbf16>,
    %c1_25 = arith.constant 1 : index
    %c2_26 = arith.constant 2 : index
    %c0_27 = arith.constant 0 : index
    %24 = vector.load %arg11[%c1_25, %c2_26, %c0_27] : memref<18x18x32xbf16, #tpu.memory_space<vmem>>, vector<16x16x32xbf16>
    %25 = vector.shape_cast %24 : vector<16x16x32xbf16> to vector<256x32xbf16>
    %c0_28 = arith.constant 0 : index
    %c160 = arith.constant 160 : index
    %26 = vector.load %arg12[%c0_28, %c160] : memref<256x288xbf16, #tpu.memory_space<vmem>>, vector<256x32xbf16>
    tpu.vector_store %arg12[%c0_28, %c160], %25 {strides = array<i32>} : memref<256x288xbf16, #tpu.memory_space<vmem>>, vector<256x32xbf16>,
    %c2_29 = arith.constant 2 : index
    %c0_30 = arith.constant 0 : index
    %c0_31 = arith.constant 0 : index
    %27 = vector.load %arg11[%c2_29, %c0_30, %c0_31] : memref<18x18x32xbf16, #tpu.memory_space<vmem>>, vector<16x16x32xbf16>
    %28 = vector.shape_cast %27 : vector<16x16x32xbf16> to vector<256x32xbf16>
    %c0_32 = arith.constant 0 : index
    %c192 = arith.constant 192 : index
    %29 = vector.load %arg12[%c0_32, %c192] : memref<256x288xbf16, #tpu.memory_space<vmem>>, vector<256x32xbf16>
    tpu.vector_store %arg12[%c0_32, %c192], %28 {strides = array<i32>} : memref<256x288xbf16, #tpu.memory_space<vmem>>, vector<256x32xbf16>,
    %c2_33 = arith.constant 2 : index
    %c1_34 = arith.constant 1 : index
    %c0_35 = arith.constant 0 : index
    %30 = vector.load %arg11[%c2_33, %c1_34, %c0_35] : memref<18x18x32xbf16, #tpu.memory_space<vmem>>, vector<16x16x32xbf16>
    %31 = vector.shape_cast %30 : vector<16x16x32xbf16> to vector<256x32xbf16>
    %c0_36 = arith.constant 0 : index
    %c224 = arith.constant 224 : index
    %32 = vector.load %arg12[%c0_36, %c224] : memref<256x288xbf16, #tpu.memory_space<vmem>>, vector<256x32xbf16>
    tpu.vector_store %arg12[%c0_36, %c224], %31 {strides = array<i32>} : memref<256x288xbf16, #tpu.memory_space<vmem>>, vector<256x32xbf16>,
    %c2_37 = arith.constant 2 : index
    %c2_38 = arith.constant 2 : index
    %c0_39 = arith.constant 0 : index
    %33 = vector.load %arg11[%c2_37, %c2_38, %c0_39] : memref<18x18x32xbf16, #tpu.memory_space<vmem>>, vector<16x16x32xbf16>
    %34 = vector.shape_cast %33 : vector<16x16x32xbf16> to vector<256x32xbf16>
    %c0_40 = arith.constant 0 : index
    %c256 = arith.constant 256 : index
    %35 = vector.load %arg12[%c0_40, %c256] : memref<256x288xbf16, #tpu.memory_space<vmem>>, vector<256x32xbf16>
    tpu.vector_store %arg12[%c0_40, %c256], %34 {strides = array<i32>} : memref<256x288xbf16, #tpu.memory_space<vmem>>, vector<256x32xbf16>,
    %c0_41 = arith.constant 0 : index
    %c0_42 = arith.constant 0 : index
    %36 = vector.load %arg12[%c0_41, %c0_42] : memref<256x288xbf16, #tpu.memory_space<vmem>>, vector<256x288xbf16>
    %c0_43 = arith.constant 0 : index
    %c0_44 = arith.constant 0 : index
    %37 = vector.load %arg2[%c0_43, %c0_44] : memref<288x32xbf16, #tpu.memory_space<vmem>>, vector<288x32xbf16>
    %cst = arith.constant dense<0.000000e+00> : vector<256x32xf32>
    %38 = tpu.matmul %36, %37, %cst {dimension_numbers = #tpu.dot_dimension_numbers<[1], [0], [0], [1], [0, 0, 1, 1], [], []>} : vector<256x288xbf16>, vector<288x32xbf16>, vector<256x32xf32> -> vector<256x32xf32>
    %c0_45 = arith.constant 0 : index
    %c0_46 = arith.constant 0 : index
    %39 = vector.load %arg3[%c0_45, %c0_46] : memref<1x32xf32, #tpu.memory_space<vmem>>, vector<1x32xf32>
    %40 = vector.broadcast %39 : vector<1x32xf32> to vector<256x32xf32>
    %41 = arith.addf %38, %40 : vector<256x32xf32>
    %cst_47 = arith.constant 0.000000e+00 : f32
    %42 = vector.broadcast %cst_47 : f32 to vector<256x32xf32>
    %43 = arith.maximumf %41, %42 : vector<256x32xf32>
    %44 = arith.truncf %43 : vector<256x32xf32> to vector<256x32xbf16>
    %45 = vector.shape_cast %44 : vector<256x32xbf16> to vector<16x16x32xbf16>
    %c1_48 = arith.constant 1 : index
    %c1_49 = arith.constant 1 : index
    %c0_50 = arith.constant 0 : index
    %46 = vector.load %arg11[%c1_48, %c1_49, %c0_50] : memref<18x18x32xbf16, #tpu.memory_space<vmem>>, vector<16x16x32xbf16>
    tpu.vector_store %arg11[%c1_48, %c1_49, %c0_50], %45 {strides = array<i32>} : memref<18x18x32xbf16, #tpu.memory_space<vmem>>, vector<16x16x32xbf16>,
    %c0_51 = arith.constant 0 : index
    %c0_52 = arith.constant 0 : index
    %c0_53 = arith.constant 0 : index
    %47 = vector.load %arg11[%c0_51, %c0_52, %c0_53] : memref<18x18x32xbf16, #tpu.memory_space<vmem>>, vector<16x16x32xbf16>
    %48 = vector.shape_cast %47 : vector<16x16x32xbf16> to vector<256x32xbf16>
    %c0_54 = arith.constant 0 : index
    %c0_55 = arith.constant 0 : index
    %49 = vector.load %arg12[%c0_54, %c0_55] : memref<256x288xbf16, #tpu.memory_space<vmem>>, vector<256x32xbf16>
    tpu.vector_store %arg12[%c0_54, %c0_55], %48 {strides = array<i32>} : memref<256x288xbf16, #tpu.memory_space<vmem>>, vector<256x32xbf16>,
    %c0_56 = arith.constant 0 : index
    %c1_57 = arith.constant 1 : index
    %c0_58 = arith.constant 0 : index
    %50 = vector.load %arg11[%c0_56, %c1_57, %c0_58] : memref<18x18x32xbf16, #tpu.memory_space<vmem>>, vector<16x16x32xbf16>
    %51 = vector.shape_cast %50 : vector<16x16x32xbf16> to vector<256x32xbf16>
    %c0_59 = arith.constant 0 : index
    %c32_60 = arith.constant 32 : index
    %52 = vector.load %arg12[%c0_59, %c32_60] : memref<256x288xbf16, #tpu.memory_space<vmem>>, vector<256x32xbf16>
    tpu.vector_store %arg12[%c0_59, %c32_60], %51 {strides = array<i32>} : memref<256x288xbf16, #tpu.memory_space<vmem>>, vector<256x32xbf16>,
    %c0_61 = arith.constant 0 : index
    %c2_62 = arith.constant 2 : index
    %c0_63 = arith.constant 0 : index
    %53 = vector.load %arg11[%c0_61, %c2_62, %c0_63] : memref<18x18x32xbf16, #tpu.memory_space<vmem>>, vector<16x16x32xbf16>
    %54 = vector.shape_cast %53 : vector<16x16x32xbf16> to vector<256x32xbf16>
    %c0_64 = arith.constant 0 : index
    %c64_65 = arith.constant 64 : index
    %55 = vector.load %arg12[%c0_64, %c64_65] : memref<256x288xbf16, #tpu.memory_space<vmem>>, vector<256x32xbf16>
    tpu.vector_store %arg12[%c0_64, %c64_65], %54 {strides = array<i32>} : memref<256x288xbf16, #tpu.memory_space<vmem>>, vector<256x32xbf16>,
    %c1_66 = arith.constant 1 : index
    %c0_67 = arith.constant 0 : index
    %c0_68 = arith.constant 0 : index
    %56 = vector.load %arg11[%c1_66, %c0_67, %c0_68] : memref<18x18x32xbf16, #tpu.memory_space<vmem>>, vector<16x16x32xbf16>
    %57 = vector.shape_cast %56 : vector<16x16x32xbf16> to vector<256x32xbf16>
    %c0_69 = arith.constant 0 : index
    %c96_70 = arith.constant 96 : index
    %58 = vector.load %arg12[%c0_69, %c96_70] : memref<256x288xbf16, #tpu.memory_space<vmem>>, vector<256x32xbf16>
    tpu.vector_store %arg12[%c0_69, %c96_70], %57 {strides = array<i32>} : memref<256x288xbf16, #tpu.memory_space<vmem>>, vector<256x32xbf16>,
    %c1_71 = arith.constant 1 : index
    %c1_72 = arith.constant 1 : index
    %c0_73 = arith.constant 0 : index
    %59 = vector.load %arg11[%c1_71, %c1_72, %c0_73] : memref<18x18x32xbf16, #tpu.memory_space<vmem>>, vector<16x16x32xbf16>
    %60 = vector.shape_cast %59 : vector<16x16x32xbf16> to vector<256x32xbf16>
    %c0_74 = arith.constant 0 : index
    %c128_75 = arith.constant 128 : index
    %61 = vector.load %arg12[%c0_74, %c128_75] : memref<256x288xbf16, #tpu.memory_space<vmem>>, vector<256x32xbf16>
    tpu.vector_store %arg12[%c0_74, %c128_75], %60 {strides = array<i32>} : memref<256x288xbf16, #tpu.memory_space<vmem>>, vector<256x32xbf16>,
    %c1_76 = arith.constant 1 : index
    %c2_77 = arith.constant 2 : index
    %c0_78 = arith.constant 0 : index
    %62 = vector.load %arg11[%c1_76, %c2_77, %c0_78] : memref<18x18x32xbf16, #tpu.memory_space<vmem>>, vector<16x16x32xbf16>
    %63 = vector.shape_cast %62 : vector<16x16x32xbf16> to vector<256x32xbf16>
    %c0_79 = arith.constant 0 : index
    %c160_80 = arith.constant 160 : index
    %64 = vector.load %arg12[%c0_79, %c160_80] : memref<256x288xbf16, #tpu.memory_space<vmem>>, vector<256x32xbf16>
    tpu.vector_store %arg12[%c0_79, %c160_80], %63 {strides = array<i32>} : memref<256x288xbf16, #tpu.memory_space<vmem>>, vector<256x32xbf16>,
    %c2_81 = arith.constant 2 : index
    %c0_82 = arith.constant 0 : index
    %c0_83 = arith.constant 0 : index
    %65 = vector.load %arg11[%c2_81, %c0_82, %c0_83] : memref<18x18x32xbf16, #tpu.memory_space<vmem>>, vector<16x16x32xbf16>
    %66 = vector.shape_cast %65 : vector<16x16x32xbf16> to vector<256x32xbf16>
    %c0_84 = arith.constant 0 : index
    %c192_85 = arith.constant 192 : index
    %67 = vector.load %arg12[%c0_84, %c192_85] : memref<256x288xbf16, #tpu.memory_space<vmem>>, vector<256x32xbf16>
    tpu.vector_store %arg12[%c0_84, %c192_85], %66 {strides = array<i32>} : memref<256x288xbf16, #tpu.memory_space<vmem>>, vector<256x32xbf16>,
    %c2_86 = arith.constant 2 : index
    %c1_87 = arith.constant 1 : index
    %c0_88 = arith.constant 0 : index
    %68 = vector.load %arg11[%c2_86, %c1_87, %c0_88] : memref<18x18x32xbf16, #tpu.memory_space<vmem>>, vector<16x16x32xbf16>
    %69 = vector.shape_cast %68 : vector<16x16x32xbf16> to vector<256x32xbf16>
    %c0_89 = arith.constant 0 : index
    %c224_90 = arith.constant 224 : index
    %70 = vector.load %arg12[%c0_89, %c224_90] : memref<256x288xbf16, #tpu.memory_space<vmem>>, vector<256x32xbf16>
    tpu.vector_store %arg12[%c0_89, %c224_90], %69 {strides = array<i32>} : memref<256x288xbf16, #tpu.memory_space<vmem>>, vector<256x32xbf16>,
    %c2_91 = arith.constant 2 : index
    %c2_92 = arith.constant 2 : index
    %c0_93 = arith.constant 0 : index
    %71 = vector.load %arg11[%c2_91, %c2_92, %c0_93] : memref<18x18x32xbf16, #tpu.memory_space<vmem>>, vector<16x16x32xbf16>
    %72 = vector.shape_cast %71 : vector<16x16x32xbf16> to vector<256x32xbf16>
    %c0_94 = arith.constant 0 : index
    %c256_95 = arith.constant 256 : index
    %73 = vector.load %arg12[%c0_94, %c256_95] : memref<256x288xbf16, #tpu.memory_space<vmem>>, vector<256x32xbf16>
    tpu.vector_store %arg12[%c0_94, %c256_95], %72 {strides = array<i32>} : memref<256x288xbf16, #tpu.memory_space<vmem>>, vector<256x32xbf16>,
    %c0_96 = arith.constant 0 : index
    %c0_97 = arith.constant 0 : index
    %74 = vector.load %arg12[%c0_96, %c0_97] : memref<256x288xbf16, #tpu.memory_space<vmem>>, vector<256x288xbf16>
    %c0_98 = arith.constant 0 : index
    %c0_99 = arith.constant 0 : index
    %75 = vector.load %arg4[%c0_98, %c0_99] : memref<288x32xbf16, #tpu.memory_space<vmem>>, vector<288x32xbf16>
    %cst_100 = arith.constant dense<0.000000e+00> : vector<256x32xf32>
    %76 = tpu.matmul %74, %75, %cst_100 {dimension_numbers = #tpu.dot_dimension_numbers<[1], [0], [0], [1], [0, 0, 1, 1], [], []>} : vector<256x288xbf16>, vector<288x32xbf16>, vector<256x32xf32> -> vector<256x32xf32>
    %c0_101 = arith.constant 0 : index
    %c0_102 = arith.constant 0 : index
    %77 = vector.load %arg5[%c0_101, %c0_102] : memref<1x32xf32, #tpu.memory_space<vmem>>, vector<1x32xf32>
    %78 = vector.broadcast %77 : vector<1x32xf32> to vector<256x32xf32>
    %79 = arith.addf %76, %78 : vector<256x32xf32>
    %cst_103 = arith.constant dense<0.000000e+00> : vector<32xf32>
    %80 = vector.multi_reduction <add>, %79, %cst_103 [0] : vector<256x32xf32> to vector<32xf32>
    %81 = vector.shape_cast %80 : vector<32xf32> to vector<1x32xf32>
    %cst_104 = arith.constant 2.560000e+02 : f32
    %82 = vector.broadcast %cst_104 : f32 to vector<1x32xf32>
    %83 = arith.divf %81, %82 : vector<1x32xf32>
    %c0_105 = arith.constant 0 : index
    %c0_106 = arith.constant 0 : index
    %84 = vector.load %arg6[%c0_105, %c0_106] : memref<32x2xf32, #tpu.memory_space<vmem>>, vector<32x2xf32>
    %cst_107 = arith.constant dense<0.000000e+00> : vector<1x2xf32>
    %85 = tpu.matmul %83, %84, %cst_107 {dimension_numbers = #tpu.dot_dimension_numbers<[1], [0], [0], [1], [0, 0, 1, 1], [], []>} : vector<1x32xf32>, vector<32x2xf32>, vector<1x2xf32> -> vector<1x2xf32>
    %c0_108 = arith.constant 0 : index
    %c0_109 = arith.constant 0 : index
    %86 = vector.load %arg7[%c0_108, %c0_109] : memref<1x2xf32, #tpu.memory_space<vmem>>, vector<1x2xf32>
    %87 = arith.addf %85, %86 : vector<1x2xf32>
    %cst_110 = arith.constant 0.000000e+00 : f32
    %88 = vector.broadcast %cst_110 : f32 to vector<1x2xf32>
    %89 = arith.maximumf %87, %88 : vector<1x2xf32>
    %c0_111 = arith.constant 0 : index
    %c0_112 = arith.constant 0 : index
    %90 = vector.load %arg8[%c0_111, %c0_112] : memref<2x32xf32, #tpu.memory_space<vmem>>, vector<2x32xf32>
    %cst_113 = arith.constant dense<0.000000e+00> : vector<1x32xf32>
    %91 = tpu.matmul %89, %90, %cst_113 {dimension_numbers = #tpu.dot_dimension_numbers<[1], [0], [0], [1], [0, 0, 1, 1], [], []>} : vector<1x2xf32>, vector<2x32xf32>, vector<1x32xf32> -> vector<1x32xf32>
    %c0_114 = arith.constant 0 : index
    %c0_115 = arith.constant 0 : index
    %92 = vector.load %arg9[%c0_114, %c0_115] : memref<1x32xf32, #tpu.memory_space<vmem>>, vector<1x32xf32>
    %93 = arith.addf %91, %92 : vector<1x32xf32>
    %cst_116 = arith.constant 0.000000e+00 : f32
    %94 = vector.broadcast %cst_116 : f32 to vector<1x32xf32>
    %95 = arith.subf %94, %93 : vector<1x32xf32>
    %96 = math.exp %95 : vector<1x32xf32>
    %cst_117 = arith.constant 1.000000e+00 : f32
    %97 = vector.broadcast %cst_117 : f32 to vector<1x32xf32>
    %98 = arith.addf %97, %96 : vector<1x32xf32>
    %cst_118 = arith.constant 1.000000e+00 : f32
    %99 = vector.broadcast %cst_118 : f32 to vector<1x32xf32>
    %100 = arith.divf %99, %98 : vector<1x32xf32>
    %101 = vector.broadcast %100 : vector<1x32xf32> to vector<256x32xf32>
    %102 = arith.mulf %79, %101 : vector<256x32xf32>
    %103 = tpu.transpose %102, [1, 0] : vector<256x32xf32> -> vector<32x256xf32>
    %c0_119 = arith.constant 0 : index
    %c0_120 = arith.constant 0 : index
    %c0_121 = arith.constant 0 : index
    %104 = vector.load %arg1[%c0_119, %c0_120, %c0_121] : memref<1x32x256xf32, #tpu.memory_space<vmem>>, vector<1x32x256xf32>
    %105 = vector.shape_cast %104 : vector<1x32x256xf32> to vector<32x256xf32>
    %106 = arith.addf %103, %105 : vector<32x256xf32>
    %c0_122 = arith.constant 0 : index
    %c0_123 = arith.constant 0 : index
    %c0_124 = arith.constant 0 : index
    %107 = vector.load %arg10[%c0_122, %c0_123, %c0_124] : memref<1x32x256xf32, #tpu.memory_space<vmem>>, vector<1x32x256xf32>
    %108 = vector.shape_cast %107 : vector<1x32x256xf32> to vector<32x256xf32>
    %109 = vector.shape_cast %106 : vector<32x256xf32> to vector<1x32x256xf32>
    tpu.vector_store %arg10[%c0_122, %c0_123, %c0_124], %109 {strides = array<i32>} : memref<1x32x256xf32, #tpu.memory_space<vmem>>, vector<1x32x256xf32>,
    return
  }
  func.func @transform_0(%arg0: i32) -> (i32, i32, i32) {
    %c0_i32 = arith.constant 0 : i32
    %c0_i32_0 = arith.constant 0 : i32
    %c0_i32_1 = arith.constant 0 : i32
    return %arg0, %c0_i32, %c0_i32_0 : i32, i32, i32
  }
  func.func @transform_1(%arg0: i32) -> (i32, i32) {
    %c0_i32 = arith.constant 0 : i32
    %c0_i32_0 = arith.constant 0 : i32
    %c0_i32_1 = arith.constant 0 : i32
    return %c0_i32, %c0_i32_0 : i32, i32
  }
  func.func @transform_2(%arg0: i32) -> (i32, i32) {
    %c0_i32 = arith.constant 0 : i32
    %c0_i32_0 = arith.constant 0 : i32
    %c0_i32_1 = arith.constant 0 : i32
    return %c0_i32, %c0_i32_0 : i32, i32
  }
  func.func @transform_3(%arg0: i32) -> (i32, i32) {
    %c0_i32 = arith.constant 0 : i32
    %c0_i32_0 = arith.constant 0 : i32
    %c0_i32_1 = arith.constant 0 : i32
    return %c0_i32, %c0_i32_0 : i32, i32
  }
  func.func @transform_4(%arg0: i32) -> (i32, i32) {
    %c0_i32 = arith.constant 0 : i32
    %c0_i32_0 = arith.constant 0 : i32
    %c0_i32_1 = arith.constant 0 : i32
    return %c0_i32, %c0_i32_0 : i32, i32
  }
  func.func @transform_5(%arg0: i32) -> (i32, i32) {
    %c0_i32 = arith.constant 0 : i32
    %c0_i32_0 = arith.constant 0 : i32
    %c0_i32_1 = arith.constant 0 : i32
    return %c0_i32, %c0_i32_0 : i32, i32
  }
  func.func @transform_6(%arg0: i32) -> (i32, i32) {
    %c0_i32 = arith.constant 0 : i32
    %c0_i32_0 = arith.constant 0 : i32
    %c0_i32_1 = arith.constant 0 : i32
    return %c0_i32, %c0_i32_0 : i32, i32
  }
  func.func @transform_7(%arg0: i32) -> (i32, i32) {
    %c0_i32 = arith.constant 0 : i32
    %c0_i32_0 = arith.constant 0 : i32
    %c0_i32_1 = arith.constant 0 : i32
    return %c0_i32, %c0_i32_0 : i32, i32
  }
  func.func @transform_8(%arg0: i32) -> (i32, i32) {
    %c0_i32 = arith.constant 0 : i32
    %c0_i32_0 = arith.constant 0 : i32
    %c0_i32_1 = arith.constant 0 : i32
    return %c0_i32, %c0_i32_0 : i32, i32
  }
  func.func @transform_9(%arg0: i32) -> (i32, i32, i32) {
    %c0_i32 = arith.constant 0 : i32
    %c0_i32_0 = arith.constant 0 : i32
    %c0_i32_1 = arith.constant 0 : i32
    return %arg0, %c0_i32, %c0_i32_0 : i32, i32, i32
  }
}

</mosaic_0001>

<llo_original>
// kernel: tpu_custom_call.1
$region0: #{tpu_custom_call.1}
  #allocation0 [shape = 'u32[]', space=smem, size = 0x4, offset = 0x4, fixed_abs, tag = 'smem constant byte address 0x4 - core index']
  #allocation1 [shape = 'u32[144,128]{1,0:T(1,128)}', space=vmem, size = 0x12000, scoped, tag = 'internal scratch']
  #allocation2 [shape = 'bf16[18,18,32]{2,1,0:T(8,128)(2,1)}', space=vmem, size = 0x1b000, scoped, tag = 'scratch operand']
  #allocation3 [shape = 'bf16[256,288]{1,0:T(8,128)(2,1)}', space=vmem, size = 0x30000, scoped, tag = 'scratch operand']
  %s0 = inlined_call_operand.vmem [shape: f32[2,32,256], index: 0, kind: input, shape index: {}]
  %s1 = inlined_call_operand.vmem [shape: bf16[288,32], index: 1, kind: input, shape index: {}]
  %s2 = inlined_call_operand.vmem [shape: f32[1,32], index: 2, kind: input, shape index: {}]
  %s3 = inlined_call_operand.vmem [shape: bf16[288,32], index: 3, kind: input, shape index: {}]
  %s4 = inlined_call_operand.vmem [shape: f32[1,32], index: 4, kind: input, shape index: {}]
  %s5 = inlined_call_operand.vmem [shape: f32[32,2], index: 5, kind: input, shape index: {}]
  %s6 = inlined_call_operand.vmem [shape: f32[1,2], index: 6, kind: input, shape index: {}]
  %s7 = inlined_call_operand.vmem [shape: f32[2,32], index: 7, kind: input, shape index: {}]
  %s8 = inlined_call_operand.vmem [shape: f32[1,32], index: 8, kind: input, shape index: {}]
  %s9 = inlined_call_operand.hbm [shape: f32[2,32,256], index: 9, kind: output, shape index: {}]
  %s10 = sld [smem:[#allocation0]]
  $region73: #{tpu_custom_call.1} parent=0
    _
  %s12 = ssub.s32 1, %s10
  %s13 = scalar_select 0, %s12, %s10
  $region1: #{tpu_custom_call.1} parent=0
    #allocation4 [shape = 'u8[65536]{0}', space=vmem, size = 0x10000, scoped, tag = 'output window, operand 0']
    #allocation5 [shape = 's32[2]{0}', space=sflag, size = 0x8, scoped, tag = 'scoped memory for tpu_custom_call.1']
    %14 = vsyncpa [#allocation5], 0
    %s15 = scalar_lea.sflag [#allocation5], 1
    %16 = vsyncpa %s15, 0
    loop: start=0, step=1, limit=4
    $region2: #{tpu_custom_call.1} parent=1 // loop_pre_header
      _
    $region3: #{tpu_custom_call.1} parent=1 // loop_header
      %s18 = sphi 0, %s22
      %p19 = scmp.ge.s32.totalorder %s18, 4
      %s28 = sphi 0, %s30
      %s31 = sphi 0, %s28
      %s32 = sphi 0, %s31
      %s48 = sphi 0, %s32
      %s52 = sphi 0, %s52
      %s54 = sphi 0, %s52
      %s55 = sphi 0, %s54
      %s69 = sphi 0, %s55
      %s73 = sphi 0, %s73
      %s75 = sphi 0, %s73
      %s76 = sphi 0, %s75
      %s90 = sphi 0, %s76
      %s94 = sphi 0, %s94
      %s96 = sphi 0, %s94
      %s97 = sphi 0, %s96
      %s111 = sphi 0, %s97
      %s115 = sphi 0, %s115
      %s117 = sphi 0, %s115
      %s118 = sphi 0, %s117
      %s132 = sphi 0, %s118
      %s136 = sphi 0, %s136
      %s138 = sphi 0, %s136
      %s139 = sphi 0, %s138
      %s153 = sphi 0, %s139
      %s157 = sphi 0, %s157
      %s159 = sphi 0, %s157
      %s160 = sphi 0, %s159
      %s174 = sphi 0, %s160
      %s178 = sphi 0, %s178
      %s180 = sphi 0, %s178
      %s181 = sphi 0, %s180
      %s195 = sphi 0, %s181
      %s199 = sphi 0, %s199
      %s201 = sphi 0, %s199
      %s202 = sphi 0, %s201
      %s216 = sphi 0, %s202
      %s222 = sphi 0, %s224
      %s225 = sphi 0, %s222
      %s226 = sphi 0, %s225
      %s242 = sphi 0, %s226
    $region4: #{tpu_custom_call.1} parent=1 // loop_header_branch
      %21 = sbr.rel (%p19) target = $region8
    $region5: #{tpu_custom_call.1} parent=1 // loop_body
      %s23 = ssub.s32 %s18, 1
      %s24 = ssub.s32 %s18, 2
      %s25 = sadd.s32 %s18, 1
      %s26 = ssub.s32 %s18, %s25
      %p27 = scmp.eq.s32.totalorder %s26, 0
      %s29 = sadd.s32 %s28, 1
      %s30 = scalar_select %p27, %s28, %s29
      %p33 = pneg %p27
      %p34 = scmp.eq.s32.totalorder %s18, 1
      %p35 = por %p33, %p34
      %p36 = scmp.ne.s32.totalorder %s28, %s31
      %p37 = scmp.eq.s32.totalorder %s18, 0
      %p38 = por %p36, %p37
      %p39 = scmp.ne.s32.totalorder %s28, %s31
      %p40 = scmp.eq.s32.totalorder %s23, 1
      %p41 = por %p39, %p40
      %p42 = scmp.ne.s32.totalorder %s31, %s32
      %p43 = scmp.eq.s32.totalorder %s23, 0
      %p44 = por %p42, %p43
      %p45 = scmp.ne.s32.totalorder %s31, %s32
      %p46 = scmp.eq.s32.totalorder %s24, 1
      %p47 = por %p45, %p46
      %p49 = scmp.ne.s32.totalorder %s32, %s48
      %p50 = scmp.eq.s32.totalorder %s24, 0
      %p51 = por %p49, %p50
      %s53 = sadd.s32 %s52, 1
      %p56 = scmp.eq.s32.totalorder %s18, 1
      %p57 = scmp.ne.s32.totalorder %s52, %s54
      %p58 = scmp.eq.s32.totalorder %s18, 0
      %p59 = por %p57, %p58
      %p60 = scmp.ne.s32.totalorder %s52, %s54
      %p61 = scmp.eq.s32.totalorder %s23, 1
      %p62 = por %p60, %p61
      %p63 = scmp.ne.s32.totalorder %s54, %s55
      %p64 = scmp.eq.s32.totalorder %s23, 0
      %p65 = por %p63, %p64
      %p66 = scmp.ne.s32.totalorder %s54, %s55
      %p67 = scmp.eq.s32.totalorder %s24, 1
      %p68 = por %p66, %p67
      %p70 = scmp.ne.s32.totalorder %s55, %s69
      %p71 = scmp.eq.s32.totalorder %s24, 0
      %p72 = por %p70, %p71
      %s74 = sadd.s32 %s73, 1
      %p77 = scmp.eq.s32.totalorder %s18, 1
      %p78 = scmp.ne.s32.totalorder %s73, %s75
      %p79 = scmp.eq.s32.totalorder %s18, 0
      %p80 = por %p78, %p79
      %p81 = scmp.ne.s32.totalorder %s73, %s75
      %p82 = scmp.eq.s32.totalorder %s23, 1
      %p83 = por %p81, %p82
      %p84 = scmp.ne.s32.totalorder %s75, %s76
      %p85 = scmp.eq.s32.totalorder %s23, 0
      %p86 = por %p84, %p85
      %p87 = scmp.ne.s32.totalorder %s75, %s76
      %p88 = scmp.eq.s32.totalorder %s24, 1
      %p89 = por %p87, %p88
      %p91 = scmp.ne.s32.totalorder %s76, %s90
      %p92 = scmp.eq.s32.totalorder %s24, 0
      %p93 = por %p91, %p92
      %s95 = sadd.s32 %s94, 1
      %p98 = scmp.eq.s32.totalorder %s18, 1
      %p99 = scmp.ne.s32.totalorder %s94, %s96
      %p100 = scmp.eq.s32.totalorder %s18, 0
      %p101 = por %p99, %p100
      %p102 = scmp.ne.s32.totalorder %s94, %s96
      %p103 = scmp.eq.s32.totalorder %s23, 1
      %p104 = por %p102, %p103
      %p105 = scmp.ne.s32.totalorder %s96, %s97
      %p106 = scmp.eq.s32.totalorder %s23, 0
      %p107 = por %p105, %p106
      %p108 = scmp.ne.s32.totalorder %s96, %s97
      %p109 = scmp.eq.s32.totalorder %s24, 1
      %p110 = por %p108, %p109
      %p112 = scmp.ne.s32.totalorder %s97, %s111
      %p113 = scmp.eq.s32.totalorder %s24, 0
      %p114 = por %p112, %p113
      %s116 = sadd.s32 %s115, 1
      %p119 = scmp.eq.s32.totalorder %s18, 1
      %p120 = scmp.ne.s32.totalorder %s115, %s117
      %p121 = scmp.eq.s32.totalorder %s18, 0
      %p122 = por %p120, %p121
      %p123 = scmp.ne.s32.totalorder %s115, %s117
      %p124 = scmp.eq.s32.totalorder %s23, 1
      %p125 = por %p123, %p124
      %p126 = scmp.ne.s32.totalorder %s117, %s118
      %p127 = scmp.eq.s32.totalorder %s23, 0
      %p128 = por %p126, %p127
      %p129 = scmp.ne.s32.totalorder %s117, %s118
      %p130 = scmp.eq.s32.totalorder %s24, 1
      %p131 = por %p129, %p130
      %p133 = scmp.ne.s32.totalorder %s118, %s132
      %p134 = scmp.eq.s32.totalorder %s24, 0
      %p135 = por %p133, %p134
      %s137 = sadd.s32 %s136, 1
      %p140 = scmp.eq.s32.totalorder %s18, 1
      %p141 = scmp.ne.s32.totalorder %s136, %s138
      %p142 = scmp.eq.s32.totalorder %s18, 0
      %p143 = por %p141, %p142
      %p144 = scmp.ne.s32.totalorder %s136, %s138
      %p145 = scmp.eq.s32.totalorder %s23, 1
      %p146 = por %p144, %p145
      %p147 = scmp.ne.s32.totalorder %s138, %s139
      %p148 = scmp.eq.s32.totalorder %s23, 0
      %p149 = por %p147, %p148
      %p150 = scmp.ne.s32.totalorder %s138, %s139
      %p151 = scmp.eq.s32.totalorder %s24, 1
      %p152 = por %p150, %p151
      %p154 = scmp.ne.s32.totalorder %s139, %s153
      %p155 = scmp.eq.s32.totalorder %s24, 0
      %p156 = por %p154, %p155
      %s158 = sadd.s32 %s157, 1
      %p161 = scmp.eq.s32.totalorder %s18, 1
      %p162 = scmp.ne.s32.totalorder %s157, %s159
      %p163 = scmp.eq.s32.totalorder %s18, 0
      %p164 = por %p162, %p163
      %p165 = scmp.ne.s32.totalorder %s157, %s159
      %p166 = scmp.eq.s32.totalorder %s23, 1
      %p167 = por %p165, %p166
      %p168 = scmp.ne.s32.totalorder %s159, %s160
      %p169 = scmp.eq.s32.totalorder %s23, 0
      %p170 = por %p168, %p169
      %p171 = scmp.ne.s32.totalorder %s159, %s160
      %p172 = scmp.eq.s32.totalorder %s24, 1
      %p173 = por %p171, %p172
      %p175 = scmp.ne.s32.totalorder %s160, %s174
      %p176 = scmp.eq.s32.totalorder %s24, 0
      %p177 = por %p175, %p176
      %s179 = sadd.s32 %s178, 1
      %p182 = scmp.eq.s32.totalorder %s18, 1
      %p183 = scmp.ne.s32.totalorder %s178, %s180
      %p184 = scmp.eq.s32.totalorder %s18, 0
      %p185 = por %p183, %p184
      %p186 = scmp.ne.s32.totalorder %s178, %s180
      %p187 = scmp.eq.s32.totalorder %s23, 1
      %p188 = por %p186, %p187
      %p189 = scmp.ne.s32.totalorder %s180, %s181
      %p190 = scmp.eq.s32.totalorder %s23, 0
      %p191 = por %p189, %p190
      %p192 = scmp.ne.s32.totalorder %s180, %s181
      %p193 = scmp.eq.s32.totalorder %s24, 1
      %p194 = por %p192, %p193
      %p196 = scmp.ne.s32.totalorder %s181, %s195
      %p197 = scmp.eq.s32.totalorder %s24, 0
      %p198 = por %p196, %p197
      %s200 = sadd.s32 %s199, 1
      %p203 = scmp.eq.s32.totalorder %s18, 1
      %p204 = scmp.ne.s32.totalorder %s199, %s201
      %p205 = scmp.eq.s32.totalorder %s18, 0
      %p206 = por %p204, %p205
      %p207 = scmp.ne.s32.totalorder %s199, %s201
      %p208 = scmp.eq.s32.totalorder %s23, 1
      %p209 = por %p207, %p208
      %p210 = scmp.ne.s32.totalorder %s201, %s202
      %p211 = scmp.eq.s32.totalorder %s23, 0
      %p212 = por %p210, %p211
      %p213 = scmp.ne.s32.totalorder %s201, %s202
      %p214 = scmp.eq.s32.totalorder %s24, 1
      %p215 = por %p213, %p214
      %p217 = scmp.ne.s32.totalorder %s202, %s216
      %p218 = scmp.eq.s32.totalorder %s24, 0
      %p219 = por %p217, %p218
      %s220 = ssub.s32 %s18, %s25
      %p221 = scmp.eq.s32.totalorder %s220, 0
      %s223 = sadd.s32 %s222, 1
      %s224 = scalar_select %p221, %s222, %s223
      %p227 = pneg %p221
      %p228 = scmp.eq.s32.totalorder %s18, 1
      %p229 = por %p227, %p228
      %p230 = scmp.ne.s32.totalorder %s222, %s225
      %p231 = scmp.eq.s32.totalorder %s18, 0
      %p232 = por %p230, %p231
      %p233 = scmp.ne.s32.totalorder %s222, %s225
      %p234 = scmp.eq.s32.totalorder %s23, 1
      %p235 = por %p233, %p234
      %p236 = scmp.ne.s32.totalorder %s225, %s226
      %p237 = scmp.eq.s32.totalorder %s23, 0
      %p238 = por %p236, %p237
      %p239 = scmp.ne.s32.totalorder %s225, %s226
      %p240 = scmp.eq.s32.totalorder %s24, 1
      %p241 = por %p239, %p240
      %p243 = scmp.ne.s32.totalorder %s226, %s242
      %p244 = scmp.eq.s32.totalorder %s24, 0
      %p245 = por %p243, %p244
      %p246 = scmp.le.s32.totalorder 1, %s18
      %p247 = scmp.lt.s32.totalorder %s18, 3
      %p248 = pnand %p246, %p247
      %p249 = pneg %p248
      // Predicated region
      $region9: #{tpu_custom_call.1} parent=5 // pred_check
        _
      $region10: #{tpu_custom_call.1} parent=5 // pred_check_branch
        %251 = sbr.rel (%p248) target = $region12
      $region11: #{tpu_custom_call.1} parent=5 // pred_region
        %s252 = ssub.s32 %s18, 1
        // Predicated region
        $region13: #{tpu_custom_call.1} parent=11 // pred_check
          %p253 = pneg %p65
        $region14: #{tpu_custom_call.1} parent=11 // pred_check_branch
          %255 = sbr.rel (%p253) target = $region16
        $region15: #{tpu_custom_call.1} parent=11 // pred_region
          _
        $region16: #{tpu_custom_call.1} parent=11 // pred_fallthru
          _
        // Predicated region
        $region17: #{tpu_custom_call.1} parent=11 // pred_check
          %p256 = pneg %p86
        $region18: #{tpu_custom_call.1} parent=11 // pred_check_branch
          %258 = sbr.rel (%p256) target = $region20
        $region19: #{tpu_custom_call.1} parent=11 // pred_region
          _
        $region20: #{tpu_custom_call.1} parent=11 // pred_fallthru
          _
        // Predicated region
        $region21: #{tpu_custom_call.1} parent=11 // pred_check
          %p259 = pneg %p107
        $region22: #{tpu_custom_call.1} parent=11 // pred_check_branch
          %261 = sbr.rel (%p259) target = $region24
        $region23: #{tpu_custom_call.1} parent=11 // pred_region
          _
        $region24: #{tpu_custom_call.1} parent=11 // pred_fallthru
          _
        // Predicated region
        $region25: #{tpu_custom_call.1} parent=11 // pred_check
          %p262 = pneg %p128
        $region26: #{tpu_custom_call.1} parent=11 // pred_check_branch
          %264 = sbr.rel (%p262) target = $region28
        $region27: #{tpu_custom_call.1} parent=11 // pred_region
          _
        $region28: #{tpu_custom_call.1} parent=11 // pred_fallthru
          _
        // Predicated region
        $region29: #{tpu_custom_call.1} parent=11 // pred_check
          %p265 = pneg %p149
        $region30: #{tpu_custom_call.1} parent=11 // pred_check_branch
          %267 = sbr.rel (%p265) target = $region32
        $region31: #{tpu_custom_call.1} parent=11 // pred_region
          _
        $region32: #{tpu_custom_call.1} parent=11 // pred_fallthru
          _
        // Predicated region
        $region33: #{tpu_custom_call.1} parent=11 // pred_check
          %p268 = pneg %p170
        $region34: #{tpu_custom_call.1} parent=11 // pred_check_branch
          %270 = sbr.rel (%p268) target = $region36
        $region35: #{tpu_custom_call.1} parent=11 // pred_region
          _
        $region36: #{tpu_custom_call.1} parent=11 // pred_fallthru
          _
        // Predicated region
        $region37: #{tpu_custom_call.1} parent=11 // pred_check
          %p271 = pneg %p191
        $region38: #{tpu_custom_call.1} parent=11 // pred_check_branch
          %273 = sbr.rel (%p271) target = $region40
        $region39: #{tpu_custom_call.1} parent=11 // pred_region
          _
        $region40: #{tpu_custom_call.1} parent=11 // pred_fallthru
          _
        // Predicated region
        $region41: #{tpu_custom_call.1} parent=11 // pred_check
          %p274 = pneg %p212
        $region42: #{tpu_custom_call.1} parent=11 // pred_check_branch
          %276 = sbr.rel (%p274) target = $region44
        $region43: #{tpu_custom_call.1} parent=11 // pred_region
          _
        $region44: #{tpu_custom_call.1} parent=11 // pred_fallthru
          _
      $region12: #{tpu_custom_call.1} parent=5 // pred_fallthru
        _
      %p277 = scmp.lt.s32.totalorder %s18, 2
      // Predicated region
      $region45: #{tpu_custom_call.1} parent=5 // pred_check
        %p278 = pneg %p277
      $region46: #{tpu_custom_call.1} parent=5 // pred_check_branch
        %280 = sbr.rel (%p278) target = $region48
      $region47: #{tpu_custom_call.1} parent=5 // pred_region
        // Predicated region
        $region49: #{tpu_custom_call.1} parent=47 // pred_check
          %p281 = pneg %p38
        $region50: #{tpu_custom_call.1} parent=47 // pred_check_branch
          %283 = sbr.rel (%p281) target = $region52
        $region51: #{tpu_custom_call.1} parent=47 // pred_region
          %p284 = scmp.lt.s32.totalorder %s18, 1
          %s285 = scalar_select %p284, %s18, 1
          %s286 = smul.addr %s285, 8
          %s287 = smul.addr %s286, 8
          %s288 = scalar_lea.vmem %s0, %s287
        $region52: #{tpu_custom_call.1} parent=47 // pred_fallthru
          _
      $region48: #{tpu_custom_call.1} parent=5 // pred_fallthru
        _
      %p289 = scmp.le.s32.totalorder 1, %s18
      %p290 = scmp.lt.s32.totalorder %s18, 3
      %p291 = pnand %p289, %p290
      %p292 = pneg %p291
      // Predicated region
      $region53: #{tpu_custom_call.1} parent=5 // pred_check
        _
      $region54: #{tpu_custom_call.1} parent=5 // pred_check_branch
        %294 = sbr.rel (%p291) target = $region56
      $region55: #{tpu_custom_call.1} parent=5 // pred_region
        %s295 = ssub.s32 %s18, 1
        %p296 = scmp.lt.s32.totalorder %s23, 1
        %s297 = scalar_select %p296, %s23, 1
        %s298 = smul.addr %s297, 8
        %s299 = smul.addr %s298, 8
        %s300 = scalar_lea.vmem %s0, %s299
        %p301 = pneg %p44
        %p302 = pneg %p41
        %p303 = pneg %p65
        %p304 = pneg %p62
        %p305 = pneg %p86
        %p306 = pneg %p83
        %p307 = pneg %p107
        %p308 = pneg %p104
        %p309 = pneg %p128
        %p310 = pneg %p125
        %p311 = pneg %p149
        %p312 = pneg %p146
        %p313 = pneg %p170
        %p314 = pneg %p167
        %p315 = pneg %p191
        %p316 = pneg %p188
        %p317 = pneg %p212
        %p318 = pneg %p209
        %p319 = pneg %p238
        %p320 = pneg %p235
        %s321 = sand.u32 %s225, 1
        %s322 = scalar_lea.sflag [#allocation5], %s321
        %s323 = sand.u32 %s225, 1
        %s324 = smul.addr %s323, 64
        %s325 = scalar_lea.vmem [#allocation4], %s324
        %p326 = scmp.lt.s32.totalorder %s23, 1
        %s327 = scalar_select %p326, %s23, 1
        %s328 = smul.addr %s327, 8
        %s329 = smul.addr %s328, 8
        %s330 = scalar_lea.vmem %s0, %s329
        %p332 = scmp.eq.s32.totalorder %s23, 0
        // Predicated region
        $region57: #{tpu_custom_call.1} parent=55 // pred_check
          %p333 = pneg %p332
        $region58: #{tpu_custom_call.1} parent=55 // pred_check_branch
          %335 = sbr.rel (%p333) target = $region60
        $region59: #{tpu_custom_call.1} parent=55 // pred_region
          %vm336 = vcmask 257024
          %337 = vst.msk [vmem:[#allocation2] sm:$0xf] %vm336, 0
          %338 = vst.msk [vmem:[#allocation2 + $0x4] sm:$0xf] %vm336, 0
          %vm339 = vcmask 253952
          %340 = vst.msk [vmem:[#allocation2 + $0x8] sm:$0x1] %vm339, 0
          %341 = vst.msk [vmem:[#allocation2 + $0xc] sm:$0xf] %vm336, 0
          %342 = vst.msk [vmem:[#allocation2 + $0x10] sm:$0xf] %vm336, 0
          %343 = vst.msk [vmem:[#allocation2 + $0x14] sm:$0x1] %vm339, 0
          %344 = vst.msk [vmem:[#allocation2 + $0x18] sm:$0xf] %vm336, 0
          %345 = vst.msk [vmem:[#allocation2 + $0x1c] sm:$0xf] %vm336, 0
          %346 = vst.msk [vmem:[#allocation2 + $0x20] sm:$0x1] %vm339, 0
          %347 = vst.msk [vmem:[#allocation2 + $0x24] sm:$0xf] %vm336, 0
          %348 = vst.msk [vmem:[#allocation2 + $0x28] sm:$0xf] %vm336, 0
          %349 = vst.msk [vmem:[#allocation2 + $0x2c] sm:$0x1] %vm339, 0
          %350 = vst.msk [vmem:[#allocation2 + $0x30] sm:$0xf] %vm336, 0
          %351 = vst.msk [vmem:[#allocation2 + $0x34] sm:$0xf] %vm336, 0
          %352 = vst.msk [vmem:[#allocation2 + $0x38] sm:$0x1] %vm339, 0
          %353 = vst.msk [vmem:[#allocation2 + $0x3c] sm:$0xf] %vm336, 0
          %354 = vst.msk [vmem:[#allocation2 + $0x40] sm:$0xf] %vm336, 0
          %355 = vst.msk [vmem:[#allocation2 + $0x44] sm:$0x1] %vm339, 0
          %356 = vst.msk [vmem:[#allocation2 + $0x48] sm:$0xf] %vm336, 0
          %357 = vst.msk [vmem:[#allocation2 + $0x4c] sm:$0xf] %vm336, 0
          %358 = vst.msk [vmem:[#allocation2 + $0x50] sm:$0x1] %vm339, 0
          %359 = vst.msk [vmem:[#allocation2 + $0x54] sm:$0xf] %vm336, 0
          %360 = vst.msk [vmem:[#allocation2 + $0x58] sm:$0xf] %vm336, 0
          %361 = vst.msk [vmem:[#allocation2 + $0x5c] sm:$0x1] %vm339, 0
          %362 = vst.msk [vmem:[#allocation2 + $0x60] sm:$0xf] %vm336, 0
          %363 = vst.msk [vmem:[#allocation2 + $0x64] sm:$0xf] %vm336, 0
          %364 = vst.msk [vmem:[#allocation2 + $0x68] sm:$0x1] %vm339, 0
          %365 = vst.msk [vmem:[#allocation2 + $0x6c] sm:$0xf] %vm336, 0
          %366 = vst.msk [vmem:[#allocation2 + $0x70] sm:$0xf] %vm336, 0
          %367 = vst.msk [vmem:[#allocation2 + $0x74] sm:$0x1] %vm339, 0
          %368 = vst.msk [vmem:[#allocation2 + $0x78] sm:$0xf] %vm336, 0
          %369 = vst.msk [vmem:[#allocation2 + $0x7c] sm:$0xf] %vm336, 0
          %370 = vst.msk [vmem:[#allocation2 + $0x80] sm:$0x1] %vm339, 0
          %371 = vst.msk [vmem:[#allocation2 + $0x84] sm:$0xf] %vm336, 0
          %372 = vst.msk [vmem:[#allocation2 + $0x88] sm:$0xf] %vm336, 0
          %373 = vst.msk [vmem:[#allocation2 + $0x8c] sm:$0x1] %vm339, 0
          %374 = vst.msk [vmem:[#allocation2 + $0x90] sm:$0xf] %vm336, 0
          %375 = vst.msk [vmem:[#allocation2 + $0x94] sm:$0xf] %vm336, 0
          %376 = vst.msk [vmem:[#allocation2 + $0x98] sm:$0x1] %vm339, 0
          %377 = vst.msk [vmem:[#allocation2 + $0x9c] sm:$0xf] %vm336, 0
          %378 = vst.msk [vmem:[#allocation2 + $0xa0] sm:$0xf] %vm336, 0
          %379 = vst.msk [vmem:[#allocation2 + $0xa4] sm:$0x1] %vm339, 0
          %380 = vst.msk [vmem:[#allocation2 + $0xa8] sm:$0xf] %vm336, 0
          %381 = vst.msk [vmem:[#allocation2 + $0xac] sm:$0xf] %vm336, 0
          %382 = vst.msk [vmem:[#allocation2 + $0xb0] sm:$0x1] %vm339, 0
          %383 = vst.msk [vmem:[#allocation2 + $0xb4] sm:$0xf] %vm336, 0
          %384 = vst.msk [vmem:[#allocation2 + $0xb8] sm:$0xf] %vm336, 0
          %385 = vst.msk [vmem:[#allocation2 + $0xbc] sm:$0x1] %vm339, 0
          %386 = vst.msk [vmem:[#allocation2 + $0xc0] sm:$0xf] %vm336, 0
          %387 = vst.msk [vmem:[#allocation2 + $0xc4] sm:$0xf] %vm336, 0
          %388 = vst.msk [vmem:[#allocation2 + $0xc8] sm:$0x1] %vm339, 0
          %389 = vst.msk [vmem:[#allocation2 + $0xcc] sm:$0xf] %vm336, 0
          %390 = vst.msk [vmem:[#allocation2 + $0xd0] sm:$0xf] %vm336, 0
          %391 = vst.msk [vmem:[#allocation2 + $0xd4] sm:$0x1] %vm339, 0
        $region60: #{tpu_custom_call.1} parent=55 // pred_fallthru
          _
        %v392 = vld [vmem:[%s330] sm:$0xff]
        %v393 = vld [vmem:[%s330 + $0x8] sm:$0xff]
        %v394 = vld [vmem:[%s330 + $0x10] sm:$0xff]
        %v395 = vld [vmem:[%s330 + $0x18] sm:$0xff]
        %v396 = vld [vmem:[%s330 + $0x20] sm:$0xff]
        %v397 = vld [vmem:[%s330 + $0x28] sm:$0xff]
        %v398 = vld [vmem:[%s330 + $0x30] sm:$0xff]
        %v399 = vld [vmem:[%s330 + $0x38] sm:$0xff]
        %400 = vxpose.xlu0.b32.start [1/16] %v392, 128
        %401 = vxpose.xlu0.b32.cont [2/16] %v394, 128
        %402 = vxpose.xlu0.b32.cont [3/16] %v396, 128
        %403 = vxpose.xlu0.b32.cont [4/16] %v398, 128
        %404 = vxpose.xlu0.b32.cont [5/16] 0.0, 128
        %405 = vxpose.xlu0.b32.cont [6/16] 0.0, 128
        %406 = vxpose.xlu0.b32.cont [7/16] 0.0, 128
        %407 = vxpose.xlu0.b32.cont [8/16] 0.0, 128
        %408 = vxpose.xlu0.b32.cont [9/16] 0.0, 128
        %409 = vxpose.xlu0.b32.cont [10/16] 0.0, 128
        %410 = vxpose.xlu0.b32.cont [11/16] 0.0, 128
        %411 = vxpose.xlu0.b32.cont [12/16] 0.0, 128
        %412 = vxpose.xlu0.b32.cont [13/16] 0.0, 128
        %413 = vxpose.xlu0.b32.cont [14/16] 0.0, 128
        %414 = vxpose.xlu0.b32.cont [15/16] 0.0, 128
        %415 = vxpose.xlu0.b32.end [16/16] 0.0, 128
        %v416 = vpop.trf.xlu0
        %v417 = vpop.trf.xlu0
        %v418 = vpop.trf.xlu0
        %v419 = vpop.trf.xlu0
        %v420 = vpop.trf.xlu0
        %v421 = vpop.trf.xlu0
        %v422 = vpop.trf.xlu0
        %v423 = vpop.trf.xlu0
        %v424 = vpop.trf.xlu0
        %v425 = vpop.trf.xlu0
        %v426 = vpop.trf.xlu0
        %v427 = vpop.trf.xlu0
        %v428 = vpop.trf.xlu0
        %v429 = vpop.trf.xlu0
        %v430 = vpop.trf.xlu0
        %v431 = vpop.trf.xlu0
        %432 = vxpose.xlu0.b32.start [1/16] %v393, 128
        %433 = vxpose.xlu0.b32.cont [2/16] %v395, 128
        %434 = vxpose.xlu0.b32.cont [3/16] %v397, 128
        %435 = vxpose.xlu0.b32.cont [4/16] %v399, 128
        %436 = vxpose.xlu0.b32.cont [5/16] 0.0, 128
        %437 = vxpose.xlu0.b32.cont [6/16] 0.0, 128
        %438 = vxpose.xlu0.b32.cont [7/16] 0.0, 128
        %439 = vxpose.xlu0.b32.cont [8/16] 0.0, 128
        %440 = vxpose.xlu0.b32.cont [9/16] 0.0, 128
        %441 = vxpose.xlu0.b32.cont [10/16] 0.0, 128
        %442 = vxpose.xlu0.b32.cont [11/16] 0.0, 128
        %443 = vxpose.xlu0.b32.cont [12/16] 0.0, 128
        %444 = vxpose.xlu0.b32.cont [13/16] 0.0, 128
        %445 = vxpose.xlu0.b32.cont [14/16] 0.0, 128
        %446 = vxpose.xlu0.b32.cont [15/16] 0.0, 128
        %447 = vxpose.xlu0.b32.end [16/16] 0.0, 128
        %v448 = vpop.trf.xlu0
        %v449 = vpop.trf.xlu0
        %v450 = vpop.trf.xlu0
        %v451 = vpop.trf.xlu0
        %v452 = vpop.trf.xlu0
        %v453 = vpop.trf.xlu0
        %v454 = vpop.trf.xlu0
        %v455 = vpop.trf.xlu0
        %v456 = vpop.trf.xlu0
        %v457 = vpop.trf.xlu0
        %v458 = vpop.trf.xlu0
        %v459 = vpop.trf.xlu0
        %v460 = vpop.trf.xlu0
        %v461 = vpop.trf.xlu0
        %v462 = vpop.trf.xlu0
        %v463 = vpop.trf.xlu0
        %v464 = vpack.c.bf16 %v417, %v416
        %v465 = vpack.c.bf16 %v419, %v418
        %v466 = vpack.c.bf16 %v421, %v420
        %v467 = vpack.c.bf16 %v423, %v422
        %v468 = vpack.c.bf16 %v425, %v424
        %v469 = vpack.c.bf16 %v427, %v426
        %v470 = vpack.c.bf16 %v429, %v428
        %v471 = vpack.c.bf16 %v431, %v430
        %v472 = vpack.c.bf16 %v449, %v448
        %v473 = vpack.c.bf16 %v451, %v450
        %v474 = vpack.c.bf16 %v453, %v452
        %v475 = vpack.c.bf16 %v455, %v454
        %v476 = vpack.c.bf16 %v457, %v456
        %v477 = vpack.c.bf16 %v459, %v458
        %v478 = vpack.c.bf16 %v461, %v460
        %v479 = vpack.c.bf16 %v463, %v462
        %v496 = vunpack.c.l.b16 %v464
        %v497 = vunpack.c.h.b16 %v464
        %v498 = vunpack.c.l.b16 %v465
        %v499 = vunpack.c.h.b16 %v465
        %v500 = vunpack.c.l.b16 %v466
        %v501 = vunpack.c.h.b16 %v466
        %v502 = vunpack.c.l.b16 %v467
        %v503 = vunpack.c.h.b16 %v467
        %v504 = vunpack.c.l.b16 %v468
        %v505 = vunpack.c.h.b16 %v468
        %v506 = vunpack.c.l.b16 %v469
        %v507 = vunpack.c.h.b16 %v469
        %v508 = vunpack.c.l.b16 %v470
        %v509 = vunpack.c.h.b16 %v470
        %v510 = vunpack.c.l.b16 %v471
        %v511 = vunpack.c.h.b16 %v471
        %v512 = vunpack.c.l.b16 %v472
        %v513 = vunpack.c.h.b16 %v472
        %v514 = vunpack.c.l.b16 %v473
        %v515 = vunpack.c.h.b16 %v473
        %v516 = vunpack.c.l.b16 %v474
        %v517 = vunpack.c.h.b16 %v474
        %v518 = vunpack.c.l.b16 %v475
        %v519 = vunpack.c.h.b16 %v475
        %v520 = vunpack.c.l.b16 %v476
        %v521 = vunpack.c.h.b16 %v476
        %v522 = vunpack.c.l.b16 %v477
        %v523 = vunpack.c.h.b16 %v477
        %v524 = vunpack.c.l.b16 %v478
        %v525 = vunpack.c.h.b16 %v478
        %v526 = vunpack.c.l.b16 %v479
        %v527 = vunpack.c.h.b16 %v479
        %v528 = vpack.c.b16 %v496, %v496
        %v529 = vpack.c.b16 %v497, %v497
        %v530 = vpack.c.b16 %v498, %v498
        %v531 = vpack.c.b16 %v499, %v499
        %v532 = vpack.c.b16 %v500, %v500
        %v533 = vpack.c.b16 %v501, %v501
        %v534 = vpack.c.b16 %v502, %v502
        %v535 = vpack.c.b16 %v503, %v503
        %v536 = vpack.c.b16 %v504, %v504
        %v537 = vpack.c.b16 %v505, %v505
        %v538 = vpack.c.b16 %v506, %v506
        %v539 = vpack.c.b16 %v507, %v507
        %v540 = vpack.c.b16 %v508, %v508
        %v541 = vpack.c.b16 %v509, %v509
        %v542 = vpack.c.b16 %v510, %v510
        %v543 = vpack.c.b16 %v511, %v511
        %v544 = vpack.c.b16 %v512, %v512
        %v545 = vpack.c.b16 %v513, %v513
        %v546 = vpack.c.b16 %v514, %v514
        %v547 = vpack.c.b16 %v515, %v515
        %v548 = vpack.c.b16 %v516, %v516
        %v549 = vpack.c.b16 %v517, %v517
        %v550 = vpack.c.b16 %v518, %v518
        %v551 = vpack.c.b16 %v519, %v519
        %v552 = vpack.c.b16 %v520, %v520
        %v553 = vpack.c.b16 %v521, %v521
        %v554 = vpack.c.b16 %v522, %v522
        %v555 = vpack.c.b16 %v523, %v523
        %v556 = vpack.c.b16 %v524, %v524
        %v557 = vpack.c.b16 %v525, %v525
        %v558 = vpack.c.b16 %v526, %v526
        %v559 = vpack.c.b16 %v527, %v527
        %vm560 = vsmask.f32 256
        %vm561 = vsmask.f32 4368
        %vm562 = vmor %vm560, %vm561
        %v564 = vshrl.u32 %v528, 16
        %v566 = vrot.slane %v564, 7
        %v567 = vshll.u32 %v528, 16
        %v569 = vor.u32 %v566, %v567
        %v570 = vrot.slane %v566, 4
        %v572 = vshrl.u32 %v529, 16
        %v574 = vrot.slane %v572, 7
        %v575 = vshll.u32 %v529, 16
        %v577 = vor.u32 %v574, %v575
        %v578 = vsel %vm562, %v570, %v577
        %v579 = vrot.slane %v574, 4
        %v581 = vshrl.u32 %v530, 16
        %v583 = vrot.slane %v581, 7
        %v584 = vshll.u32 %v530, 16
        %v586 = vor.u32 %v583, %v584
        %v587 = vrot.slane %v583, 4
        %v589 = vshrl.u32 %v531, 16
        %v591 = vrot.slane %v589, 7
        %v592 = vshll.u32 %v531, 16
        %v594 = vor.u32 %v591, %v592
        %v595 = vsel %vm562, %v587, %v594
        %v596 = vrot.slane %v591, 4
        %v598 = vshrl.u32 %v532, 16
        %v600 = vrot.slane %v598, 7
        %v601 = vshll.u32 %v532, 16
        %v603 = vor.u32 %v600, %v601
        %v604 = vrot.slane %v600, 4
        %v606 = vshrl.u32 %v533, 16
        %v608 = vrot.slane %v606, 7
        %v609 = vshll.u32 %v533, 16
        %v611 = vor.u32 %v608, %v609
        %v612 = vsel %vm562, %v604, %v611
        %v613 = vrot.slane %v608, 4
        %v615 = vshrl.u32 %v534, 16
        %v617 = vrot.slane %v615, 7
        %v618 = vshll.u32 %v534, 16
        %v620 = vor.u32 %v617, %v618
        %v621 = vrot.slane %v617, 4
        %v623 = vshrl.u32 %v535, 16
        %v625 = vrot.slane %v623, 7
        %v626 = vshll.u32 %v535, 16
        %v628 = vor.u32 %v625, %v626
        %v629 = vsel %vm562, %v621, %v628
        %v630 = vrot.slane %v625, 4
        %v632 = vshrl.u32 %v536, 16
        %v634 = vrot.slane %v632, 7
        %v635 = vshll.u32 %v536, 16
        %v637 = vor.u32 %v634, %v635
        %v638 = vrot.slane %v634, 4
        %v640 = vshrl.u32 %v537, 16
        %v642 = vrot.slane %v640, 7
        %v643 = vshll.u32 %v537, 16
        %v645 = vor.u32 %v642, %v643
        %v646 = vsel %vm562, %v638, %v645
        %v647 = vrot.slane %v642, 4
        %v649 = vshrl.u32 %v538, 16
        %v651 = vrot.slane %v649, 7
        %v652 = vshll.u32 %v538, 16
        %v654 = vor.u32 %v651, %v652
        %v655 = vrot.slane %v651, 4
        %v657 = vshrl.u32 %v539, 16
        %v659 = vrot.slane %v657, 7
        %v660 = vshll.u32 %v539, 16
        %v662 = vor.u32 %v659, %v660
        %v663 = vsel %vm562, %v655, %v662
        %v664 = vrot.slane %v659, 4
        %v666 = vshrl.u32 %v540, 16
        %v668 = vrot.slane %v666, 7
        %v669 = vshll.u32 %v540, 16
        %v671 = vor.u32 %v668, %v669
        %v672 = vrot.slane %v668, 4
        %v674 = vshrl.u32 %v541, 16
        %v676 = vrot.slane %v674, 7
        %v677 = vshll.u32 %v541, 16
        %v679 = vor.u32 %v676, %v677
        %v680 = vsel %vm562, %v672, %v679
        %v681 = vrot.slane %v676, 4
        %v683 = vshrl.u32 %v542, 16
        %v685 = vrot.slane %v683, 7
        %v686 = vshll.u32 %v542, 16
        %v688 = vor.u32 %v685, %v686
        %v689 = vrot.slane %v685, 4
        %v691 = vshrl.u32 %v543, 16
        %v693 = vrot.slane %v691, 7
        %v694 = vshll.u32 %v543, 16
        %v696 = vor.u32 %v693, %v694
        %v697 = vsel %vm562, %v689, %v696
        %v698 = vrot.slane %v693, 4
        %v700 = vshrl.u32 %v544, 16
        %v702 = vrot.slane %v700, 7
        %v703 = vshll.u32 %v544, 16
        %v705 = vor.u32 %v702, %v703
        %v706 = vrot.slane %v702, 4
        %v708 = vshrl.u32 %v545, 16
        %v710 = vrot.slane %v708, 7
        %v711 = vshll.u32 %v545, 16
        %v713 = vor.u32 %v710, %v711
        %v714 = vsel %vm562, %v706, %v713
        %v715 = vrot.slane %v710, 4
        %v717 = vshrl.u32 %v546, 16
        %v719 = vrot.slane %v717, 7
        %v720 = vshll.u32 %v546, 16
        %v722 = vor.u32 %v719, %v720
        %v723 = vrot.slane %v719, 4
        %v725 = vshrl.u32 %v547, 16
        %v727 = vrot.slane %v725, 7
        %v728 = vshll.u32 %v547, 16
        %v730 = vor.u32 %v727, %v728
        %v731 = vsel %vm562, %v723, %v730
        %v732 = vrot.slane %v727, 4
        %v734 = vshrl.u32 %v548, 16
        %v736 = vrot.slane %v734, 7
        %v737 = vshll.u32 %v548, 16
        %v739 = vor.u32 %v736, %v737
        %v740 = vrot.slane %v736, 4
        %v742 = vshrl.u32 %v549, 16
        %v744 = vrot.slane %v742, 7
        %v745 = vshll.u32 %v549, 16
        %v747 = vor.u32 %v744, %v745
        %v748 = vsel %vm562, %v740, %v747
        %v749 = vrot.slane %v744, 4
        %v751 = vshrl.u32 %v550, 16
        %v753 = vrot.slane %v751, 7
        %v754 = vshll.u32 %v550, 16
        %v756 = vor.u32 %v753, %v754
        %v757 = vrot.slane %v753, 4
        %v759 = vshrl.u32 %v551, 16
        %v761 = vrot.slane %v759, 7
        %v762 = vshll.u32 %v551, 16
        %v764 = vor.u32 %v761, %v762
        %v765 = vsel %vm562, %v757, %v764
        %v766 = vrot.slane %v761, 4
        %v768 = vshrl.u32 %v552, 16
        %v770 = vrot.slane %v768, 7
        %v771 = vshll.u32 %v552, 16
        %v773 = vor.u32 %v770, %v771
        %v774 = vrot.slane %v770, 4
        %v776 = vshrl.u32 %v553, 16
        %v778 = vrot.slane %v776, 7
        %v779 = vshll.u32 %v553, 16
        %v781 = vor.u32 %v778, %v779
        %v782 = vsel %vm562, %v774, %v781
        %v783 = vrot.slane %v778, 4
        %v785 = vshrl.u32 %v554, 16
        %v787 = vrot.slane %v785, 7
        %v788 = vshll.u32 %v554, 16
        %v790 = vor.u32 %v787, %v788
        %v791 = vrot.slane %v787, 4
        %v793 = vshrl.u32 %v555, 16
        %v795 = vrot.slane %v793, 7
        %v796 = vshll.u32 %v555, 16
        %v798 = vor.u32 %v795, %v796
        %v799 = vsel %vm562, %v791, %v798
        %v800 = vrot.slane %v795, 4
        %v802 = vshrl.u32 %v556, 16
        %v804 = vrot.slane %v802, 7
        %v805 = vshll.u32 %v556, 16
        %v807 = vor.u32 %v804, %v805
        %v808 = vrot.slane %v804, 4
        %v810 = vshrl.u32 %v557, 16
        %v812 = vrot.slane %v810, 7
        %v813 = vshll.u32 %v557, 16
        %v815 = vor.u32 %v812, %v813
        %v816 = vsel %vm562, %v808, %v815
        %v817 = vrot.slane %v812, 4
        %v819 = vshrl.u32 %v558, 16
        %v821 = vrot.slane %v819, 7
        %v822 = vshll.u32 %v558, 16
        %v824 = vor.u32 %v821, %v822
        %v825 = vrot.slane %v821, 4
        %v827 = vshrl.u32 %v559, 16
        %v829 = vrot.slane %v827, 7
        %v830 = vshll.u32 %v559, 16
        %v832 = vor.u32 %v829, %v830
        %v833 = vsel %vm562, %v825, %v832
        %v834 = vrot.slane %v829, 4
        %s883 = scalar_lea.vmem [#allocation2], 12
        %vm884 = vcmask 257024
        %vm885 = vsmask.f32 7938
        %vm886 = vmand %vm884, %vm885
        %v887 = vld [vmem:[%s883] sm:$0xf]
        %v888 = vsel %vm886, %v569, %v887
        %889 = vst [vmem:[%s883] sm:$0xf] %v888
        %vm890 = vcmask 257024
        %891 = vst.msk [vmem:[%s883 + $0x4] sm:$0xf] %vm890, %v578
        %vm892 = vcmask 253952
        %vm893 = vmand %vm892, %vm560
        %v894 = vld [vmem:[%s883 + $0x8] sm:$0x1]
        %v895 = vsel %vm893, %v579, %v894
        %896 = vst [vmem:[%s883 + $0x8] sm:$0x1] %v895
        %v897 = vld [vmem:[%s883 + $0xc] sm:$0xf]
        %v898 = vsel %vm886, %v586, %v897
        %899 = vst [vmem:[%s883 + $0xc] sm:$0xf] %v898
        %900 = vst.msk [vmem:[%s883 + $0x10] sm:$0xf] %vm890, %v595
        %v901 = vld [vmem:[%s883 + $0x14] sm:$0x1]
        %v902 = vsel %vm893, %v596, %v901
        %903 = vst [vmem:[%s883 + $0x14] sm:$0x1] %v902
        %v904 = vld [vmem:[%s883 + $0x18] sm:$0xf]
        %v905 = vsel %vm886, %v603, %v904
        %906 = vst [vmem:[%s883 + $0x18] sm:$0xf] %v905
        %907 = vst.msk [vmem:[%s883 + $0x1c] sm:$0xf] %vm890, %v612
        %v908 = vld [vmem:[%s883 + $0x20] sm:$0x1]
        %v909 = vsel %vm893, %v613, %v908
        %910 = vst [vmem:[%s883 + $0x20] sm:$0x1] %v909
        %v911 = vld [vmem:[%s883 + $0x24] sm:$0xf]
        %v912 = vsel %vm886, %v620, %v911
        %913 = vst [vmem:[%s883 + $0x24] sm:$0xf] %v912
        %914 = vst.msk [vmem:[%s883 + $0x28] sm:$0xf] %vm890, %v629
        %v915 = vld [vmem:[%s883 + $0x2c] sm:$0x1]
        %v916 = vsel %vm893, %v630, %v915
        %917 = vst [vmem:[%s883 + $0x2c] sm:$0x1] %v916
        %v918 = vld [vmem:[%s883 + $0x30] sm:$0xf]
        %v919 = vsel %vm886, %v637, %v918
        %920 = vst [vmem:[%s883 + $0x30] sm:$0xf] %v919
        %921 = vst.msk [vmem:[%s883 + $0x34] sm:$0xf] %vm890, %v646
        %v922 = vld [vmem:[%s883 + $0x38] sm:$0x1]
        %v923 = vsel %vm893, %v647, %v922
        %924 = vst [vmem:[%s883 + $0x38] sm:$0x1] %v923
        %v925 = vld [vmem:[%s883 + $0x3c] sm:$0xf]
        %v926 = vsel %vm886, %v654, %v925
        %927 = vst [vmem:[%s883 + $0x3c] sm:$0xf] %v926
        %928 = vst.msk [vmem:[%s883 + $0x40] sm:$0xf] %vm890, %v663
        %v929 = vld [vmem:[%s883 + $0x44] sm:$0x1]
        %v930 = vsel %vm893, %v664, %v929
        %931 = vst [vmem:[%s883 + $0x44] sm:$0x1] %v930
        %v932 = vld [vmem:[%s883 + $0x48] sm:$0xf]
        %v933 = vsel %vm886, %v671, %v932
        %934 = vst [vmem:[%s883 + $0x48] sm:$0xf] %v933
        %935 = vst.msk [vmem:[%s883 + $0x4c] sm:$0xf] %vm890, %v680
        %v936 = vld [vmem:[%s883 + $0x50] sm:$0x1]
        %v937 = vsel %vm893, %v681, %v936
        %938 = vst [vmem:[%s883 + $0x50] sm:$0x1] %v937
        %v939 = vld [vmem:[%s883 + $0x54] sm:$0xf]
        %v940 = vsel %vm886, %v688, %v939
        %941 = vst [vmem:[%s883 + $0x54] sm:$0xf] %v940
        %942 = vst.msk [vmem:[%s883 + $0x58] sm:$0xf] %vm890, %v697
        %v943 = vld [vmem:[%s883 + $0x5c] sm:$0x1]
        %v944 = vsel %vm893, %v698, %v943
        %945 = vst [vmem:[%s883 + $0x5c] sm:$0x1] %v944
        %v946 = vld [vmem:[%s883 + $0x60] sm:$0xf]
        %v947 = vsel %vm886, %v705, %v946
        %948 = vst [vmem:[%s883 + $0x60] sm:$0xf] %v947
        %949 = vst.msk [vmem:[%s883 + $0x64] sm:$0xf] %vm890, %v714
        %v950 = vld [vmem:[%s883 + $0x68] sm:$0x1]
        %v951 = vsel %vm893, %v715, %v950
        %952 = vst [vmem:[%s883 + $0x68] sm:$0x1] %v951
        %v953 = vld [vmem:[%s883 + $0x6c] sm:$0xf]
        %v954 = vsel %vm886, %v722, %v953
        %955 = vst [vmem:[%s883 + $0x6c] sm:$0xf] %v954
        %956 = vst.msk [vmem:[%s883 + $0x70] sm:$0xf] %vm890, %v731
        %v957 = vld [vmem:[%s883 + $0x74] sm:$0x1]
        %v958 = vsel %vm893, %v732, %v957
        %959 = vst [vmem:[%s883 + $0x74] sm:$0x1] %v958
        %v960 = vld [vmem:[%s883 + $0x78] sm:$0xf]
        %v961 = vsel %vm886, %v739, %v960
        %962 = vst [vmem:[%s883 + $0x78] sm:$0xf] %v961
        %963 = vst.msk [vmem:[%s883 + $0x7c] sm:$0xf] %vm890, %v748
        %v964 = vld [vmem:[%s883 + $0x80] sm:$0x1]
        %v965 = vsel %vm893, %v749, %v964
        %966 = vst [vmem:[%s883 + $0x80] sm:$0x1] %v965
        %v967 = vld [vmem:[%s883 + $0x84] sm:$0xf]
        %v968 = vsel %vm886, %v756, %v967
        %969 = vst [vmem:[%s883 + $0x84] sm:$0xf] %v968
        %970 = vst.msk [vmem:[%s883 + $0x88] sm:$0xf] %vm890, %v765
        %v971 = vld [vmem:[%s883 + $0x8c] sm:$0x1]
        %v972 = vsel %vm893, %v766, %v971
        %973 = vst [vmem:[%s883 + $0x8c] sm:$0x1] %v972
        %v974 = vld [vmem:[%s883 + $0x90] sm:$0xf]
        %v975 = vsel %vm886, %v773, %v974
        %976 = vst [vmem:[%s883 + $0x90] sm:$0xf] %v975
        %977 = vst.msk [vmem:[%s883 + $0x94] sm:$0xf] %vm890, %v782
        %v978 = vld [vmem:[%s883 + $0x98] sm:$0x1]
        %v979 = vsel %vm893, %v783, %v978
        %980 = vst [vmem:[%s883 + $0x98] sm:$0x1] %v979
        %v981 = vld [vmem:[%s883 + $0x9c] sm:$0xf]
        %v982 = vsel %vm886, %v790, %v981
        %983 = vst [vmem:[%s883 + $0x9c] sm:$0xf] %v982
        %984 = vst.msk [vmem:[%s883 + $0xa0] sm:$0xf] %vm890, %v799
        %v985 = vld [vmem:[%s883 + $0xa4] sm:$0x1]
        %v986 = vsel %vm893, %v800, %v985
        %987 = vst [vmem:[%s883 + $0xa4] sm:$0x1] %v986
        %v988 = vld [vmem:[%s883 + $0xa8] sm:$0xf]
        %v989 = vsel %vm886, %v807, %v988
        %990 = vst [vmem:[%s883 + $0xa8] sm:$0xf] %v989
        %991 = vst.msk [vmem:[%s883 + $0xac] sm:$0xf] %vm890, %v816
        %v992 = vld [vmem:[%s883 + $0xb0] sm:$0x1]
        %v993 = vsel %vm893, %v817, %v992
        %994 = vst [vmem:[%s883 + $0xb0] sm:$0x1] %v993
        %v995 = vld [vmem:[%s883 + $0xb4] sm:$0xf]
        %v996 = vsel %vm886, %v824, %v995
        %997 = vst [vmem:[%s883 + $0xb4] sm:$0xf] %v996
        %998 = vst.msk [vmem:[%s883 + $0xb8] sm:$0xf] %vm890, %v833
        %v999 = vld [vmem:[%s883 + $0xbc] sm:$0x1]
        %v1000 = vsel %vm893, %v834, %v999
        %1001 = vst [vmem:[%s883 + $0xbc] sm:$0x1] %v1000
        %v1002 = vld [vmem:[#allocation2] sm:$0xf]
        %v1003 = vld [vmem:[#allocation2 + $0x4] sm:$0xf]
        %v1004 = vld [vmem:[#allocation2 + $0xc] sm:$0xf]
        %v1005 = vld [vmem:[#allocation2 + $0x10] sm:$0xf]
        %v1006 = vld [vmem:[#allocation2 + $0x18] sm:$0xf]
        %v1007 = vld [vmem:[#allocation2 + $0x1c] sm:$0xf]
        %v1008 = vld [vmem:[#allocation2 + $0x24] sm:$0xf]
        %v1009 = vld [vmem:[#allocation2 + $0x28] sm:$0xf]
        %v1010 = vld [vmem:[#allocation2 + $0x30] sm:$0xf]
        %v1011 = vld [vmem:[#allocation2 + $0x34] sm:$0xf]
        %v1012 = vld [vmem:[#allocation2 + $0x3c] sm:$0xf]
        %v1013 = vld [vmem:[#allocation2 + $0x40] sm:$0xf]
        %v1014 = vld [vmem:[#allocation2 + $0x48] sm:$0xf]
        %v1015 = vld [vmem:[#allocation2 + $0x4c] sm:$0xf]
        %v1016 = vld [vmem:[#allocation2 + $0x54] sm:$0xf]
        %v1017 = vld [vmem:[#allocation2 + $0x58] sm:$0xf]
        %v1018 = vld [vmem:[#allocation2 + $0x60] sm:$0xf]
        %v1019 = vld [vmem:[#allocation2 + $0x64] sm:$0xf]
        %v1020 = vld [vmem:[#allocation2 + $0x6c] sm:$0xf]
        %v1021 = vld [vmem:[#allocation2 + $0x70] sm:$0xf]
        %v1022 = vld [vmem:[#allocation2 + $0x78] sm:$0xf]
        %v1023 = vld [vmem:[#allocation2 + $0x7c] sm:$0xf]
        %v1024 = vld [vmem:[#allocation2 + $0x84] sm:$0xf]
        %v1025 = vld [vmem:[#allocation2 + $0x88] sm:$0xf]
        %v1026 = vld [vmem:[#allocation2 + $0x90] sm:$0xf]
        %v1027 = vld [vmem:[#allocation2 + $0x94] sm:$0xf]
        %v1028 = vld [vmem:[#allocation2 + $0x9c] sm:$0xf]
        %v1029 = vld [vmem:[#allocation2 + $0xa0] sm:$0xf]
        %v1030 = vld [vmem:[#allocation2 + $0xa8] sm:$0xf]
        %v1031 = vld [vmem:[#allocation2 + $0xac] sm:$0xf]
        %v1032 = vld [vmem:[#allocation2 + $0xb4] sm:$0xf]
        %v1033 = vld [vmem:[#allocation2 + $0xb8] sm:$0xf]
        %1034 = vst.msk [vmem:[#allocation3] sm:$0xf] %vm890, %v1002
        %1035 = vst.msk [vmem:[#allocation3 + $0xc] sm:$0xf] %vm890, %v1003
        %1036 = vst.msk [vmem:[#allocation3 + $0x18] sm:$0xf] %vm890, %v1004
        %1037 = vst.msk [vmem:[#allocation3 + $0x24] sm:$0xf] %vm890, %v1005
        %1038 = vst.msk [vmem:[#allocation3 + $0x30] sm:$0xf] %vm890, %v1006
        %1039 = vst.msk [vmem:[#allocation3 + $0x3c] sm:$0xf] %vm890, %v1007
        %1040 = vst.msk [vmem:[#allocation3 + $0x48] sm:$0xf] %vm890, %v1008
        %1041 = vst.msk [vmem:[#allocation3 + $0x54] sm:$0xf] %vm890, %v1009
        %1042 = vst.msk [vmem:[#allocation3 + $0x60] sm:$0xf] %vm890, %v1010
        %1043 = vst.msk [vmem:[#allocation3 + $0x6c] sm:$0xf] %vm890, %v1011
        %1044 = vst.msk [vmem:[#allocation3 + $0x78] sm:$0xf] %vm890, %v1012
        %1045 = vst.msk [vmem:[#allocation3 + $0x84] sm:$0xf] %vm890, %v1013
        %1046 = vst.msk [vmem:[#allocation3 + $0x90] sm:$0xf] %vm890, %v1014
        %1047 = vst.msk [vmem:[#allocation3 + $0x9c] sm:$0xf] %vm890, %v1015
        %1048 = vst.msk [vmem:[#allocation3 + $0xa8] sm:$0xf] %vm890, %v1016
        %1049 = vst.msk [vmem:[#allocation3 + $0xb4] sm:$0xf] %vm890, %v1017
        %1050 = vst.msk [vmem:[#allocation3 + $0xc0] sm:$0xf] %vm890, %v1018
        %1051 = vst.msk [vmem:[#allocation3 + $0xcc] sm:$0xf] %vm890, %v1019
        %1052 = vst.msk [vmem:[#allocation3 + $0xd8] sm:$0xf] %vm890, %v1020
        %1053 = vst.msk [vmem:[#allocation3 + $0xe4] sm:$0xf] %vm890, %v1021
        %1054 = vst.msk [vmem:[#allocation3 + $0xf0] sm:$0xf] %vm890, %v1022
        %1055 = vst.msk [vmem:[#allocation3 + $0xfc] sm:$0xf] %vm890, %v1023
        %1056 = vst.msk [vmem:[#allocation3 + $0x108] sm:$0xf] %vm890, %v1024
        %1057 = vst.msk [vmem:[#allocation3 + $0x114] sm:$0xf] %vm890, %v1025
        %1058 = vst.msk [vmem:[#allocation3 + $0x120] sm:$0xf] %vm890, %v1026
        %1059 = vst.msk [vmem:[#allocation3 + $0x12c] sm:$0xf] %vm890, %v1027
        %1060 = vst.msk [vmem:[#allocation3 + $0x138] sm:$0xf] %vm890, %v1028
        %1061 = vst.msk [vmem:[#allocation3 + $0x144] sm:$0xf] %vm890, %v1029
        %1062 = vst.msk [vmem:[#allocation3 + $0x150] sm:$0xf] %vm890, %v1030
        %1063 = vst.msk [vmem:[#allocation3 + $0x15c] sm:$0xf] %vm890, %v1031
        %1064 = vst.msk [vmem:[#allocation3 + $0x168] sm:$0xf] %vm890, %v1032
        %1065 = vst.msk [vmem:[#allocation3 + $0x174] sm:$0xf] %vm890, %v1033
        %v1066 = vld [vmem:[#allocation2] sm:$0xf]
        %v1067 = vld [vmem:[#allocation2 + $0x4] sm:$0xf]
        %v1068 = vld [vmem:[#allocation2 + $0x8] sm:$0x1]
        %v1069 = vld [vmem:[#allocation2 + $0xc] sm:$0xf]
        %v1070 = vld [vmem:[#allocation2 + $0x10] sm:$0xf]
        %v1071 = vld [vmem:[#allocation2 + $0x14] sm:$0x1]
        %v1072 = vld [vmem:[#allocation2 + $0x18] sm:$0xf]
        %v1073 = vld [vmem:[#allocation2 + $0x1c] sm:$0xf]
        %v1074 = vld [vmem:[#allocation2 + $0x20] sm:$0x1]
        %v1075 = vld [vmem:[#allocation2 + $0x24] sm:$0xf]
        %v1076 = vld [vmem:[#allocation2 + $0x28] sm:$0xf]
        %v1077 = vld [vmem:[#allocation2 + $0x2c] sm:$0x1]
        %v1078 = vld [vmem:[#allocation2 + $0x30] sm:$0xf]
        %v1079 = vld [vmem:[#allocation2 + $0x34] sm:$0xf]
        %v1080 = vld [vmem:[#allocation2 + $0x38] sm:$0x1]
        %v1081 = vld [vmem:[#allocation2 + $0x3c] sm:$0xf]
        %v1082 = vld [vmem:[#allocation2 + $0x40] sm:$0xf]
        %v1083 = vld [vmem:[#allocation2 + $0x44] sm:$0x1]
        %v1084 = vld [vmem:[#allocation2 + $0x48] sm:$0xf]
        %v1085 = vld [vmem:[#allocation2 + $0x4c] sm:$0xf]
        %v1086 = vld [vmem:[#allocation2 + $0x50] sm:$0x1]
        %v1087 = vld [vmem:[#allocation2 + $0x54] sm:$0xf]
        %v1088 = vld [vmem:[#allocation2 + $0x58] sm:$0xf]
        %v1089 = vld [vmem:[#allocation2 + $0x5c] sm:$0x1]
        %v1090 = vld [vmem:[#allocation2 + $0x60] sm:$0xf]
        %v1091 = vld [vmem:[#allocation2 + $0x64] sm:$0xf]
        %v1092 = vld [vmem:[#allocation2 + $0x68] sm:$0x1]
        %v1093 = vld [vmem:[#allocation2 + $0x6c] sm:$0xf]
        %v1094 = vld [vmem:[#allocation2 + $0x70] sm:$0xf]
        %v1095 = vld [vmem:[#allocation2 + $0x74] sm:$0x1]
        %v1096 = vld [vmem:[#allocation2 + $0x78] sm:$0xf]
        %v1097 = vld [vmem:[#allocation2 + $0x7c] sm:$0xf]
        %v1098 = vld [vmem:[#allocation2 + $0x80] sm:$0x1]
        %v1099 = vld [vmem:[#allocation2 + $0x84] sm:$0xf]
        %v1100 = vld [vmem:[#allocation2 + $0x88] sm:$0xf]
        %v1101 = vld [vmem:[#allocation2 + $0x8c] sm:$0x1]
        %v1102 = vld [vmem:[#allocation2 + $0x90] sm:$0xf]
        %v1103 = vld [vmem:[#allocation2 + $0x94] sm:$0xf]
        %v1104 = vld [vmem:[#allocation2 + $0x98] sm:$0x1]
        %v1105 = vld [vmem:[#allocation2 + $0x9c] sm:$0xf]
        %v1106 = vld [vmem:[#allocation2 + $0xa0] sm:$0xf]
        %v1107 = vld [vmem:[#allocation2 + $0xa4] sm:$0x1]
        %v1108 = vld [vmem:[#allocation2 + $0xa8] sm:$0xf]
        %v1109 = vld [vmem:[#allocation2 + $0xac] sm:$0xf]
        %v1110 = vld [vmem:[#allocation2 + $0xb0] sm:$0x1]
        %v1111 = vld [vmem:[#allocation2 + $0xb4] sm:$0xf]
        %v1112 = vld [vmem:[#allocation2 + $0xb8] sm:$0xf]
        %v1113 = vld [vmem:[#allocation2 + $0xbc] sm:$0x1]
        %vm1114 = vsmask.f32 3328
        %vm1115 = vsmask.f32 7440
        %vm1116 = vmor %vm1114, %vm1115
        %v1118 = vshrl.u32 %v1066, 16
        %v1120 = vrot.slane %v1118, 4
        %v1121 = vshll.u32 %v1066, 16
        %v1123 = vrot.slane %v1121, 5
        %v1124 = vor.u32 %v1120, %v1123
        %v1125 = vrot.slane %v1124, 4
        %v1127 = vshll.u32 %v1067, 16
        %v1129 = vrot.slane %v1127, 5
        %v1130 = vsel %vm1116, %v1125, %v1129
        %v1131 = vshrl.u32 %v1067, 16
        %v1133 = vrot.slane %v1131, 4
        %v1134 = vor.u32 %v1133, %v1129
        %v1135 = vrot.slane %v1134, 4
        %v1137 = vshll.u32 %v1068, 16
        %v1139 = vrot.slane %v1137, 5
        %v1140 = vsel %vm1116, %v1135, %v1139
        %v1142 = vshrl.u32 %v1069, 16
        %v1144 = vrot.slane %v1142, 4
        %v1145 = vshll.u32 %v1069, 16
        %v1147 = vrot.slane %v1145, 5
        %v1148 = vor.u32 %v1144, %v1147
        %v1149 = vrot.slane %v1148, 4
        %v1151 = vshll.u32 %v1070, 16
        %v1153 = vrot.slane %v1151, 5
        %v1154 = vsel %vm1116, %v1149, %v1153
        %v1155 = vshrl.u32 %v1070, 16
        %v1157 = vrot.slane %v1155, 4
        %v1158 = vor.u32 %v1157, %v1153
        %v1159 = vrot.slane %v1158, 4
        %v1161 = vshll.u32 %v1071, 16
        %v1163 = vrot.slane %v1161, 5
        %v1164 = vsel %vm1116, %v1159, %v1163
        %v1166 = vshrl.u32 %v1072, 16
        %v1168 = vrot.slane %v1166, 4
        %v1169 = vshll.u32 %v1072, 16
        %v1171 = vrot.slane %v1169, 5
        %v1172 = vor.u32 %v1168, %v1171
        %v1173 = vrot.slane %v1172, 4
        %v1175 = vshll.u32 %v1073, 16
        %v1177 = vrot.slane %v1175, 5
        %v1178 = vsel %vm1116, %v1173, %v1177
        %v1179 = vshrl.u32 %v1073, 16
        %v1181 = vrot.slane %v1179, 4
        %v1182 = vor.u32 %v1181, %v1177
        %v1183 = vrot.slane %v1182, 4
        %v1185 = vshll.u32 %v1074, 16
        %v1187 = vrot.slane %v1185, 5
        %v1188 = vsel %vm1116, %v1183, %v1187
        %v1190 = vshrl.u32 %v1075, 16
        %v1192 = vrot.slane %v1190, 4
        %v1193 = vshll.u32 %v1075, 16
        %v1195 = vrot.slane %v1193, 5
        %v1196 = vor.u32 %v1192, %v1195
        %v1197 = vrot.slane %v1196, 4
        %v1199 = vshll.u32 %v1076, 16
        %v1201 = vrot.slane %v1199, 5
        %v1202 = vsel %vm1116, %v1197, %v1201
        %v1203 = vshrl.u32 %v1076, 16
        %v1205 = vrot.slane %v1203, 4
        %v1206 = vor.u32 %v1205, %v1201
        %v1207 = vrot.slane %v1206, 4
        %v1209 = vshll.u32 %v1077, 16
        %v1211 = vrot.slane %v1209, 5
        %v1212 = vsel %vm1116, %v1207, %v1211
        %v1214 = vshrl.u32 %v1078, 16
        %v1216 = vrot.slane %v1214, 4
        %v1217 = vshll.u32 %v1078, 16
        %v1219 = vrot.slane %v1217, 5
        %v1220 = vor.u32 %v1216, %v1219
        %v1221 = vrot.slane %v1220, 4
        %v1223 = vshll.u32 %v1079, 16
        %v1225 = vrot.slane %v1223, 5
        %v1226 = vsel %vm1116, %v1221, %v1225
        %v1227 = vshrl.u32 %v1079, 16
        %v1229 = vrot.slane %v1227, 4
        %v1230 = vor.u32 %v1229, %v1225
        %v1231 = vrot.slane %v1230, 4
        %v1233 = vshll.u32 %v1080, 16
        %v1235 = vrot.slane %v1233, 5
        %v1236 = vsel %vm1116, %v1231, %v1235
        %v1238 = vshrl.u32 %v1081, 16
        %v1240 = vrot.slane %v1238, 4
        %v1241 = vshll.u32 %v1081, 16
        %v1243 = vrot.slane %v1241, 5
        %v1244 = vor.u32 %v1240, %v1243
        %v1245 = vrot.slane %v1244, 4
        %v1247 = vshll.u32 %v1082, 16
        %v1249 = vrot.slane %v1247, 5
        %v1250 = vsel %vm1116, %v1245, %v1249
        %v1251 = vshrl.u32 %v1082, 16
        %v1253 = vrot.slane %v1251, 4
        %v1254 = vor.u32 %v1253, %v1249
        %v1255 = vrot.slane %v1254, 4
        %v1257 = vshll.u32 %v1083, 16
        %v1259 = vrot.slane %v1257, 5
        %v1260 = vsel %vm1116, %v1255, %v1259
        %v1262 = vshrl.u32 %v1084, 16
        %v1264 = vrot.slane %v1262, 4
        %v1265 = vshll.u32 %v1084, 16
        %v1267 = vrot.slane %v1265, 5
        %v1268 = vor.u32 %v1264, %v1267
        %v1269 = vrot.slane %v1268, 4
        %v1271 = vshll.u32 %v1085, 16
        %v1273 = vrot.slane %v1271, 5
        %v1274 = vsel %vm1116, %v1269, %v1273
        %v1275 = vshrl.u32 %v1085, 16
        %v1277 = vrot.slane %v1275, 4
        %v1278 = vor.u32 %v1277, %v1273
        %v1279 = vrot.slane %v1278, 4
        %v1281 = vshll.u32 %v1086, 16
        %v1283 = vrot.slane %v1281, 5
        %v1284 = vsel %vm1116, %v1279, %v1283
        %v1286 = vshrl.u32 %v1087, 16
        %v1288 = vrot.slane %v1286, 4
        %v1289 = vshll.u32 %v1087, 16
        %v1291 = vrot.slane %v1289, 5
        %v1292 = vor.u32 %v1288, %v1291
        %v1293 = vrot.slane %v1292, 4
        %v1295 = vshll.u32 %v1088, 16
        %v1297 = vrot.slane %v1295, 5
        %v1298 = vsel %vm1116, %v1293, %v1297
        %v1299 = vshrl.u32 %v1088, 16
        %v1301 = vrot.slane %v1299, 4
        %v1302 = vor.u32 %v1301, %v1297
        %v1303 = vrot.slane %v1302, 4
        %v1305 = vshll.u32 %v1089, 16
        %v1307 = vrot.slane %v1305, 5
        %v1308 = vsel %vm1116, %v1303, %v1307
        %v1310 = vshrl.u32 %v1090, 16
        %v1312 = vrot.slane %v1310, 4
        %v1313 = vshll.u32 %v1090, 16
        %v1315 = vrot.slane %v1313, 5
        %v1316 = vor.u32 %v1312, %v1315
        %v1317 = vrot.slane %v1316, 4
        %v1319 = vshll.u32 %v1091, 16
        %v1321 = vrot.slane %v1319, 5
        %v1322 = vsel %vm1116, %v1317, %v1321
        %v1323 = vshrl.u32 %v1091, 16
        %v1325 = vrot.slane %v1323, 4
        %v1326 = vor.u32 %v1325, %v1321
        %v1327 = vrot.slane %v1326, 4
        %v1329 = vshll.u32 %v1092, 16
        %v1331 = vrot.slane %v1329, 5
        %v1332 = vsel %vm1116, %v1327, %v1331
        %v1334 = vshrl.u32 %v1093, 16
        %v1336 = vrot.slane %v1334, 4
        %v1337 = vshll.u32 %v1093, 16
        %v1339 = vrot.slane %v1337, 5
        %v1340 = vor.u32 %v1336, %v1339
        %v1341 = vrot.slane %v1340, 4
        %v1343 = vshll.u32 %v1094, 16
        %v1345 = vrot.slane %v1343, 5
        %v1346 = vsel %vm1116, %v1341, %v1345
        %v1347 = vshrl.u32 %v1094, 16
        %v1349 = vrot.slane %v1347, 4
        %v1350 = vor.u32 %v1349, %v1345
        %v1351 = vrot.slane %v1350, 4
        %v1353 = vshll.u32 %v1095, 16
        %v1355 = vrot.slane %v1353, 5
        %v1356 = vsel %vm1116, %v1351, %v1355
        %v1358 = vshrl.u32 %v1096, 16
        %v1360 = vrot.slane %v1358, 4
        %v1361 = vshll.u32 %v1096, 16
        %v1363 = vrot.slane %v1361, 5
        %v1364 = vor.u32 %v1360, %v1363
        %v1365 = vrot.slane %v1364, 4
        %v1367 = vshll.u32 %v1097, 16
        %v1369 = vrot.slane %v1367, 5
        %v1370 = vsel %vm1116, %v1365, %v1369
        %v1371 = vshrl.u32 %v1097, 16
        %v1373 = vrot.slane %v1371, 4
        %v1374 = vor.u32 %v1373, %v1369
        %v1375 = vrot.slane %v1374, 4
        %v1377 = vshll.u32 %v1098, 16
        %v1379 = vrot.slane %v1377, 5
        %v1380 = vsel %vm1116, %v1375, %v1379
        %v1382 = vshrl.u32 %v1099, 16
        %v1384 = vrot.slane %v1382, 4
        %v1385 = vshll.u32 %v1099, 16
        %v1387 = vrot.slane %v1385, 5
        %v1388 = vor.u32 %v1384, %v1387
        %v1389 = vrot.slane %v1388, 4
        %v1391 = vshll.u32 %v1100, 16
        %v1393 = vrot.slane %v1391, 5
        %v1394 = vsel %vm1116, %v1389, %v1393
        %v1395 = vshrl.u32 %v1100, 16
        %v1397 = vrot.slane %v1395, 4
        %v1398 = vor.u32 %v1397, %v1393
        %v1399 = vrot.slane %v1398, 4
        %v1401 = vshll.u32 %v1101, 16
        %v1403 = vrot.slane %v1401, 5
        %v1404 = vsel %vm1116, %v1399, %v1403
        %v1406 = vshrl.u32 %v1102, 16
        %v1408 = vrot.slane %v1406, 4
        %v1409 = vshll.u32 %v1102, 16
        %v1411 = vrot.slane %v1409, 5
        %v1412 = vor.u32 %v1408, %v1411
        %v1413 = vrot.slane %v1412, 4
        %v1415 = vshll.u32 %v1103, 16
        %v1417 = vrot.slane %v1415, 5
        %v1418 = vsel %vm1116, %v1413, %v1417
        %v1419 = vshrl.u32 %v1103, 16
        %v1421 = vrot.slane %v1419, 4
        %v1422 = vor.u32 %v1421, %v1417
        %v1423 = vrot.slane %v1422, 4
        %v1425 = vshll.u32 %v1104, 16
        %v1427 = vrot.slane %v1425, 5
        %v1428 = vsel %vm1116, %v1423, %v1427
        %v1430 = vshrl.u32 %v1105, 16
        %v1432 = vrot.slane %v1430, 4
        %v1433 = vshll.u32 %v1105, 16
        %v1435 = vrot.slane %v1433, 5
        %v1436 = vor.u32 %v1432, %v1435
        %v1437 = vrot.slane %v1436, 4
        %v1439 = vshll.u32 %v1106, 16
        %v1441 = vrot.slane %v1439, 5
        %v1442 = vsel %vm1116, %v1437, %v1441
        %v1443 = vshrl.u32 %v1106, 16
        %v1445 = vrot.slane %v1443, 4
        %v1446 = vor.u32 %v1445, %v1441
        %v1447 = vrot.slane %v1446, 4
        %v1449 = vshll.u32 %v1107, 16
        %v1451 = vrot.slane %v1449, 5
        %v1452 = vsel %vm1116, %v1447, %v1451
        %v1454 = vshrl.u32 %v1108, 16
        %v1456 = vrot.slane %v1454, 4
        %v1457 = vshll.u32 %v1108, 16
        %v1459 = vrot.slane %v1457, 5
        %v1460 = vor.u32 %v1456, %v1459
        %v1461 = vrot.slane %v1460, 4
        %v1463 = vshll.u32 %v1109, 16
        %v1465 = vrot.slane %v1463, 5
        %v1466 = vsel %vm1116, %v1461, %v1465
        %v1467 = vshrl.u32 %v1109, 16
        %v1469 = vrot.slane %v1467, 4
        %v1470 = vor.u32 %v1469, %v1465
        %v1471 = vrot.slane %v1470, 4
        %v1473 = vshll.u32 %v1110, 16
        %v1475 = vrot.slane %v1473, 5
        %v1476 = vsel %vm1116, %v1471, %v1475
        %v1478 = vshrl.u32 %v1111, 16
        %v1480 = vrot.slane %v1478, 4
        %v1481 = vshll.u32 %v1111, 16
        %v1483 = vrot.slane %v1481, 5
        %v1484 = vor.u32 %v1480, %v1483
        %v1485 = vrot.slane %v1484, 4
        %v1487 = vshll.u32 %v1112, 16
        %v1489 = vrot.slane %v1487, 5
        %v1490 = vsel %vm1116, %v1485, %v1489
        %v1491 = vshrl.u32 %v1112, 16
        %v1493 = vrot.slane %v1491, 4
        %v1494 = vor.u32 %v1493, %v1489
        %v1495 = vrot.slane %v1494, 4
        %v1497 = vshll.u32 %v1113, 16
        %v1499 = vrot.slane %v1497, 5
        %v1500 = vsel %vm1116, %v1495, %v1499
        %1501 = vrot.lane.b32.xlu0 %v1130, 32
        %v1502 = vpop.permute.xlu0 %1501
        %1503 = vrot.lane.b32.xlu0 %v1140, 32
        %v1504 = vpop.permute.xlu0 %1503
        %1505 = vrot.lane.b32.xlu0 %v1154, 32
        %v1506 = vpop.permute.xlu0 %1505
        %1507 = vrot.lane.b32.xlu0 %v1164, 32
        %v1508 = vpop.permute.xlu0 %1507
        %1509 = vrot.lane.b32.xlu0 %v1178, 32
        %v1510 = vpop.permute.xlu0 %1509
        %1511 = vrot.lane.b32.xlu0 %v1188, 32
        %v1512 = vpop.permute.xlu0 %1511
        %1513 = vrot.lane.b32.xlu0 %v1202, 32
        %v1514 = vpop.permute.xlu0 %1513
        %1515 = vrot.lane.b32.xlu0 %v1212, 32
        %v1516 = vpop.permute.xlu0 %1515
        %1517 = vrot.lane.b32.xlu0 %v1226, 32
        %v1518 = vpop.permute.xlu0 %1517
        %1519 = vrot.lane.b32.xlu0 %v1236, 32
        %v1520 = vpop.permute.xlu0 %1519
        %1521 = vrot.lane.b32.xlu0 %v1250, 32
        %v1522 = vpop.permute.xlu0 %1521
        %1523 = vrot.lane.b32.xlu0 %v1260, 32
        %v1524 = vpop.permute.xlu0 %1523
        %1525 = vrot.lane.b32.xlu0 %v1274, 32
        %v1526 = vpop.permute.xlu0 %1525
        %1527 = vrot.lane.b32.xlu0 %v1284, 32
        %v1528 = vpop.permute.xlu0 %1527
        %1529 = vrot.lane.b32.xlu0 %v1298, 32
        %v1530 = vpop.permute.xlu0 %1529
        %1531 = vrot.lane.b32.xlu0 %v1308, 32
        %v1532 = vpop.permute.xlu0 %1531
        %1533 = vrot.lane.b32.xlu0 %v1322, 32
        %v1534 = vpop.permute.xlu0 %1533
        %1535 = vrot.lane.b32.xlu0 %v1332, 32
        %v1536 = vpop.permute.xlu0 %1535
        %1537 = vrot.lane.b32.xlu0 %v1346, 32
        %v1538 = vpop.permute.xlu0 %1537
        %1539 = vrot.lane.b32.xlu0 %v1356, 32
        %v1540 = vpop.permute.xlu0 %1539
        %1541 = vrot.lane.b32.xlu0 %v1370, 32
        %v1542 = vpop.permute.xlu0 %1541
        %1543 = vrot.lane.b32.xlu0 %v1380, 32
        %v1544 = vpop.permute.xlu0 %1543
        %1545 = vrot.lane.b32.xlu0 %v1394, 32
        %v1546 = vpop.permute.xlu0 %1545
        %1547 = vrot.lane.b32.xlu0 %v1404, 32
        %v1548 = vpop.permute.xlu0 %1547
        %1549 = vrot.lane.b32.xlu0 %v1418, 32
        %v1550 = vpop.permute.xlu0 %1549
        %1551 = vrot.lane.b32.xlu0 %v1428, 32
        %v1552 = vpop.permute.xlu0 %1551
        %1553 = vrot.lane.b32.xlu0 %v1442, 32
        %v1554 = vpop.permute.xlu0 %1553
        %1555 = vrot.lane.b32.xlu0 %v1452, 32
        %v1556 = vpop.permute.xlu0 %1555
        %1557 = vrot.lane.b32.xlu0 %v1466, 32
        %v1558 = vpop.permute.xlu0 %1557
        %1559 = vrot.lane.b32.xlu0 %v1476, 32
        %v1560 = vpop.permute.xlu0 %1559
        %1561 = vrot.lane.b32.xlu0 %v1490, 32
        %v1562 = vpop.permute.xlu0 %1561
        %1563 = vrot.lane.b32.xlu0 %v1500, 32
        %v1564 = vpop.permute.xlu0 %1563
        %vm1597 = vcmask 519424
        %1598 = vst.msk [vmem:[#allocation3] sm:$0xf] %vm1597, %v1502
        %1599 = vst.msk [vmem:[#allocation3 + $0xc] sm:$0xf] %vm1597, %v1504
        %1600 = vst.msk [vmem:[#allocation3 + $0x18] sm:$0xf] %vm1597, %v1506
        %1601 = vst.msk [vmem:[#allocation3 + $0x24] sm:$0xf] %vm1597, %v1508
        %1602 = vst.msk [vmem:[#allocation3 + $0x30] sm:$0xf] %vm1597, %v1510
        %1603 = vst.msk [vmem:[#allocation3 + $0x3c] sm:$0xf] %vm1597, %v1512
        %1604 = vst.msk [vmem:[#allocation3 + $0x48] sm:$0xf] %vm1597, %v1514
        %1605 = vst.msk [vmem:[#allocation3 + $0x54] sm:$0xf] %vm1597, %v1516
        %1606 = vst.msk [vmem:[#allocation3 + $0x60] sm:$0xf] %vm1597, %v1518
        %1607 = vst.msk [vmem:[#allocation3 + $0x6c] sm:$0xf] %vm1597, %v1520
        %1608 = vst.msk [vmem:[#allocation3 + $0x78] sm:$0xf] %vm1597, %v1522
        %1609 = vst.msk [vmem:[#allocation3 + $0x84] sm:$0xf] %vm1597, %v1524
        %1610 = vst.msk [vmem:[#allocation3 + $0x90] sm:$0xf] %vm1597, %v1526
        %1611 = vst.msk [vmem:[#allocation3 + $0x9c] sm:$0xf] %vm1597, %v1528
        %1612 = vst.msk [vmem:[#allocation3 + $0xa8] sm:$0xf] %vm1597, %v1530
        %1613 = vst.msk [vmem:[#allocation3 + $0xb4] sm:$0xf] %vm1597, %v1532
        %1614 = vst.msk [vmem:[#allocation3 + $0xc0] sm:$0xf] %vm1597, %v1534
        %1615 = vst.msk [vmem:[#allocation3 + $0xcc] sm:$0xf] %vm1597, %v1536
        %1616 = vst.msk [vmem:[#allocation3 + $0xd8] sm:$0xf] %vm1597, %v1538
        %1617 = vst.msk [vmem:[#allocation3 + $0xe4] sm:$0xf] %vm1597, %v1540
        %1618 = vst.msk [vmem:[#allocation3 + $0xf0] sm:$0xf] %vm1597, %v1542
        %1619 = vst.msk [vmem:[#allocation3 + $0xfc] sm:$0xf] %vm1597, %v1544
        %1620 = vst.msk [vmem:[#allocation3 + $0x108] sm:$0xf] %vm1597, %v1546
        %1621 = vst.msk [vmem:[#allocation3 + $0x114] sm:$0xf] %vm1597, %v1548
        %1622 = vst.msk [vmem:[#allocation3 + $0x120] sm:$0xf] %vm1597, %v1550
        %1623 = vst.msk [vmem:[#allocation3 + $0x12c] sm:$0xf] %vm1597, %v1552
        %1624 = vst.msk [vmem:[#allocation3 + $0x138] sm:$0xf] %vm1597, %v1554
        %1625 = vst.msk [vmem:[#allocation3 + $0x144] sm:$0xf] %vm1597, %v1556
        %1626 = vst.msk [vmem:[#allocation3 + $0x150] sm:$0xf] %vm1597, %v1558
        %1627 = vst.msk [vmem:[#allocation3 + $0x15c] sm:$0xf] %vm1597, %v1560
        %1628 = vst.msk [vmem:[#allocation3 + $0x168] sm:$0xf] %vm1597, %v1562
        %1629 = vst.msk [vmem:[#allocation3 + $0x174] sm:$0xf] %vm1597, %v1564
        %v1630 = vld [vmem:[#allocation2] sm:$0xe]
        %v1631 = vld [vmem:[#allocation2 + $0x4] sm:$0xf]
        %v1632 = vld [vmem:[#allocation2 + $0x8] sm:$0x1]
        %v1633 = vld [vmem:[#allocation2 + $0xc] sm:$0xe]
        %v1634 = vld [vmem:[#allocation2 + $0x10] sm:$0xf]
        %v1635 = vld [vmem:[#allocation2 + $0x14] sm:$0x1]
        %v1636 = vld [vmem:[#allocation2 + $0x18] sm:$0xe]
        %v1637 = vld [vmem:[#allocation2 + $0x1c] sm:$0xf]
        %v1638 = vld [vmem:[#allocation2 + $0x20] sm:$0x1]
        %v1639 = vld [vmem:[#allocation2 + $0x24] sm:$0xe]
        %v1640 = vld [vmem:[#allocation2 + $0x28] sm:$0xf]
        %v1641 = vld [vmem:[#allocation2 + $0x2c] sm:$0x1]
        %v1642 = vld [vmem:[#allocation2 + $0x30] sm:$0xe]
        %v1643 = vld [vmem:[#allocation2 + $0x34] sm:$0xf]
        %v1644 = vld [vmem:[#allocation2 + $0x38] sm:$0x1]
        %v1645 = vld [vmem:[#allocation2 + $0x3c] sm:$0xe]
        %v1646 = vld [vmem:[#allocation2 + $0x40] sm:$0xf]
        %v1647 = vld [vmem:[#allocation2 + $0x44] sm:$0x1]
        %v1648 = vld [vmem:[#allocation2 + $0x48] sm:$0xe]
        %v1649 = vld [vmem:[#allocation2 + $0x4c] sm:$0xf]
        %v1650 = vld [vmem:[#allocation2 + $0x50] sm:$0x1]
        %v1651 = vld [vmem:[#allocation2 + $0x54] sm:$0xe]
        %v1652 = vld [vmem:[#allocation2 + $0x58] sm:$0xf]
        %v1653 = vld [vmem:[#allocation2 + $0x5c] sm:$0x1]
        %v1654 = vld [vmem:[#allocation2 + $0x60] sm:$0xe]
        %v1655 = vld [vmem:[#allocation2 + $0x64] sm:$0xf]
        %v1656 = vld [vmem:[#allocation2 + $0x68] sm:$0x1]
        %v1657 = vld [vmem:[#allocation2 + $0x6c] sm:$0xe]
        %v1658 = vld [vmem:[#allocation2 + $0x70] sm:$0xf]
        %v1659 = vld [vmem:[#allocation2 + $0x74] sm:$0x1]
        %v1660 = vld [vmem:[#allocation2 + $0x78] sm:$0xe]
        %v1661 = vld [vmem:[#allocation2 + $0x7c] sm:$0xf]
        %v1662 = vld [vmem:[#allocation2 + $0x80] sm:$0x1]
        %v1663 = vld [vmem:[#allocation2 + $0x84] sm:$0xe]
        %v1664 = vld [vmem:[#allocation2 + $0x88] sm:$0xf]
        %v1665 = vld [vmem:[#allocation2 + $0x8c] sm:$0x1]
        %v1666 = vld [vmem:[#allocation2 + $0x90] sm:$0xe]
        %v1667 = vld [vmem:[#allocation2 + $0x94] sm:$0xf]
        %v1668 = vld [vmem:[#allocation2 + $0x98] sm:$0x1]
        %v1669 = vld [vmem:[#allocation2 + $0x9c] sm:$0xe]
        %v1670 = vld [vmem:[#allocation2 + $0xa0] sm:$0xf]
        %v1671 = vld [vmem:[#allocation2 + $0xa4] sm:$0x1]
        %v1672 = vld [vmem:[#allocation2 + $0xa8] sm:$0xe]
        %v1673 = vld [vmem:[#allocation2 + $0xac] sm:$0xf]
        %v1674 = vld [vmem:[#allocation2 + $0xb0] sm:$0x1]
        %v1675 = vld [vmem:[#allocation2 + $0xb4] sm:$0xe]
        %v1676 = vld [vmem:[#allocation2 + $0xb8] sm:$0xf]
        %v1677 = vld [vmem:[#allocation2 + $0xbc] sm:$0x1]
        %vm1726 = vcmask 1042432
        %vm1727 = vcmask 1046532
        %vm1728 = vmor %vm1726, %vm1727
        %v1729 = vrot.slane %v1630, 5
        %v1730 = vrot.slane %v1729, 4
        %v1731 = vrot.slane %v1631, 5
        %v1732 = vsel %vm1728, %v1730, %v1731
        %v1733 = vrot.slane %v1731, 4
        %v1734 = vrot.slane %v1632, 5
        %v1735 = vsel %vm1728, %v1733, %v1734
        %v1736 = vrot.slane %v1633, 5
        %v1737 = vrot.slane %v1736, 4
        %v1738 = vrot.slane %v1634, 5
        %v1739 = vsel %vm1728, %v1737, %v1738
        %v1740 = vrot.slane %v1738, 4
        %v1741 = vrot.slane %v1635, 5
        %v1742 = vsel %vm1728, %v1740, %v1741
        %v1743 = vrot.slane %v1636, 5
        %v1744 = vrot.slane %v1743, 4
        %v1745 = vrot.slane %v1637, 5
        %v1746 = vsel %vm1728, %v1744, %v1745
        %v1747 = vrot.slane %v1745, 4
        %v1748 = vrot.slane %v1638, 5
        %v1749 = vsel %vm1728, %v1747, %v1748
        %v1750 = vrot.slane %v1639, 5
        %v1751 = vrot.slane %v1750, 4
        %v1752 = vrot.slane %v1640, 5
        %v1753 = vsel %vm1728, %v1751, %v1752
        %v1754 = vrot.slane %v1752, 4
        %v1755 = vrot.slane %v1641, 5
        %v1756 = vsel %vm1728, %v1754, %v1755
        %v1757 = vrot.slane %v1642, 5
        %v1758 = vrot.slane %v1757, 4
        %v1759 = vrot.slane %v1643, 5
        %v1760 = vsel %vm1728, %v1758, %v1759
        %v1761 = vrot.slane %v1759, 4
        %v1762 = vrot.slane %v1644, 5
        %v1763 = vsel %vm1728, %v1761, %v1762
        %v1764 = vrot.slane %v1645, 5
        %v1765 = vrot.slane %v1764, 4
        %v1766 = vrot.slane %v1646, 5
        %v1767 = vsel %vm1728, %v1765, %v1766
        %v1768 = vrot.slane %v1766, 4
        %v1769 = vrot.slane %v1647, 5
        %v1770 = vsel %vm1728, %v1768, %v1769
        %v1771 = vrot.slane %v1648, 5
        %v1772 = vrot.slane %v1771, 4
        %v1773 = vrot.slane %v1649, 5
        %v1774 = vsel %vm1728, %v1772, %v1773
        %v1775 = vrot.slane %v1773, 4
        %v1776 = vrot.slane %v1650, 5
        %v1777 = vsel %vm1728, %v1775, %v1776
        %v1778 = vrot.slane %v1651, 5
        %v1779 = vrot.slane %v1778, 4
        %v1780 = vrot.slane %v1652, 5
        %v1781 = vsel %vm1728, %v1779, %v1780
        %v1782 = vrot.slane %v1780, 4
        %v1783 = vrot.slane %v1653, 5
        %v1784 = vsel %vm1728, %v1782, %v1783
        %v1785 = vrot.slane %v1654, 5
        %v1786 = vrot.slane %v1785, 4
        %v1787 = vrot.slane %v1655, 5
        %v1788 = vsel %vm1728, %v1786, %v1787
        %v1789 = vrot.slane %v1787, 4
        %v1790 = vrot.slane %v1656, 5
        %v1791 = vsel %vm1728, %v1789, %v1790
        %v1792 = vrot.slane %v1657, 5
        %v1793 = vrot.slane %v1792, 4
        %v1794 = vrot.slane %v1658, 5
        %v1795 = vsel %vm1728, %v1793, %v1794
        %v1796 = vrot.slane %v1794, 4
        %v1797 = vrot.slane %v1659, 5
        %v1798 = vsel %vm1728, %v1796, %v1797
        %v1799 = vrot.slane %v1660, 5
        %v1800 = vrot.slane %v1799, 4
        %v1801 = vrot.slane %v1661, 5
        %v1802 = vsel %vm1728, %v1800, %v1801
        %v1803 = vrot.slane %v1801, 4
        %v1804 = vrot.slane %v1662, 5
        %v1805 = vsel %vm1728, %v1803, %v1804
        %v1806 = vrot.slane %v1663, 5
        %v1807 = vrot.slane %v1806, 4
        %v1808 = vrot.slane %v1664, 5
        %v1809 = vsel %vm1728, %v1807, %v1808
        %v1810 = vrot.slane %v1808, 4
        %v1811 = vrot.slane %v1665, 5
        %v1812 = vsel %vm1728, %v1810, %v1811
        %v1813 = vrot.slane %v1666, 5
        %v1814 = vrot.slane %v1813, 4
        %v1815 = vrot.slane %v1667, 5
        %v1816 = vsel %vm1728, %v1814, %v1815
        %v1817 = vrot.slane %v1815, 4
        %v1818 = vrot.slane %v1668, 5
        %v1819 = vsel %vm1728, %v1817, %v1818
        %v1820 = vrot.slane %v1669, 5
        %v1821 = vrot.slane %v1820, 4
        %v1822 = vrot.slane %v1670, 5
        %v1823 = vsel %vm1728, %v1821, %v1822
        %v1824 = vrot.slane %v1822, 4
        %v1825 = vrot.slane %v1671, 5
        %v1826 = vsel %vm1728, %v1824, %v1825
        %v1827 = vrot.slane %v1672, 5
        %v1828 = vrot.slane %v1827, 4
        %v1829 = vrot.slane %v1673, 5
        %v1830 = vsel %vm1728, %v1828, %v1829
        %v1831 = vrot.slane %v1829, 4
        %v1832 = vrot.slane %v1674, 5
        %v1833 = vsel %vm1728, %v1831, %v1832
        %v1834 = vrot.slane %v1675, 5
        %v1835 = vrot.slane %v1834, 4
        %v1836 = vrot.slane %v1676, 5
        %v1837 = vsel %vm1728, %v1835, %v1836
        %v1838 = vrot.slane %v1836, 4
        %v1839 = vrot.slane %v1677, 5
        %v1840 = vsel %vm1728, %v1838, %v1839
        %1841 = vrot.lane.b32.xlu0 %v1732, 64
        %v1842 = vpop.permute.xlu0 %1841
        %1843 = vrot.lane.b32.xlu0 %v1735, 64
        %v1844 = vpop.permute.xlu0 %1843
        %1845 = vrot.lane.b32.xlu0 %v1739, 64
        %v1846 = vpop.permute.xlu0 %1845
        %1847 = vrot.lane.b32.xlu0 %v1742, 64
        %v1848 = vpop.permute.xlu0 %1847
        %1849 = vrot.lane.b32.xlu0 %v1746, 64
        %v1850 = vpop.permute.xlu0 %1849
        %1851 = vrot.lane.b32.xlu0 %v1749, 64
        %v1852 = vpop.permute.xlu0 %1851
        %1853 = vrot.lane.b32.xlu0 %v1753, 64
        %v1854 = vpop.permute.xlu0 %1853
        %1855 = vrot.lane.b32.xlu0 %v1756, 64
        %v1856 = vpop.permute.xlu0 %1855
        %1857 = vrot.lane.b32.xlu0 %v1760, 64
        %v1858 = vpop.permute.xlu0 %1857
        %1859 = vrot.lane.b32.xlu0 %v1763, 64
        %v1860 = vpop.permute.xlu0 %1859
        %1861 = vrot.lane.b32.xlu0 %v1767, 64
        %v1862 = vpop.permute.xlu0 %1861
        %1863 = vrot.lane.b32.xlu0 %v1770, 64
        %v1864 = vpop.permute.xlu0 %1863
        %1865 = vrot.lane.b32.xlu0 %v1774, 64
        %v1866 = vpop.permute.xlu0 %1865
        %1867 = vrot.lane.b32.xlu0 %v1777, 64
        %v1868 = vpop.permute.xlu0 %1867
        %1869 = vrot.lane.b32.xlu0 %v1781, 64
        %v1870 = vpop.permute.xlu0 %1869
        %1871 = vrot.lane.b32.xlu0 %v1784, 64
        %v1872 = vpop.permute.xlu0 %1871
        %1873 = vrot.lane.b32.xlu0 %v1788, 64
        %v1874 = vpop.permute.xlu0 %1873
        %1875 = vrot.lane.b32.xlu0 %v1791, 64
        %v1876 = vpop.permute.xlu0 %1875
        %1877 = vrot.lane.b32.xlu0 %v1795, 64
        %v1878 = vpop.permute.xlu0 %1877
        %1879 = vrot.lane.b32.xlu0 %v1798, 64
        %v1880 = vpop.permute.xlu0 %1879
        %1881 = vrot.lane.b32.xlu0 %v1802, 64
        %v1882 = vpop.permute.xlu0 %1881
        %1883 = vrot.lane.b32.xlu0 %v1805, 64
        %v1884 = vpop.permute.xlu0 %1883
        %1885 = vrot.lane.b32.xlu0 %v1809, 64
        %v1886 = vpop.permute.xlu0 %1885
        %1887 = vrot.lane.b32.xlu0 %v1812, 64
        %v1888 = vpop.permute.xlu0 %1887
        %1889 = vrot.lane.b32.xlu0 %v1816, 64
        %v1890 = vpop.permute.xlu0 %1889
        %1891 = vrot.lane.b32.xlu0 %v1819, 64
        %v1892 = vpop.permute.xlu0 %1891
        %1893 = vrot.lane.b32.xlu0 %v1823, 64
        %v1894 = vpop.permute.xlu0 %1893
        %1895 = vrot.lane.b32.xlu0 %v1826, 64
        %v1896 = vpop.permute.xlu0 %1895
        %1897 = vrot.lane.b32.xlu0 %v1830, 64
        %v1898 = vpop.permute.xlu0 %1897
        %1899 = vrot.lane.b32.xlu0 %v1833, 64
        %v1900 = vpop.permute.xlu0 %1899
        %1901 = vrot.lane.b32.xlu0 %v1837, 64
        %v1902 = vpop.permute.xlu0 %1901
        %1903 = vrot.lane.b32.xlu0 %v1840, 64
        %v1904 = vpop.permute.xlu0 %1903
        %vm1937 = vcmask 781824
        %1938 = vst.msk [vmem:[#allocation3] sm:$0xf] %vm1937, %v1842
        %1939 = vst.msk [vmem:[#allocation3 + $0xc] sm:$0xf] %vm1937, %v1844
        %1940 = vst.msk [vmem:[#allocation3 + $0x18] sm:$0xf] %vm1937, %v1846
        %1941 = vst.msk [vmem:[#allocation3 + $0x24] sm:$0xf] %vm1937, %v1848
        %1942 = vst.msk [vmem:[#allocation3 + $0x30] sm:$0xf] %vm1937, %v1850
        %1943 = vst.msk [vmem:[#allocation3 + $0x3c] sm:$0xf] %vm1937, %v1852
        %1944 = vst.msk [vmem:[#allocation3 + $0x48] sm:$0xf] %vm1937, %v1854
        %1945 = vst.msk [vmem:[#allocation3 + $0x54] sm:$0xf] %vm1937, %v1856
        %1946 = vst.msk [vmem:[#allocation3 + $0x60] sm:$0xf] %vm1937, %v1858
        %1947 = vst.msk [vmem:[#allocation3 + $0x6c] sm:$0xf] %vm1937, %v1860
        %1948 = vst.msk [vmem:[#allocation3 + $0x78] sm:$0xf] %vm1937, %v1862
        %1949 = vst.msk [vmem:[#allocation3 + $0x84] sm:$0xf] %vm1937, %v1864
        %1950 = vst.msk [vmem:[#allocation3 + $0x90] sm:$0xf] %vm1937, %v1866
        %1951 = vst.msk [vmem:[#allocation3 + $0x9c] sm:$0xf] %vm1937, %v1868
        %1952 = vst.msk [vmem:[#allocation3 + $0xa8] sm:$0xf] %vm1937, %v1870
        %1953 = vst.msk [vmem:[#allocation3 + $0xb4] sm:$0xf] %vm1937, %v1872
        %1954 = vst.msk [vmem:[#allocation3 + $0xc0] sm:$0xf] %vm1937, %v1874
        %1955 = vst.msk [vmem:[#allocation3 + $0xcc] sm:$0xf] %vm1937, %v1876
        %1956 = vst.msk [vmem:[#allocation3 + $0xd8] sm:$0xf] %vm1937, %v1878
        %1957 = vst.msk [vmem:[#allocation3 + $0xe4] sm:$0xf] %vm1937, %v1880
        %1958 = vst.msk [vmem:[#allocation3 + $0xf0] sm:$0xf] %vm1937, %v1882
        %1959 = vst.msk [vmem:[#allocation3 + $0xfc] sm:$0xf] %vm1937, %v1884
        %1960 = vst.msk [vmem:[#allocation3 + $0x108] sm:$0xf] %vm1937, %v1886
        %1961 = vst.msk [vmem:[#allocation3 + $0x114] sm:$0xf] %vm1937, %v1888
        %1962 = vst.msk [vmem:[#allocation3 + $0x120] sm:$0xf] %vm1937, %v1890
        %1963 = vst.msk [vmem:[#allocation3 + $0x12c] sm:$0xf] %vm1937, %v1892
        %1964 = vst.msk [vmem:[#allocation3 + $0x138] sm:$0xf] %vm1937, %v1894
        %1965 = vst.msk [vmem:[#allocation3 + $0x144] sm:$0xf] %vm1937, %v1896
        %1966 = vst.msk [vmem:[#allocation3 + $0x150] sm:$0xf] %vm1937, %v1898
        %1967 = vst.msk [vmem:[#allocation3 + $0x15c] sm:$0xf] %vm1937, %v1900
        %1968 = vst.msk [vmem:[#allocation3 + $0x168] sm:$0xf] %vm1937, %v1902
        %1969 = vst.msk [vmem:[#allocation3 + $0x174] sm:$0xf] %vm1937, %v1904
        %v1970 = vld [vmem:[%s883] sm:$0xf]
        %v1971 = vld [vmem:[%s883 + $0x4] sm:$0xf]
        %v1972 = vld [vmem:[%s883 + $0xc] sm:$0xf]
        %v1973 = vld [vmem:[%s883 + $0x10] sm:$0xf]
        %v1974 = vld [vmem:[%s883 + $0x18] sm:$0xf]
        %v1975 = vld [vmem:[%s883 + $0x1c] sm:$0xf]
        %v1976 = vld [vmem:[%s883 + $0x24] sm:$0xf]
        %v1977 = vld [vmem:[%s883 + $0x28] sm:$0xf]
        %v1978 = vld [vmem:[%s883 + $0x30] sm:$0xf]
        %v1979 = vld [vmem:[%s883 + $0x34] sm:$0xf]
        %v1980 = vld [vmem:[%s883 + $0x3c] sm:$0xf]
        %v1981 = vld [vmem:[%s883 + $0x40] sm:$0xf]
        %v1982 = vld [vmem:[%s883 + $0x48] sm:$0xf]
        %v1983 = vld [vmem:[%s883 + $0x4c] sm:$0xf]
        %v1984 = vld [vmem:[%s883 + $0x54] sm:$0xf]
        %v1985 = vld [vmem:[%s883 + $0x58] sm:$0xf]
        %v1986 = vld [vmem:[%s883 + $0x60] sm:$0xf]
        %v1987 = vld [vmem:[%s883 + $0x64] sm:$0xf]
        %v1988 = vld [vmem:[%s883 + $0x6c] sm:$0xf]
        %v1989 = vld [vmem:[%s883 + $0x70] sm:$0xf]
        %v1990 = vld [vmem:[%s883 + $0x78] sm:$0xf]
        %v1991 = vld [vmem:[%s883 + $0x7c] sm:$0xf]
        %v1992 = vld [vmem:[%s883 + $0x84] sm:$0xf]
        %v1993 = vld [vmem:[%s883 + $0x88] sm:$0xf]
        %v1994 = vld [vmem:[%s883 + $0x90] sm:$0xf]
        %v1995 = vld [vmem:[%s883 + $0x94] sm:$0xf]
        %v1996 = vld [vmem:[%s883 + $0x9c] sm:$0xf]
        %v1997 = vld [vmem:[%s883 + $0xa0] sm:$0xf]
        %v1998 = vld [vmem:[%s883 + $0xa8] sm:$0xf]
        %v1999 = vld [vmem:[%s883 + $0xac] sm:$0xf]
        %v2000 = vld [vmem:[%s883 + $0xb4] sm:$0xf]
        %v2001 = vld [vmem:[%s883 + $0xb8] sm:$0xf]
        %2034 = vrot.lane.b32.xlu0 %v1970, 96
        %v2035 = vpop.permute.xlu0 %2034
        %2036 = vrot.lane.b32.xlu0 %v1971, 96
        %v2037 = vpop.permute.xlu0 %2036
        %2038 = vrot.lane.b32.xlu0 %v1972, 96
        %v2039 = vpop.permute.xlu0 %2038
        %2040 = vrot.lane.b32.xlu0 %v1973, 96
        %v2041 = vpop.permute.xlu0 %2040
        %2042 = vrot.lane.b32.xlu0 %v1974, 96
        %v2043 = vpop.permute.xlu0 %2042
        %2044 = vrot.lane.b32.xlu0 %v1975, 96
        %v2045 = vpop.permute.xlu0 %2044
        %2046 = vrot.lane.b32.xlu0 %v1976, 96
        %v2047 = vpop.permute.xlu0 %2046
        %2048 = vrot.lane.b32.xlu0 %v1977, 96
        %v2049 = vpop.permute.xlu0 %2048
        %2050 = vrot.lane.b32.xlu0 %v1978, 96
        %v2051 = vpop.permute.xlu0 %2050
        %2052 = vrot.lane.b32.xlu0 %v1979, 96
        %v2053 = vpop.permute.xlu0 %2052
        %2054 = vrot.lane.b32.xlu0 %v1980, 96
        %v2055 = vpop.permute.xlu0 %2054
        %2056 = vrot.lane.b32.xlu0 %v1981, 96
        %v2057 = vpop.permute.xlu0 %2056
        %2058 = vrot.lane.b32.xlu0 %v1982, 96
        %v2059 = vpop.permute.xlu0 %2058
        %2060 = vrot.lane.b32.xlu0 %v1983, 96
        %v2061 = vpop.permute.xlu0 %2060
        %2062 = vrot.lane.b32.xlu0 %v1984, 96
        %v2063 = vpop.permute.xlu0 %2062
        %2064 = vrot.lane.b32.xlu0 %v1985, 96
        %v2065 = vpop.permute.xlu0 %2064
        %2066 = vrot.lane.b32.xlu0 %v1986, 96
        %v2067 = vpop.permute.xlu0 %2066
        %2068 = vrot.lane.b32.xlu0 %v1987, 96
        %v2069 = vpop.permute.xlu0 %2068
        %2070 = vrot.lane.b32.xlu0 %v1988, 96
        %v2071 = vpop.permute.xlu0 %2070
        %2072 = vrot.lane.b32.xlu0 %v1989, 96
        %v2073 = vpop.permute.xlu0 %2072
        %2074 = vrot.lane.b32.xlu0 %v1990, 96
        %v2075 = vpop.permute.xlu0 %2074
        %2076 = vrot.lane.b32.xlu0 %v1991, 96
        %v2077 = vpop.permute.xlu0 %2076
        %2078 = vrot.lane.b32.xlu0 %v1992, 96
        %v2079 = vpop.permute.xlu0 %2078
        %2080 = vrot.lane.b32.xlu0 %v1993, 96
        %v2081 = vpop.permute.xlu0 %2080
        %2082 = vrot.lane.b32.xlu0 %v1994, 96
        %v2083 = vpop.permute.xlu0 %2082
        %2084 = vrot.lane.b32.xlu0 %v1995, 96
        %v2085 = vpop.permute.xlu0 %2084
        %2086 = vrot.lane.b32.xlu0 %v1996, 96
        %v2087 = vpop.permute.xlu0 %2086
        %2088 = vrot.lane.b32.xlu0 %v1997, 96
        %v2089 = vpop.permute.xlu0 %2088
        %2090 = vrot.lane.b32.xlu0 %v1998, 96
        %v2091 = vpop.permute.xlu0 %2090
        %2092 = vrot.lane.b32.xlu0 %v1999, 96
        %v2093 = vpop.permute.xlu0 %2092
        %2094 = vrot.lane.b32.xlu0 %v2000, 96
        %v2095 = vpop.permute.xlu0 %2094
        %2096 = vrot.lane.b32.xlu0 %v2001, 96
        %v2097 = vpop.permute.xlu0 %2096
        %vm2130 = vcmask 1044224
        %2131 = vst.msk [vmem:[#allocation3] sm:$0xf] %vm2130, %v2035
        %2132 = vst.msk [vmem:[#allocation3 + $0xc] sm:$0xf] %vm2130, %v2037
        %2133 = vst.msk [vmem:[#allocation3 + $0x18] sm:$0xf] %vm2130, %v2039
        %2134 = vst.msk [vmem:[#allocation3 + $0x24] sm:$0xf] %vm2130, %v2041
        %2135 = vst.msk [vmem:[#allocation3 + $0x30] sm:$0xf] %vm2130, %v2043
        %2136 = vst.msk [vmem:[#allocation3 + $0x3c] sm:$0xf] %vm2130, %v2045
        %2137 = vst.msk [vmem:[#allocation3 + $0x48] sm:$0xf] %vm2130, %v2047
        %2138 = vst.msk [vmem:[#allocation3 + $0x54] sm:$0xf] %vm2130, %v2049
        %2139 = vst.msk [vmem:[#allocation3 + $0x60] sm:$0xf] %vm2130, %v2051
        %2140 = vst.msk [vmem:[#allocation3 + $0x6c] sm:$0xf] %vm2130, %v2053
        %2141 = vst.msk [vmem:[#allocation3 + $0x78] sm:$0xf] %vm2130, %v2055
        %2142 = vst.msk [vmem:[#allocation3 + $0x84] sm:$0xf] %vm2130, %v2057
        %2143 = vst.msk [vmem:[#allocation3 + $0x90] sm:$0xf] %vm2130, %v2059
        %2144 = vst.msk [vmem:[#allocation3 + $0x9c] sm:$0xf] %vm2130, %v2061
        %2145 = vst.msk [vmem:[#allocation3 + $0xa8] sm:$0xf] %vm2130, %v2063
        %2146 = vst.msk [vmem:[#allocation3 + $0xb4] sm:$0xf] %vm2130, %v2065
        %2147 = vst.msk [vmem:[#allocation3 + $0xc0] sm:$0xf] %vm2130, %v2067
        %2148 = vst.msk [vmem:[#allocation3 + $0xcc] sm:$0xf] %vm2130, %v2069
        %2149 = vst.msk [vmem:[#allocation3 + $0xd8] sm:$0xf] %vm2130, %v2071
        %2150 = vst.msk [vmem:[#allocation3 + $0xe4] sm:$0xf] %vm2130, %v2073
        %2151 = vst.msk [vmem:[#allocation3 + $0xf0] sm:$0xf] %vm2130, %v2075
        %2152 = vst.msk [vmem:[#allocation3 + $0xfc] sm:$0xf] %vm2130, %v2077
        %2153 = vst.msk [vmem:[#allocation3 + $0x108] sm:$0xf] %vm2130, %v2079
        %2154 = vst.msk [vmem:[#allocation3 + $0x114] sm:$0xf] %vm2130, %v2081
        %2155 = vst.msk [vmem:[#allocation3 + $0x120] sm:$0xf] %vm2130, %v2083
        %2156 = vst.msk [vmem:[#allocation3 + $0x12c] sm:$0xf] %vm2130, %v2085
        %2157 = vst.msk [vmem:[#allocation3 + $0x138] sm:$0xf] %vm2130, %v2087
        %2158 = vst.msk [vmem:[#allocation3 + $0x144] sm:$0xf] %vm2130, %v2089
        %2159 = vst.msk [vmem:[#allocation3 + $0x150] sm:$0xf] %vm2130, %v2091
        %2160 = vst.msk [vmem:[#allocation3 + $0x15c] sm:$0xf] %vm2130, %v2093
        %2161 = vst.msk [vmem:[#allocation3 + $0x168] sm:$0xf] %vm2130, %v2095
        %2162 = vst.msk [vmem:[#allocation3 + $0x174] sm:$0xf] %vm2130, %v2097
        %v2163 = vld [vmem:[%s883] sm:$0xf]
        %v2164 = vld [vmem:[%s883 + $0x4] sm:$0xf]
        %v2165 = vld [vmem:[%s883 + $0x8] sm:$0x1]
        %v2166 = vld [vmem:[%s883 + $0xc] sm:$0xf]
        %v2167 = vld [vmem:[%s883 + $0x10] sm:$0xf]
        %v2168 = vld [vmem:[%s883 + $0x14] sm:$0x1]
        %v2169 = vld [vmem:[%s883 + $0x18] sm:$0xf]
        %v2170 = vld [vmem:[%s883 + $0x1c] sm:$0xf]
        %v2171 = vld [vmem:[%s883 + $0x20] sm:$0x1]
        %v2172 = vld [vmem:[%s883 + $0x24] sm:$0xf]
        %v2173 = vld [vmem:[%s883 + $0x28] sm:$0xf]
        %v2174 = vld [vmem:[%s883 + $0x2c] sm:$0x1]
        %v2175 = vld [vmem:[%s883 + $0x30] sm:$0xf]
        %v2176 = vld [vmem:[%s883 + $0x34] sm:$0xf]
        %v2177 = vld [vmem:[%s883 + $0x38] sm:$0x1]
        %v2178 = vld [vmem:[%s883 + $0x3c] sm:$0xf]
        %v2179 = vld [vmem:[%s883 + $0x40] sm:$0xf]
        %v2180 = vld [vmem:[%s883 + $0x44] sm:$0x1]
        %v2181 = vld [vmem:[%s883 + $0x48] sm:$0xf]
        %v2182 = vld [vmem:[%s883 + $0x4c] sm:$0xf]
        %v2183 = vld [vmem:[%s883 + $0x50] sm:$0x1]
        %v2184 = vld [vmem:[%s883 + $0x54] sm:$0xf]
        %v2185 = vld [vmem:[%s883 + $0x58] sm:$0xf]
        %v2186 = vld [vmem:[%s883 + $0x5c] sm:$0x1]
        %v2187 = vld [vmem:[%s883 + $0x60] sm:$0xf]
        %v2188 = vld [vmem:[%s883 + $0x64] sm:$0xf]
        %v2189 = vld [vmem:[%s883 + $0x68] sm:$0x1]
        %v2190 = vld [vmem:[%s883 + $0x6c] sm:$0xf]
        %v2191 = vld [vmem:[%s883 + $0x70] sm:$0xf]
        %v2192 = vld [vmem:[%s883 + $0x74] sm:$0x1]
        %v2193 = vld [vmem:[%s883 + $0x78] sm:$0xf]
        %v2194 = vld [vmem:[%s883 + $0x7c] sm:$0xf]
        %v2195 = vld [vmem:[%s883 + $0x80] sm:$0x1]
        %v2196 = vld [vmem:[%s883 + $0x84] sm:$0xf]
        %v2197 = vld [vmem:[%s883 + $0x88] sm:$0xf]
        %v2198 = vld [vmem:[%s883 + $0x8c] sm:$0x1]
        %v2199 = vld [vmem:[%s883 + $0x90] sm:$0xf]
        %v2200 = vld [vmem:[%s883 + $0x94] sm:$0xf]
        %v2201 = vld [vmem:[%s883 + $0x98] sm:$0x1]
        %v2202 = vld [vmem:[%s883 + $0x9c] sm:$0xf]
        %v2203 = vld [vmem:[%s883 + $0xa0] sm:$0xf]
        %v2204 = vld [vmem:[%s883 + $0xa4] sm:$0x1]
        %v2205 = vld [vmem:[%s883 + $0xa8] sm:$0xf]
        %v2206 = vld [vmem:[%s883 + $0xac] sm:$0xf]
        %v2207 = vld [vmem:[%s883 + $0xb0] sm:$0x1]
        %v2208 = vld [vmem:[%s883 + $0xb4] sm:$0xf]
        %v2209 = vld [vmem:[%s883 + $0xb8] sm:$0xf]
        %v2210 = vld [vmem:[%s883 + $0xbc] sm:$0x1]
        %v2212 = vshrl.u32 %v2163, 16
        %v2214 = vrot.slane %v2212, 4
        %v2215 = vshll.u32 %v2163, 16
        %v2217 = vrot.slane %v2215, 5
        %v2218 = vor.u32 %v2214, %v2217
        %v2219 = vrot.slane %v2218, 4
        %v2221 = vshll.u32 %v2164, 16
        %v2223 = vrot.slane %v2221, 5
        %v2224 = vsel %vm1116, %v2219, %v2223
        %v2225 = vshrl.u32 %v2164, 16
        %v2227 = vrot.slane %v2225, 4
        %v2228 = vor.u32 %v2227, %v2223
        %v2229 = vrot.slane %v2228, 4
        %v2231 = vshll.u32 %v2165, 16
        %v2233 = vrot.slane %v2231, 5
        %v2234 = vsel %vm1116, %v2229, %v2233
        %v2236 = vshrl.u32 %v2166, 16
        %v2238 = vrot.slane %v2236, 4
        %v2239 = vshll.u32 %v2166, 16
        %v2241 = vrot.slane %v2239, 5
        %v2242 = vor.u32 %v2238, %v2241
        %v2243 = vrot.slane %v2242, 4
        %v2245 = vshll.u32 %v2167, 16
        %v2247 = vrot.slane %v2245, 5
        %v2248 = vsel %vm1116, %v2243, %v2247
        %v2249 = vshrl.u32 %v2167, 16
        %v2251 = vrot.slane %v2249, 4
        %v2252 = vor.u32 %v2251, %v2247
        %v2253 = vrot.slane %v2252, 4
        %v2255 = vshll.u32 %v2168, 16
        %v2257 = vrot.slane %v2255, 5
        %v2258 = vsel %vm1116, %v2253, %v2257
        %v2260 = vshrl.u32 %v2169, 16
        %v2262 = vrot.slane %v2260, 4
        %v2263 = vshll.u32 %v2169, 16
        %v2265 = vrot.slane %v2263, 5
        %v2266 = vor.u32 %v2262, %v2265
        %v2267 = vrot.slane %v2266, 4
        %v2269 = vshll.u32 %v2170, 16
        %v2271 = vrot.slane %v2269, 5
        %v2272 = vsel %vm1116, %v2267, %v2271
        %v2273 = vshrl.u32 %v2170, 16
        %v2275 = vrot.slane %v2273, 4
        %v2276 = vor.u32 %v2275, %v2271
        %v2277 = vrot.slane %v2276, 4
        %v2279 = vshll.u32 %v2171, 16
        %v2281 = vrot.slane %v2279, 5
        %v2282 = vsel %vm1116, %v2277, %v2281
        %v2284 = vshrl.u32 %v2172, 16
        %v2286 = vrot.slane %v2284, 4
        %v2287 = vshll.u32 %v2172, 16
        %v2289 = vrot.slane %v2287, 5
        %v2290 = vor.u32 %v2286, %v2289
        %v2291 = vrot.slane %v2290, 4
        %v2293 = vshll.u32 %v2173, 16
        %v2295 = vrot.slane %v2293, 5
        %v2296 = vsel %vm1116, %v2291, %v2295
        %v2297 = vshrl.u32 %v2173, 16
        %v2299 = vrot.slane %v2297, 4
        %v2300 = vor.u32 %v2299, %v2295
        %v2301 = vrot.slane %v2300, 4
        %v2303 = vshll.u32 %v2174, 16
        %v2305 = vrot.slane %v2303, 5
        %v2306 = vsel %vm1116, %v2301, %v2305
        %v2308 = vshrl.u32 %v2175, 16
        %v2310 = vrot.slane %v2308, 4
        %v2311 = vshll.u32 %v2175, 16
        %v2313 = vrot.slane %v2311, 5
        %v2314 = vor.u32 %v2310, %v2313
        %v2315 = vrot.slane %v2314, 4
        %v2317 = vshll.u32 %v2176, 16
        %v2319 = vrot.slane %v2317, 5
        %v2320 = vsel %vm1116, %v2315, %v2319
        %v2321 = vshrl.u32 %v2176, 16
        %v2323 = vrot.slane %v2321, 4
        %v2324 = vor.u32 %v2323, %v2319
        %v2325 = vrot.slane %v2324, 4
        %v2327 = vshll.u32 %v2177, 16
        %v2329 = vrot.slane %v2327, 5
        %v2330 = vsel %vm1116, %v2325, %v2329
        %v2332 = vshrl.u32 %v2178, 16
        %v2334 = vrot.slane %v2332, 4
        %v2335 = vshll.u32 %v2178, 16
        %v2337 = vrot.slane %v2335, 5
        %v2338 = vor.u32 %v2334, %v2337
        %v2339 = vrot.slane %v2338, 4
        %v2341 = vshll.u32 %v2179, 16
        %v2343 = vrot.slane %v2341, 5
        %v2344 = vsel %vm1116, %v2339, %v2343
        %v2345 = vshrl.u32 %v2179, 16
        %v2347 = vrot.slane %v2345, 4
        %v2348 = vor.u32 %v2347, %v2343
        %v2349 = vrot.slane %v2348, 4
        %v2351 = vshll.u32 %v2180, 16
        %v2353 = vrot.slane %v2351, 5
        %v2354 = vsel %vm1116, %v2349, %v2353
        %v2356 = vshrl.u32 %v2181, 16
        %v2358 = vrot.slane %v2356, 4
        %v2359 = vshll.u32 %v2181, 16
        %v2361 = vrot.slane %v2359, 5
        %v2362 = vor.u32 %v2358, %v2361
        %v2363 = vrot.slane %v2362, 4
        %v2365 = vshll.u32 %v2182, 16
        %v2367 = vrot.slane %v2365, 5
        %v2368 = vsel %vm1116, %v2363, %v2367
        %v2369 = vshrl.u32 %v2182, 16
        %v2371 = vrot.slane %v2369, 4
        %v2372 = vor.u32 %v2371, %v2367
        %v2373 = vrot.slane %v2372, 4
        %v2375 = vshll.u32 %v2183, 16
        %v2377 = vrot.slane %v2375, 5
        %v2378 = vsel %vm1116, %v2373, %v2377
        %v2380 = vshrl.u32 %v2184, 16
        %v2382 = vrot.slane %v2380, 4
        %v2383 = vshll.u32 %v2184, 16
        %v2385 = vrot.slane %v2383, 5
        %v2386 = vor.u32 %v2382, %v2385
        %v2387 = vrot.slane %v2386, 4
        %v2389 = vshll.u32 %v2185, 16
        %v2391 = vrot.slane %v2389, 5
        %v2392 = vsel %vm1116, %v2387, %v2391
        %v2393 = vshrl.u32 %v2185, 16
        %v2395 = vrot.slane %v2393, 4
        %v2396 = vor.u32 %v2395, %v2391
        %v2397 = vrot.slane %v2396, 4
        %v2399 = vshll.u32 %v2186, 16
        %v2401 = vrot.slane %v2399, 5
        %v2402 = vsel %vm1116, %v2397, %v2401
        %v2404 = vshrl.u32 %v2187, 16
        %v2406 = vrot.slane %v2404, 4
        %v2407 = vshll.u32 %v2187, 16
        %v2409 = vrot.slane %v2407, 5
        %v2410 = vor.u32 %v2406, %v2409
        %v2411 = vrot.slane %v2410, 4
        %v2413 = vshll.u32 %v2188, 16
        %v2415 = vrot.slane %v2413, 5
        %v2416 = vsel %vm1116, %v2411, %v2415
        %v2417 = vshrl.u32 %v2188, 16
        %v2419 = vrot.slane %v2417, 4
        %v2420 = vor.u32 %v2419, %v2415
        %v2421 = vrot.slane %v2420, 4
        %v2423 = vshll.u32 %v2189, 16
        %v2425 = vrot.slane %v2423, 5
        %v2426 = vsel %vm1116, %v2421, %v2425
        %v2428 = vshrl.u32 %v2190, 16
        %v2430 = vrot.slane %v2428, 4
        %v2431 = vshll.u32 %v2190, 16
        %v2433 = vrot.slane %v2431, 5
        %v2434 = vor.u32 %v2430, %v2433
        %v2435 = vrot.slane %v2434, 4
        %v2437 = vshll.u32 %v2191, 16
        %v2439 = vrot.slane %v2437, 5
        %v2440 = vsel %vm1116, %v2435, %v2439
        %v2441 = vshrl.u32 %v2191, 16
        %v2443 = vrot.slane %v2441, 4
        %v2444 = vor.u32 %v2443, %v2439
        %v2445 = vrot.slane %v2444, 4
        %v2447 = vshll.u32 %v2192, 16
        %v2449 = vrot.slane %v2447, 5
        %v2450 = vsel %vm1116, %v2445, %v2449
        %v2452 = vshrl.u32 %v2193, 16
        %v2454 = vrot.slane %v2452, 4
        %v2455 = vshll.u32 %v2193, 16
        %v2457 = vrot.slane %v2455, 5
        %v2458 = vor.u32 %v2454, %v2457
        %v2459 = vrot.slane %v2458, 4
        %v2461 = vshll.u32 %v2194, 16
        %v2463 = vrot.slane %v2461, 5
        %v2464 = vsel %vm1116, %v2459, %v2463
        %v2465 = vshrl.u32 %v2194, 16
        %v2467 = vrot.slane %v2465, 4
        %v2468 = vor.u32 %v2467, %v2463
        %v2469 = vrot.slane %v2468, 4
        %v2471 = vshll.u32 %v2195, 16
        %v2473 = vrot.slane %v2471, 5
        %v2474 = vsel %vm1116, %v2469, %v2473
        %v2476 = vshrl.u32 %v2196, 16
        %v2478 = vrot.slane %v2476, 4
        %v2479 = vshll.u32 %v2196, 16
        %v2481 = vrot.slane %v2479, 5
        %v2482 = vor.u32 %v2478, %v2481
        %v2483 = vrot.slane %v2482, 4
        %v2485 = vshll.u32 %v2197, 16
        %v2487 = vrot.slane %v2485, 5
        %v2488 = vsel %vm1116, %v2483, %v2487
        %v2489 = vshrl.u32 %v2197, 16
        %v2491 = vrot.slane %v2489, 4
        %v2492 = vor.u32 %v2491, %v2487
        %v2493 = vrot.slane %v2492, 4
        %v2495 = vshll.u32 %v2198, 16
        %v2497 = vrot.slane %v2495, 5
        %v2498 = vsel %vm1116, %v2493, %v2497
        %v2500 = vshrl.u32 %v2199, 16
        %v2502 = vrot.slane %v2500, 4
        %v2503 = vshll.u32 %v2199, 16
        %v2505 = vrot.slane %v2503, 5
        %v2506 = vor.u32 %v2502, %v2505
        %v2507 = vrot.slane %v2506, 4
        %v2509 = vshll.u32 %v2200, 16
        %v2511 = vrot.slane %v2509, 5
        %v2512 = vsel %vm1116, %v2507, %v2511
        %v2513 = vshrl.u32 %v2200, 16
        %v2515 = vrot.slane %v2513, 4
        %v2516 = vor.u32 %v2515, %v2511
        %v2517 = vrot.slane %v2516, 4
        %v2519 = vshll.u32 %v2201, 16
        %v2521 = vrot.slane %v2519, 5
        %v2522 = vsel %vm1116, %v2517, %v2521
        %v2524 = vshrl.u32 %v2202, 16
        %v2526 = vrot.slane %v2524, 4
        %v2527 = vshll.u32 %v2202, 16
        %v2529 = vrot.slane %v2527, 5
        %v2530 = vor.u32 %v2526, %v2529
        %v2531 = vrot.slane %v2530, 4
        %v2533 = vshll.u32 %v2203, 16
        %v2535 = vrot.slane %v2533, 5
        %v2536 = vsel %vm1116, %v2531, %v2535
        %v2537 = vshrl.u32 %v2203, 16
        %v2539 = vrot.slane %v2537, 4
        %v2540 = vor.u32 %v2539, %v2535
        %v2541 = vrot.slane %v2540, 4
        %v2543 = vshll.u32 %v2204, 16
        %v2545 = vrot.slane %v2543, 5
        %v2546 = vsel %vm1116, %v2541, %v2545
        %v2548 = vshrl.u32 %v2205, 16
        %v2550 = vrot.slane %v2548, 4
        %v2551 = vshll.u32 %v2205, 16
        %v2553 = vrot.slane %v2551, 5
        %v2554 = vor.u32 %v2550, %v2553
        %v2555 = vrot.slane %v2554, 4
        %v2557 = vshll.u32 %v2206, 16
        %v2559 = vrot.slane %v2557, 5
        %v2560 = vsel %vm1116, %v2555, %v2559
        %v2561 = vshrl.u32 %v2206, 16
        %v2563 = vrot.slane %v2561, 4
        %v2564 = vor.u32 %v2563, %v2559
        %v2565 = vrot.slane %v2564, 4
        %v2567 = vshll.u32 %v2207, 16
        %v2569 = vrot.slane %v2567, 5
        %v2570 = vsel %vm1116, %v2565, %v2569
        %v2572 = vshrl.u32 %v2208, 16
        %v2574 = vrot.slane %v2572, 4
        %v2575 = vshll.u32 %v2208, 16
        %v2577 = vrot.slane %v2575, 5
        %v2578 = vor.u32 %v2574, %v2577
        %v2579 = vrot.slane %v2578, 4
        %v2581 = vshll.u32 %v2209, 16
        %v2583 = vrot.slane %v2581, 5
        %v2584 = vsel %vm1116, %v2579, %v2583
        %v2585 = vshrl.u32 %v2209, 16
        %v2587 = vrot.slane %v2585, 4
        %v2588 = vor.u32 %v2587, %v2583
        %v2589 = vrot.slane %v2588, 4
        %v2591 = vshll.u32 %v2210, 16
        %v2593 = vrot.slane %v2591, 5
        %v2594 = vsel %vm1116, %v2589, %v2593
        %2627 = vst.msk [vmem:[#allocation3 + $0x4] sm:$0xf] %vm890, %v2224
        %2628 = vst.msk [vmem:[#allocation3 + $0x10] sm:$0xf] %vm890, %v2234
        %2629 = vst.msk [vmem:[#allocation3 + $0x1c] sm:$0xf] %vm890, %v2248
        %2630 = vst.msk [vmem:[#allocation3 + $0x28] sm:$0xf] %vm890, %v2258
        %2631 = vst.msk [vmem:[#allocation3 + $0x34] sm:$0xf] %vm890, %v2272
        %2632 = vst.msk [vmem:[#allocation3 + $0x40] sm:$0xf] %vm890, %v2282
        %2633 = vst.msk [vmem:[#allocation3 + $0x4c] sm:$0xf] %vm890, %v2296
        %2634 = vst.msk [vmem:[#allocation3 + $0x58] sm:$0xf] %vm890, %v2306
        %2635 = vst.msk [vmem:[#allocation3 + $0x64] sm:$0xf] %vm890, %v2320
        %2636 = vst.msk [vmem:[#allocation3 + $0x70] sm:$0xf] %vm890, %v2330
        %2637 = vst.msk [vmem:[#allocation3 + $0x7c] sm:$0xf] %vm890, %v2344
        %2638 = vst.msk [vmem:[#allocation3 + $0x88] sm:$0xf] %vm890, %v2354
        %2639 = vst.msk [vmem:[#allocation3 + $0x94] sm:$0xf] %vm890, %v2368
        %2640 = vst.msk [vmem:[#allocation3 + $0xa0] sm:$0xf] %vm890, %v2378
        %2641 = vst.msk [vmem:[#allocation3 + $0xac] sm:$0xf] %vm890, %v2392
        %2642 = vst.msk [vmem:[#allocation3 + $0xb8] sm:$0xf] %vm890, %v2402
        %2643 = vst.msk [vmem:[#allocation3 + $0xc4] sm:$0xf] %vm890, %v2416
        %2644 = vst.msk [vmem:[#allocation3 + $0xd0] sm:$0xf] %vm890, %v2426
        %2645 = vst.msk [vmem:[#allocation3 + $0xdc] sm:$0xf] %vm890, %v2440
        %2646 = vst.msk [vmem:[#allocation3 + $0xe8] sm:$0xf] %vm890, %v2450
        %2647 = vst.msk [vmem:[#allocation3 + $0xf4] sm:$0xf] %vm890, %v2464
        %2648 = vst.msk [vmem:[#allocation3 + $0x100] sm:$0xf] %vm890, %v2474
        %2649 = vst.msk [vmem:[#allocation3 + $0x10c] sm:$0xf] %vm890, %v2488
        %2650 = vst.msk [vmem:[#allocation3 + $0x118] sm:$0xf] %vm890, %v2498
        %2651 = vst.msk [vmem:[#allocation3 + $0x124] sm:$0xf] %vm890, %v2512
        %2652 = vst.msk [vmem:[#allocation3 + $0x130] sm:$0xf] %vm890, %v2522
        %2653 = vst.msk [vmem:[#allocation3 + $0x13c] sm:$0xf] %vm890, %v2536
        %2654 = vst.msk [vmem:[#allocation3 + $0x148] sm:$0xf] %vm890, %v2546
        %2655 = vst.msk [vmem:[#allocation3 + $0x154] sm:$0xf] %vm890, %v2560
        %2656 = vst.msk [vmem:[#allocation3 + $0x160] sm:$0xf] %vm890, %v2570
        %2657 = vst.msk [vmem:[#allocation3 + $0x16c] sm:$0xf] %vm890, %v2584
        %2658 = vst.msk [vmem:[#allocation3 + $0x178] sm:$0xf] %vm890, %v2594
        %v2659 = vld [vmem:[%s883] sm:$0xe]
        %v2660 = vld [vmem:[%s883 + $0x4] sm:$0xf]
        %v2661 = vld [vmem:[%s883 + $0x8] sm:$0x1]
        %v2662 = vld [vmem:[%s883 + $0xc] sm:$0xe]
        %v2663 = vld [vmem:[%s883 + $0x10] sm:$0xf]
        %v2664 = vld [vmem:[%s883 + $0x14] sm:$0x1]
        %v2665 = vld [vmem:[%s883 + $0x18] sm:$0xe]
        %v2666 = vld [vmem:[%s883 + $0x1c] sm:$0xf]
        %v2667 = vld [vmem:[%s883 + $0x20] sm:$0x1]
        %v2668 = vld [vmem:[%s883 + $0x24] sm:$0xe]
        %v2669 = vld [vmem:[%s883 + $0x28] sm:$0xf]
        %v2670 = vld [vmem:[%s883 + $0x2c] sm:$0x1]
        %v2671 = vld [vmem:[%s883 + $0x30] sm:$0xe]
        %v2672 = vld [vmem:[%s883 + $0x34] sm:$0xf]
        %v2673 = vld [vmem:[%s883 + $0x38] sm:$0x1]
        %v2674 = vld [vmem:[%s883 + $0x3c] sm:$0xe]
        %v2675 = vld [vmem:[%s883 + $0x40] sm:$0xf]
        %v2676 = vld [vmem:[%s883 + $0x44] sm:$0x1]
        %v2677 = vld [vmem:[%s883 + $0x48] sm:$0xe]
        %v2678 = vld [vmem:[%s883 + $0x4c] sm:$0xf]
        %v2679 = vld [vmem:[%s883 + $0x50] sm:$0x1]
        %v2680 = vld [vmem:[%s883 + $0x54] sm:$0xe]
        %v2681 = vld [vmem:[%s883 + $0x58] sm:$0xf]
        %v2682 = vld [vmem:[%s883 + $0x5c] sm:$0x1]
        %v2683 = vld [vmem:[%s883 + $0x60] sm:$0xe]
        %v2684 = vld [vmem:[%s883 + $0x64] sm:$0xf]
        %v2685 = vld [vmem:[%s883 + $0x68] sm:$0x1]
        %v2686 = vld [vmem:[%s883 + $0x6c] sm:$0xe]
        %v2687 = vld [vmem:[%s883 + $0x70] sm:$0xf]
        %v2688 = vld [vmem:[%s883 + $0x74] sm:$0x1]
        %v2689 = vld [vmem:[%s883 + $0x78] sm:$0xe]
        %v2690 = vld [vmem:[%s883 + $0x7c] sm:$0xf]
        %v2691 = vld [vmem:[%s883 + $0x80] sm:$0x1]
        %v2692 = vld [vmem:[%s883 + $0x84] sm:$0xe]
        %v2693 = vld [vmem:[%s883 + $0x88] sm:$0xf]
        %v2694 = vld [vmem:[%s883 + $0x8c] sm:$0x1]
        %v2695 = vld [vmem:[%s883 + $0x90] sm:$0xe]
        %v2696 = vld [vmem:[%s883 + $0x94] sm:$0xf]
        %v2697 = vld [vmem:[%s883 + $0x98] sm:$0x1]
        %v2698 = vld [vmem:[%s883 + $0x9c] sm:$0xe]
        %v2699 = vld [vmem:[%s883 + $0xa0] sm:$0xf]
        %v2700 = vld [vmem:[%s883 + $0xa4] sm:$0x1]
        %v2701 = vld [vmem:[%s883 + $0xa8] sm:$0xe]
        %v2702 = vld [vmem:[%s883 + $0xac] sm:$0xf]
        %v2703 = vld [vmem:[%s883 + $0xb0] sm:$0x1]
        %v2704 = vld [vmem:[%s883 + $0xb4] sm:$0xe]
        %v2705 = vld [vmem:[%s883 + $0xb8] sm:$0xf]
        %v2706 = vld [vmem:[%s883 + $0xbc] sm:$0x1]
        %v2755 = vrot.slane %v2659, 5
        %v2756 = vrot.slane %v2755, 4
        %v2757 = vrot.slane %v2660, 5
        %v2758 = vsel %vm1728, %v2756, %v2757
        %v2759 = vrot.slane %v2757, 4
        %v2760 = vrot.slane %v2661, 5
        %v2761 = vsel %vm1728, %v2759, %v2760
        %v2762 = vrot.slane %v2662, 5
        %v2763 = vrot.slane %v2762, 4
        %v2764 = vrot.slane %v2663, 5
        %v2765 = vsel %vm1728, %v2763, %v2764
        %v2766 = vrot.slane %v2764, 4
        %v2767 = vrot.slane %v2664, 5
        %v2768 = vsel %vm1728, %v2766, %v2767
        %v2769 = vrot.slane %v2665, 5
        %v2770 = vrot.slane %v2769, 4
        %v2771 = vrot.slane %v2666, 5
        %v2772 = vsel %vm1728, %v2770, %v2771
        %v2773 = vrot.slane %v2771, 4
        %v2774 = vrot.slane %v2667, 5
        %v2775 = vsel %vm1728, %v2773, %v2774
        %v2776 = vrot.slane %v2668, 5
        %v2777 = vrot.slane %v2776, 4
        %v2778 = vrot.slane %v2669, 5
        %v2779 = vsel %vm1728, %v2777, %v2778
        %v2780 = vrot.slane %v2778, 4
        %v2781 = vrot.slane %v2670, 5
        %v2782 = vsel %vm1728, %v2780, %v2781
        %v2783 = vrot.slane %v2671, 5
        %v2784 = vrot.slane %v2783, 4
        %v2785 = vrot.slane %v2672, 5
        %v2786 = vsel %vm1728, %v2784, %v2785
        %v2787 = vrot.slane %v2785, 4
        %v2788 = vrot.slane %v2673, 5
        %v2789 = vsel %vm1728, %v2787, %v2788
        %v2790 = vrot.slane %v2674, 5
        %v2791 = vrot.slane %v2790, 4
        %v2792 = vrot.slane %v2675, 5
        %v2793 = vsel %vm1728, %v2791, %v2792
        %v2794 = vrot.slane %v2792, 4
        %v2795 = vrot.slane %v2676, 5
        %v2796 = vsel %vm1728, %v2794, %v2795
        %v2797 = vrot.slane %v2677, 5
        %v2798 = vrot.slane %v2797, 4
        %v2799 = vrot.slane %v2678, 5
        %v2800 = vsel %vm1728, %v2798, %v2799
        %v2801 = vrot.slane %v2799, 4
        %v2802 = vrot.slane %v2679, 5
        %v2803 = vsel %vm1728, %v2801, %v2802
        %v2804 = vrot.slane %v2680, 5
        %v2805 = vrot.slane %v2804, 4
        %v2806 = vrot.slane %v2681, 5
        %v2807 = vsel %vm1728, %v2805, %v2806
        %v2808 = vrot.slane %v2806, 4
        %v2809 = vrot.slane %v2682, 5
        %v2810 = vsel %vm1728, %v2808, %v2809
        %v2811 = vrot.slane %v2683, 5
        %v2812 = vrot.slane %v2811, 4
        %v2813 = vrot.slane %v2684, 5
        %v2814 = vsel %vm1728, %v2812, %v2813
        %v2815 = vrot.slane %v2813, 4
        %v2816 = vrot.slane %v2685, 5
        %v2817 = vsel %vm1728, %v2815, %v2816
        %v2818 = vrot.slane %v2686, 5
        %v2819 = vrot.slane %v2818, 4
        %v2820 = vrot.slane %v2687, 5
        %v2821 = vsel %vm1728, %v2819, %v2820
        %v2822 = vrot.slane %v2820, 4
        %v2823 = vrot.slane %v2688, 5
        %v2824 = vsel %vm1728, %v2822, %v2823
        %v2825 = vrot.slane %v2689, 5
        %v2826 = vrot.slane %v2825, 4
        %v2827 = vrot.slane %v2690, 5
        %v2828 = vsel %vm1728, %v2826, %v2827
        %v2829 = vrot.slane %v2827, 4
        %v2830 = vrot.slane %v2691, 5
        %v2831 = vsel %vm1728, %v2829, %v2830
        %v2832 = vrot.slane %v2692, 5
        %v2833 = vrot.slane %v2832, 4
        %v2834 = vrot.slane %v2693, 5
        %v2835 = vsel %vm1728, %v2833, %v2834
        %v2836 = vrot.slane %v2834, 4
        %v2837 = vrot.slane %v2694, 5
        %v2838 = vsel %vm1728, %v2836, %v2837
        %v2839 = vrot.slane %v2695, 5
        %v2840 = vrot.slane %v2839, 4
        %v2841 = vrot.slane %v2696, 5
        %v2842 = vsel %vm1728, %v2840, %v2841
        %v2843 = vrot.slane %v2841, 4
        %v2844 = vrot.slane %v2697, 5
        %v2845 = vsel %vm1728, %v2843, %v2844
        %v2846 = vrot.slane %v2698, 5
        %v2847 = vrot.slane %v2846, 4
        %v2848 = vrot.slane %v2699, 5
        %v2849 = vsel %vm1728, %v2847, %v2848
        %v2850 = vrot.slane %v2848, 4
        %v2851 = vrot.slane %v2700, 5
        %v2852 = vsel %vm1728, %v2850, %v2851
        %v2853 = vrot.slane %v2701, 5
        %v2854 = vrot.slane %v2853, 4
        %v2855 = vrot.slane %v2702, 5
        %v2856 = vsel %vm1728, %v2854, %v2855
        %v2857 = vrot.slane %v2855, 4
        %v2858 = vrot.slane %v2703, 5
        %v2859 = vsel %vm1728, %v2857, %v2858
        %v2860 = vrot.slane %v2704, 5
        %v2861 = vrot.slane %v2860, 4
        %v2862 = vrot.slane %v2705, 5
        %v2863 = vsel %vm1728, %v2861, %v2862
        %v2864 = vrot.slane %v2862, 4
        %v2865 = vrot.slane %v2706, 5
        %v2866 = vsel %vm1728, %v2864, %v2865
        %2867 = vrot.lane.b32.xlu0 %v2758, 32
        %v2868 = vpop.permute.xlu0 %2867
        %2869 = vrot.lane.b32.xlu0 %v2761, 32
        %v2870 = vpop.permute.xlu0 %2869
        %2871 = vrot.lane.b32.xlu0 %v2765, 32
        %v2872 = vpop.permute.xlu0 %2871
        %2873 = vrot.lane.b32.xlu0 %v2768, 32
        %v2874 = vpop.permute.xlu0 %2873
        %2875 = vrot.lane.b32.xlu0 %v2772, 32
        %v2876 = vpop.permute.xlu0 %2875
        %2877 = vrot.lane.b32.xlu0 %v2775, 32
        %v2878 = vpop.permute.xlu0 %2877
        %2879 = vrot.lane.b32.xlu0 %v2779, 32
        %v2880 = vpop.permute.xlu0 %2879
        %2881 = vrot.lane.b32.xlu0 %v2782, 32
        %v2882 = vpop.permute.xlu0 %2881
        %2883 = vrot.lane.b32.xlu0 %v2786, 32
        %v2884 = vpop.permute.xlu0 %2883
        %2885 = vrot.lane.b32.xlu0 %v2789, 32
        %v2886 = vpop.permute.xlu0 %2885
        %2887 = vrot.lane.b32.xlu0 %v2793, 32
        %v2888 = vpop.permute.xlu0 %2887
        %2889 = vrot.lane.b32.xlu0 %v2796, 32
        %v2890 = vpop.permute.xlu0 %2889
        %2891 = vrot.lane.b32.xlu0 %v2800, 32
        %v2892 = vpop.permute.xlu0 %2891
        %2893 = vrot.lane.b32.xlu0 %v2803, 32
        %v2894 = vpop.permute.xlu0 %2893
        %2895 = vrot.lane.b32.xlu0 %v2807, 32
        %v2896 = vpop.permute.xlu0 %2895
        %2897 = vrot.lane.b32.xlu0 %v2810, 32
        %v2898 = vpop.permute.xlu0 %2897
        %2899 = vrot.lane.b32.xlu0 %v2814, 32
        %v2900 = vpop.permute.xlu0 %2899
        %2901 = vrot.lane.b32.xlu0 %v2817, 32
        %v2902 = vpop.permute.xlu0 %2901
        %2903 = vrot.lane.b32.xlu0 %v2821, 32
        %v2904 = vpop.permute.xlu0 %2903
        %2905 = vrot.lane.b32.xlu0 %v2824, 32
        %v2906 = vpop.permute.xlu0 %2905
        %2907 = vrot.lane.b32.xlu0 %v2828, 32
        %v2908 = vpop.permute.xlu0 %2907
        %2909 = vrot.lane.b32.xlu0 %v2831, 32
        %v2910 = vpop.permute.xlu0 %2909
        %2911 = vrot.lane.b32.xlu0 %v2835, 32
        %v2912 = vpop.permute.xlu0 %2911
        %2913 = vrot.lane.b32.xlu0 %v2838, 32
        %v2914 = vpop.permute.xlu0 %2913
        %2915 = vrot.lane.b32.xlu0 %v2842, 32
        %v2916 = vpop.permute.xlu0 %2915
        %2917 = vrot.lane.b32.xlu0 %v2845, 32
        %v2918 = vpop.permute.xlu0 %2917
        %2919 = vrot.lane.b32.xlu0 %v2849, 32
        %v2920 = vpop.permute.xlu0 %2919
        %2921 = vrot.lane.b32.xlu0 %v2852, 32
        %v2922 = vpop.permute.xlu0 %2921
        %2923 = vrot.lane.b32.xlu0 %v2856, 32
        %v2924 = vpop.permute.xlu0 %2923
        %2925 = vrot.lane.b32.xlu0 %v2859, 32
        %v2926 = vpop.permute.xlu0 %2925
        %2927 = vrot.lane.b32.xlu0 %v2863, 32
        %v2928 = vpop.permute.xlu0 %2927
        %2929 = vrot.lane.b32.xlu0 %v2866, 32
        %v2930 = vpop.permute.xlu0 %2929
        %2963 = vst.msk [vmem:[#allocation3 + $0x4] sm:$0xf] %vm1597, %v2868
        %2964 = vst.msk [vmem:[#allocation3 + $0x10] sm:$0xf] %vm1597, %v2870
        %2965 = vst.msk [vmem:[#allocation3 + $0x1c] sm:$0xf] %vm1597, %v2872
        %2966 = vst.msk [vmem:[#allocation3 + $0x28] sm:$0xf] %vm1597, %v2874
        %2967 = vst.msk [vmem:[#allocation3 + $0x34] sm:$0xf] %vm1597, %v2876
        %2968 = vst.msk [vmem:[#allocation3 + $0x40] sm:$0xf] %vm1597, %v2878
        %2969 = vst.msk [vmem:[#allocation3 + $0x4c] sm:$0xf] %vm1597, %v2880
        %2970 = vst.msk [vmem:[#allocation3 + $0x58] sm:$0xf] %vm1597, %v2882
        %2971 = vst.msk [vmem:[#allocation3 + $0x64] sm:$0xf] %vm1597, %v2884
        %2972 = vst.msk [vmem:[#allocation3 + $0x70] sm:$0xf] %vm1597, %v2886
        %2973 = vst.msk [vmem:[#allocation3 + $0x7c] sm:$0xf] %vm1597, %v2888
        %2974 = vst.msk [vmem:[#allocation3 + $0x88] sm:$0xf] %vm1597, %v2890
        %2975 = vst.msk [vmem:[#allocation3 + $0x94] sm:$0xf] %vm1597, %v2892
        %2976 = vst.msk [vmem:[#allocation3 + $0xa0] sm:$0xf] %vm1597, %v2894
        %2977 = vst.msk [vmem:[#allocation3 + $0xac] sm:$0xf] %vm1597, %v2896
        %2978 = vst.msk [vmem:[#allocation3 + $0xb8] sm:$0xf] %vm1597, %v2898
        %2979 = vst.msk [vmem:[#allocation3 + $0xc4] sm:$0xf] %vm1597, %v2900
        %2980 = vst.msk [vmem:[#allocation3 + $0xd0] sm:$0xf] %vm1597, %v2902
        %2981 = vst.msk [vmem:[#allocation3 + $0xdc] sm:$0xf] %vm1597, %v2904
        %2982 = vst.msk [vmem:[#allocation3 + $0xe8] sm:$0xf] %vm1597, %v2906
        %2983 = vst.msk [vmem:[#allocation3 + $0xf4] sm:$0xf] %vm1597, %v2908
        %2984 = vst.msk [vmem:[#allocation3 + $0x100] sm:$0xf] %vm1597, %v2910
        %2985 = vst.msk [vmem:[#allocation3 + $0x10c] sm:$0xf] %vm1597, %v2912
        %2986 = vst.msk [vmem:[#allocation3 + $0x118] sm:$0xf] %vm1597, %v2914
        %2987 = vst.msk [vmem:[#allocation3 + $0x124] sm:$0xf] %vm1597, %v2916
        %2988 = vst.msk [vmem:[#allocation3 + $0x130] sm:$0xf] %vm1597, %v2918
        %2989 = vst.msk [vmem:[#allocation3 + $0x13c] sm:$0xf] %vm1597, %v2920
        %2990 = vst.msk [vmem:[#allocation3 + $0x148] sm:$0xf] %vm1597, %v2922
        %2991 = vst.msk [vmem:[#allocation3 + $0x154] sm:$0xf] %vm1597, %v2924
        %2992 = vst.msk [vmem:[#allocation3 + $0x160] sm:$0xf] %vm1597, %v2926
        %2993 = vst.msk [vmem:[#allocation3 + $0x16c] sm:$0xf] %vm1597, %v2928
        %2994 = vst.msk [vmem:[#allocation3 + $0x178] sm:$0xf] %vm1597, %v2930
        %s2995 = scalar_lea.vmem [#allocation2], 24
        %v2996 = vld [vmem:[%s2995] sm:$0xf]
        %v2997 = vld [vmem:[%s2995 + $0x4] sm:$0xf]
        %v2998 = vld [vmem:[%s2995 + $0xc] sm:$0xf]
        %v2999 = vld [vmem:[%s2995 + $0x10] sm:$0xf]
        %v3000 = vld [vmem:[%s2995 + $0x18] sm:$0xf]
        %v3001 = vld [vmem:[%s2995 + $0x1c] sm:$0xf]
        %v3002 = vld [vmem:[%s2995 + $0x24] sm:$0xf]
        %v3003 = vld [vmem:[%s2995 + $0x28] sm:$0xf]
        %v3004 = vld [vmem:[%s2995 + $0x30] sm:$0xf]
        %v3005 = vld [vmem:[%s2995 + $0x34] sm:$0xf]
        %v3006 = vld [vmem:[%s2995 + $0x3c] sm:$0xf]
        %v3007 = vld [vmem:[%s2995 + $0x40] sm:$0xf]
        %v3008 = vld [vmem:[%s2995 + $0x48] sm:$0xf]
        %v3009 = vld [vmem:[%s2995 + $0x4c] sm:$0xf]
        %v3010 = vld [vmem:[%s2995 + $0x54] sm:$0xf]
        %v3011 = vld [vmem:[%s2995 + $0x58] sm:$0xf]
        %v3012 = vld [vmem:[%s2995 + $0x60] sm:$0xf]
        %v3013 = vld [vmem:[%s2995 + $0x64] sm:$0xf]
        %v3014 = vld [vmem:[%s2995 + $0x6c] sm:$0xf]
        %v3015 = vld [vmem:[%s2995 + $0x70] sm:$0xf]
        %v3016 = vld [vmem:[%s2995 + $0x78] sm:$0xf]
        %v3017 = vld [vmem:[%s2995 + $0x7c] sm:$0xf]
        %v3018 = vld [vmem:[%s2995 + $0x84] sm:$0xf]
        %v3019 = vld [vmem:[%s2995 + $0x88] sm:$0xf]
        %v3020 = vld [vmem:[%s2995 + $0x90] sm:$0xf]
        %v3021 = vld [vmem:[%s2995 + $0x94] sm:$0xf]
        %v3022 = vld [vmem:[%s2995 + $0x9c] sm:$0xf]
        %v3023 = vld [vmem:[%s2995 + $0xa0] sm:$0xf]
        %v3024 = vld [vmem:[%s2995 + $0xa8] sm:$0xf]
        %v3025 = vld [vmem:[%s2995 + $0xac] sm:$0xf]
        %v3026 = vld [vmem:[%s2995 + $0xb4] sm:$0xf]
        %v3027 = vld [vmem:[%s2995 + $0xb8] sm:$0xf]
        %3060 = vrot.lane.b32.xlu0 %v2996, 64
        %v3061 = vpop.permute.xlu0 %3060
        %3062 = vrot.lane.b32.xlu0 %v2997, 64
        %v3063 = vpop.permute.xlu0 %3062
        %3064 = vrot.lane.b32.xlu0 %v2998, 64
        %v3065 = vpop.permute.xlu0 %3064
        %3066 = vrot.lane.b32.xlu0 %v2999, 64
        %v3067 = vpop.permute.xlu0 %3066
        %3068 = vrot.lane.b32.xlu0 %v3000, 64
        %v3069 = vpop.permute.xlu0 %3068
        %3070 = vrot.lane.b32.xlu0 %v3001, 64
        %v3071 = vpop.permute.xlu0 %3070
        %3072 = vrot.lane.b32.xlu0 %v3002, 64
        %v3073 = vpop.permute.xlu0 %3072
        %3074 = vrot.lane.b32.xlu0 %v3003, 64
        %v3075 = vpop.permute.xlu0 %3074
        %3076 = vrot.lane.b32.xlu0 %v3004, 64
        %v3077 = vpop.permute.xlu0 %3076
        %3078 = vrot.lane.b32.xlu0 %v3005, 64
        %v3079 = vpop.permute.xlu0 %3078
        %3080 = vrot.lane.b32.xlu0 %v3006, 64
        %v3081 = vpop.permute.xlu0 %3080
        %3082 = vrot.lane.b32.xlu0 %v3007, 64
        %v3083 = vpop.permute.xlu0 %3082
        %3084 = vrot.lane.b32.xlu0 %v3008, 64
        %v3085 = vpop.permute.xlu0 %3084
        %3086 = vrot.lane.b32.xlu0 %v3009, 64
        %v3087 = vpop.permute.xlu0 %3086
        %3088 = vrot.lane.b32.xlu0 %v3010, 64
        %v3089 = vpop.permute.xlu0 %3088
        %3090 = vrot.lane.b32.xlu0 %v3011, 64
        %v3091 = vpop.permute.xlu0 %3090
        %3092 = vrot.lane.b32.xlu0 %v3012, 64
        %v3093 = vpop.permute.xlu0 %3092
        %3094 = vrot.lane.b32.xlu0 %v3013, 64
        %v3095 = vpop.permute.xlu0 %3094
        %3096 = vrot.lane.b32.xlu0 %v3014, 64
        %v3097 = vpop.permute.xlu0 %3096
        %3098 = vrot.lane.b32.xlu0 %v3015, 64
        %v3099 = vpop.permute.xlu0 %3098
        %3100 = vrot.lane.b32.xlu0 %v3016, 64
        %v3101 = vpop.permute.xlu0 %3100
        %3102 = vrot.lane.b32.xlu0 %v3017, 64
        %v3103 = vpop.permute.xlu0 %3102
        %3104 = vrot.lane.b32.xlu0 %v3018, 64
        %v3105 = vpop.permute.xlu0 %3104
        %3106 = vrot.lane.b32.xlu0 %v3019, 64
        %v3107 = vpop.permute.xlu0 %3106
        %3108 = vrot.lane.b32.xlu0 %v3020, 64
        %v3109 = vpop.permute.xlu0 %3108
        %3110 = vrot.lane.b32.xlu0 %v3021, 64
        %v3111 = vpop.permute.xlu0 %3110
        %3112 = vrot.lane.b32.xlu0 %v3022, 64
        %v3113 = vpop.permute.xlu0 %3112
        %3114 = vrot.lane.b32.xlu0 %v3023, 64
        %v3115 = vpop.permute.xlu0 %3114
        %3116 = vrot.lane.b32.xlu0 %v3024, 64
        %v3117 = vpop.permute.xlu0 %3116
        %3118 = vrot.lane.b32.xlu0 %v3025, 64
        %v3119 = vpop.permute.xlu0 %3118
        %3120 = vrot.lane.b32.xlu0 %v3026, 64
        %v3121 = vpop.permute.xlu0 %3120
        %3122 = vrot.lane.b32.xlu0 %v3027, 64
        %v3123 = vpop.permute.xlu0 %3122
        %3156 = vst.msk [vmem:[#allocation3 + $0x4] sm:$0xf] %vm1937, %v3061
        %3157 = vst.msk [vmem:[#allocation3 + $0x10] sm:$0xf] %vm1937, %v3063
        %3158 = vst.msk [vmem:[#allocation3 + $0x1c] sm:$0xf] %vm1937, %v3065
        %3159 = vst.msk [vmem:[#allocation3 + $0x28] sm:$0xf] %vm1937, %v3067
        %3160 = vst.msk [vmem:[#allocation3 + $0x34] sm:$0xf] %vm1937, %v3069
        %3161 = vst.msk [vmem:[#allocation3 + $0x40] sm:$0xf] %vm1937, %v3071
        %3162 = vst.msk [vmem:[#allocation3 + $0x4c] sm:$0xf] %vm1937, %v3073
        %3163 = vst.msk [vmem:[#allocation3 + $0x58] sm:$0xf] %vm1937, %v3075
        %3164 = vst.msk [vmem:[#allocation3 + $0x64] sm:$0xf] %vm1937, %v3077
        %3165 = vst.msk [vmem:[#allocation3 + $0x70] sm:$0xf] %vm1937, %v3079
        %3166 = vst.msk [vmem:[#allocation3 + $0x7c] sm:$0xf] %vm1937, %v3081
        %3167 = vst.msk [vmem:[#allocation3 + $0x88] sm:$0xf] %vm1937, %v3083
        %3168 = vst.msk [vmem:[#allocation3 + $0x94] sm:$0xf] %vm1937, %v3085
        %3169 = vst.msk [vmem:[#allocation3 + $0xa0] sm:$0xf] %vm1937, %v3087
        %3170 = vst.msk [vmem:[#allocation3 + $0xac] sm:$0xf] %vm1937, %v3089
        %3171 = vst.msk [vmem:[#allocation3 + $0xb8] sm:$0xf] %vm1937, %v3091
        %3172 = vst.msk [vmem:[#allocation3 + $0xc4] sm:$0xf] %vm1937, %v3093
        %3173 = vst.msk [vmem:[#allocation3 + $0xd0] sm:$0xf] %vm1937, %v3095
        %3174 = vst.msk [vmem:[#allocation3 + $0xdc] sm:$0xf] %vm1937, %v3097
        %3175 = vst.msk [vmem:[#allocation3 + $0xe8] sm:$0xf] %vm1937, %v3099
        %3176 = vst.msk [vmem:[#allocation3 + $0xf4] sm:$0xf] %vm1937, %v3101
        %3177 = vst.msk [vmem:[#allocation3 + $0x100] sm:$0xf] %vm1937, %v3103
        %3178 = vst.msk [vmem:[#allocation3 + $0x10c] sm:$0xf] %vm1937, %v3105
        %3179 = vst.msk [vmem:[#allocation3 + $0x118] sm:$0xf] %vm1937, %v3107
        %3180 = vst.msk [vmem:[#allocation3 + $0x124] sm:$0xf] %vm1937, %v3109
        %3181 = vst.msk [vmem:[#allocation3 + $0x130] sm:$0xf] %vm1937, %v3111
        %3182 = vst.msk [vmem:[#allocation3 + $0x13c] sm:$0xf] %vm1937, %v3113
        %3183 = vst.msk [vmem:[#allocation3 + $0x148] sm:$0xf] %vm1937, %v3115
        %3184 = vst.msk [vmem:[#allocation3 + $0x154] sm:$0xf] %vm1937, %v3117
        %3185 = vst.msk [vmem:[#allocation3 + $0x160] sm:$0xf] %vm1937, %v3119
        %3186 = vst.msk [vmem:[#allocation3 + $0x16c] sm:$0xf] %vm1937, %v3121
        %3187 = vst.msk [vmem:[#allocation3 + $0x178] sm:$0xf] %vm1937, %v3123
        %v3188 = vld [vmem:[%s2995] sm:$0xf]
        %v3189 = vld [vmem:[%s2995 + $0x4] sm:$0xf]
        %v3190 = vld [vmem:[%s2995 + $0x8] sm:$0x1]
        %v3191 = vld [vmem:[%s2995 + $0xc] sm:$0xf]
        %v3192 = vld [vmem:[%s2995 + $0x10] sm:$0xf]
        %v3193 = vld [vmem:[%s2995 + $0x14] sm:$0x1]
        %v3194 = vld [vmem:[%s2995 + $0x18] sm:$0xf]
        %v3195 = vld [vmem:[%s2995 + $0x1c] sm:$0xf]
        %v3196 = vld [vmem:[%s2995 + $0x20] sm:$0x1]
        %v3197 = vld [vmem:[%s2995 + $0x24] sm:$0xf]
        %v3198 = vld [vmem:[%s2995 + $0x28] sm:$0xf]
        %v3199 = vld [vmem:[%s2995 + $0x2c] sm:$0x1]
        %v3200 = vld [vmem:[%s2995 + $0x30] sm:$0xf]
        %v3201 = vld [vmem:[%s2995 + $0x34] sm:$0xf]
        %v3202 = vld [vmem:[%s2995 + $0x38] sm:$0x1]
        %v3203 = vld [vmem:[%s2995 + $0x3c] sm:$0xf]
        %v3204 = vld [vmem:[%s2995 + $0x40] sm:$0xf]
        %v3205 = vld [vmem:[%s2995 + $0x44] sm:$0x1]
        %v3206 = vld [vmem:[%s2995 + $0x48] sm:$0xf]
        %v3207 = vld [vmem:[%s2995 + $0x4c] sm:$0xf]
        %v3208 = vld [vmem:[%s2995 + $0x50] sm:$0x1]
        %v3209 = vld [vmem:[%s2995 + $0x54] sm:$0xf]
        %v3210 = vld [vmem:[%s2995 + $0x58] sm:$0xf]
        %v3211 = vld [vmem:[%s2995 + $0x5c] sm:$0x1]
        %v3212 = vld [vmem:[%s2995 + $0x60] sm:$0xf]
        %v3213 = vld [vmem:[%s2995 + $0x64] sm:$0xf]
        %v3214 = vld [vmem:[%s2995 + $0x68] sm:$0x1]
        %v3215 = vld [vmem:[%s2995 + $0x6c] sm:$0xf]
        %v3216 = vld [vmem:[%s2995 + $0x70] sm:$0xf]
        %v3217 = vld [vmem:[%s2995 + $0x74] sm:$0x1]
        %v3218 = vld [vmem:[%s2995 + $0x78] sm:$0xf]
        %v3219 = vld [vmem:[%s2995 + $0x7c] sm:$0xf]
        %v3220 = vld [vmem:[%s2995 + $0x80] sm:$0x1]
        %v3221 = vld [vmem:[%s2995 + $0x84] sm:$0xf]
        %v3222 = vld [vmem:[%s2995 + $0x88] sm:$0xf]
        %v3223 = vld [vmem:[%s2995 + $0x8c] sm:$0x1]
        %v3224 = vld [vmem:[%s2995 + $0x90] sm:$0xf]
        %v3225 = vld [vmem:[%s2995 + $0x94] sm:$0xf]
        %v3226 = vld [vmem:[%s2995 + $0x98] sm:$0x1]
        %v3227 = vld [vmem:[%s2995 + $0x9c] sm:$0xf]
        %v3228 = vld [vmem:[%s2995 + $0xa0] sm:$0xf]
        %v3229 = vld [vmem:[%s2995 + $0xa4] sm:$0x1]
        %v3230 = vld [vmem:[%s2995 + $0xa8] sm:$0xf]
        %v3231 = vld [vmem:[%s2995 + $0xac] sm:$0xf]
        %v3232 = vld [vmem:[%s2995 + $0xb0] sm:$0x1]
        %v3233 = vld [vmem:[%s2995 + $0xb4] sm:$0xf]
        %v3234 = vld [vmem:[%s2995 + $0xb8] sm:$0xf]
        %v3235 = vld [vmem:[%s2995 + $0xbc] sm:$0x1]
        %v3237 = vshrl.u32 %v3188, 16
        %v3239 = vrot.slane %v3237, 4
        %v3240 = vshll.u32 %v3188, 16
        %v3242 = vrot.slane %v3240, 5
        %v3243 = vor.u32 %v3239, %v3242
        %v3244 = vrot.slane %v3243, 4
        %v3246 = vshll.u32 %v3189, 16
        %v3248 = vrot.slane %v3246, 5
        %v3249 = vsel %vm1116, %v3244, %v3248
        %v3250 = vshrl.u32 %v3189, 16
        %v3252 = vrot.slane %v3250, 4
        %v3253 = vor.u32 %v3252, %v3248
        %v3254 = vrot.slane %v3253, 4
        %v3256 = vshll.u32 %v3190, 16
        %v3258 = vrot.slane %v3256, 5
        %v3259 = vsel %vm1116, %v3254, %v3258
        %v3261 = vshrl.u32 %v3191, 16
        %v3263 = vrot.slane %v3261, 4
        %v3264 = vshll.u32 %v3191, 16
        %v3266 = vrot.slane %v3264, 5
        %v3267 = vor.u32 %v3263, %v3266
        %v3268 = vrot.slane %v3267, 4
        %v3270 = vshll.u32 %v3192, 16
        %v3272 = vrot.slane %v3270, 5
        %v3273 = vsel %vm1116, %v3268, %v3272
        %v3274 = vshrl.u32 %v3192, 16
        %v3276 = vrot.slane %v3274, 4
        %v3277 = vor.u32 %v3276, %v3272
        %v3278 = vrot.slane %v3277, 4
        %v3280 = vshll.u32 %v3193, 16
        %v3282 = vrot.slane %v3280, 5
        %v3283 = vsel %vm1116, %v3278, %v3282
        %v3285 = vshrl.u32 %v3194, 16
        %v3287 = vrot.slane %v3285, 4
        %v3288 = vshll.u32 %v3194, 16
        %v3290 = vrot.slane %v3288, 5
        %v3291 = vor.u32 %v3287, %v3290
        %v3292 = vrot.slane %v3291, 4
        %v3294 = vshll.u32 %v3195, 16
        %v3296 = vrot.slane %v3294, 5
        %v3297 = vsel %vm1116, %v3292, %v3296
        %v3298 = vshrl.u32 %v3195, 16
        %v3300 = vrot.slane %v3298, 4
        %v3301 = vor.u32 %v3300, %v3296
        %v3302 = vrot.slane %v3301, 4
        %v3304 = vshll.u32 %v3196, 16
        %v3306 = vrot.slane %v3304, 5
        %v3307 = vsel %vm1116, %v3302, %v3306
        %v3309 = vshrl.u32 %v3197, 16
        %v3311 = vrot.slane %v3309, 4
        %v3312 = vshll.u32 %v3197, 16
        %v3314 = vrot.slane %v3312, 5
        %v3315 = vor.u32 %v3311, %v3314
        %v3316 = vrot.slane %v3315, 4
        %v3318 = vshll.u32 %v3198, 16
        %v3320 = vrot.slane %v3318, 5
        %v3321 = vsel %vm1116, %v3316, %v3320
        %v3322 = vshrl.u32 %v3198, 16
        %v3324 = vrot.slane %v3322, 4
        %v3325 = vor.u32 %v3324, %v3320
        %v3326 = vrot.slane %v3325, 4
        %v3328 = vshll.u32 %v3199, 16
        %v3330 = vrot.slane %v3328, 5
        %v3331 = vsel %vm1116, %v3326, %v3330
        %v3333 = vshrl.u32 %v3200, 16
        %v3335 = vrot.slane %v3333, 4
        %v3336 = vshll.u32 %v3200, 16
        %v3338 = vrot.slane %v3336, 5
        %v3339 = vor.u32 %v3335, %v3338
        %v3340 = vrot.slane %v3339, 4
        %v3342 = vshll.u32 %v3201, 16
        %v3344 = vrot.slane %v3342, 5
        %v3345 = vsel %vm1116, %v3340, %v3344
        %v3346 = vshrl.u32 %v3201, 16
        %v3348 = vrot.slane %v3346, 4
        %v3349 = vor.u32 %v3348, %v3344
        %v3350 = vrot.slane %v3349, 4
        %v3352 = vshll.u32 %v3202, 16
        %v3354 = vrot.slane %v3352, 5
        %v3355 = vsel %vm1116, %v3350, %v3354
        %v3357 = vshrl.u32 %v3203, 16
        %v3359 = vrot.slane %v3357, 4
        %v3360 = vshll.u32 %v3203, 16
        %v3362 = vrot.slane %v3360, 5
        %v3363 = vor.u32 %v3359, %v3362
        %v3364 = vrot.slane %v3363, 4
        %v3366 = vshll.u32 %v3204, 16
        %v3368 = vrot.slane %v3366, 5
        %v3369 = vsel %vm1116, %v3364, %v3368
        %v3370 = vshrl.u32 %v3204, 16
        %v3372 = vrot.slane %v3370, 4
        %v3373 = vor.u32 %v3372, %v3368
        %v3374 = vrot.slane %v3373, 4
        %v3376 = vshll.u32 %v3205, 16
        %v3378 = vrot.slane %v3376, 5
        %v3379 = vsel %vm1116, %v3374, %v3378
        %v3381 = vshrl.u32 %v3206, 16
        %v3383 = vrot.slane %v3381, 4
        %v3384 = vshll.u32 %v3206, 16
        %v3386 = vrot.slane %v3384, 5
        %v3387 = vor.u32 %v3383, %v3386
        %v3388 = vrot.slane %v3387, 4
        %v3390 = vshll.u32 %v3207, 16
        %v3392 = vrot.slane %v3390, 5
        %v3393 = vsel %vm1116, %v3388, %v3392
        %v3394 = vshrl.u32 %v3207, 16
        %v3396 = vrot.slane %v3394, 4
        %v3397 = vor.u32 %v3396, %v3392
        %v3398 = vrot.slane %v3397, 4
        %v3400 = vshll.u32 %v3208, 16
        %v3402 = vrot.slane %v3400, 5
        %v3403 = vsel %vm1116, %v3398, %v3402
        %v3405 = vshrl.u32 %v3209, 16
        %v3407 = vrot.slane %v3405, 4
        %v3408 = vshll.u32 %v3209, 16
        %v3410 = vrot.slane %v3408, 5
        %v3411 = vor.u32 %v3407, %v3410
        %v3412 = vrot.slane %v3411, 4
        %v3414 = vshll.u32 %v3210, 16
        %v3416 = vrot.slane %v3414, 5
        %v3417 = vsel %vm1116, %v3412, %v3416
        %v3418 = vshrl.u32 %v3210, 16
        %v3420 = vrot.slane %v3418, 4
        %v3421 = vor.u32 %v3420, %v3416
        %v3422 = vrot.slane %v3421, 4
        %v3424 = vshll.u32 %v3211, 16
        %v3426 = vrot.slane %v3424, 5
        %v3427 = vsel %vm1116, %v3422, %v3426
        %v3429 = vshrl.u32 %v3212, 16
        %v3431 = vrot.slane %v3429, 4
        %v3432 = vshll.u32 %v3212, 16
        %v3434 = vrot.slane %v3432, 5
        %v3435 = vor.u32 %v3431, %v3434
        %v3436 = vrot.slane %v3435, 4
        %v3438 = vshll.u32 %v3213, 16
        %v3440 = vrot.slane %v3438, 5
        %v3441 = vsel %vm1116, %v3436, %v3440
        %v3442 = vshrl.u32 %v3213, 16
        %v3444 = vrot.slane %v3442, 4
        %v3445 = vor.u32 %v3444, %v3440
        %v3446 = vrot.slane %v3445, 4
        %v3448 = vshll.u32 %v3214, 16
        %v3450 = vrot.slane %v3448, 5
        %v3451 = vsel %vm1116, %v3446, %v3450
        %v3453 = vshrl.u32 %v3215, 16
        %v3455 = vrot.slane %v3453, 4
        %v3456 = vshll.u32 %v3215, 16
        %v3458 = vrot.slane %v3456, 5
        %v3459 = vor.u32 %v3455, %v3458
        %v3460 = vrot.slane %v3459, 4
        %v3462 = vshll.u32 %v3216, 16
        %v3464 = vrot.slane %v3462, 5
        %v3465 = vsel %vm1116, %v3460, %v3464
        %v3466 = vshrl.u32 %v3216, 16
        %v3468 = vrot.slane %v3466, 4
        %v3469 = vor.u32 %v3468, %v3464
        %v3470 = vrot.slane %v3469, 4
        %v3472 = vshll.u32 %v3217, 16
        %v3474 = vrot.slane %v3472, 5
        %v3475 = vsel %vm1116, %v3470, %v3474
        %v3477 = vshrl.u32 %v3218, 16
        %v3479 = vrot.slane %v3477, 4
        %v3480 = vshll.u32 %v3218, 16
        %v3482 = vrot.slane %v3480, 5
        %v3483 = vor.u32 %v3479, %v3482
        %v3484 = vrot.slane %v3483, 4
        %v3486 = vshll.u32 %v3219, 16
        %v3488 = vrot.slane %v3486, 5
        %v3489 = vsel %vm1116, %v3484, %v3488
        %v3490 = vshrl.u32 %v3219, 16
        %v3492 = vrot.slane %v3490, 4
        %v3493 = vor.u32 %v3492, %v3488
        %v3494 = vrot.slane %v3493, 4
        %v3496 = vshll.u32 %v3220, 16
        %v3498 = vrot.slane %v3496, 5
        %v3499 = vsel %vm1116, %v3494, %v3498
        %v3501 = vshrl.u32 %v3221, 16
        %v3503 = vrot.slane %v3501, 4
        %v3504 = vshll.u32 %v3221, 16
        %v3506 = vrot.slane %v3504, 5
        %v3507 = vor.u32 %v3503, %v3506
        %v3508 = vrot.slane %v3507, 4
        %v3510 = vshll.u32 %v3222, 16
        %v3512 = vrot.slane %v3510, 5
        %v3513 = vsel %vm1116, %v3508, %v3512
        %v3514 = vshrl.u32 %v3222, 16
        %v3516 = vrot.slane %v3514, 4
        %v3517 = vor.u32 %v3516, %v3512
        %v3518 = vrot.slane %v3517, 4
        %v3520 = vshll.u32 %v3223, 16
        %v3522 = vrot.slane %v3520, 5
        %v3523 = vsel %vm1116, %v3518, %v3522
        %v3525 = vshrl.u32 %v3224, 16
        %v3527 = vrot.slane %v3525, 4
        %v3528 = vshll.u32 %v3224, 16
        %v3530 = vrot.slane %v3528, 5
        %v3531 = vor.u32 %v3527, %v3530
        %v3532 = vrot.slane %v3531, 4
        %v3534 = vshll.u32 %v3225, 16
        %v3536 = vrot.slane %v3534, 5
        %v3537 = vsel %vm1116, %v3532, %v3536
        %v3538 = vshrl.u32 %v3225, 16
        %v3540 = vrot.slane %v3538, 4
        %v3541 = vor.u32 %v3540, %v3536
        %v3542 = vrot.slane %v3541, 4
        %v3544 = vshll.u32 %v3226, 16
        %v3546 = vrot.slane %v3544, 5
        %v3547 = vsel %vm1116, %v3542, %v3546
        %v3549 = vshrl.u32 %v3227, 16
        %v3551 = vrot.slane %v3549, 4
        %v3552 = vshll.u32 %v3227, 16
        %v3554 = vrot.slane %v3552, 5
        %v3555 = vor.u32 %v3551, %v3554
        %v3556 = vrot.slane %v3555, 4
        %v3558 = vshll.u32 %v3228, 16
        %v3560 = vrot.slane %v3558, 5
        %v3561 = vsel %vm1116, %v3556, %v3560
        %v3562 = vshrl.u32 %v3228, 16
        %v3564 = vrot.slane %v3562, 4
        %v3565 = vor.u32 %v3564, %v3560
        %v3566 = vrot.slane %v3565, 4
        %v3568 = vshll.u32 %v3229, 16
        %v3570 = vrot.slane %v3568, 5
        %v3571 = vsel %vm1116, %v3566, %v3570
        %v3573 = vshrl.u32 %v3230, 16
        %v3575 = vrot.slane %v3573, 4
        %v3576 = vshll.u32 %v3230, 16
        %v3578 = vrot.slane %v3576, 5
        %v3579 = vor.u32 %v3575, %v3578
        %v3580 = vrot.slane %v3579, 4
        %v3582 = vshll.u32 %v3231, 16
        %v3584 = vrot.slane %v3582, 5
        %v3585 = vsel %vm1116, %v3580, %v3584
        %v3586 = vshrl.u32 %v3231, 16
        %v3588 = vrot.slane %v3586, 4
        %v3589 = vor.u32 %v3588, %v3584
        %v3590 = vrot.slane %v3589, 4
        %v3592 = vshll.u32 %v3232, 16
        %v3594 = vrot.slane %v3592, 5
        %v3595 = vsel %vm1116, %v3590, %v3594
        %v3597 = vshrl.u32 %v3233, 16
        %v3599 = vrot.slane %v3597, 4
        %v3600 = vshll.u32 %v3233, 16
        %v3602 = vrot.slane %v3600, 5
        %v3603 = vor.u32 %v3599, %v3602
        %v3604 = vrot.slane %v3603, 4
        %v3606 = vshll.u32 %v3234, 16
        %v3608 = vrot.slane %v3606, 5
        %v3609 = vsel %vm1116, %v3604, %v3608
        %v3610 = vshrl.u32 %v3234, 16
        %v3612 = vrot.slane %v3610, 4
        %v3613 = vor.u32 %v3612, %v3608
        %v3614 = vrot.slane %v3613, 4
        %v3616 = vshll.u32 %v3235, 16
        %v3618 = vrot.slane %v3616, 5
        %v3619 = vsel %vm1116, %v3614, %v3618
        %3620 = vrot.lane.b32.xlu0 %v3249, 96
        %v3621 = vpop.permute.xlu0 %3620
        %3622 = vrot.lane.b32.xlu0 %v3259, 96
        %v3623 = vpop.permute.xlu0 %3622
        %3624 = vrot.lane.b32.xlu0 %v3273, 96
        %v3625 = vpop.permute.xlu0 %3624
        %3626 = vrot.lane.b32.xlu0 %v3283, 96
        %v3627 = vpop.permute.xlu0 %3626
        %3628 = vrot.lane.b32.xlu0 %v3297, 96
        %v3629 = vpop.permute.xlu0 %3628
        %3630 = vrot.lane.b32.xlu0 %v3307, 96
        %v3631 = vpop.permute.xlu0 %3630
        %3632 = vrot.lane.b32.xlu0 %v3321, 96
        %v3633 = vpop.permute.xlu0 %3632
        %3634 = vrot.lane.b32.xlu0 %v3331, 96
        %v3635 = vpop.permute.xlu0 %3634
        %3636 = vrot.lane.b32.xlu0 %v3345, 96
        %v3637 = vpop.permute.xlu0 %3636
        %3638 = vrot.lane.b32.xlu0 %v3355, 96
        %v3639 = vpop.permute.xlu0 %3638
        %3640 = vrot.lane.b32.xlu0 %v3369, 96
        %v3641 = vpop.permute.xlu0 %3640
        %3642 = vrot.lane.b32.xlu0 %v3379, 96
        %v3643 = vpop.permute.xlu0 %3642
        %3644 = vrot.lane.b32.xlu0 %v3393, 96
        %v3645 = vpop.permute.xlu0 %3644
        %3646 = vrot.lane.b32.xlu0 %v3403, 96
        %v3647 = vpop.permute.xlu0 %3646
        %3648 = vrot.lane.b32.xlu0 %v3417, 96
        %v3649 = vpop.permute.xlu0 %3648
        %3650 = vrot.lane.b32.xlu0 %v3427, 96
        %v3651 = vpop.permute.xlu0 %3650
        %3652 = vrot.lane.b32.xlu0 %v3441, 96
        %v3653 = vpop.permute.xlu0 %3652
        %3654 = vrot.lane.b32.xlu0 %v3451, 96
        %v3655 = vpop.permute.xlu0 %3654
        %3656 = vrot.lane.b32.xlu0 %v3465, 96
        %v3657 = vpop.permute.xlu0 %3656
        %3658 = vrot.lane.b32.xlu0 %v3475, 96
        %v3659 = vpop.permute.xlu0 %3658
        %3660 = vrot.lane.b32.xlu0 %v3489, 96
        %v3661 = vpop.permute.xlu0 %3660
        %3662 = vrot.lane.b32.xlu0 %v3499, 96
        %v3663 = vpop.permute.xlu0 %3662
        %3664 = vrot.lane.b32.xlu0 %v3513, 96
        %v3665 = vpop.permute.xlu0 %3664
        %3666 = vrot.lane.b32.xlu0 %v3523, 96
        %v3667 = vpop.permute.xlu0 %3666
        %3668 = vrot.lane.b32.xlu0 %v3537, 96
        %v3669 = vpop.permute.xlu0 %3668
        %3670 = vrot.lane.b32.xlu0 %v3547, 96
        %v3671 = vpop.permute.xlu0 %3670
        %3672 = vrot.lane.b32.xlu0 %v3561, 96
        %v3673 = vpop.permute.xlu0 %3672
        %3674 = vrot.lane.b32.xlu0 %v3571, 96
        %v3675 = vpop.permute.xlu0 %3674
        %3676 = vrot.lane.b32.xlu0 %v3585, 96
        %v3677 = vpop.permute.xlu0 %3676
        %3678 = vrot.lane.b32.xlu0 %v3595, 96
        %v3679 = vpop.permute.xlu0 %3678
        %3680 = vrot.lane.b32.xlu0 %v3609, 96
        %v3681 = vpop.permute.xlu0 %3680
        %3682 = vrot.lane.b32.xlu0 %v3619, 96
        %v3683 = vpop.permute.xlu0 %3682
        %3716 = vst.msk [vmem:[#allocation3 + $0x4] sm:$0xf] %vm2130, %v3621
        %3717 = vst.msk [vmem:[#allocation3 + $0x10] sm:$0xf] %vm2130, %v3623
        %3718 = vst.msk [vmem:[#allocation3 + $0x1c] sm:$0xf] %vm2130, %v3625
        %3719 = vst.msk [vmem:[#allocation3 + $0x28] sm:$0xf] %vm2130, %v3627
        %3720 = vst.msk [vmem:[#allocation3 + $0x34] sm:$0xf] %vm2130, %v3629
        %3721 = vst.msk [vmem:[#allocation3 + $0x40] sm:$0xf] %vm2130, %v3631
        %3722 = vst.msk [vmem:[#allocation3 + $0x4c] sm:$0xf] %vm2130, %v3633
        %3723 = vst.msk [vmem:[#allocation3 + $0x58] sm:$0xf] %vm2130, %v3635
        %3724 = vst.msk [vmem:[#allocation3 + $0x64] sm:$0xf] %vm2130, %v3637
        %3725 = vst.msk [vmem:[#allocation3 + $0x70] sm:$0xf] %vm2130, %v3639
        %3726 = vst.msk [vmem:[#allocation3 + $0x7c] sm:$0xf] %vm2130, %v3641
        %3727 = vst.msk [vmem:[#allocation3 + $0x88] sm:$0xf] %vm2130, %v3643
        %3728 = vst.msk [vmem:[#allocation3 + $0x94] sm:$0xf] %vm2130, %v3645
        %3729 = vst.msk [vmem:[#allocation3 + $0xa0] sm:$0xf] %vm2130, %v3647
        %3730 = vst.msk [vmem:[#allocation3 + $0xac] sm:$0xf] %vm2130, %v3649
        %3731 = vst.msk [vmem:[#allocation3 + $0xb8] sm:$0xf] %vm2130, %v3651
        %3732 = vst.msk [vmem:[#allocation3 + $0xc4] sm:$0xf] %vm2130, %v3653
        %3733 = vst.msk [vmem:[#allocation3 + $0xd0] sm:$0xf] %vm2130, %v3655
        %3734 = vst.msk [vmem:[#allocation3 + $0xdc] sm:$0xf] %vm2130, %v3657
        %3735 = vst.msk [vmem:[#allocation3 + $0xe8] sm:$0xf] %vm2130, %v3659
        %3736 = vst.msk [vmem:[#allocation3 + $0xf4] sm:$0xf] %vm2130, %v3661
        %3737 = vst.msk [vmem:[#allocation3 + $0x100] sm:$0xf] %vm2130, %v3663
        %3738 = vst.msk [vmem:[#allocation3 + $0x10c] sm:$0xf] %vm2130, %v3665
        %3739 = vst.msk [vmem:[#allocation3 + $0x118] sm:$0xf] %vm2130, %v3667
        %3740 = vst.msk [vmem:[#allocation3 + $0x124] sm:$0xf] %vm2130, %v3669
        %3741 = vst.msk [vmem:[#allocation3 + $0x130] sm:$0xf] %vm2130, %v3671
        %3742 = vst.msk [vmem:[#allocation3 + $0x13c] sm:$0xf] %vm2130, %v3673
        %3743 = vst.msk [vmem:[#allocation3 + $0x148] sm:$0xf] %vm2130, %v3675
        %3744 = vst.msk [vmem:[#allocation3 + $0x154] sm:$0xf] %vm2130, %v3677
        %3745 = vst.msk [vmem:[#allocation3 + $0x160] sm:$0xf] %vm2130, %v3679
        %3746 = vst.msk [vmem:[#allocation3 + $0x16c] sm:$0xf] %vm2130, %v3681
        %3747 = vst.msk [vmem:[#allocation3 + $0x178] sm:$0xf] %vm2130, %v3683
        %v3748 = vld [vmem:[%s2995] sm:$0xe]
        %v3749 = vld [vmem:[%s2995 + $0x4] sm:$0xf]
        %v3750 = vld [vmem:[%s2995 + $0x8] sm:$0x1]
        %v3751 = vld [vmem:[%s2995 + $0xc] sm:$0xe]
        %v3752 = vld [vmem:[%s2995 + $0x10] sm:$0xf]
        %v3753 = vld [vmem:[%s2995 + $0x14] sm:$0x1]
        %v3754 = vld [vmem:[%s2995 + $0x18] sm:$0xe]
        %v3755 = vld [vmem:[%s2995 + $0x1c] sm:$0xf]
        %v3756 = vld [vmem:[%s2995 + $0x20] sm:$0x1]
        %v3757 = vld [vmem:[%s2995 + $0x24] sm:$0xe]
        %v3758 = vld [vmem:[%s2995 + $0x28] sm:$0xf]
        %v3759 = vld [vmem:[%s2995 + $0x2c] sm:$0x1]
        %v3760 = vld [vmem:[%s2995 + $0x30] sm:$0xe]
        %v3761 = vld [vmem:[%s2995 + $0x34] sm:$0xf]
        %v3762 = vld [vmem:[%s2995 + $0x38] sm:$0x1]
        %v3763 = vld [vmem:[%s2995 + $0x3c] sm:$0xe]
        %v3764 = vld [vmem:[%s2995 + $0x40] sm:$0xf]
        %v3765 = vld [vmem:[%s2995 + $0x44] sm:$0x1]
        %v3766 = vld [vmem:[%s2995 + $0x48] sm:$0xe]
        %v3767 = vld [vmem:[%s2995 + $0x4c] sm:$0xf]
        %v3768 = vld [vmem:[%s2995 + $0x50] sm:$0x1]
        %v3769 = vld [vmem:[%s2995 + $0x54] sm:$0xe]
        %v3770 = vld [vmem:[%s2995 + $0x58] sm:$0xf]
        %v3771 = vld [vmem:[%s2995 + $0x5c] sm:$0x1]
        %v3772 = vld [vmem:[%s2995 + $0x60] sm:$0xe]
        %v3773 = vld [vmem:[%s2995 + $0x64] sm:$0xf]
        %v3774 = vld [vmem:[%s2995 + $0x68] sm:$0x1]
        %v3775 = vld [vmem:[%s2995 + $0x6c] sm:$0xe]
        %v3776 = vld [vmem:[%s2995 + $0x70] sm:$0xf]
        %v3777 = vld [vmem:[%s2995 + $0x74] sm:$0x1]
        %v3778 = vld [vmem:[%s2995 + $0x78] sm:$0xe]
        %v3779 = vld [vmem:[%s2995 + $0x7c] sm:$0xf]
        %v3780 = vld [vmem:[%s2995 + $0x80] sm:$0x1]
        %v3781 = vld [vmem:[%s2995 + $0x84] sm:$0xe]
        %v3782 = vld [vmem:[%s2995 + $0x88] sm:$0xf]
        %v3783 = vld [vmem:[%s2995 + $0x8c] sm:$0x1]
        %v3784 = vld [vmem:[%s2995 + $0x90] sm:$0xe]
        %v3785 = vld [vmem:[%s2995 + $0x94] sm:$0xf]
        %v3786 = vld [vmem:[%s2995 + $0x98] sm:$0x1]
        %v3787 = vld [vmem:[%s2995 + $0x9c] sm:$0xe]
        %v3788 = vld [vmem:[%s2995 + $0xa0] sm:$0xf]
        %v3789 = vld [vmem:[%s2995 + $0xa4] sm:$0x1]
        %v3790 = vld [vmem:[%s2995 + $0xa8] sm:$0xe]
        %v3791 = vld [vmem:[%s2995 + $0xac] sm:$0xf]
        %v3792 = vld [vmem:[%s2995 + $0xb0] sm:$0x1]
        %v3793 = vld [vmem:[%s2995 + $0xb4] sm:$0xe]
        %v3794 = vld [vmem:[%s2995 + $0xb8] sm:$0xf]
        %v3795 = vld [vmem:[%s2995 + $0xbc] sm:$0x1]
        %v3844 = vrot.slane %v3748, 5
        %v3845 = vrot.slane %v3844, 4
        %v3846 = vrot.slane %v3749, 5
        %v3847 = vsel %vm1728, %v3845, %v3846
        %v3848 = vrot.slane %v3846, 4
        %v3849 = vrot.slane %v3750, 5
        %v3850 = vsel %vm1728, %v3848, %v3849
        %v3851 = vrot.slane %v3751, 5
        %v3852 = vrot.slane %v3851, 4
        %v3853 = vrot.slane %v3752, 5
        %v3854 = vsel %vm1728, %v3852, %v3853
        %v3855 = vrot.slane %v3853, 4
        %v3856 = vrot.slane %v3753, 5
        %v3857 = vsel %vm1728, %v3855, %v3856
        %v3858 = vrot.slane %v3754, 5
        %v3859 = vrot.slane %v3858, 4
        %v3860 = vrot.slane %v3755, 5
        %v3861 = vsel %vm1728, %v3859, %v3860
        %v3862 = vrot.slane %v3860, 4
        %v3863 = vrot.slane %v3756, 5
        %v3864 = vsel %vm1728, %v3862, %v3863
        %v3865 = vrot.slane %v3757, 5
        %v3866 = vrot.slane %v3865, 4
        %v3867 = vrot.slane %v3758, 5
        %v3868 = vsel %vm1728, %v3866, %v3867
        %v3869 = vrot.slane %v3867, 4
        %v3870 = vrot.slane %v3759, 5
        %v3871 = vsel %vm1728, %v3869, %v3870
        %v3872 = vrot.slane %v3760, 5
        %v3873 = vrot.slane %v3872, 4
        %v3874 = vrot.slane %v3761, 5
        %v3875 = vsel %vm1728, %v3873, %v3874
        %v3876 = vrot.slane %v3874, 4
        %v3877 = vrot.slane %v3762, 5
        %v3878 = vsel %vm1728, %v3876, %v3877
        %v3879 = vrot.slane %v3763, 5
        %v3880 = vrot.slane %v3879, 4
        %v3881 = vrot.slane %v3764, 5
        %v3882 = vsel %vm1728, %v3880, %v3881
        %v3883 = vrot.slane %v3881, 4
        %v3884 = vrot.slane %v3765, 5
        %v3885 = vsel %vm1728, %v3883, %v3884
        %v3886 = vrot.slane %v3766, 5
        %v3887 = vrot.slane %v3886, 4
        %v3888 = vrot.slane %v3767, 5
        %v3889 = vsel %vm1728, %v3887, %v3888
        %v3890 = vrot.slane %v3888, 4
        %v3891 = vrot.slane %v3768, 5
        %v3892 = vsel %vm1728, %v3890, %v3891
        %v3893 = vrot.slane %v3769, 5
        %v3894 = vrot.slane %v3893, 4
        %v3895 = vrot.slane %v3770, 5
        %v3896 = vsel %vm1728, %v3894, %v3895
        %v3897 = vrot.slane %v3895, 4
        %v3898 = vrot.slane %v3771, 5
        %v3899 = vsel %vm1728, %v3897, %v3898
        %v3900 = vrot.slane %v3772, 5
        %v3901 = vrot.slane %v3900, 4
        %v3902 = vrot.slane %v3773, 5
        %v3903 = vsel %vm1728, %v3901, %v3902
        %v3904 = vrot.slane %v3902, 4
        %v3905 = vrot.slane %v3774, 5
        %v3906 = vsel %vm1728, %v3904, %v3905
        %v3907 = vrot.slane %v3775, 5
        %v3908 = vrot.slane %v3907, 4
        %v3909 = vrot.slane %v3776, 5
        %v3910 = vsel %vm1728, %v3908, %v3909
        %v3911 = vrot.slane %v3909, 4
        %v3912 = vrot.slane %v3777, 5
        %v3913 = vsel %vm1728, %v3911, %v3912
        %v3914 = vrot.slane %v3778, 5
        %v3915 = vrot.slane %v3914, 4
        %v3916 = vrot.slane %v3779, 5
        %v3917 = vsel %vm1728, %v3915, %v3916
        %v3918 = vrot.slane %v3916, 4
        %v3919 = vrot.slane %v3780, 5
        %v3920 = vsel %vm1728, %v3918, %v3919
        %v3921 = vrot.slane %v3781, 5
        %v3922 = vrot.slane %v3921, 4
        %v3923 = vrot.slane %v3782, 5
        %v3924 = vsel %vm1728, %v3922, %v3923
        %v3925 = vrot.slane %v3923, 4
        %v3926 = vrot.slane %v3783, 5
        %v3927 = vsel %vm1728, %v3925, %v3926
        %v3928 = vrot.slane %v3784, 5
        %v3929 = vrot.slane %v3928, 4
        %v3930 = vrot.slane %v3785, 5
        %v3931 = vsel %vm1728, %v3929, %v3930
        %v3932 = vrot.slane %v3930, 4
        %v3933 = vrot.slane %v3786, 5
        %v3934 = vsel %vm1728, %v3932, %v3933
        %v3935 = vrot.slane %v3787, 5
        %v3936 = vrot.slane %v3935, 4
        %v3937 = vrot.slane %v3788, 5
        %v3938 = vsel %vm1728, %v3936, %v3937
        %v3939 = vrot.slane %v3937, 4
        %v3940 = vrot.slane %v3789, 5
        %v3941 = vsel %vm1728, %v3939, %v3940
        %v3942 = vrot.slane %v3790, 5
        %v3943 = vrot.slane %v3942, 4
        %v3944 = vrot.slane %v3791, 5
        %v3945 = vsel %vm1728, %v3943, %v3944
        %v3946 = vrot.slane %v3944, 4
        %v3947 = vrot.slane %v3792, 5
        %v3948 = vsel %vm1728, %v3946, %v3947
        %v3949 = vrot.slane %v3793, 5
        %v3950 = vrot.slane %v3949, 4
        %v3951 = vrot.slane %v3794, 5
        %v3952 = vsel %vm1728, %v3950, %v3951
        %v3953 = vrot.slane %v3951, 4
        %v3954 = vrot.slane %v3795, 5
        %v3955 = vsel %vm1728, %v3953, %v3954
        %3988 = vst.msk [vmem:[#allocation3 + $0x8] sm:$0xf] %vm890, %v3847
        %3989 = vst.msk [vmem:[#allocation3 + $0x14] sm:$0xf] %vm890, %v3850
        %3990 = vst.msk [vmem:[#allocation3 + $0x20] sm:$0xf] %vm890, %v3854
        %3991 = vst.msk [vmem:[#allocation3 + $0x2c] sm:$0xf] %vm890, %v3857
        %3992 = vst.msk [vmem:[#allocation3 + $0x38] sm:$0xf] %vm890, %v3861
        %3993 = vst.msk [vmem:[#allocation3 + $0x44] sm:$0xf] %vm890, %v3864
        %3994 = vst.msk [vmem:[#allocation3 + $0x50] sm:$0xf] %vm890, %v3868
        %3995 = vst.msk [vmem:[#allocation3 + $0x5c] sm:$0xf] %vm890, %v3871
        %3996 = vst.msk [vmem:[#allocation3 + $0x68] sm:$0xf] %vm890, %v3875
        %3997 = vst.msk [vmem:[#allocation3 + $0x74] sm:$0xf] %vm890, %v3878
        %3998 = vst.msk [vmem:[#allocation3 + $0x80] sm:$0xf] %vm890, %v3882
        %3999 = vst.msk [vmem:[#allocation3 + $0x8c] sm:$0xf] %vm890, %v3885
        %4000 = vst.msk [vmem:[#allocation3 + $0x98] sm:$0xf] %vm890, %v3889
        %4001 = vst.msk [vmem:[#allocation3 + $0xa4] sm:$0xf] %vm890, %v3892
        %4002 = vst.msk [vmem:[#allocation3 + $0xb0] sm:$0xf] %vm890, %v3896
        %4003 = vst.msk [vmem:[#allocation3 + $0xbc] sm:$0xf] %vm890, %v3899
        %4004 = vst.msk [vmem:[#allocation3 + $0xc8] sm:$0xf] %vm890, %v3903
        %4005 = vst.msk [vmem:[#allocation3 + $0xd4] sm:$0xf] %vm890, %v3906
        %4006 = vst.msk [vmem:[#allocation3 + $0xe0] sm:$0xf] %vm890, %v3910
        %4007 = vst.msk [vmem:[#allocation3 + $0xec] sm:$0xf] %vm890, %v3913
        %4008 = vst.msk [vmem:[#allocation3 + $0xf8] sm:$0xf] %vm890, %v3917
        %4009 = vst.msk [vmem:[#allocation3 + $0x104] sm:$0xf] %vm890, %v3920
        %4010 = vst.msk [vmem:[#allocation3 + $0x110] sm:$0xf] %vm890, %v3924
        %4011 = vst.msk [vmem:[#allocation3 + $0x11c] sm:$0xf] %vm890, %v3927
        %4012 = vst.msk [vmem:[#allocation3 + $0x128] sm:$0xf] %vm890, %v3931
        %4013 = vst.msk [vmem:[#allocation3 + $0x134] sm:$0xf] %vm890, %v3934
        %4014 = vst.msk [vmem:[#allocation3 + $0x140] sm:$0xf] %vm890, %v3938
        %4015 = vst.msk [vmem:[#allocation3 + $0x14c] sm:$0xf] %vm890, %v3941
        %4016 = vst.msk [vmem:[#allocation3 + $0x158] sm:$0xf] %vm890, %v3945
        %4017 = vst.msk [vmem:[#allocation3 + $0x164] sm:$0xf] %vm890, %v3948
        %4018 = vst.msk [vmem:[#allocation3 + $0x170] sm:$0xf] %vm890, %v3952
        %4019 = vst.msk [vmem:[#allocation3 + $0x17c] sm:$0xf] %vm890, %v3955
        %v4020 = vld [vmem:[#allocation3] sm:$0xff]
        %v4021 = vld [vmem:[#allocation3 + $0x8] sm:$0xf]
        %v4022 = vld [vmem:[#allocation3 + $0xc] sm:$0xff]
        %v4023 = vld [vmem:[#allocation3 + $0x14] sm:$0xf]
        %v4024 = vld [vmem:[#allocation3 + $0x18] sm:$0xff]
        %v4025 = vld [vmem:[#allocation3 + $0x20] sm:$0xf]
        %v4026 = vld [vmem:[#allocation3 + $0x24] sm:$0xff]
        %v4027 = vld [vmem:[#allocation3 + $0x2c] sm:$0xf]
        %v4028 = vld [vmem:[#allocation3 + $0x30] sm:$0xff]
        %v4029 = vld [vmem:[#allocation3 + $0x38] sm:$0xf]
        %v4030 = vld [vmem:[#allocation3 + $0x3c] sm:$0xff]
        %v4031 = vld [vmem:[#allocation3 + $0x44] sm:$0xf]
        %v4032 = vld [vmem:[#allocation3 + $0x48] sm:$0xff]
        %v4033 = vld [vmem:[#allocation3 + $0x50] sm:$0xf]
        %v4034 = vld [vmem:[#allocation3 + $0x54] sm:$0xff]
        %v4035 = vld [vmem:[#allocation3 + $0x5c] sm:$0xf]
        %v4036 = vld [vmem:[#allocation3 + $0x60] sm:$0xff]
        %v4037 = vld [vmem:[#allocation3 + $0x68] sm:$0xf]
        %v4038 = vld [vmem:[#allocation3 + $0x6c] sm:$0xff]
        %v4039 = vld [vmem:[#allocation3 + $0x74] sm:$0xf]
        %v4040 = vld [vmem:[#allocation3 + $0x78] sm:$0xff]
        %v4041 = vld [vmem:[#allocation3 + $0x80] sm:$0xf]
        %v4042 = vld [vmem:[#allocation3 + $0x84] sm:$0xff]
        %v4043 = vld [vmem:[#allocation3 + $0x8c] sm:$0xf]
        %v4044 = vld [vmem:[#allocation3 + $0x90] sm:$0xff]
        %v4045 = vld [vmem:[#allocation3 + $0x98] sm:$0xf]
        %v4046 = vld [vmem:[#allocation3 + $0x9c] sm:$0xff]
        %v4047 = vld [vmem:[#allocation3 + $0xa4] sm:$0xf]
        %v4048 = vld [vmem:[#allocation3 + $0xa8] sm:$0xff]
        %v4049 = vld [vmem:[#allocation3 + $0xb0] sm:$0xf]
        %v4050 = vld [vmem:[#allocation3 + $0xb4] sm:$0xff]
        %v4051 = vld [vmem:[#allocation3 + $0xbc] sm:$0xf]
        %v4052 = vld [vmem:[#allocation3 + $0xc0] sm:$0xff]
        %v4053 = vld [vmem:[#allocation3 + $0xc8] sm:$0xf]
        %v4054 = vld [vmem:[#allocation3 + $0xcc] sm:$0xff]
        %v4055 = vld [vmem:[#allocation3 + $0xd4] sm:$0xf]
        %v4056 = vld [vmem:[#allocation3 + $0xd8] sm:$0xff]
        %v4057 = vld [vmem:[#allocation3 + $0xe0] sm:$0xf]
        %v4058 = vld [vmem:[#allocation3 + $0xe4] sm:$0xff]
        %v4059 = vld [vmem:[#allocation3 + $0xec] sm:$0xf]
        %v4060 = vld [vmem:[#allocation3 + $0xf0] sm:$0xff]
        %v4061 = vld [vmem:[#allocation3 + $0xf8] sm:$0xf]
        %v4062 = vld [vmem:[#allocation3 + $0xfc] sm:$0xff]
        %v4063 = vld [vmem:[#allocation3 + $0x104] sm:$0xf]
        %v4064 = vld [vmem:[#allocation3 + $0x108] sm:$0xff]
        %v4065 = vld [vmem:[#allocation3 + $0x110] sm:$0xf]
        %v4066 = vld [vmem:[#allocation3 + $0x114] sm:$0xff]
        %v4067 = vld [vmem:[#allocation3 + $0x11c] sm:$0xf]
        %v4068 = vld [vmem:[#allocation3 + $0x120] sm:$0xff]
        %v4069 = vld [vmem:[#allocation3 + $0x128] sm:$0xf]
        %v4070 = vld [vmem:[#allocation3 + $0x12c] sm:$0xff]
        %v4071 = vld [vmem:[#allocation3 + $0x134] sm:$0xf]
        %v4072 = vld [vmem:[#allocation3 + $0x138] sm:$0xff]
        %v4073 = vld [vmem:[#allocation3 + $0x140] sm:$0xf]
        %v4074 = vld [vmem:[#allocation3 + $0x144] sm:$0xff]
        %v4075 = vld [vmem:[#allocation3 + $0x14c] sm:$0xf]
        %v4076 = vld [vmem:[#allocation3 + $0x150] sm:$0xff]
        %v4077 = vld [vmem:[#allocation3 + $0x158] sm:$0xf]
        %v4078 = vld [vmem:[#allocation3 + $0x15c] sm:$0xff]
        %v4079 = vld [vmem:[#allocation3 + $0x164] sm:$0xf]
        %v4080 = vld [vmem:[#allocation3 + $0x168] sm:$0xff]
        %v4081 = vld [vmem:[#allocation3 + $0x170] sm:$0xf]
        %v4082 = vld [vmem:[#allocation3 + $0x174] sm:$0xff]
        %v4083 = vld [vmem:[#allocation3 + $0x17c] sm:$0xf]
        %v4084 = vld [vmem:[%s1] sm:$0xf]
        %v4085 = vld [vmem:[%s1 + $0x4] sm:$0xf]
        %v4086 = vld [vmem:[%s1 + $0x8] sm:$0xf]
        %v4087 = vld [vmem:[%s1 + $0xc] sm:$0xf]
        %v4088 = vld [vmem:[%s1 + $0x10] sm:$0xf]
        %v4089 = vld [vmem:[%s1 + $0x14] sm:$0xf]
        %v4090 = vld [vmem:[%s1 + $0x18] sm:$0xf]
        %v4091 = vld [vmem:[%s1 + $0x1c] sm:$0xf]
        %v4092 = vld [vmem:[%s1 + $0x20] sm:$0xf]
        %v4093 = vld [vmem:[%s1 + $0x24] sm:$0xf]
        %v4094 = vld [vmem:[%s1 + $0x28] sm:$0xf]
        %v4095 = vld [vmem:[%s1 + $0x2c] sm:$0xf]
        %v4096 = vld [vmem:[%s1 + $0x30] sm:$0xf]
        %v4097 = vld [vmem:[%s1 + $0x34] sm:$0xf]
        %v4098 = vld [vmem:[%s1 + $0x38] sm:$0xf]
        %v4099 = vld [vmem:[%s1 + $0x3c] sm:$0xf]
        %v4100 = vld [vmem:[%s1 + $0x40] sm:$0xf]
        %v4101 = vld [vmem:[%s1 + $0x44] sm:$0xf]
        %v4102 = vld [vmem:[%s1 + $0x48] sm:$0xf]
        %v4103 = vld [vmem:[%s1 + $0x4c] sm:$0xf]
        %v4104 = vld [vmem:[%s1 + $0x50] sm:$0xf]
        %v4105 = vld [vmem:[%s1 + $0x54] sm:$0xf]
        %v4106 = vld [vmem:[%s1 + $0x58] sm:$0xf]
        %v4107 = vld [vmem:[%s1 + $0x5c] sm:$0xf]
        %v4108 = vld [vmem:[%s1 + $0x60] sm:$0xf]
        %v4109 = vld [vmem:[%s1 + $0x64] sm:$0xf]
        %v4110 = vld [vmem:[%s1 + $0x68] sm:$0xf]
        %v4111 = vld [vmem:[%s1 + $0x6c] sm:$0xf]
        %v4112 = vld [vmem:[%s1 + $0x70] sm:$0xf]
        %v4113 = vld [vmem:[%s1 + $0x74] sm:$0xf]
        %v4114 = vld [vmem:[%s1 + $0x78] sm:$0xf]
        %v4115 = vld [vmem:[%s1 + $0x7c] sm:$0xf]
        %v4116 = vld [vmem:[%s1 + $0x80] sm:$0xf]
        %v4117 = vld [vmem:[%s1 + $0x84] sm:$0xf]
        %v4118 = vld [vmem:[%s1 + $0x88] sm:$0xf]
        %v4119 = vld [vmem:[%s1 + $0x8c] sm:$0xf]
        %v4120 = vld [vmem:[%s2] sm:$0x1]
        %v4122 = vlaneseq
        %v4123 = vshrl.u32 %v4122, 7
        %v4124 = vsub.s32 0, %v4123
        %v4125 = vrot.slane %v4120, %v4124
        %v4191 = vunpack.c.l.b16 %v4020
        %v4192 = vunpack.c.h.b16 %v4020
        %v4193 = vunpack.c.l.b16 %v4021
        %v4194 = vunpack.c.l.b16 %v4022
        %v4195 = vunpack.c.h.b16 %v4022
        %v4196 = vunpack.c.l.b16 %v4023
        %v4197 = vunpack.c.l.b16 %v4024
        %v4198 = vunpack.c.h.b16 %v4024
        %v4199 = vunpack.c.l.b16 %v4025
        %v4200 = vunpack.c.l.b16 %v4026
        %v4201 = vunpack.c.h.b16 %v4026
        %v4202 = vunpack.c.l.b16 %v4027
        %v4203 = vunpack.c.l.b16 %v4028
        %v4204 = vunpack.c.h.b16 %v4028
        %v4205 = vunpack.c.l.b16 %v4029
        %v4206 = vunpack.c.l.b16 %v4030
        %v4207 = vunpack.c.h.b16 %v4030
        %v4208 = vunpack.c.l.b16 %v4031
        %v4209 = vunpack.c.l.b16 %v4032
        %v4210 = vunpack.c.h.b16 %v4032
        %v4211 = vunpack.c.l.b16 %v4033
        %v4212 = vunpack.c.l.b16 %v4034
        %v4213 = vunpack.c.h.b16 %v4034
        %v4214 = vunpack.c.l.b16 %v4035
        %v4215 = vunpack.c.l.b16 %v4036
        %v4216 = vunpack.c.h.b16 %v4036
        %v4217 = vunpack.c.l.b16 %v4037
        %v4218 = vunpack.c.l.b16 %v4038
        %v4219 = vunpack.c.h.b16 %v4038
        %v4220 = vunpack.c.l.b16 %v4039
        %v4221 = vunpack.c.l.b16 %v4040
        %v4222 = vunpack.c.h.b16 %v4040
        %v4223 = vunpack.c.l.b16 %v4041
        %v4224 = vunpack.c.l.b16 %v4042
        %v4225 = vunpack.c.h.b16 %v4042
        %v4226 = vunpack.c.l.b16 %v4043
        %v4227 = vunpack.c.l.b16 %v4044
        %v4228 = vunpack.c.h.b16 %v4044
        %v4229 = vunpack.c.l.b16 %v4045
        %v4230 = vunpack.c.l.b16 %v4046
        %v4231 = vunpack.c.h.b16 %v4046
        %v4232 = vunpack.c.l.b16 %v4047
        %v4233 = vunpack.c.l.b16 %v4048
        %v4234 = vunpack.c.h.b16 %v4048
        %v4235 = vunpack.c.l.b16 %v4049
        %v4236 = vunpack.c.l.b16 %v4050
        %v4237 = vunpack.c.h.b16 %v4050
        %v4238 = vunpack.c.l.b16 %v4051
        %v4239 = vunpack.c.l.b16 %v4052
        %v4240 = vunpack.c.h.b16 %v4052
        %v4241 = vunpack.c.l.b16 %v4053
        %v4242 = vunpack.c.l.b16 %v4054
        %v4243 = vunpack.c.h.b16 %v4054
        %v4244 = vunpack.c.l.b16 %v4055
        %v4245 = vunpack.c.l.b16 %v4056
        %v4246 = vunpack.c.h.b16 %v4056
        %v4247 = vunpack.c.l.b16 %v4057
        %v4248 = vunpack.c.l.b16 %v4058
        %v4249 = vunpack.c.h.b16 %v4058
        %v4250 = vunpack.c.l.b16 %v4059
        %v4251 = vunpack.c.l.b16 %v4060
        %v4252 = vunpack.c.h.b16 %v4060
        %v4253 = vunpack.c.l.b16 %v4061
        %v4254 = vunpack.c.l.b16 %v4062
        %v4255 = vunpack.c.h.b16 %v4062
        %v4256 = vunpack.c.l.b16 %v4063
        %v4257 = vunpack.c.l.b16 %v4064
        %v4258 = vunpack.c.h.b16 %v4064
        %v4259 = vunpack.c.l.b16 %v4065
        %v4260 = vunpack.c.l.b16 %v4066
        %v4261 = vunpack.c.h.b16 %v4066
        %v4262 = vunpack.c.l.b16 %v4067
        %v4263 = vunpack.c.l.b16 %v4068
        %v4264 = vunpack.c.h.b16 %v4068
        %v4265 = vunpack.c.l.b16 %v4069
        %v4266 = vunpack.c.l.b16 %v4070
        %v4267 = vunpack.c.h.b16 %v4070
        %v4268 = vunpack.c.l.b16 %v4071
        %v4269 = vunpack.c.l.b16 %v4072
        %v4270 = vunpack.c.h.b16 %v4072
        %v4271 = vunpack.c.l.b16 %v4073
        %v4272 = vunpack.c.l.b16 %v4074
        %v4273 = vunpack.c.h.b16 %v4074
        %v4274 = vunpack.c.l.b16 %v4075
        %v4275 = vunpack.c.l.b16 %v4076
        %v4276 = vunpack.c.h.b16 %v4076
        %v4277 = vunpack.c.l.b16 %v4077
        %v4278 = vunpack.c.l.b16 %v4078
        %v4279 = vunpack.c.h.b16 %v4078
        %v4280 = vunpack.c.l.b16 %v4079
        %v4281 = vunpack.c.l.b16 %v4080
        %v4282 = vunpack.c.h.b16 %v4080
        %v4283 = vunpack.c.l.b16 %v4081
        %v4284 = vunpack.c.l.b16 %v4082
        %v4285 = vunpack.c.h.b16 %v4082
        %v4286 = vunpack.c.l.b16 %v4083
        %v4287 = vpack.c.b16 %v4194, %v4191
        %v4288 = vpack.c.b16 %v4195, %v4192
        %v4289 = vpack.c.b16 %v4196, %v4193
        %v4290 = vpack.c.b16 %v4200, %v4197
        %v4291 = vpack.c.b16 %v4201, %v4198
        %v4292 = vpack.c.b16 %v4202, %v4199
        %v4293 = vpack.c.b16 %v4206, %v4203
        %v4294 = vpack.c.b16 %v4207, %v4204
        %v4295 = vpack.c.b16 %v4208, %v4205
        %v4296 = vpack.c.b16 %v4212, %v4209
        %v4297 = vpack.c.b16 %v4213, %v4210
        %v4298 = vpack.c.b16 %v4214, %v4211
        %v4299 = vpack.c.b16 %v4218, %v4215
        %v4300 = vpack.c.b16 %v4219, %v4216
        %v4301 = vpack.c.b16 %v4220, %v4217
        %v4302 = vpack.c.b16 %v4224, %v4221
        %v4303 = vpack.c.b16 %v4225, %v4222
        %v4304 = vpack.c.b16 %v4226, %v4223
        %v4305 = vpack.c.b16 %v4230, %v4227
        %v4306 = vpack.c.b16 %v4231, %v4228
        %v4307 = vpack.c.b16 %v4232, %v4229
        %v4308 = vpack.c.b16 %v4236, %v4233
        %v4309 = vpack.c.b16 %v4237, %v4234
        %v4310 = vpack.c.b16 %v4238, %v4235
        %v4311 = vpack.c.b16 %v4242, %v4239
        %v4312 = vpack.c.b16 %v4243, %v4240
        %v4313 = vpack.c.b16 %v4244, %v4241
        %v4314 = vpack.c.b16 %v4248, %v4245
        %v4315 = vpack.c.b16 %v4249, %v4246
        %v4316 = vpack.c.b16 %v4250, %v4247
        %v4317 = vpack.c.b16 %v4254, %v4251
        %v4318 = vpack.c.b16 %v4255, %v4252
        %v4319 = vpack.c.b16 %v4256, %v4253
        %v4320 = vpack.c.b16 %v4260, %v4257
        %v4321 = vpack.c.b16 %v4261, %v4258
        %v4322 = vpack.c.b16 %v4262, %v4259
        %v4323 = vpack.c.b16 %v4266, %v4263
        %v4324 = vpack.c.b16 %v4267, %v4264
        %v4325 = vpack.c.b16 %v4268, %v4265
        %v4326 = vpack.c.b16 %v4272, %v4269
        %v4327 = vpack.c.b16 %v4273, %v4270
        %v4328 = vpack.c.b16 %v4274, %v4271
        %v4329 = vpack.c.b16 %v4278, %v4275
        %v4330 = vpack.c.b16 %v4279, %v4276
        %v4331 = vpack.c.b16 %v4280, %v4277
        %v4332 = vpack.c.b16 %v4284, %v4281
        %v4333 = vpack.c.b16 %v4285, %v4282
        %v4334 = vpack.c.b16 %v4286, %v4283
        %v4403 = vunpack.c.l.b16 %v4084
        %v4404 = vunpack.c.l.b16 %v4085
        %v4405 = vunpack.c.l.b16 %v4086
        %v4406 = vunpack.c.l.b16 %v4087
        %v4407 = vunpack.c.l.b16 %v4088
        %v4408 = vunpack.c.l.b16 %v4089
        %v4409 = vunpack.c.l.b16 %v4090
        %v4410 = vunpack.c.l.b16 %v4091
        %v4411 = vunpack.c.l.b16 %v4092
        %v4412 = vunpack.c.l.b16 %v4093
        %v4413 = vunpack.c.l.b16 %v4094
        %v4414 = vunpack.c.l.b16 %v4095
        %v4415 = vunpack.c.l.b16 %v4096
        %v4416 = vunpack.c.l.b16 %v4097
        %v4417 = vunpack.c.l.b16 %v4098
        %v4418 = vunpack.c.l.b16 %v4099
        %v4419 = vunpack.c.l.b16 %v4100
        %v4420 = vunpack.c.l.b16 %v4101
        %v4421 = vunpack.c.l.b16 %v4102
        %v4422 = vunpack.c.l.b16 %v4103
        %v4423 = vunpack.c.l.b16 %v4104
        %v4424 = vunpack.c.l.b16 %v4105
        %v4425 = vunpack.c.l.b16 %v4106
        %v4426 = vunpack.c.l.b16 %v4107
        %v4427 = vunpack.c.l.b16 %v4108
        %v4428 = vunpack.c.l.b16 %v4109
        %v4429 = vunpack.c.l.b16 %v4110
        %v4430 = vunpack.c.l.b16 %v4111
        %v4431 = vunpack.c.l.b16 %v4112
        %v4432 = vunpack.c.l.b16 %v4113
        %v4433 = vunpack.c.l.b16 %v4114
        %v4434 = vunpack.c.l.b16 %v4115
        %v4435 = vunpack.c.l.b16 %v4116
        %v4436 = vunpack.c.l.b16 %v4117
        %v4437 = vunpack.c.l.b16 %v4118
        %v4438 = vunpack.c.l.b16 %v4119
        %v4439 = vpack.c.b16 %v4404, %v4403
        %v4440 = vpack.c.b16 %v4406, %v4405
        %v4441 = vpack.c.b16 %v4408, %v4407
        %v4442 = vpack.c.b16 %v4410, %v4409
        %v4443 = vpack.c.b16 %v4412, %v4411
        %v4444 = vpack.c.b16 %v4414, %v4413
        %v4445 = vpack.c.b16 %v4416, %v4415
        %v4446 = vpack.c.b16 %v4418, %v4417
        %v4447 = vpack.c.b16 %v4420, %v4419
        %v4448 = vpack.c.b16 %v4422, %v4421
        %v4449 = vpack.c.b16 %v4424, %v4423
        %v4450 = vpack.c.b16 %v4426, %v4425
        %v4451 = vpack.c.b16 %v4428, %v4427
        %v4452 = vpack.c.b16 %v4430, %v4429
        %v4453 = vpack.c.b16 %v4432, %v4431
        %v4454 = vpack.c.b16 %v4434, %v4433
        %v4455 = vpack.c.b16 %v4436, %v4435
        %v4456 = vpack.c.b16 %v4438, %v4437
        %vm4475 = vcmask 261120
        %v4477 = vsel %vm4475, %v4289, 0
        %v4480 = vsel %vm4475, %v4292, 0
        %v4483 = vsel %vm4475, %v4295, 0
        %v4486 = vsel %vm4475, %v4298, 0
        %v4489 = vsel %vm4475, %v4301, 0
        %v4492 = vsel %vm4475, %v4304, 0
        %v4495 = vsel %vm4475, %v4307, 0
        %v4498 = vsel %vm4475, %v4310, 0
        %v4501 = vsel %vm4475, %v4313, 0
        %v4504 = vsel %vm4475, %v4316, 0
        %v4507 = vsel %vm4475, %v4319, 0
        %v4510 = vsel %vm4475, %v4322, 0
        %v4513 = vsel %vm4475, %v4325, 0
        %v4516 = vsel %vm4475, %v4328, 0
        %v4519 = vsel %vm4475, %v4331, 0
        %v4522 = vsel %vm4475, %v4334, 0
        %4524 = vmatprep.subr.bf16.mxu0 0
        %4525 = vmatpush1.bf16.msra.mxu0 %v4446
        %4526 = vmatprep.subr.bf16.mxu0 0
        %4527 = vmatpush1.bf16.msra.mxu0 %v4445
        %4528 = vmatprep.subr.bf16.mxu0 0
        %4529 = vmatpush1.bf16.msra.mxu0 %v4444
        %4530 = vmatprep.subr.bf16.mxu0 0
        %4531 = vmatpush1.bf16.msra.mxu0 %v4443
        %4532 = vmatprep.subr.bf16.mxu0 0
        %4533 = vmatpush1.bf16.msra.mxu0 %v4442
        %4534 = vmatprep.subr.bf16.mxu0 0
        %4535 = vmatpush1.bf16.msra.mxu0 %v4441
        %4536 = vmatprep.subr.bf16.mxu0 0
        %4537 = vmatpush1.bf16.msra.mxu0 %v4440
        %4538 = vmatprep.subr.bf16.mxu0 0
        %4539 = vmatpush1.bf16.msra.mxu0 %v4439
        %4540 = vmatprep.subr.bf16.mxu0 0
        %4541 = vmatpush2.bf16.msra.mxu0 %v4454
        %4542 = vmatprep.subr.bf16.mxu0 0
        %4543 = vmatpush2.bf16.msra.mxu0 %v4453
        %4544 = vmatprep.subr.bf16.mxu0 0
        %4545 = vmatpush2.bf16.msra.mxu0 %v4452
        %4546 = vmatprep.subr.bf16.mxu0 0
        %4547 = vmatpush2.bf16.msra.mxu0 %v4451
        %4548 = vmatprep.subr.bf16.mxu0 0
        %4549 = vmatpush2.bf16.msra.mxu0 %v4450
        %4550 = vmatprep.subr.bf16.mxu0 0
        %4551 = vmatpush2.bf16.msra.mxu0 %v4449
        %4552 = vmatprep.subr.bf16.mxu0 0
        %4553 = vmatpush2.bf16.msra.mxu0 %v4448
        %4554 = vmatprep.subr.bf16.mxu0 0
        %4555 = vmatpush2.bf16.msra.mxu0 %v4447
        %4556 = vmatprep.mubr.bf16.mxu0 %v4288
        %4557 = vmatmul.mubr.bf16.gmra.mxu0 %v4287
        %v4558 = vpop.f32.mrf.mxu0
        %v4559 = vadd.f32 %v4125, %v4558
        %v4560 = vpop.f32.mrf.mxu0
        %v4561 = vpop.f32.mrf.mxu0
        %v4562 = vadd.f32 %v4125, %v4561
        %v4563 = vpop.f32.mrf.mxu0
        %4564 = vmatprep.mubr.bf16.mxu0 %v4291
        %4565 = vmatmul.mubr.bf16.gmra.mxu0 %v4290
        %v4566 = vpop.f32.mrf.mxu0
        %v4567 = vadd.f32 %v4125, %v4566
        %v4568 = vpop.f32.mrf.mxu0
        %v4569 = vpop.f32.mrf.mxu0
        %v4570 = vadd.f32 %v4125, %v4569
        %v4571 = vpop.f32.mrf.mxu0
        %4572 = vmatprep.mubr.bf16.mxu0 %v4294
        %4573 = vmatmul.mubr.bf16.gmra.mxu0 %v4293
        %v4574 = vpop.f32.mrf.mxu0
        %v4575 = vadd.f32 %v4125, %v4574
        %v4576 = vpop.f32.mrf.mxu0
        %v4577 = vpop.f32.mrf.mxu0
        %v4578 = vadd.f32 %v4125, %v4577
        %v4579 = vpop.f32.mrf.mxu0
        %4580 = vmatprep.mubr.bf16.mxu0 %v4297
        %4581 = vmatmul.mubr.bf16.gmra.mxu0 %v4296
        %v4582 = vpop.f32.mrf.mxu0
        %v4583 = vadd.f32 %v4125, %v4582
        %v4584 = vpop.f32.mrf.mxu0
        %v4585 = vpop.f32.mrf.mxu0
        %v4586 = vadd.f32 %v4125, %v4585
        %v4587 = vpop.f32.mrf.mxu0
        %4588 = vmatprep.mubr.bf16.mxu0 %v4300
        %4589 = vmatmul.mubr.bf16.gmra.mxu0 %v4299
        %v4590 = vpop.f32.mrf.mxu0
        %v4591 = vadd.f32 %v4125, %v4590
        %v4592 = vpop.f32.mrf.mxu0
        %v4593 = vpop.f32.mrf.mxu0
        %v4594 = vadd.f32 %v4125, %v4593
        %v4595 = vpop.f32.mrf.mxu0
        %4596 = vmatprep.mubr.bf16.mxu0 %v4303
        %4597 = vmatmul.mubr.bf16.gmra.mxu0 %v4302
        %v4598 = vpop.f32.mrf.mxu0
        %v4599 = vadd.f32 %v4125, %v4598
        %v4600 = vpop.f32.mrf.mxu0
        %v4601 = vpop.f32.mrf.mxu0
        %v4602 = vadd.f32 %v4125, %v4601
        %v4603 = vpop.f32.mrf.mxu0
        %4604 = vmatprep.mubr.bf16.mxu0 %v4306
        %4605 = vmatmul.mubr.bf16.gmra.mxu0 %v4305
        %v4606 = vpop.f32.mrf.mxu0
        %v4607 = vadd.f32 %v4125, %v4606
        %v4608 = vpop.f32.mrf.mxu0
        %v4609 = vpop.f32.mrf.mxu0
        %v4610 = vadd.f32 %v4125, %v4609
        %v4611 = vpop.f32.mrf.mxu0
        %4612 = vmatprep.mubr.bf16.mxu0 %v4309
        %4613 = vmatmul.mubr.bf16.gmra.mxu0 %v4308
        %v4614 = vpop.f32.mrf.mxu0
        %v4615 = vadd.f32 %v4125, %v4614
        %v4616 = vpop.f32.mrf.mxu0
        %v4617 = vpop.f32.mrf.mxu0
        %v4618 = vadd.f32 %v4125, %v4617
        %v4619 = vpop.f32.mrf.mxu0
        %4620 = vmatprep.mubr.bf16.mxu0 %v4312
        %4621 = vmatmul.mubr.bf16.gmra.mxu0 %v4311
        %v4622 = vpop.f32.mrf.mxu0
        %v4623 = vadd.f32 %v4125, %v4622
        %v4624 = vpop.f32.mrf.mxu0
        %v4625 = vpop.f32.mrf.mxu0
        %v4626 = vadd.f32 %v4125, %v4625
        %v4627 = vpop.f32.mrf.mxu0
        %4628 = vmatprep.mubr.bf16.mxu0 %v4315
        %4629 = vmatmul.mubr.bf16.gmra.mxu0 %v4314
        %v4630 = vpop.f32.mrf.mxu0
        %v4631 = vadd.f32 %v4125, %v4630
        %v4632 = vpop.f32.mrf.mxu0
        %v4633 = vpop.f32.mrf.mxu0
        %v4634 = vadd.f32 %v4125, %v4633
        %v4635 = vpop.f32.mrf.mxu0
        %4636 = vmatprep.mubr.bf16.mxu0 %v4318
        %4637 = vmatmul.mubr.bf16.gmra.mxu0 %v4317
        %v4638 = vpop.f32.mrf.mxu0
        %v4639 = vadd.f32 %v4125, %v4638
        %v4640 = vpop.f32.mrf.mxu0
        %v4641 = vpop.f32.mrf.mxu0
        %v4642 = vadd.f32 %v4125, %v4641
        %v4643 = vpop.f32.mrf.mxu0
        %4644 = vmatprep.mubr.bf16.mxu0 %v4321
        %4645 = vmatmul.mubr.bf16.gmra.mxu0 %v4320
        %v4646 = vpop.f32.mrf.mxu0
        %v4647 = vadd.f32 %v4125, %v4646
        %v4648 = vpop.f32.mrf.mxu0
        %v4649 = vpop.f32.mrf.mxu0
        %v4650 = vadd.f32 %v4125, %v4649
        %v4651 = vpop.f32.mrf.mxu0
        %4652 = vmatprep.mubr.bf16.mxu0 %v4324
        %4653 = vmatmul.mubr.bf16.gmra.mxu0 %v4323
        %v4654 = vpop.f32.mrf.mxu0
        %v4655 = vadd.f32 %v4125, %v4654
        %v4656 = vpop.f32.mrf.mxu0
        %v4657 = vpop.f32.mrf.mxu0
        %v4658 = vadd.f32 %v4125, %v4657
        %v4659 = vpop.f32.mrf.mxu0
        %4660 = vmatprep.mubr.bf16.mxu0 %v4327
        %4661 = vmatmul.mubr.bf16.gmra.mxu0 %v4326
        %v4662 = vpop.f32.mrf.mxu0
        %v4663 = vadd.f32 %v4125, %v4662
        %v4664 = vpop.f32.mrf.mxu0
        %v4665 = vpop.f32.mrf.mxu0
        %v4666 = vadd.f32 %v4125, %v4665
        %v4667 = vpop.f32.mrf.mxu0
        %4668 = vmatprep.mubr.bf16.mxu0 %v4330
        %4669 = vmatmul.mubr.bf16.gmra.mxu0 %v4329
        %v4670 = vpop.f32.mrf.mxu0
        %v4671 = vadd.f32 %v4125, %v4670
        %v4672 = vpop.f32.mrf.mxu0
        %v4673 = vpop.f32.mrf.mxu0
        %v4674 = vadd.f32 %v4125, %v4673
        %v4675 = vpop.f32.mrf.mxu0
        %4676 = vmatprep.mubr.bf16.mxu0 %v4333
        %4677 = vmatmul.mubr.bf16.gmra.mxu0 %v4332
        %v4678 = vpop.f32.mrf.mxu0
        %v4679 = vadd.f32 %v4125, %v4678
        %v4680 = vpop.f32.mrf.mxu0
        %v4681 = vpop.f32.mrf.mxu0
        %v4682 = vadd.f32 %v4125, %v4681
        %v4683 = vpop.f32.mrf.mxu0
        %4684 = vdwg.mxu0
        %4685 = vmatprep.subr.bf16.mxu0 0
        %4686 = vmatpush1.bf16.msra.mxu0 0
        %4687 = vmatprep.subr.bf16.mxu0 0
        %4688 = vmatpush1.bf16.msra.mxu0 0
        %4689 = vmatprep.subr.bf16.mxu0 0
        %4690 = vmatpush1.bf16.msra.mxu0 0
        %4691 = vmatprep.subr.bf16.mxu0 0
        %4692 = vmatpush1.bf16.msra.mxu0 0
        %4693 = vmatprep.subr.bf16.mxu0 0
        %4694 = vmatpush1.bf16.msra.mxu0 0
        %4695 = vmatprep.subr.bf16.mxu0 0
        %4696 = vmatpush1.bf16.msra.mxu0 0
        %4697 = vmatprep.subr.bf16.mxu0 0
        %4698 = vmatpush1.bf16.msra.mxu0 %v4456
        %4699 = vmatprep.subr.bf16.mxu0 0
        %4700 = vmatpush1.bf16.msra.mxu0 %v4455
        %4701 = vmatprep.subr.bf16.mxu0 0
        %4702 = vmatpush2.bf16.msra.mxu0 0
        %4703 = vmatprep.subr.bf16.mxu0 0
        %4704 = vmatpush2.bf16.msra.mxu0 0
        %4705 = vmatprep.subr.bf16.mxu0 0
        %4706 = vmatpush2.bf16.msra.mxu0 0
        %4707 = vmatprep.subr.bf16.mxu0 0
        %4708 = vmatpush2.bf16.msra.mxu0 0
        %4709 = vmatprep.subr.bf16.mxu0 0
        %4710 = vmatpush2.bf16.msra.mxu0 0
        %4711 = vmatprep.subr.bf16.mxu0 0
        %4712 = vmatpush2.bf16.msra.mxu0 0
        %4713 = vmatprep.subr.bf16.mxu0 0
        %4714 = vmatpush2.bf16.msra.mxu0 0
        %4715 = vmatprep.subr.bf16.mxu0 0
        %4716 = vmatpush2.bf16.msra.mxu0 0
        %4717 = vmatprep.mubr.bf16.mxu0 0
        %4718 = vmatmul.mubr.bf16.gmra.mxu0 %v4477
        %v4719 = vpop.f32.mrf.mxu0
        %v4720 = vadd.f32 %v4559, %v4719
        %v4721 = vpop.f32.mrf.mxu0
        %v4722 = vpop.f32.mrf.mxu0
        %v4723 = vadd.f32 %v4562, %v4722
        %v4724 = vpop.f32.mrf.mxu0
        %4725 = vmatprep.mubr.bf16.mxu0 0
        %4726 = vmatmul.mubr.bf16.gmra.mxu0 %v4480
        %v4727 = vpop.f32.mrf.mxu0
        %v4728 = vadd.f32 %v4567, %v4727
        %v4729 = vpop.f32.mrf.mxu0
        %v4730 = vpop.f32.mrf.mxu0
        %v4731 = vadd.f32 %v4570, %v4730
        %v4732 = vpop.f32.mrf.mxu0
        %4733 = vmatprep.mubr.bf16.mxu0 0
        %4734 = vmatmul.mubr.bf16.gmra.mxu0 %v4483
        %v4735 = vpop.f32.mrf.mxu0
        %v4736 = vadd.f32 %v4575, %v4735
        %v4737 = vpop.f32.mrf.mxu0
        %v4738 = vpop.f32.mrf.mxu0
        %v4739 = vadd.f32 %v4578, %v4738
        %v4740 = vpop.f32.mrf.mxu0
        %4741 = vmatprep.mubr.bf16.mxu0 0
        %4742 = vmatmul.mubr.bf16.gmra.mxu0 %v4486
        %v4743 = vpop.f32.mrf.mxu0
        %v4744 = vadd.f32 %v4583, %v4743
        %v4745 = vpop.f32.mrf.mxu0
        %v4746 = vpop.f32.mrf.mxu0
        %v4747 = vadd.f32 %v4586, %v4746
        %v4748 = vpop.f32.mrf.mxu0
        %4749 = vmatprep.mubr.bf16.mxu0 0
        %4750 = vmatmul.mubr.bf16.gmra.mxu0 %v4489
        %v4751 = vpop.f32.mrf.mxu0
        %v4752 = vadd.f32 %v4591, %v4751
        %v4753 = vpop.f32.mrf.mxu0
        %v4754 = vpop.f32.mrf.mxu0
        %v4755 = vadd.f32 %v4594, %v4754
        %v4756 = vpop.f32.mrf.mxu0
        %4757 = vmatprep.mubr.bf16.mxu0 0
        %4758 = vmatmul.mubr.bf16.gmra.mxu0 %v4492
        %v4759 = vpop.f32.mrf.mxu0
        %v4760 = vadd.f32 %v4599, %v4759
        %v4761 = vpop.f32.mrf.mxu0
        %v4762 = vpop.f32.mrf.mxu0
        %v4763 = vadd.f32 %v4602, %v4762
        %v4764 = vpop.f32.mrf.mxu0
        %4765 = vmatprep.mubr.bf16.mxu0 0
        %4766 = vmatmul.mubr.bf16.gmra.mxu0 %v4495
        %v4767 = vpop.f32.mrf.mxu0
        %v4768 = vadd.f32 %v4607, %v4767
        %v4769 = vpop.f32.mrf.mxu0
        %v4770 = vpop.f32.mrf.mxu0
        %v4771 = vadd.f32 %v4610, %v4770
        %v4772 = vpop.f32.mrf.mxu0
        %4773 = vmatprep.mubr.bf16.mxu0 0
        %4774 = vmatmul.mubr.bf16.gmra.mxu0 %v4498
        %v4775 = vpop.f32.mrf.mxu0
        %v4776 = vadd.f32 %v4615, %v4775
        %v4777 = vpop.f32.mrf.mxu0
        %v4778 = vpop.f32.mrf.mxu0
        %v4779 = vadd.f32 %v4618, %v4778
        %v4780 = vpop.f32.mrf.mxu0
        %4781 = vmatprep.mubr.bf16.mxu0 0
        %4782 = vmatmul.mubr.bf16.gmra.mxu0 %v4501
        %v4783 = vpop.f32.mrf.mxu0
        %v4784 = vadd.f32 %v4623, %v4783
        %v4785 = vpop.f32.mrf.mxu0
        %v4786 = vpop.f32.mrf.mxu0
        %v4787 = vadd.f32 %v4626, %v4786
        %v4788 = vpop.f32.mrf.mxu0
        %4789 = vmatprep.mubr.bf16.mxu0 0
        %4790 = vmatmul.mubr.bf16.gmra.mxu0 %v4504
        %v4791 = vpop.f32.mrf.mxu0
        %v4792 = vadd.f32 %v4631, %v4791
        %v4793 = vpop.f32.mrf.mxu0
        %v4794 = vpop.f32.mrf.mxu0
        %v4795 = vadd.f32 %v4634, %v4794
        %v4796 = vpop.f32.mrf.mxu0
        %4797 = vmatprep.mubr.bf16.mxu0 0
        %4798 = vmatmul.mubr.bf16.gmra.mxu0 %v4507
        %v4799 = vpop.f32.mrf.mxu0
        %v4800 = vadd.f32 %v4639, %v4799
        %v4801 = vpop.f32.mrf.mxu0
        %v4802 = vpop.f32.mrf.mxu0
        %v4803 = vadd.f32 %v4642, %v4802
        %v4804 = vpop.f32.mrf.mxu0
        %4805 = vmatprep.mubr.bf16.mxu0 0
        %4806 = vmatmul.mubr.bf16.gmra.mxu0 %v4510
        %v4807 = vpop.f32.mrf.mxu0
        %v4808 = vadd.f32 %v4647, %v4807
        %v4809 = vpop.f32.mrf.mxu0
        %v4810 = vpop.f32.mrf.mxu0
        %v4811 = vadd.f32 %v4650, %v4810
        %v4812 = vpop.f32.mrf.mxu0
        %4813 = vmatprep.mubr.bf16.mxu0 0
        %4814 = vmatmul.mubr.bf16.gmra.mxu0 %v4513
        %v4815 = vpop.f32.mrf.mxu0
        %v4816 = vadd.f32 %v4655, %v4815
        %v4817 = vpop.f32.mrf.mxu0
        %v4818 = vpop.f32.mrf.mxu0
        %v4819 = vadd.f32 %v4658, %v4818
        %v4820 = vpop.f32.mrf.mxu0
        %4821 = vmatprep.mubr.bf16.mxu0 0
        %4822 = vmatmul.mubr.bf16.gmra.mxu0 %v4516
        %v4823 = vpop.f32.mrf.mxu0
        %v4824 = vadd.f32 %v4663, %v4823
        %v4825 = vpop.f32.mrf.mxu0
        %v4826 = vpop.f32.mrf.mxu0
        %v4827 = vadd.f32 %v4666, %v4826
        %v4828 = vpop.f32.mrf.mxu0
        %4829 = vmatprep.mubr.bf16.mxu0 0
        %4830 = vmatmul.mubr.bf16.gmra.mxu0 %v4519
        %v4831 = vpop.f32.mrf.mxu0
        %v4832 = vadd.f32 %v4671, %v4831
        %v4833 = vpop.f32.mrf.mxu0
        %v4834 = vpop.f32.mrf.mxu0
        %v4835 = vadd.f32 %v4674, %v4834
        %v4836 = vpop.f32.mrf.mxu0
        %4837 = vmatprep.mubr.bf16.mxu0 0
        %4838 = vmatmul.mubr.bf16.gmra.mxu0 %v4522
        %v4839 = vpop.f32.mrf.mxu0
        %v4840 = vadd.f32 %v4679, %v4839
        %v4841 = vpop.f32.mrf.mxu0
        %v4842 = vpop.f32.mrf.mxu0
        %v4843 = vadd.f32 %v4682, %v4842
        %v4844 = vpop.f32.mrf.mxu0
        %4845 = vdwg.mxu0
        %v4846 = vmax.f32 %v4720, 0.0
        %v4847 = vmax.f32 %v4723, 0.0
        %v4848 = vmax.f32 %v4728, 0.0
        %v4849 = vmax.f32 %v4731, 0.0
        %v4850 = vmax.f32 %v4736, 0.0
        %v4851 = vmax.f32 %v4739, 0.0
        %v4852 = vmax.f32 %v4744, 0.0
        %v4853 = vmax.f32 %v4747, 0.0
        %v4854 = vmax.f32 %v4752, 0.0
        %v4855 = vmax.f32 %v4755, 0.0
        %v4856 = vmax.f32 %v4760, 0.0
        %v4857 = vmax.f32 %v4763, 0.0
        %v4858 = vmax.f32 %v4768, 0.0
        %v4859 = vmax.f32 %v4771, 0.0
        %v4860 = vmax.f32 %v4776, 0.0
        %v4861 = vmax.f32 %v4779, 0.0
        %v4862 = vmax.f32 %v4784, 0.0
        %v4863 = vmax.f32 %v4787, 0.0
        %v4864 = vmax.f32 %v4792, 0.0
        %v4865 = vmax.f32 %v4795, 0.0
        %v4866 = vmax.f32 %v4800, 0.0
        %v4867 = vmax.f32 %v4803, 0.0
        %v4868 = vmax.f32 %v4808, 0.0
        %v4869 = vmax.f32 %v4811, 0.0
        %v4870 = vmax.f32 %v4816, 0.0
        %v4871 = vmax.f32 %v4819, 0.0
        %v4872 = vmax.f32 %v4824, 0.0
        %v4873 = vmax.f32 %v4827, 0.0
        %v4874 = vmax.f32 %v4832, 0.0
        %v4875 = vmax.f32 %v4835, 0.0
        %v4876 = vmax.f32 %v4840, 0.0
        %v4877 = vmax.f32 %v4843, 0.0
        %v4878 = vpack.c.bf16 %v4847, %v4846
        %v4879 = vpack.c.bf16 %v4849, %v4848
        %v4880 = vpack.c.bf16 %v4851, %v4850
        %v4881 = vpack.c.bf16 %v4853, %v4852
        %v4882 = vpack.c.bf16 %v4855, %v4854
        %v4883 = vpack.c.bf16 %v4857, %v4856
        %v4884 = vpack.c.bf16 %v4859, %v4858
        %v4885 = vpack.c.bf16 %v4861, %v4860
        %v4886 = vpack.c.bf16 %v4863, %v4862
        %v4887 = vpack.c.bf16 %v4865, %v4864
        %v4888 = vpack.c.bf16 %v4867, %v4866
        %v4889 = vpack.c.bf16 %v4869, %v4868
        %v4890 = vpack.c.bf16 %v4871, %v4870
        %v4891 = vpack.c.bf16 %v4873, %v4872
        %v4892 = vpack.c.bf16 %v4875, %v4874
        %v4893 = vpack.c.bf16 %v4877, %v4876
        %v4910 = vunpack.c.l.b16 %v4878
        %v4911 = vunpack.c.h.b16 %v4878
        %v4912 = vunpack.c.l.b16 %v4879
        %v4913 = vunpack.c.h.b16 %v4879
        %v4914 = vunpack.c.l.b16 %v4880
        %v4915 = vunpack.c.h.b16 %v4880
        %v4916 = vunpack.c.l.b16 %v4881
        %v4917 = vunpack.c.h.b16 %v4881
        %v4918 = vunpack.c.l.b16 %v4882
        %v4919 = vunpack.c.h.b16 %v4882
        %v4920 = vunpack.c.l.b16 %v4883
        %v4921 = vunpack.c.h.b16 %v4883
        %v4922 = vunpack.c.l.b16 %v4884
        %v4923 = vunpack.c.h.b16 %v4884
        %v4924 = vunpack.c.l.b16 %v4885
        %v4925 = vunpack.c.h.b16 %v4885
        %v4926 = vunpack.c.l.b16 %v4886
        %v4927 = vunpack.c.h.b16 %v4886
        %v4928 = vunpack.c.l.b16 %v4887
        %v4929 = vunpack.c.h.b16 %v4887
        %v4930 = vunpack.c.l.b16 %v4888
        %v4931 = vunpack.c.h.b16 %v4888
        %v4932 = vunpack.c.l.b16 %v4889
        %v4933 = vunpack.c.h.b16 %v4889
        %v4934 = vunpack.c.l.b16 %v4890
        %v4935 = vunpack.c.h.b16 %v4890
        %v4936 = vunpack.c.l.b16 %v4891
        %v4937 = vunpack.c.h.b16 %v4891
        %v4938 = vunpack.c.l.b16 %v4892
        %v4939 = vunpack.c.h.b16 %v4892
        %v4940 = vunpack.c.l.b16 %v4893
        %v4941 = vunpack.c.h.b16 %v4893
        %v4942 = vpack.c.b16 %v4910, %v4910
        %v4943 = vpack.c.b16 %v4911, %v4911
        %v4944 = vpack.c.b16 %v4912, %v4912
        %v4945 = vpack.c.b16 %v4913, %v4913
        %v4946 = vpack.c.b16 %v4914, %v4914
        %v4947 = vpack.c.b16 %v4915, %v4915
        %v4948 = vpack.c.b16 %v4916, %v4916
        %v4949 = vpack.c.b16 %v4917, %v4917
        %v4950 = vpack.c.b16 %v4918, %v4918
        %v4951 = vpack.c.b16 %v4919, %v4919
        %v4952 = vpack.c.b16 %v4920, %v4920
        %v4953 = vpack.c.b16 %v4921, %v4921
        %v4954 = vpack.c.b16 %v4922, %v4922
        %v4955 = vpack.c.b16 %v4923, %v4923
        %v4956 = vpack.c.b16 %v4924, %v4924
        %v4957 = vpack.c.b16 %v4925, %v4925
        %v4958 = vpack.c.b16 %v4926, %v4926
        %v4959 = vpack.c.b16 %v4927, %v4927
        %v4960 = vpack.c.b16 %v4928, %v4928
        %v4961 = vpack.c.b16 %v4929, %v4929
        %v4962 = vpack.c.b16 %v4930, %v4930
        %v4963 = vpack.c.b16 %v4931, %v4931
        %v4964 = vpack.c.b16 %v4932, %v4932
        %v4965 = vpack.c.b16 %v4933, %v4933
        %v4966 = vpack.c.b16 %v4934, %v4934
        %v4967 = vpack.c.b16 %v4935, %v4935
        %v4968 = vpack.c.b16 %v4936, %v4936
        %v4969 = vpack.c.b16 %v4937, %v4937
        %v4970 = vpack.c.b16 %v4938, %v4938
        %v4971 = vpack.c.b16 %v4939, %v4939
        %v4972 = vpack.c.b16 %v4940, %v4940
        %v4973 = vpack.c.b16 %v4941, %v4941
        %v4975 = vshrl.u32 %v4942, 16
        %v4977 = vrot.slane %v4975, 7
        %v4978 = vshll.u32 %v4942, 16
        %v4980 = vor.u32 %v4977, %v4978
        %v4981 = vrot.slane %v4977, 4
        %v4983 = vshrl.u32 %v4943, 16
        %v4985 = vrot.slane %v4983, 7
        %v4986 = vshll.u32 %v4943, 16
        %v4988 = vor.u32 %v4985, %v4986
        %v4989 = vsel %vm562, %v4981, %v4988
        %v4990 = vrot.slane %v4985, 4
        %v4992 = vshrl.u32 %v4944, 16
        %v4994 = vrot.slane %v4992, 7
        %v4995 = vshll.u32 %v4944, 16
        %v4997 = vor.u32 %v4994, %v4995
        %v4998 = vrot.slane %v4994, 4
        %v5000 = vshrl.u32 %v4945, 16
        %v5002 = vrot.slane %v5000, 7
        %v5003 = vshll.u32 %v4945, 16
        %v5005 = vor.u32 %v5002, %v5003
        %v5006 = vsel %vm562, %v4998, %v5005
        %v5007 = vrot.slane %v5002, 4
        %v5009 = vshrl.u32 %v4946, 16
        %v5011 = vrot.slane %v5009, 7
        %v5012 = vshll.u32 %v4946, 16
        %v5014 = vor.u32 %v5011, %v5012
        %v5015 = vrot.slane %v5011, 4
        %v5017 = vshrl.u32 %v4947, 16
        %v5019 = vrot.slane %v5017, 7
        %v5020 = vshll.u32 %v4947, 16
        %v5022 = vor.u32 %v5019, %v5020
        %v5023 = vsel %vm562, %v5015, %v5022
        %v5024 = vrot.slane %v5019, 4
        %v5026 = vshrl.u32 %v4948, 16
        %v5028 = vrot.slane %v5026, 7
        %v5029 = vshll.u32 %v4948, 16
        %v5031 = vor.u32 %v5028, %v5029
        %v5032 = vrot.slane %v5028, 4
        %v5034 = vshrl.u32 %v4949, 16
        %v5036 = vrot.slane %v5034, 7
        %v5037 = vshll.u32 %v4949, 16
        %v5039 = vor.u32 %v5036, %v5037
        %v5040 = vsel %vm562, %v5032, %v5039
        %v5041 = vrot.slane %v5036, 4
        %v5043 = vshrl.u32 %v4950, 16
        %v5045 = vrot.slane %v5043, 7
        %v5046 = vshll.u32 %v4950, 16
        %v5048 = vor.u32 %v5045, %v5046
        %v5049 = vrot.slane %v5045, 4
        %v5051 = vshrl.u32 %v4951, 16
        %v5053 = vrot.slane %v5051, 7
        %v5054 = vshll.u32 %v4951, 16
        %v5056 = vor.u32 %v5053, %v5054
        %v5057 = vsel %vm562, %v5049, %v5056
        %v5058 = vrot.slane %v5053, 4
        %v5060 = vshrl.u32 %v4952, 16
        %v5062 = vrot.slane %v5060, 7
        %v5063 = vshll.u32 %v4952, 16
        %v5065 = vor.u32 %v5062, %v5063
        %v5066 = vrot.slane %v5062, 4
        %v5068 = vshrl.u32 %v4953, 16
        %v5070 = vrot.slane %v5068, 7
        %v5071 = vshll.u32 %v4953, 16
        %v5073 = vor.u32 %v5070, %v5071
        %v5074 = vsel %vm562, %v5066, %v5073
        %v5075 = vrot.slane %v5070, 4
        %v5077 = vshrl.u32 %v4954, 16
        %v5079 = vrot.slane %v5077, 7
        %v5080 = vshll.u32 %v4954, 16
        %v5082 = vor.u32 %v5079, %v5080
        %v5083 = vrot.slane %v5079, 4
        %v5085 = vshrl.u32 %v4955, 16
        %v5087 = vrot.slane %v5085, 7
        %v5088 = vshll.u32 %v4955, 16
        %v5090 = vor.u32 %v5087, %v5088
        %v5091 = vsel %vm562, %v5083, %v5090
        %v5092 = vrot.slane %v5087, 4
        %v5094 = vshrl.u32 %v4956, 16
        %v5096 = vrot.slane %v5094, 7
        %v5097 = vshll.u32 %v4956, 16
        %v5099 = vor.u32 %v5096, %v5097
        %v5100 = vrot.slane %v5096, 4
        %v5102 = vshrl.u32 %v4957, 16
        %v5104 = vrot.slane %v5102, 7
        %v5105 = vshll.u32 %v4957, 16
        %v5107 = vor.u32 %v5104, %v5105
        %v5108 = vsel %vm562, %v5100, %v5107
        %v5109 = vrot.slane %v5104, 4
        %v5111 = vshrl.u32 %v4958, 16
        %v5113 = vrot.slane %v5111, 7
        %v5114 = vshll.u32 %v4958, 16
        %v5116 = vor.u32 %v5113, %v5114
        %v5117 = vrot.slane %v5113, 4
        %v5119 = vshrl.u32 %v4959, 16
        %v5121 = vrot.slane %v5119, 7
        %v5122 = vshll.u32 %v4959, 16
        %v5124 = vor.u32 %v5121, %v5122
        %v5125 = vsel %vm562, %v5117, %v5124
        %v5126 = vrot.slane %v5121, 4
        %v5128 = vshrl.u32 %v4960, 16
        %v5130 = vrot.slane %v5128, 7
        %v5131 = vshll.u32 %v4960, 16
        %v5133 = vor.u32 %v5130, %v5131
        %v5134 = vrot.slane %v5130, 4
        %v5136 = vshrl.u32 %v4961, 16
        %v5138 = vrot.slane %v5136, 7
        %v5139 = vshll.u32 %v4961, 16
        %v5141 = vor.u32 %v5138, %v5139
        %v5142 = vsel %vm562, %v5134, %v5141
        %v5143 = vrot.slane %v5138, 4
        %v5145 = vshrl.u32 %v4962, 16
        %v5147 = vrot.slane %v5145, 7
        %v5148 = vshll.u32 %v4962, 16
        %v5150 = vor.u32 %v5147, %v5148
        %v5151 = vrot.slane %v5147, 4
        %v5153 = vshrl.u32 %v4963, 16
        %v5155 = vrot.slane %v5153, 7
        %v5156 = vshll.u32 %v4963, 16
        %v5158 = vor.u32 %v5155, %v5156
        %v5159 = vsel %vm562, %v5151, %v5158
        %v5160 = vrot.slane %v5155, 4
        %v5162 = vshrl.u32 %v4964, 16
        %v5164 = vrot.slane %v5162, 7
        %v5165 = vshll.u32 %v4964, 16
        %v5167 = vor.u32 %v5164, %v5165
        %v5168 = vrot.slane %v5164, 4
        %v5170 = vshrl.u32 %v4965, 16
        %v5172 = vrot.slane %v5170, 7
        %v5173 = vshll.u32 %v4965, 16
        %v5175 = vor.u32 %v5172, %v5173
        %v5176 = vsel %vm562, %v5168, %v5175
        %v5177 = vrot.slane %v5172, 4
        %v5179 = vshrl.u32 %v4966, 16
        %v5181 = vrot.slane %v5179, 7
        %v5182 = vshll.u32 %v4966, 16
        %v5184 = vor.u32 %v5181, %v5182
        %v5185 = vrot.slane %v5181, 4
        %v5187 = vshrl.u32 %v4967, 16
        %v5189 = vrot.slane %v5187, 7
        %v5190 = vshll.u32 %v4967, 16
        %v5192 = vor.u32 %v5189, %v5190
        %v5193 = vsel %vm562, %v5185, %v5192
        %v5194 = vrot.slane %v5189, 4
        %v5196 = vshrl.u32 %v4968, 16
        %v5198 = vrot.slane %v5196, 7
        %v5199 = vshll.u32 %v4968, 16
        %v5201 = vor.u32 %v5198, %v5199
        %v5202 = vrot.slane %v5198, 4
        %v5204 = vshrl.u32 %v4969, 16
        %v5206 = vrot.slane %v5204, 7
        %v5207 = vshll.u32 %v4969, 16
        %v5209 = vor.u32 %v5206, %v5207
        %v5210 = vsel %vm562, %v5202, %v5209
        %v5211 = vrot.slane %v5206, 4
        %v5213 = vshrl.u32 %v4970, 16
        %v5215 = vrot.slane %v5213, 7
        %v5216 = vshll.u32 %v4970, 16
        %v5218 = vor.u32 %v5215, %v5216
        %v5219 = vrot.slane %v5215, 4
        %v5221 = vshrl.u32 %v4971, 16
        %v5223 = vrot.slane %v5221, 7
        %v5224 = vshll.u32 %v4971, 16
        %v5226 = vor.u32 %v5223, %v5224
        %v5227 = vsel %vm562, %v5219, %v5226
        %v5228 = vrot.slane %v5223, 4
        %v5230 = vshrl.u32 %v4972, 16
        %v5232 = vrot.slane %v5230, 7
        %v5233 = vshll.u32 %v4972, 16
        %v5235 = vor.u32 %v5232, %v5233
        %v5236 = vrot.slane %v5232, 4
        %v5238 = vshrl.u32 %v4973, 16
        %v5240 = vrot.slane %v5238, 7
        %v5241 = vshll.u32 %v4973, 16
        %v5243 = vor.u32 %v5240, %v5241
        %v5244 = vsel %vm562, %v5236, %v5243
        %v5245 = vrot.slane %v5240, 4
        %v5294 = vld [vmem:[%s883] sm:$0xf]
        %v5295 = vsel %vm886, %v4980, %v5294
        %5296 = vst [vmem:[%s883] sm:$0xf] %v5295
        %5297 = vst.msk [vmem:[%s883 + $0x4] sm:$0xf] %vm890, %v4989
        %v5298 = vld [vmem:[%s883 + $0x8] sm:$0x1]
        %v5299 = vsel %vm893, %v4990, %v5298
        %5300 = vst [vmem:[%s883 + $0x8] sm:$0x1] %v5299
        %v5301 = vld [vmem:[%s883 + $0xc] sm:$0xf]
        %v5302 = vsel %vm886, %v4997, %v5301
        %5303 = vst [vmem:[%s883 + $0xc] sm:$0xf] %v5302
        %5304 = vst.msk [vmem:[%s883 + $0x10] sm:$0xf] %vm890, %v5006
        %v5305 = vld [vmem:[%s883 + $0x14] sm:$0x1]
        %v5306 = vsel %vm893, %v5007, %v5305
        %5307 = vst [vmem:[%s883 + $0x14] sm:$0x1] %v5306
        %v5308 = vld [vmem:[%s883 + $0x18] sm:$0xf]
        %v5309 = vsel %vm886, %v5014, %v5308
        %5310 = vst [vmem:[%s883 + $0x18] sm:$0xf] %v5309
        %5311 = vst.msk [vmem:[%s883 + $0x1c] sm:$0xf] %vm890, %v5023
        %v5312 = vld [vmem:[%s883 + $0x20] sm:$0x1]
        %v5313 = vsel %vm893, %v5024, %v5312
        %5314 = vst [vmem:[%s883 + $0x20] sm:$0x1] %v5313
        %v5315 = vld [vmem:[%s883 + $0x24] sm:$0xf]
        %v5316 = vsel %vm886, %v5031, %v5315
        %5317 = vst [vmem:[%s883 + $0x24] sm:$0xf] %v5316
        %5318 = vst.msk [vmem:[%s883 + $0x28] sm:$0xf] %vm890, %v5040
        %v5319 = vld [vmem:[%s883 + $0x2c] sm:$0x1]
        %v5320 = vsel %vm893, %v5041, %v5319
        %5321 = vst [vmem:[%s883 + $0x2c] sm:$0x1] %v5320
        %v5322 = vld [vmem:[%s883 + $0x30] sm:$0xf]
        %v5323 = vsel %vm886, %v5048, %v5322
        %5324 = vst [vmem:[%s883 + $0x30] sm:$0xf] %v5323
        %5325 = vst.msk [vmem:[%s883 + $0x34] sm:$0xf] %vm890, %v5057
        %v5326 = vld [vmem:[%s883 + $0x38] sm:$0x1]
        %v5327 = vsel %vm893, %v5058, %v5326
        %5328 = vst [vmem:[%s883 + $0x38] sm:$0x1] %v5327
        %v5329 = vld [vmem:[%s883 + $0x3c] sm:$0xf]
        %v5330 = vsel %vm886, %v5065, %v5329
        %5331 = vst [vmem:[%s883 + $0x3c] sm:$0xf] %v5330
        %5332 = vst.msk [vmem:[%s883 + $0x40] sm:$0xf] %vm890, %v5074
        %v5333 = vld [vmem:[%s883 + $0x44] sm:$0x1]
        %v5334 = vsel %vm893, %v5075, %v5333
        %5335 = vst [vmem:[%s883 + $0x44] sm:$0x1] %v5334
        %v5336 = vld [vmem:[%s883 + $0x48] sm:$0xf]
        %v5337 = vsel %vm886, %v5082, %v5336
        %5338 = vst [vmem:[%s883 + $0x48] sm:$0xf] %v5337
        %5339 = vst.msk [vmem:[%s883 + $0x4c] sm:$0xf] %vm890, %v5091
        %v5340 = vld [vmem:[%s883 + $0x50] sm:$0x1]
        %v5341 = vsel %vm893, %v5092, %v5340
        %5342 = vst [vmem:[%s883 + $0x50] sm:$0x1] %v5341
        %v5343 = vld [vmem:[%s883 + $0x54] sm:$0xf]
        %v5344 = vsel %vm886, %v5099, %v5343
        %5345 = vst [vmem:[%s883 + $0x54] sm:$0xf] %v5344
        %5346 = vst.msk [vmem:[%s883 + $0x58] sm:$0xf] %vm890, %v5108
        %v5347 = vld [vmem:[%s883 + $0x5c] sm:$0x1]
        %v5348 = vsel %vm893, %v5109, %v5347
        %5349 = vst [vmem:[%s883 + $0x5c] sm:$0x1] %v5348
        %v5350 = vld [vmem:[%s883 + $0x60] sm:$0xf]
        %v5351 = vsel %vm886, %v5116, %v5350
        %5352 = vst [vmem:[%s883 + $0x60] sm:$0xf] %v5351
        %5353 = vst.msk [vmem:[%s883 + $0x64] sm:$0xf] %vm890, %v5125
        %v5354 = vld [vmem:[%s883 + $0x68] sm:$0x1]
        %v5355 = vsel %vm893, %v5126, %v5354
        %5356 = vst [vmem:[%s883 + $0x68] sm:$0x1] %v5355
        %v5357 = vld [vmem:[%s883 + $0x6c] sm:$0xf]
        %v5358 = vsel %vm886, %v5133, %v5357
        %5359 = vst [vmem:[%s883 + $0x6c] sm:$0xf] %v5358
        %5360 = vst.msk [vmem:[%s883 + $0x70] sm:$0xf] %vm890, %v5142
        %v5361 = vld [vmem:[%s883 + $0x74] sm:$0x1]
        %v5362 = vsel %vm893, %v5143, %v5361
        %5363 = vst [vmem:[%s883 + $0x74] sm:$0x1] %v5362
        %v5364 = vld [vmem:[%s883 + $0x78] sm:$0xf]
        %v5365 = vsel %vm886, %v5150, %v5364
        %5366 = vst [vmem:[%s883 + $0x78] sm:$0xf] %v5365
        %5367 = vst.msk [vmem:[%s883 + $0x7c] sm:$0xf] %vm890, %v5159
        %v5368 = vld [vmem:[%s883 + $0x80] sm:$0x1]
        %v5369 = vsel %vm893, %v5160, %v5368
        %5370 = vst [vmem:[%s883 + $0x80] sm:$0x1] %v5369
        %v5371 = vld [vmem:[%s883 + $0x84] sm:$0xf]
        %v5372 = vsel %vm886, %v5167, %v5371
        %5373 = vst [vmem:[%s883 + $0x84] sm:$0xf] %v5372
        %5374 = vst.msk [vmem:[%s883 + $0x88] sm:$0xf] %vm890, %v5176
        %v5375 = vld [vmem:[%s883 + $0x8c] sm:$0x1]
        %v5376 = vsel %vm893, %v5177, %v5375
        %5377 = vst [vmem:[%s883 + $0x8c] sm:$0x1] %v5376
        %v5378 = vld [vmem:[%s883 + $0x90] sm:$0xf]
        %v5379 = vsel %vm886, %v5184, %v5378
        %5380 = vst [vmem:[%s883 + $0x90] sm:$0xf] %v5379
        %5381 = vst.msk [vmem:[%s883 + $0x94] sm:$0xf] %vm890, %v5193
        %v5382 = vld [vmem:[%s883 + $0x98] sm:$0x1]
        %v5383 = vsel %vm893, %v5194, %v5382
        %5384 = vst [vmem:[%s883 + $0x98] sm:$0x1] %v5383
        %v5385 = vld [vmem:[%s883 + $0x9c] sm:$0xf]
        %v5386 = vsel %vm886, %v5201, %v5385
        %5387 = vst [vmem:[%s883 + $0x9c] sm:$0xf] %v5386
        %5388 = vst.msk [vmem:[%s883 + $0xa0] sm:$0xf] %vm890, %v5210
        %v5389 = vld [vmem:[%s883 + $0xa4] sm:$0x1]
        %v5390 = vsel %vm893, %v5211, %v5389
        %5391 = vst [vmem:[%s883 + $0xa4] sm:$0x1] %v5390
        %v5392 = vld [vmem:[%s883 + $0xa8] sm:$0xf]
        %v5393 = vsel %vm886, %v5218, %v5392
        %5394 = vst [vmem:[%s883 + $0xa8] sm:$0xf] %v5393
        %5395 = vst.msk [vmem:[%s883 + $0xac] sm:$0xf] %vm890, %v5227
        %v5396 = vld [vmem:[%s883 + $0xb0] sm:$0x1]
        %v5397 = vsel %vm893, %v5228, %v5396
        %5398 = vst [vmem:[%s883 + $0xb0] sm:$0x1] %v5397
        %v5399 = vld [vmem:[%s883 + $0xb4] sm:$0xf]
        %v5400 = vsel %vm886, %v5235, %v5399
        %5401 = vst [vmem:[%s883 + $0xb4] sm:$0xf] %v5400
        %5402 = vst.msk [vmem:[%s883 + $0xb8] sm:$0xf] %vm890, %v5244
        %v5403 = vld [vmem:[%s883 + $0xbc] sm:$0x1]
        %v5404 = vsel %vm893, %v5245, %v5403
        %5405 = vst [vmem:[%s883 + $0xbc] sm:$0x1] %v5404
        %v5406 = vld [vmem:[#allocation2] sm:$0xf]
        %v5407 = vld [vmem:[#allocation2 + $0x4] sm:$0xf]
        %v5408 = vld [vmem:[#allocation2 + $0xc] sm:$0xf]
        %v5409 = vld [vmem:[#allocation2 + $0x10] sm:$0xf]
        %v5410 = vld [vmem:[#allocation2 + $0x18] sm:$0xf]
        %v5411 = vld [vmem:[#allocation2 + $0x1c] sm:$0xf]
        %v5412 = vld [vmem:[#allocation2 + $0x24] sm:$0xf]
        %v5413 = vld [vmem:[#allocation2 + $0x28] sm:$0xf]
        %v5414 = vld [vmem:[#allocation2 + $0x30] sm:$0xf]
        %v5415 = vld [vmem:[#allocation2 + $0x34] sm:$0xf]
        %v5416 = vld [vmem:[#allocation2 + $0x3c] sm:$0xf]
        %v5417 = vld [vmem:[#allocation2 + $0x40] sm:$0xf]
        %v5418 = vld [vmem:[#allocation2 + $0x48] sm:$0xf]
        %v5419 = vld [vmem:[#allocation2 + $0x4c] sm:$0xf]
        %v5420 = vld [vmem:[#allocation2 + $0x54] sm:$0xf]
        %v5421 = vld [vmem:[#allocation2 + $0x58] sm:$0xf]
        %v5422 = vld [vmem:[#allocation2 + $0x60] sm:$0xf]
        %v5423 = vld [vmem:[#allocation2 + $0x64] sm:$0xf]
        %v5424 = vld [vmem:[#allocation2 + $0x6c] sm:$0xf]
        %v5425 = vld [vmem:[#allocation2 + $0x70] sm:$0xf]
        %v5426 = vld [vmem:[#allocation2 + $0x78] sm:$0xf]
        %v5427 = vld [vmem:[#allocation2 + $0x7c] sm:$0xf]
        %v5428 = vld [vmem:[#allocation2 + $0x84] sm:$0xf]
        %v5429 = vld [vmem:[#allocation2 + $0x88] sm:$0xf]
        %v5430 = vld [vmem:[#allocation2 + $0x90] sm:$0xf]
        %v5431 = vld [vmem:[#allocation2 + $0x94] sm:$0xf]
        %v5432 = vld [vmem:[#allocation2 + $0x9c] sm:$0xf]
        %v5433 = vld [vmem:[#allocation2 + $0xa0] sm:$0xf]
        %v5434 = vld [vmem:[#allocation2 + $0xa8] sm:$0xf]
        %v5435 = vld [vmem:[#allocation2 + $0xac] sm:$0xf]
        %v5436 = vld [vmem:[#allocation2 + $0xb4] sm:$0xf]
        %v5437 = vld [vmem:[#allocation2 + $0xb8] sm:$0xf]
        %5438 = vst.msk [vmem:[#allocation3] sm:$0xf] %vm890, %v5406
        %5439 = vst.msk [vmem:[#allocation3 + $0xc] sm:$0xf] %vm890, %v5407
        %5440 = vst.msk [vmem:[#allocation3 + $0x18] sm:$0xf] %vm890, %v5408
        %5441 = vst.msk [vmem:[#allocation3 + $0x24] sm:$0xf] %vm890, %v5409
        %5442 = vst.msk [vmem:[#allocation3 + $0x30] sm:$0xf] %vm890, %v5410
        %5443 = vst.msk [vmem:[#allocation3 + $0x3c] sm:$0xf] %vm890, %v5411
        %5444 = vst.msk [vmem:[#allocation3 + $0x48] sm:$0xf] %vm890, %v5412
        %5445 = vst.msk [vmem:[#allocation3 + $0x54] sm:$0xf] %vm890, %v5413
        %5446 = vst.msk [vmem:[#allocation3 + $0x60] sm:$0xf] %vm890, %v5414
        %5447 = vst.msk [vmem:[#allocation3 + $0x6c] sm:$0xf] %vm890, %v5415
        %5448 = vst.msk [vmem:[#allocation3 + $0x78] sm:$0xf] %vm890, %v5416
        %5449 = vst.msk [vmem:[#allocation3 + $0x84] sm:$0xf] %vm890, %v5417
        %5450 = vst.msk [vmem:[#allocation3 + $0x90] sm:$0xf] %vm890, %v5418
        %5451 = vst.msk [vmem:[#allocation3 + $0x9c] sm:$0xf] %vm890, %v5419
        %5452 = vst.msk [vmem:[#allocation3 + $0xa8] sm:$0xf] %vm890, %v5420
        %5453 = vst.msk [vmem:[#allocation3 + $0xb4] sm:$0xf] %vm890, %v5421
        %5454 = vst.msk [vmem:[#allocation3 + $0xc0] sm:$0xf] %vm890, %v5422
        %5455 = vst.msk [vmem:[#allocation3 + $0xcc] sm:$0xf] %vm890, %v5423
        %5456 = vst.msk [vmem:[#allocation3 + $0xd8] sm:$0xf] %vm890, %v5424
        %5457 = vst.msk [vmem:[#allocation3 + $0xe4] sm:$0xf] %vm890, %v5425
        %5458 = vst.msk [vmem:[#allocation3 + $0xf0] sm:$0xf] %vm890, %v5426
        %5459 = vst.msk [vmem:[#allocation3 + $0xfc] sm:$0xf] %vm890, %v5427
        %5460 = vst.msk [vmem:[#allocation3 + $0x108] sm:$0xf] %vm890, %v5428
        %5461 = vst.msk [vmem:[#allocation3 + $0x114] sm:$0xf] %vm890, %v5429
        %5462 = vst.msk [vmem:[#allocation3 + $0x120] sm:$0xf] %vm890, %v5430
        %5463 = vst.msk [vmem:[#allocation3 + $0x12c] sm:$0xf] %vm890, %v5431
        %5464 = vst.msk [vmem:[#allocation3 + $0x138] sm:$0xf] %vm890, %v5432
        %5465 = vst.msk [vmem:[#allocation3 + $0x144] sm:$0xf] %vm890, %v5433
        %5466 = vst.msk [vmem:[#allocation3 + $0x150] sm:$0xf] %vm890, %v5434
        %5467 = vst.msk [vmem:[#allocation3 + $0x15c] sm:$0xf] %vm890, %v5435
        %5468 = vst.msk [vmem:[#allocation3 + $0x168] sm:$0xf] %vm890, %v5436
        %5469 = vst.msk [vmem:[#allocation3 + $0x174] sm:$0xf] %vm890, %v5437
        %v5470 = vld [vmem:[#allocation2] sm:$0xf]
        %v5471 = vld [vmem:[#allocation2 + $0x4] sm:$0xf]
        %v5472 = vld [vmem:[#allocation2 + $0x8] sm:$0x1]
        %v5473 = vld [vmem:[#allocation2 + $0xc] sm:$0xf]
        %v5474 = vld [vmem:[#allocation2 + $0x10] sm:$0xf]
        %v5475 = vld [vmem:[#allocation2 + $0x14] sm:$0x1]
        %v5476 = vld [vmem:[#allocation2 + $0x18] sm:$0xf]
        %v5477 = vld [vmem:[#allocation2 + $0x1c] sm:$0xf]
        %v5478 = vld [vmem:[#allocation2 + $0x20] sm:$0x1]
        %v5479 = vld [vmem:[#allocation2 + $0x24] sm:$0xf]
        %v5480 = vld [vmem:[#allocation2 + $0x28] sm:$0xf]
        %v5481 = vld [vmem:[#allocation2 + $0x2c] sm:$0x1]
        %v5482 = vld [vmem:[#allocation2 + $0x30] sm:$0xf]
        %v5483 = vld [vmem:[#allocation2 + $0x34] sm:$0xf]
        %v5484 = vld [vmem:[#allocation2 + $0x38] sm:$0x1]
        %v5485 = vld [vmem:[#allocation2 + $0x3c] sm:$0xf]
        %v5486 = vld [vmem:[#allocation2 + $0x40] sm:$0xf]
        %v5487 = vld [vmem:[#allocation2 + $0x44] sm:$0x1]
        %v5488 = vld [vmem:[#allocation2 + $0x48] sm:$0xf]
        %v5489 = vld [vmem:[#allocation2 + $0x4c] sm:$0xf]
        %v5490 = vld [vmem:[#allocation2 + $0x50] sm:$0x1]
        %v5491 = vld [vmem:[#allocation2 + $0x54] sm:$0xf]
        %v5492 = vld [vmem:[#allocation2 + $0x58] sm:$0xf]
        %v5493 = vld [vmem:[#allocation2 + $0x5c] sm:$0x1]
        %v5494 = vld [vmem:[#allocation2 + $0x60] sm:$0xf]
        %v5495 = vld [vmem:[#allocation2 + $0x64] sm:$0xf]
        %v5496 = vld [vmem:[#allocation2 + $0x68] sm:$0x1]
        %v5497 = vld [vmem:[#allocation2 + $0x6c] sm:$0xf]
        %v5498 = vld [vmem:[#allocation2 + $0x70] sm:$0xf]
        %v5499 = vld [vmem:[#allocation2 + $0x74] sm:$0x1]
        %v5500 = vld [vmem:[#allocation2 + $0x78] sm:$0xf]
        %v5501 = vld [vmem:[#allocation2 + $0x7c] sm:$0xf]
        %v5502 = vld [vmem:[#allocation2 + $0x80] sm:$0x1]
        %v5503 = vld [vmem:[#allocation2 + $0x84] sm:$0xf]
        %v5504 = vld [vmem:[#allocation2 + $0x88] sm:$0xf]
        %v5505 = vld [vmem:[#allocation2 + $0x8c] sm:$0x1]
        %v5506 = vld [vmem:[#allocation2 + $0x90] sm:$0xf]
        %v5507 = vld [vmem:[#allocation2 + $0x94] sm:$0xf]
        %v5508 = vld [vmem:[#allocation2 + $0x98] sm:$0x1]
        %v5509 = vld [vmem:[#allocation2 + $0x9c] sm:$0xf]
        %v5510 = vld [vmem:[#allocation2 + $0xa0] sm:$0xf]
        %v5511 = vld [vmem:[#allocation2 + $0xa4] sm:$0x1]
        %v5512 = vld [vmem:[#allocation2 + $0xa8] sm:$0xf]
        %v5513 = vld [vmem:[#allocation2 + $0xac] sm:$0xf]
        %v5514 = vld [vmem:[#allocation2 + $0xb0] sm:$0x1]
        %v5515 = vld [vmem:[#allocation2 + $0xb4] sm:$0xf]
        %v5516 = vld [vmem:[#allocation2 + $0xb8] sm:$0xf]
        %v5517 = vld [vmem:[#allocation2 + $0xbc] sm:$0x1]
        %v5519 = vshrl.u32 %v5470, 16
        %v5521 = vrot.slane %v5519, 4
        %v5522 = vshll.u32 %v5470, 16
        %v5524 = vrot.slane %v5522, 5
        %v5525 = vor.u32 %v5521, %v5524
        %v5526 = vrot.slane %v5525, 4
        %v5528 = vshll.u32 %v5471, 16
        %v5530 = vrot.slane %v5528, 5
        %v5531 = vsel %vm1116, %v5526, %v5530
        %v5532 = vshrl.u32 %v5471, 16
        %v5534 = vrot.slane %v5532, 4
        %v5535 = vor.u32 %v5534, %v5530
        %v5536 = vrot.slane %v5535, 4
        %v5538 = vshll.u32 %v5472, 16
        %v5540 = vrot.slane %v5538, 5
        %v5541 = vsel %vm1116, %v5536, %v5540
        %v5543 = vshrl.u32 %v5473, 16
        %v5545 = vrot.slane %v5543, 4
        %v5546 = vshll.u32 %v5473, 16
        %v5548 = vrot.slane %v5546, 5
        %v5549 = vor.u32 %v5545, %v5548
        %v5550 = vrot.slane %v5549, 4
        %v5552 = vshll.u32 %v5474, 16
        %v5554 = vrot.slane %v5552, 5
        %v5555 = vsel %vm1116, %v5550, %v5554
        %v5556 = vshrl.u32 %v5474, 16
        %v5558 = vrot.slane %v5556, 4
        %v5559 = vor.u32 %v5558, %v5554
        %v5560 = vrot.slane %v5559, 4
        %v5562 = vshll.u32 %v5475, 16
        %v5564 = vrot.slane %v5562, 5
        %v5565 = vsel %vm1116, %v5560, %v5564
        %v5567 = vshrl.u32 %v5476, 16
        %v5569 = vrot.slane %v5567, 4
        %v5570 = vshll.u32 %v5476, 16
        %v5572 = vrot.slane %v5570, 5
        %v5573 = vor.u32 %v5569, %v5572
        %v5574 = vrot.slane %v5573, 4
        %v5576 = vshll.u32 %v5477, 16
        %v5578 = vrot.slane %v5576, 5
        %v5579 = vsel %vm1116, %v5574, %v5578
        %v5580 = vshrl.u32 %v5477, 16
        %v5582 = vrot.slane %v5580, 4
        %v5583 = vor.u32 %v5582, %v5578
        %v5584 = vrot.slane %v5583, 4
        %v5586 = vshll.u32 %v5478, 16
        %v5588 = vrot.slane %v5586, 5
        %v5589 = vsel %vm1116, %v5584, %v5588
        %v5591 = vshrl.u32 %v5479, 16
        %v5593 = vrot.slane %v5591, 4
        %v5594 = vshll.u32 %v5479, 16
        %v5596 = vrot.slane %v5594, 5
        %v5597 = vor.u32 %v5593, %v5596
        %v5598 = vrot.slane %v5597, 4
        %v5600 = vshll.u32 %v5480, 16
        %v5602 = vrot.slane %v5600, 5
        %v5603 = vsel %vm1116, %v5598, %v5602
        %v5604 = vshrl.u32 %v5480, 16
        %v5606 = vrot.slane %v5604, 4
        %v5607 = vor.u32 %v5606, %v5602
        %v5608 = vrot.slane %v5607, 4
        %v5610 = vshll.u32 %v5481, 16
        %v5612 = vrot.slane %v5610, 5
        %v5613 = vsel %vm1116, %v5608, %v5612
        %v5615 = vshrl.u32 %v5482, 16
        %v5617 = vrot.slane %v5615, 4
        %v5618 = vshll.u32 %v5482, 16
        %v5620 = vrot.slane %v5618, 5
        %v5621 = vor.u32 %v5617, %v5620
        %v5622 = vrot.slane %v5621, 4
        %v5624 = vshll.u32 %v5483, 16
        %v5626 = vrot.slane %v5624, 5
        %v5627 = vsel %vm1116, %v5622, %v5626
        %v5628 = vshrl.u32 %v5483, 16
        %v5630 = vrot.slane %v5628, 4
        %v5631 = vor.u32 %v5630, %v5626
        %v5632 = vrot.slane %v5631, 4
        %v5634 = vshll.u32 %v5484, 16
        %v5636 = vrot.slane %v5634, 5
        %v5637 = vsel %vm1116, %v5632, %v5636
        %v5639 = vshrl.u32 %v5485, 16
        %v5641 = vrot.slane %v5639, 4
        %v5642 = vshll.u32 %v5485, 16
        %v5644 = vrot.slane %v5642, 5
        %v5645 = vor.u32 %v5641, %v5644
        %v5646 = vrot.slane %v5645, 4
        %v5648 = vshll.u32 %v5486, 16
        %v5650 = vrot.slane %v5648, 5
        %v5651 = vsel %vm1116, %v5646, %v5650
        %v5652 = vshrl.u32 %v5486, 16
        %v5654 = vrot.slane %v5652, 4
        %v5655 = vor.u32 %v5654, %v5650
        %v5656 = vrot.slane %v5655, 4
        %v5658 = vshll.u32 %v5487, 16
        %v5660 = vrot.slane %v5658, 5
        %v5661 = vsel %vm1116, %v5656, %v5660
        %v5663 = vshrl.u32 %v5488, 16
        %v5665 = vrot.slane %v5663, 4
        %v5666 = vshll.u32 %v5488, 16
        %v5668 = vrot.slane %v5666, 5
        %v5669 = vor.u32 %v5665, %v5668
        %v5670 = vrot.slane %v5669, 4
        %v5672 = vshll.u32 %v5489, 16
        %v5674 = vrot.slane %v5672, 5
        %v5675 = vsel %vm1116, %v5670, %v5674
        %v5676 = vshrl.u32 %v5489, 16
        %v5678 = vrot.slane %v5676, 4
        %v5679 = vor.u32 %v5678, %v5674
        %v5680 = vrot.slane %v5679, 4
        %v5682 = vshll.u32 %v5490, 16
        %v5684 = vrot.slane %v5682, 5
        %v5685 = vsel %vm1116, %v5680, %v5684
        %v5687 = vshrl.u32 %v5491, 16
        %v5689 = vrot.slane %v5687, 4
        %v5690 = vshll.u32 %v5491, 16
        %v5692 = vrot.slane %v5690, 5
        %v5693 = vor.u32 %v5689, %v5692
        %v5694 = vrot.slane %v5693, 4
        %v5696 = vshll.u32 %v5492, 16
        %v5698 = vrot.slane %v5696, 5
        %v5699 = vsel %vm1116, %v5694, %v5698
        %v5700 = vshrl.u32 %v5492, 16
        %v5702 = vrot.slane %v5700, 4
        %v5703 = vor.u32 %v5702, %v5698
        %v5704 = vrot.slane %v5703, 4
        %v5706 = vshll.u32 %v5493, 16
        %v5708 = vrot.slane %v5706, 5
        %v5709 = vsel %vm1116, %v5704, %v5708
        %v5711 = vshrl.u32 %v5494, 16
        %v5713 = vrot.slane %v5711, 4
        %v5714 = vshll.u32 %v5494, 16
        %v5716 = vrot.slane %v5714, 5
        %v5717 = vor.u32 %v5713, %v5716
        %v5718 = vrot.slane %v5717, 4
        %v5720 = vshll.u32 %v5495, 16
        %v5722 = vrot.slane %v5720, 5
        %v5723 = vsel %vm1116, %v5718, %v5722
        %v5724 = vshrl.u32 %v5495, 16
        %v5726 = vrot.slane %v5724, 4
        %v5727 = vor.u32 %v5726, %v5722
        %v5728 = vrot.slane %v5727, 4
        %v5730 = vshll.u32 %v5496, 16
        %v5732 = vrot.slane %v5730, 5
        %v5733 = vsel %vm1116, %v5728, %v5732
        %v5735 = vshrl.u32 %v5497, 16
        %v5737 = vrot.slane %v5735, 4
        %v5738 = vshll.u32 %v5497, 16
        %v5740 = vrot.slane %v5738, 5
        %v5741 = vor.u32 %v5737, %v5740
        %v5742 = vrot.slane %v5741, 4
        %v5744 = vshll.u32 %v5498, 16
        %v5746 = vrot.slane %v5744, 5
        %v5747 = vsel %vm1116, %v5742, %v5746
        %v5748 = vshrl.u32 %v5498, 16
        %v5750 = vrot.slane %v5748, 4
        %v5751 = vor.u32 %v5750, %v5746
        %v5752 = vrot.slane %v5751, 4
        %v5754 = vshll.u32 %v5499, 16
        %v5756 = vrot.slane %v5754, 5
        %v5757 = vsel %vm1116, %v5752, %v5756
        %v5759 = vshrl.u32 %v5500, 16
        %v5761 = vrot.slane %v5759, 4
        %v5762 = vshll.u32 %v5500, 16
        %v5764 = vrot.slane %v5762, 5
        %v5765 = vor.u32 %v5761, %v5764
        %v5766 = vrot.slane %v5765, 4
        %v5768 = vshll.u32 %v5501, 16
        %v5770 = vrot.slane %v5768, 5
        %v5771 = vsel %vm1116, %v5766, %v5770
        %v5772 = vshrl.u32 %v5501, 16
        %v5774 = vrot.slane %v5772, 4
        %v5775 = vor.u32 %v5774, %v5770
        %v5776 = vrot.slane %v5775, 4
        %v5778 = vshll.u32 %v5502, 16
        %v5780 = vrot.slane %v5778, 5
        %v5781 = vsel %vm1116, %v5776, %v5780
        %v5783 = vshrl.u32 %v5503, 16
        %v5785 = vrot.slane %v5783, 4
        %v5786 = vshll.u32 %v5503, 16
        %v5788 = vrot.slane %v5786, 5
        %v5789 = vor.u32 %v5785, %v5788
        %v5790 = vrot.slane %v5789, 4
        %v5792 = vshll.u32 %v5504, 16
        %v5794 = vrot.slane %v5792, 5
        %v5795 = vsel %vm1116, %v5790, %v5794
        %v5796 = vshrl.u32 %v5504, 16
        %v5798 = vrot.slane %v5796, 4
        %v5799 = vor.u32 %v5798, %v5794
        %v5800 = vrot.slane %v5799, 4
        %v5802 = vshll.u32 %v5505, 16
        %v5804 = vrot.slane %v5802, 5
        %v5805 = vsel %vm1116, %v5800, %v5804
        %v5807 = vshrl.u32 %v5506, 16
        %v5809 = vrot.slane %v5807, 4
        %v5810 = vshll.u32 %v5506, 16
        %v5812 = vrot.slane %v5810, 5
        %v5813 = vor.u32 %v5809, %v5812
        %v5814 = vrot.slane %v5813, 4
        %v5816 = vshll.u32 %v5507, 16
        %v5818 = vrot.slane %v5816, 5
        %v5819 = vsel %vm1116, %v5814, %v5818
        %v5820 = vshrl.u32 %v5507, 16
        %v5822 = vrot.slane %v5820, 4
        %v5823 = vor.u32 %v5822, %v5818
        %v5824 = vrot.slane %v5823, 4
        %v5826 = vshll.u32 %v5508, 16
        %v5828 = vrot.slane %v5826, 5
        %v5829 = vsel %vm1116, %v5824, %v5828
        %v5831 = vshrl.u32 %v5509, 16
        %v5833 = vrot.slane %v5831, 4
        %v5834 = vshll.u32 %v5509, 16
        %v5836 = vrot.slane %v5834, 5
        %v5837 = vor.u32 %v5833, %v5836
        %v5838 = vrot.slane %v5837, 4
        %v5840 = vshll.u32 %v5510, 16
        %v5842 = vrot.slane %v5840, 5
        %v5843 = vsel %vm1116, %v5838, %v5842
        %v5844 = vshrl.u32 %v5510, 16
        %v5846 = vrot.slane %v5844, 4
        %v5847 = vor.u32 %v5846, %v5842
        %v5848 = vrot.slane %v5847, 4
        %v5850 = vshll.u32 %v5511, 16
        %v5852 = vrot.slane %v5850, 5
        %v5853 = vsel %vm1116, %v5848, %v5852
        %v5855 = vshrl.u32 %v5512, 16
        %v5857 = vrot.slane %v5855, 4
        %v5858 = vshll.u32 %v5512, 16
        %v5860 = vrot.slane %v5858, 5
        %v5861 = vor.u32 %v5857, %v5860
        %v5862 = vrot.slane %v5861, 4
        %v5864 = vshll.u32 %v5513, 16
        %v5866 = vrot.slane %v5864, 5
        %v5867 = vsel %vm1116, %v5862, %v5866
        %v5868 = vshrl.u32 %v5513, 16
        %v5870 = vrot.slane %v5868, 4
        %v5871 = vor.u32 %v5870, %v5866
        %v5872 = vrot.slane %v5871, 4
        %v5874 = vshll.u32 %v5514, 16
        %v5876 = vrot.slane %v5874, 5
        %v5877 = vsel %vm1116, %v5872, %v5876
        %v5879 = vshrl.u32 %v5515, 16
        %v5881 = vrot.slane %v5879, 4
        %v5882 = vshll.u32 %v5515, 16
        %v5884 = vrot.slane %v5882, 5
        %v5885 = vor.u32 %v5881, %v5884
        %v5886 = vrot.slane %v5885, 4
        %v5888 = vshll.u32 %v5516, 16
        %v5890 = vrot.slane %v5888, 5
        %v5891 = vsel %vm1116, %v5886, %v5890
        %v5892 = vshrl.u32 %v5516, 16
        %v5894 = vrot.slane %v5892, 4
        %v5895 = vor.u32 %v5894, %v5890
        %v5896 = vrot.slane %v5895, 4
        %v5898 = vshll.u32 %v5517, 16
        %v5900 = vrot.slane %v5898, 5
        %v5901 = vsel %vm1116, %v5896, %v5900
        %5902 = vrot.lane.b32.xlu0 %v5531, 32
        %v5903 = vpop.permute.xlu0 %5902
        %5904 = vrot.lane.b32.xlu0 %v5541, 32
        %v5905 = vpop.permute.xlu0 %5904
        %5906 = vrot.lane.b32.xlu0 %v5555, 32
        %v5907 = vpop.permute.xlu0 %5906
        %5908 = vrot.lane.b32.xlu0 %v5565, 32
        %v5909 = vpop.permute.xlu0 %5908
        %5910 = vrot.lane.b32.xlu0 %v5579, 32
        %v5911 = vpop.permute.xlu0 %5910
        %5912 = vrot.lane.b32.xlu0 %v5589, 32
        %v5913 = vpop.permute.xlu0 %5912
        %5914 = vrot.lane.b32.xlu0 %v5603, 32
        %v5915 = vpop.permute.xlu0 %5914
        %5916 = vrot.lane.b32.xlu0 %v5613, 32
        %v5917 = vpop.permute.xlu0 %5916
        %5918 = vrot.lane.b32.xlu0 %v5627, 32
        %v5919 = vpop.permute.xlu0 %5918
        %5920 = vrot.lane.b32.xlu0 %v5637, 32
        %v5921 = vpop.permute.xlu0 %5920
        %5922 = vrot.lane.b32.xlu0 %v5651, 32
        %v5923 = vpop.permute.xlu0 %5922
        %5924 = vrot.lane.b32.xlu0 %v5661, 32
        %v5925 = vpop.permute.xlu0 %5924
        %5926 = vrot.lane.b32.xlu0 %v5675, 32
        %v5927 = vpop.permute.xlu0 %5926
        %5928 = vrot.lane.b32.xlu0 %v5685, 32
        %v5929 = vpop.permute.xlu0 %5928
        %5930 = vrot.lane.b32.xlu0 %v5699, 32
        %v5931 = vpop.permute.xlu0 %5930
        %5932 = vrot.lane.b32.xlu0 %v5709, 32
        %v5933 = vpop.permute.xlu0 %5932
        %5934 = vrot.lane.b32.xlu0 %v5723, 32
        %v5935 = vpop.permute.xlu0 %5934
        %5936 = vrot.lane.b32.xlu0 %v5733, 32
        %v5937 = vpop.permute.xlu0 %5936
        %5938 = vrot.lane.b32.xlu0 %v5747, 32
        %v5939 = vpop.permute.xlu0 %5938
        %5940 = vrot.lane.b32.xlu0 %v5757, 32
        %v5941 = vpop.permute.xlu0 %5940
        %5942 = vrot.lane.b32.xlu0 %v5771, 32
        %v5943 = vpop.permute.xlu0 %5942
        %5944 = vrot.lane.b32.xlu0 %v5781, 32
        %v5945 = vpop.permute.xlu0 %5944
        %5946 = vrot.lane.b32.xlu0 %v5795, 32
        %v5947 = vpop.permute.xlu0 %5946
        %5948 = vrot.lane.b32.xlu0 %v5805, 32
        %v5949 = vpop.permute.xlu0 %5948
        %5950 = vrot.lane.b32.xlu0 %v5819, 32
        %v5951 = vpop.permute.xlu0 %5950
        %5952 = vrot.lane.b32.xlu0 %v5829, 32
        %v5953 = vpop.permute.xlu0 %5952
        %5954 = vrot.lane.b32.xlu0 %v5843, 32
        %v5955 = vpop.permute.xlu0 %5954
        %5956 = vrot.lane.b32.xlu0 %v5853, 32
        %v5957 = vpop.permute.xlu0 %5956
        %5958 = vrot.lane.b32.xlu0 %v5867, 32
        %v5959 = vpop.permute.xlu0 %5958
        %5960 = vrot.lane.b32.xlu0 %v5877, 32
        %v5961 = vpop.permute.xlu0 %5960
        %5962 = vrot.lane.b32.xlu0 %v5891, 32
        %v5963 = vpop.permute.xlu0 %5962
        %5964 = vrot.lane.b32.xlu0 %v5901, 32
        %v5965 = vpop.permute.xlu0 %5964
        %5998 = vst.msk [vmem:[#allocation3] sm:$0xf] %vm1597, %v5903
        %5999 = vst.msk [vmem:[#allocation3 + $0xc] sm:$0xf] %vm1597, %v5905
        %6000 = vst.msk [vmem:[#allocation3 + $0x18] sm:$0xf] %vm1597, %v5907
        %6001 = vst.msk [vmem:[#allocation3 + $0x24] sm:$0xf] %vm1597, %v5909
        %6002 = vst.msk [vmem:[#allocation3 + $0x30] sm:$0xf] %vm1597, %v5911
        %6003 = vst.msk [vmem:[#allocation3 + $0x3c] sm:$0xf] %vm1597, %v5913
        %6004 = vst.msk [vmem:[#allocation3 + $0x48] sm:$0xf] %vm1597, %v5915
        %6005 = vst.msk [vmem:[#allocation3 + $0x54] sm:$0xf] %vm1597, %v5917
        %6006 = vst.msk [vmem:[#allocation3 + $0x60] sm:$0xf] %vm1597, %v5919
        %6007 = vst.msk [vmem:[#allocation3 + $0x6c] sm:$0xf] %vm1597, %v5921
        %6008 = vst.msk [vmem:[#allocation3 + $0x78] sm:$0xf] %vm1597, %v5923
        %6009 = vst.msk [vmem:[#allocation3 + $0x84] sm:$0xf] %vm1597, %v5925
        %6010 = vst.msk [vmem:[#allocation3 + $0x90] sm:$0xf] %vm1597, %v5927
        %6011 = vst.msk [vmem:[#allocation3 + $0x9c] sm:$0xf] %vm1597, %v5929
        %6012 = vst.msk [vmem:[#allocation3 + $0xa8] sm:$0xf] %vm1597, %v5931
        %6013 = vst.msk [vmem:[#allocation3 + $0xb4] sm:$0xf] %vm1597, %v5933
        %6014 = vst.msk [vmem:[#allocation3 + $0xc0] sm:$0xf] %vm1597, %v5935
        %6015 = vst.msk [vmem:[#allocation3 + $0xcc] sm:$0xf] %vm1597, %v5937
        %6016 = vst.msk [vmem:[#allocation3 + $0xd8] sm:$0xf] %vm1597, %v5939
        %6017 = vst.msk [vmem:[#allocation3 + $0xe4] sm:$0xf] %vm1597, %v5941
        %6018 = vst.msk [vmem:[#allocation3 + $0xf0] sm:$0xf] %vm1597, %v5943
        %6019 = vst.msk [vmem:[#allocation3 + $0xfc] sm:$0xf] %vm1597, %v5945
        %6020 = vst.msk [vmem:[#allocation3 + $0x108] sm:$0xf] %vm1597, %v5947
        %6021 = vst.msk [vmem:[#allocation3 + $0x114] sm:$0xf] %vm1597, %v5949
        %6022 = vst.msk [vmem:[#allocation3 + $0x120] sm:$0xf] %vm1597, %v5951
        %6023 = vst.msk [vmem:[#allocation3 + $0x12c] sm:$0xf] %vm1597, %v5953
        %6024 = vst.msk [vmem:[#allocation3 + $0x138] sm:$0xf] %vm1597, %v5955
        %6025 = vst.msk [vmem:[#allocation3 + $0x144] sm:$0xf] %vm1597, %v5957
        %6026 = vst.msk [vmem:[#allocation3 + $0x150] sm:$0xf] %vm1597, %v5959
        %6027 = vst.msk [vmem:[#allocation3 + $0x15c] sm:$0xf] %vm1597, %v5961
        %6028 = vst.msk [vmem:[#allocation3 + $0x168] sm:$0xf] %vm1597, %v5963
        %6029 = vst.msk [vmem:[#allocation3 + $0x174] sm:$0xf] %vm1597, %v5965
        %v6030 = vld [vmem:[#allocation2] sm:$0xe]
        %v6031 = vld [vmem:[#allocation2 + $0x4] sm:$0xf]
        %v6032 = vld [vmem:[#allocation2 + $0x8] sm:$0x1]
        %v6033 = vld [vmem:[#allocation2 + $0xc] sm:$0xe]
        %v6034 = vld [vmem:[#allocation2 + $0x10] sm:$0xf]
        %v6035 = vld [vmem:[#allocation2 + $0x14] sm:$0x1]
        %v6036 = vld [vmem:[#allocation2 + $0x18] sm:$0xe]
        %v6037 = vld [vmem:[#allocation2 + $0x1c] sm:$0xf]
        %v6038 = vld [vmem:[#allocation2 + $0x20] sm:$0x1]
        %v6039 = vld [vmem:[#allocation2 + $0x24] sm:$0xe]
        %v6040 = vld [vmem:[#allocation2 + $0x28] sm:$0xf]
        %v6041 = vld [vmem:[#allocation2 + $0x2c] sm:$0x1]
        %v6042 = vld [vmem:[#allocation2 + $0x30] sm:$0xe]
        %v6043 = vld [vmem:[#allocation2 + $0x34] sm:$0xf]
        %v6044 = vld [vmem:[#allocation2 + $0x38] sm:$0x1]
        %v6045 = vld [vmem:[#allocation2 + $0x3c] sm:$0xe]
        %v6046 = vld [vmem:[#allocation2 + $0x40] sm:$0xf]
        %v6047 = vld [vmem:[#allocation2 + $0x44] sm:$0x1]
        %v6048 = vld [vmem:[#allocation2 + $0x48] sm:$0xe]
        %v6049 = vld [vmem:[#allocation2 + $0x4c] sm:$0xf]
        %v6050 = vld [vmem:[#allocation2 + $0x50] sm:$0x1]
        %v6051 = vld [vmem:[#allocation2 + $0x54] sm:$0xe]
        %v6052 = vld [vmem:[#allocation2 + $0x58] sm:$0xf]
        %v6053 = vld [vmem:[#allocation2 + $0x5c] sm:$0x1]
        %v6054 = vld [vmem:[#allocation2 + $0x60] sm:$0xe]
        %v6055 = vld [vmem:[#allocation2 + $0x64] sm:$0xf]
        %v6056 = vld [vmem:[#allocation2 + $0x68] sm:$0x1]
        %v6057 = vld [vmem:[#allocation2 + $0x6c] sm:$0xe]
        %v6058 = vld [vmem:[#allocation2 + $0x70] sm:$0xf]
        %v6059 = vld [vmem:[#allocation2 + $0x74] sm:$0x1]
        %v6060 = vld [vmem:[#allocation2 + $0x78] sm:$0xe]
        %v6061 = vld [vmem:[#allocation2 + $0x7c] sm:$0xf]
        %v6062 = vld [vmem:[#allocation2 + $0x80] sm:$0x1]
        %v6063 = vld [vmem:[#allocation2 + $0x84] sm:$0xe]
        %v6064 = vld [vmem:[#allocation2 + $0x88] sm:$0xf]
        %v6065 = vld [vmem:[#allocation2 + $0x8c] sm:$0x1]
        %v6066 = vld [vmem:[#allocation2 + $0x90] sm:$0xe]
        %v6067 = vld [vmem:[#allocation2 + $0x94] sm:$0xf]
        %v6068 = vld [vmem:[#allocation2 + $0x98] sm:$0x1]
        %v6069 = vld [vmem:[#allocation2 + $0x9c] sm:$0xe]
        %v6070 = vld [vmem:[#allocation2 + $0xa0] sm:$0xf]
        %v6071 = vld [vmem:[#allocation2 + $0xa4] sm:$0x1]
        %v6072 = vld [vmem:[#allocation2 + $0xa8] sm:$0xe]
        %v6073 = vld [vmem:[#allocation2 + $0xac] sm:$0xf]
        %v6074 = vld [vmem:[#allocation2 + $0xb0] sm:$0x1]
        %v6075 = vld [vmem:[#allocation2 + $0xb4] sm:$0xe]
        %v6076 = vld [vmem:[#allocation2 + $0xb8] sm:$0xf]
        %v6077 = vld [vmem:[#allocation2 + $0xbc] sm:$0x1]
        %v6126 = vrot.slane %v6030, 5
        %v6127 = vrot.slane %v6126, 4
        %v6128 = vrot.slane %v6031, 5
        %v6129 = vsel %vm1728, %v6127, %v6128
        %v6130 = vrot.slane %v6128, 4
        %v6131 = vrot.slane %v6032, 5
        %v6132 = vsel %vm1728, %v6130, %v6131
        %v6133 = vrot.slane %v6033, 5
        %v6134 = vrot.slane %v6133, 4
        %v6135 = vrot.slane %v6034, 5
        %v6136 = vsel %vm1728, %v6134, %v6135
        %v6137 = vrot.slane %v6135, 4
        %v6138 = vrot.slane %v6035, 5
        %v6139 = vsel %vm1728, %v6137, %v6138
        %v6140 = vrot.slane %v6036, 5
        %v6141 = vrot.slane %v6140, 4
        %v6142 = vrot.slane %v6037, 5
        %v6143 = vsel %vm1728, %v6141, %v6142
        %v6144 = vrot.slane %v6142, 4
        %v6145 = vrot.slane %v6038, 5
        %v6146 = vsel %vm1728, %v6144, %v6145
        %v6147 = vrot.slane %v6039, 5
        %v6148 = vrot.slane %v6147, 4
        %v6149 = vrot.slane %v6040, 5
        %v6150 = vsel %vm1728, %v6148, %v6149
        %v6151 = vrot.slane %v6149, 4
        %v6152 = vrot.slane %v6041, 5
        %v6153 = vsel %vm1728, %v6151, %v6152
        %v6154 = vrot.slane %v6042, 5
        %v6155 = vrot.slane %v6154, 4
        %v6156 = vrot.slane %v6043, 5
        %v6157 = vsel %vm1728, %v6155, %v6156
        %v6158 = vrot.slane %v6156, 4
        %v6159 = vrot.slane %v6044, 5
        %v6160 = vsel %vm1728, %v6158, %v6159
        %v6161 = vrot.slane %v6045, 5
        %v6162 = vrot.slane %v6161, 4
        %v6163 = vrot.slane %v6046, 5
        %v6164 = vsel %vm1728, %v6162, %v6163
        %v6165 = vrot.slane %v6163, 4
        %v6166 = vrot.slane %v6047, 5
        %v6167 = vsel %vm1728, %v6165, %v6166
        %v6168 = vrot.slane %v6048, 5
        %v6169 = vrot.slane %v6168, 4
        %v6170 = vrot.slane %v6049, 5
        %v6171 = vsel %vm1728, %v6169, %v6170
        %v6172 = vrot.slane %v6170, 4
        %v6173 = vrot.slane %v6050, 5
        %v6174 = vsel %vm1728, %v6172, %v6173
        %v6175 = vrot.slane %v6051, 5
        %v6176 = vrot.slane %v6175, 4
        %v6177 = vrot.slane %v6052, 5
        %v6178 = vsel %vm1728, %v6176, %v6177
        %v6179 = vrot.slane %v6177, 4
        %v6180 = vrot.slane %v6053, 5
        %v6181 = vsel %vm1728, %v6179, %v6180
        %v6182 = vrot.slane %v6054, 5
        %v6183 = vrot.slane %v6182, 4
        %v6184 = vrot.slane %v6055, 5
        %v6185 = vsel %vm1728, %v6183, %v6184
        %v6186 = vrot.slane %v6184, 4
        %v6187 = vrot.slane %v6056, 5
        %v6188 = vsel %vm1728, %v6186, %v6187
        %v6189 = vrot.slane %v6057, 5
        %v6190 = vrot.slane %v6189, 4
        %v6191 = vrot.slane %v6058, 5
        %v6192 = vsel %vm1728, %v6190, %v6191
        %v6193 = vrot.slane %v6191, 4
        %v6194 = vrot.slane %v6059, 5
        %v6195 = vsel %vm1728, %v6193, %v6194
        %v6196 = vrot.slane %v6060, 5
        %v6197 = vrot.slane %v6196, 4
        %v6198 = vrot.slane %v6061, 5
        %v6199 = vsel %vm1728, %v6197, %v6198
        %v6200 = vrot.slane %v6198, 4
        %v6201 = vrot.slane %v6062, 5
        %v6202 = vsel %vm1728, %v6200, %v6201
        %v6203 = vrot.slane %v6063, 5
        %v6204 = vrot.slane %v6203, 4
        %v6205 = vrot.slane %v6064, 5
        %v6206 = vsel %vm1728, %v6204, %v6205
        %v6207 = vrot.slane %v6205, 4
        %v6208 = vrot.slane %v6065, 5
        %v6209 = vsel %vm1728, %v6207, %v6208
        %v6210 = vrot.slane %v6066, 5
        %v6211 = vrot.slane %v6210, 4
        %v6212 = vrot.slane %v6067, 5
        %v6213 = vsel %vm1728, %v6211, %v6212
        %v6214 = vrot.slane %v6212, 4
        %v6215 = vrot.slane %v6068, 5
        %v6216 = vsel %vm1728, %v6214, %v6215
        %v6217 = vrot.slane %v6069, 5
        %v6218 = vrot.slane %v6217, 4
        %v6219 = vrot.slane %v6070, 5
        %v6220 = vsel %vm1728, %v6218, %v6219
        %v6221 = vrot.slane %v6219, 4
        %v6222 = vrot.slane %v6071, 5
        %v6223 = vsel %vm1728, %v6221, %v6222
        %v6224 = vrot.slane %v6072, 5
        %v6225 = vrot.slane %v6224, 4
        %v6226 = vrot.slane %v6073, 5
        %v6227 = vsel %vm1728, %v6225, %v6226
        %v6228 = vrot.slane %v6226, 4
        %v6229 = vrot.slane %v6074, 5
        %v6230 = vsel %vm1728, %v6228, %v6229
        %v6231 = vrot.slane %v6075, 5
        %v6232 = vrot.slane %v6231, 4
        %v6233 = vrot.slane %v6076, 5
        %v6234 = vsel %vm1728, %v6232, %v6233
        %v6235 = vrot.slane %v6233, 4
        %v6236 = vrot.slane %v6077, 5
        %v6237 = vsel %vm1728, %v6235, %v6236
        %6238 = vrot.lane.b32.xlu0 %v6129, 64
        %v6239 = vpop.permute.xlu0 %6238
        %6240 = vrot.lane.b32.xlu0 %v6132, 64
        %v6241 = vpop.permute.xlu0 %6240
        %6242 = vrot.lane.b32.xlu0 %v6136, 64
        %v6243 = vpop.permute.xlu0 %6242
        %6244 = vrot.lane.b32.xlu0 %v6139, 64
        %v6245 = vpop.permute.xlu0 %6244
        %6246 = vrot.lane.b32.xlu0 %v6143, 64
        %v6247 = vpop.permute.xlu0 %6246
        %6248 = vrot.lane.b32.xlu0 %v6146, 64
        %v6249 = vpop.permute.xlu0 %6248
        %6250 = vrot.lane.b32.xlu0 %v6150, 64
        %v6251 = vpop.permute.xlu0 %6250
        %6252 = vrot.lane.b32.xlu0 %v6153, 64
        %v6253 = vpop.permute.xlu0 %6252
        %6254 = vrot.lane.b32.xlu0 %v6157, 64
        %v6255 = vpop.permute.xlu0 %6254
        %6256 = vrot.lane.b32.xlu0 %v6160, 64
        %v6257 = vpop.permute.xlu0 %6256
        %6258 = vrot.lane.b32.xlu0 %v6164, 64
        %v6259 = vpop.permute.xlu0 %6258
        %6260 = vrot.lane.b32.xlu0 %v6167, 64
        %v6261 = vpop.permute.xlu0 %6260
        %6262 = vrot.lane.b32.xlu0 %v6171, 64
        %v6263 = vpop.permute.xlu0 %6262
        %6264 = vrot.lane.b32.xlu0 %v6174, 64
        %v6265 = vpop.permute.xlu0 %6264
        %6266 = vrot.lane.b32.xlu0 %v6178, 64
        %v6267 = vpop.permute.xlu0 %6266
        %6268 = vrot.lane.b32.xlu0 %v6181, 64
        %v6269 = vpop.permute.xlu0 %6268
        %6270 = vrot.lane.b32.xlu0 %v6185, 64
        %v6271 = vpop.permute.xlu0 %6270
        %6272 = vrot.lane.b32.xlu0 %v6188, 64
        %v6273 = vpop.permute.xlu0 %6272
        %6274 = vrot.lane.b32.xlu0 %v6192, 64
        %v6275 = vpop.permute.xlu0 %6274
        %6276 = vrot.lane.b32.xlu0 %v6195, 64
        %v6277 = vpop.permute.xlu0 %6276
        %6278 = vrot.lane.b32.xlu0 %v6199, 64
        %v6279 = vpop.permute.xlu0 %6278
        %6280 = vrot.lane.b32.xlu0 %v6202, 64
        %v6281 = vpop.permute.xlu0 %6280
        %6282 = vrot.lane.b32.xlu0 %v6206, 64
        %v6283 = vpop.permute.xlu0 %6282
        %6284 = vrot.lane.b32.xlu0 %v6209, 64
        %v6285 = vpop.permute.xlu0 %6284
        %6286 = vrot.lane.b32.xlu0 %v6213, 64
        %v6287 = vpop.permute.xlu0 %6286
        %6288 = vrot.lane.b32.xlu0 %v6216, 64
        %v6289 = vpop.permute.xlu0 %6288
        %6290 = vrot.lane.b32.xlu0 %v6220, 64
        %v6291 = vpop.permute.xlu0 %6290
        %6292 = vrot.lane.b32.xlu0 %v6223, 64
        %v6293 = vpop.permute.xlu0 %6292
        %6294 = vrot.lane.b32.xlu0 %v6227, 64
        %v6295 = vpop.permute.xlu0 %6294
        %6296 = vrot.lane.b32.xlu0 %v6230, 64
        %v6297 = vpop.permute.xlu0 %6296
        %6298 = vrot.lane.b32.xlu0 %v6234, 64
        %v6299 = vpop.permute.xlu0 %6298
        %6300 = vrot.lane.b32.xlu0 %v6237, 64
        %v6301 = vpop.permute.xlu0 %6300
        %6334 = vst.msk [vmem:[#allocation3] sm:$0xf] %vm1937, %v6239
        %6335 = vst.msk [vmem:[#allocation3 + $0xc] sm:$0xf] %vm1937, %v6241
        %6336 = vst.msk [vmem:[#allocation3 + $0x18] sm:$0xf] %vm1937, %v6243
        %6337 = vst.msk [vmem:[#allocation3 + $0x24] sm:$0xf] %vm1937, %v6245
        %6338 = vst.msk [vmem:[#allocation3 + $0x30] sm:$0xf] %vm1937, %v6247
        %6339 = vst.msk [vmem:[#allocation3 + $0x3c] sm:$0xf] %vm1937, %v6249
        %6340 = vst.msk [vmem:[#allocation3 + $0x48] sm:$0xf] %vm1937, %v6251
        %6341 = vst.msk [vmem:[#allocation3 + $0x54] sm:$0xf] %vm1937, %v6253
        %6342 = vst.msk [vmem:[#allocation3 + $0x60] sm:$0xf] %vm1937, %v6255
        %6343 = vst.msk [vmem:[#allocation3 + $0x6c] sm:$0xf] %vm1937, %v6257
        %6344 = vst.msk [vmem:[#allocation3 + $0x78] sm:$0xf] %vm1937, %v6259
        %6345 = vst.msk [vmem:[#allocation3 + $0x84] sm:$0xf] %vm1937, %v6261
        %6346 = vst.msk [vmem:[#allocation3 + $0x90] sm:$0xf] %vm1937, %v6263
        %6347 = vst.msk [vmem:[#allocation3 + $0x9c] sm:$0xf] %vm1937, %v6265
        %6348 = vst.msk [vmem:[#allocation3 + $0xa8] sm:$0xf] %vm1937, %v6267
        %6349 = vst.msk [vmem:[#allocation3 + $0xb4] sm:$0xf] %vm1937, %v6269
        %6350 = vst.msk [vmem:[#allocation3 + $0xc0] sm:$0xf] %vm1937, %v6271
        %6351 = vst.msk [vmem:[#allocation3 + $0xcc] sm:$0xf] %vm1937, %v6273
        %6352 = vst.msk [vmem:[#allocation3 + $0xd8] sm:$0xf] %vm1937, %v6275
        %6353 = vst.msk [vmem:[#allocation3 + $0xe4] sm:$0xf] %vm1937, %v6277
        %6354 = vst.msk [vmem:[#allocation3 + $0xf0] sm:$0xf] %vm1937, %v6279
        %6355 = vst.msk [vmem:[#allocation3 + $0xfc] sm:$0xf] %vm1937, %v6281
        %6356 = vst.msk [vmem:[#allocation3 + $0x108] sm:$0xf] %vm1937, %v6283
        %6357 = vst.msk [vmem:[#allocation3 + $0x114] sm:$0xf] %vm1937, %v6285
        %6358 = vst.msk [vmem:[#allocation3 + $0x120] sm:$0xf] %vm1937, %v6287
        %6359 = vst.msk [vmem:[#allocation3 + $0x12c] sm:$0xf] %vm1937, %v6289
        %6360 = vst.msk [vmem:[#allocation3 + $0x138] sm:$0xf] %vm1937, %v6291
        %6361 = vst.msk [vmem:[#allocation3 + $0x144] sm:$0xf] %vm1937, %v6293
        %6362 = vst.msk [vmem:[#allocation3 + $0x150] sm:$0xf] %vm1937, %v6295
        %6363 = vst.msk [vmem:[#allocation3 + $0x15c] sm:$0xf] %vm1937, %v6297
        %6364 = vst.msk [vmem:[#allocation3 + $0x168] sm:$0xf] %vm1937, %v6299
        %6365 = vst.msk [vmem:[#allocation3 + $0x174] sm:$0xf] %vm1937, %v6301
        %v6366 = vld [vmem:[%s883] sm:$0xf]
        %v6367 = vld [vmem:[%s883 + $0x4] sm:$0xf]
        %v6368 = vld [vmem:[%s883 + $0xc] sm:$0xf]
        %v6369 = vld [vmem:[%s883 + $0x10] sm:$0xf]
        %v6370 = vld [vmem:[%s883 + $0x18] sm:$0xf]
        %v6371 = vld [vmem:[%s883 + $0x1c] sm:$0xf]
        %v6372 = vld [vmem:[%s883 + $0x24] sm:$0xf]
        %v6373 = vld [vmem:[%s883 + $0x28] sm:$0xf]
        %v6374 = vld [vmem:[%s883 + $0x30] sm:$0xf]
        %v6375 = vld [vmem:[%s883 + $0x34] sm:$0xf]
        %v6376 = vld [vmem:[%s883 + $0x3c] sm:$0xf]
        %v6377 = vld [vmem:[%s883 + $0x40] sm:$0xf]
        %v6378 = vld [vmem:[%s883 + $0x48] sm:$0xf]
        %v6379 = vld [vmem:[%s883 + $0x4c] sm:$0xf]
        %v6380 = vld [vmem:[%s883 + $0x54] sm:$0xf]
        %v6381 = vld [vmem:[%s883 + $0x58] sm:$0xf]
        %v6382 = vld [vmem:[%s883 + $0x60] sm:$0xf]
        %v6383 = vld [vmem:[%s883 + $0x64] sm:$0xf]
        %v6384 = vld [vmem:[%s883 + $0x6c] sm:$0xf]
        %v6385 = vld [vmem:[%s883 + $0x70] sm:$0xf]
        %v6386 = vld [vmem:[%s883 + $0x78] sm:$0xf]
        %v6387 = vld [vmem:[%s883 + $0x7c] sm:$0xf]
        %v6388 = vld [vmem:[%s883 + $0x84] sm:$0xf]
        %v6389 = vld [vmem:[%s883 + $0x88] sm:$0xf]
        %v6390 = vld [vmem:[%s883 + $0x90] sm:$0xf]
        %v6391 = vld [vmem:[%s883 + $0x94] sm:$0xf]
        %v6392 = vld [vmem:[%s883 + $0x9c] sm:$0xf]
        %v6393 = vld [vmem:[%s883 + $0xa0] sm:$0xf]
        %v6394 = vld [vmem:[%s883 + $0xa8] sm:$0xf]
        %v6395 = vld [vmem:[%s883 + $0xac] sm:$0xf]
        %v6396 = vld [vmem:[%s883 + $0xb4] sm:$0xf]
        %v6397 = vld [vmem:[%s883 + $0xb8] sm:$0xf]
        %6430 = vrot.lane.b32.xlu0 %v6366, 96
        %v6431 = vpop.permute.xlu0 %6430
        %6432 = vrot.lane.b32.xlu0 %v6367, 96
        %v6433 = vpop.permute.xlu0 %6432
        %6434 = vrot.lane.b32.xlu0 %v6368, 96
        %v6435 = vpop.permute.xlu0 %6434
        %6436 = vrot.lane.b32.xlu0 %v6369, 96
        %v6437 = vpop.permute.xlu0 %6436
        %6438 = vrot.lane.b32.xlu0 %v6370, 96
        %v6439 = vpop.permute.xlu0 %6438
        %6440 = vrot.lane.b32.xlu0 %v6371, 96
        %v6441 = vpop.permute.xlu0 %6440
        %6442 = vrot.lane.b32.xlu0 %v6372, 96
        %v6443 = vpop.permute.xlu0 %6442
        %6444 = vrot.lane.b32.xlu0 %v6373, 96
        %v6445 = vpop.permute.xlu0 %6444
        %6446 = vrot.lane.b32.xlu0 %v6374, 96
        %v6447 = vpop.permute.xlu0 %6446
        %6448 = vrot.lane.b32.xlu0 %v6375, 96
        %v6449 = vpop.permute.xlu0 %6448
        %6450 = vrot.lane.b32.xlu0 %v6376, 96
        %v6451 = vpop.permute.xlu0 %6450
        %6452 = vrot.lane.b32.xlu0 %v6377, 96
        %v6453 = vpop.permute.xlu0 %6452
        %6454 = vrot.lane.b32.xlu0 %v6378, 96
        %v6455 = vpop.permute.xlu0 %6454
        %6456 = vrot.lane.b32.xlu0 %v6379, 96
        %v6457 = vpop.permute.xlu0 %6456
        %6458 = vrot.lane.b32.xlu0 %v6380, 96
        %v6459 = vpop.permute.xlu0 %6458
        %6460 = vrot.lane.b32.xlu0 %v6381, 96
        %v6461 = vpop.permute.xlu0 %6460
        %6462 = vrot.lane.b32.xlu0 %v6382, 96
        %v6463 = vpop.permute.xlu0 %6462
        %6464 = vrot.lane.b32.xlu0 %v6383, 96
        %v6465 = vpop.permute.xlu0 %6464
        %6466 = vrot.lane.b32.xlu0 %v6384, 96
        %v6467 = vpop.permute.xlu0 %6466
        %6468 = vrot.lane.b32.xlu0 %v6385, 96
        %v6469 = vpop.permute.xlu0 %6468
        %6470 = vrot.lane.b32.xlu0 %v6386, 96
        %v6471 = vpop.permute.xlu0 %6470
        %6472 = vrot.lane.b32.xlu0 %v6387, 96
        %v6473 = vpop.permute.xlu0 %6472
        %6474 = vrot.lane.b32.xlu0 %v6388, 96
        %v6475 = vpop.permute.xlu0 %6474
        %6476 = vrot.lane.b32.xlu0 %v6389, 96
        %v6477 = vpop.permute.xlu0 %6476
        %6478 = vrot.lane.b32.xlu0 %v6390, 96
        %v6479 = vpop.permute.xlu0 %6478
        %6480 = vrot.lane.b32.xlu0 %v6391, 96
        %v6481 = vpop.permute.xlu0 %6480
        %6482 = vrot.lane.b32.xlu0 %v6392, 96
        %v6483 = vpop.permute.xlu0 %6482
        %6484 = vrot.lane.b32.xlu0 %v6393, 96
        %v6485 = vpop.permute.xlu0 %6484
        %6486 = vrot.lane.b32.xlu0 %v6394, 96
        %v6487 = vpop.permute.xlu0 %6486
        %6488 = vrot.lane.b32.xlu0 %v6395, 96
        %v6489 = vpop.permute.xlu0 %6488
        %6490 = vrot.lane.b32.xlu0 %v6396, 96
        %v6491 = vpop.permute.xlu0 %6490
        %6492 = vrot.lane.b32.xlu0 %v6397, 96
        %v6493 = vpop.permute.xlu0 %6492
        %6526 = vst.msk [vmem:[#allocation3] sm:$0xf] %vm2130, %v6431
        %6527 = vst.msk [vmem:[#allocation3 + $0xc] sm:$0xf] %vm2130, %v6433
        %6528 = vst.msk [vmem:[#allocation3 + $0x18] sm:$0xf] %vm2130, %v6435
        %6529 = vst.msk [vmem:[#allocation3 + $0x24] sm:$0xf] %vm2130, %v6437
        %6530 = vst.msk [vmem:[#allocation3 + $0x30] sm:$0xf] %vm2130, %v6439
        %6531 = vst.msk [vmem:[#allocation3 + $0x3c] sm:$0xf] %vm2130, %v6441
        %6532 = vst.msk [vmem:[#allocation3 + $0x48] sm:$0xf] %vm2130, %v6443
        %6533 = vst.msk [vmem:[#allocation3 + $0x54] sm:$0xf] %vm2130, %v6445
        %6534 = vst.msk [vmem:[#allocation3 + $0x60] sm:$0xf] %vm2130, %v6447
        %6535 = vst.msk [vmem:[#allocation3 + $0x6c] sm:$0xf] %vm2130, %v6449
        %6536 = vst.msk [vmem:[#allocation3 + $0x78] sm:$0xf] %vm2130, %v6451
        %6537 = vst.msk [vmem:[#allocation3 + $0x84] sm:$0xf] %vm2130, %v6453
        %6538 = vst.msk [vmem:[#allocation3 + $0x90] sm:$0xf] %vm2130, %v6455
        %6539 = vst.msk [vmem:[#allocation3 + $0x9c] sm:$0xf] %vm2130, %v6457
        %6540 = vst.msk [vmem:[#allocation3 + $0xa8] sm:$0xf] %vm2130, %v6459
        %6541 = vst.msk [vmem:[#allocation3 + $0xb4] sm:$0xf] %vm2130, %v6461
        %6542 = vst.msk [vmem:[#allocation3 + $0xc0] sm:$0xf] %vm2130, %v6463
        %6543 = vst.msk [vmem:[#allocation3 + $0xcc] sm:$0xf] %vm2130, %v6465
        %6544 = vst.msk [vmem:[#allocation3 + $0xd8] sm:$0xf] %vm2130, %v6467
        %6545 = vst.msk [vmem:[#allocation3 + $0xe4] sm:$0xf] %vm2130, %v6469
        %6546 = vst.msk [vmem:[#allocation3 + $0xf0] sm:$0xf] %vm2130, %v6471
        %6547 = vst.msk [vmem:[#allocation3 + $0xfc] sm:$0xf] %vm2130, %v6473
        %6548 = vst.msk [vmem:[#allocation3 + $0x108] sm:$0xf] %vm2130, %v6475
        %6549 = vst.msk [vmem:[#allocation3 + $0x114] sm:$0xf] %vm2130, %v6477
        %6550 = vst.msk [vmem:[#allocation3 + $0x120] sm:$0xf] %vm2130, %v6479
        %6551 = vst.msk [vmem:[#allocation3 + $0x12c] sm:$0xf] %vm2130, %v6481
        %6552 = vst.msk [vmem:[#allocation3 + $0x138] sm:$0xf] %vm2130, %v6483
        %6553 = vst.msk [vmem:[#allocation3 + $0x144] sm:$0xf] %vm2130, %v6485
        %6554 = vst.msk [vmem:[#allocation3 + $0x150] sm:$0xf] %vm2130, %v6487
        %6555 = vst.msk [vmem:[#allocation3 + $0x15c] sm:$0xf] %vm2130, %v6489
        %6556 = vst.msk [vmem:[#allocation3 + $0x168] sm:$0xf] %vm2130, %v6491
        %6557 = vst.msk [vmem:[#allocation3 + $0x174] sm:$0xf] %vm2130, %v6493
        %v6558 = vld [vmem:[%s883] sm:$0xf]
        %v6559 = vld [vmem:[%s883 + $0x4] sm:$0xf]
        %v6560 = vld [vmem:[%s883 + $0x8] sm:$0x1]
        %v6561 = vld [vmem:[%s883 + $0xc] sm:$0xf]
        %v6562 = vld [vmem:[%s883 + $0x10] sm:$0xf]
        %v6563 = vld [vmem:[%s883 + $0x14] sm:$0x1]
        %v6564 = vld [vmem:[%s883 + $0x18] sm:$0xf]
        %v6565 = vld [vmem:[%s883 + $0x1c] sm:$0xf]
        %v6566 = vld [vmem:[%s883 + $0x20] sm:$0x1]
        %v6567 = vld [vmem:[%s883 + $0x24] sm:$0xf]
        %v6568 = vld [vmem:[%s883 + $0x28] sm:$0xf]
        %v6569 = vld [vmem:[%s883 + $0x2c] sm:$0x1]
        %v6570 = vld [vmem:[%s883 + $0x30] sm:$0xf]
        %v6571 = vld [vmem:[%s883 + $0x34] sm:$0xf]
        %v6572 = vld [vmem:[%s883 + $0x38] sm:$0x1]
        %v6573 = vld [vmem:[%s883 + $0x3c] sm:$0xf]
        %v6574 = vld [vmem:[%s883 + $0x40] sm:$0xf]
        %v6575 = vld [vmem:[%s883 + $0x44] sm:$0x1]
        %v6576 = vld [vmem:[%s883 + $0x48] sm:$0xf]
        %v6577 = vld [vmem:[%s883 + $0x4c] sm:$0xf]
        %v6578 = vld [vmem:[%s883 + $0x50] sm:$0x1]
        %v6579 = vld [vmem:[%s883 + $0x54] sm:$0xf]
        %v6580 = vld [vmem:[%s883 + $0x58] sm:$0xf]
        %v6581 = vld [vmem:[%s883 + $0x5c] sm:$0x1]
        %v6582 = vld [vmem:[%s883 + $0x60] sm:$0xf]
        %v6583 = vld [vmem:[%s883 + $0x64] sm:$0xf]
        %v6584 = vld [vmem:[%s883 + $0x68] sm:$0x1]
        %v6585 = vld [vmem:[%s883 + $0x6c] sm:$0xf]
        %v6586 = vld [vmem:[%s883 + $0x70] sm:$0xf]
        %v6587 = vld [vmem:[%s883 + $0x74] sm:$0x1]
        %v6588 = vld [vmem:[%s883 + $0x78] sm:$0xf]
        %v6589 = vld [vmem:[%s883 + $0x7c] sm:$0xf]
        %v6590 = vld [vmem:[%s883 + $0x80] sm:$0x1]
        %v6591 = vld [vmem:[%s883 + $0x84] sm:$0xf]
        %v6592 = vld [vmem:[%s883 + $0x88] sm:$0xf]
        %v6593 = vld [vmem:[%s883 + $0x8c] sm:$0x1]
        %v6594 = vld [vmem:[%s883 + $0x90] sm:$0xf]
        %v6595 = vld [vmem:[%s883 + $0x94] sm:$0xf]
        %v6596 = vld [vmem:[%s883 + $0x98] sm:$0x1]
        %v6597 = vld [vmem:[%s883 + $0x9c] sm:$0xf]
        %v6598 = vld [vmem:[%s883 + $0xa0] sm:$0xf]
        %v6599 = vld [vmem:[%s883 + $0xa4] sm:$0x1]
        %v6600 = vld [vmem:[%s883 + $0xa8] sm:$0xf]
        %v6601 = vld [vmem:[%s883 + $0xac] sm:$0xf]
        %v6602 = vld [vmem:[%s883 + $0xb0] sm:$0x1]
        %v6603 = vld [vmem:[%s883 + $0xb4] sm:$0xf]
        %v6604 = vld [vmem:[%s883 + $0xb8] sm:$0xf]
        %v6605 = vld [vmem:[%s883 + $0xbc] sm:$0x1]
        %v6607 = vshrl.u32 %v6558, 16
        %v6609 = vrot.slane %v6607, 4
        %v6610 = vshll.u32 %v6558, 16
        %v6612 = vrot.slane %v6610, 5
        %v6613 = vor.u32 %v6609, %v6612
        %v6614 = vrot.slane %v6613, 4
        %v6616 = vshll.u32 %v6559, 16
        %v6618 = vrot.slane %v6616, 5
        %v6619 = vsel %vm1116, %v6614, %v6618
        %v6620 = vshrl.u32 %v6559, 16
        %v6622 = vrot.slane %v6620, 4
        %v6623 = vor.u32 %v6622, %v6618
        %v6624 = vrot.slane %v6623, 4
        %v6626 = vshll.u32 %v6560, 16
        %v6628 = vrot.slane %v6626, 5
        %v6629 = vsel %vm1116, %v6624, %v6628
        %v6631 = vshrl.u32 %v6561, 16
        %v6633 = vrot.slane %v6631, 4
        %v6634 = vshll.u32 %v6561, 16
        %v6636 = vrot.slane %v6634, 5
        %v6637 = vor.u32 %v6633, %v6636
        %v6638 = vrot.slane %v6637, 4
        %v6640 = vshll.u32 %v6562, 16
        %v6642 = vrot.slane %v6640, 5
        %v6643 = vsel %vm1116, %v6638, %v6642
        %v6644 = vshrl.u32 %v6562, 16
        %v6646 = vrot.slane %v6644, 4
        %v6647 = vor.u32 %v6646, %v6642
        %v6648 = vrot.slane %v6647, 4
        %v6650 = vshll.u32 %v6563, 16
        %v6652 = vrot.slane %v6650, 5
        %v6653 = vsel %vm1116, %v6648, %v6652
        %v6655 = vshrl.u32 %v6564, 16
        %v6657 = vrot.slane %v6655, 4
        %v6658 = vshll.u32 %v6564, 16
        %v6660 = vrot.slane %v6658, 5
        %v6661 = vor.u32 %v6657, %v6660
        %v6662 = vrot.slane %v6661, 4
        %v6664 = vshll.u32 %v6565, 16
        %v6666 = vrot.slane %v6664, 5
        %v6667 = vsel %vm1116, %v6662, %v6666
        %v6668 = vshrl.u32 %v6565, 16
        %v6670 = vrot.slane %v6668, 4
        %v6671 = vor.u32 %v6670, %v6666
        %v6672 = vrot.slane %v6671, 4
        %v6674 = vshll.u32 %v6566, 16
        %v6676 = vrot.slane %v6674, 5
        %v6677 = vsel %vm1116, %v6672, %v6676
        %v6679 = vshrl.u32 %v6567, 16
        %v6681 = vrot.slane %v6679, 4
        %v6682 = vshll.u32 %v6567, 16
        %v6684 = vrot.slane %v6682, 5
        %v6685 = vor.u32 %v6681, %v6684
        %v6686 = vrot.slane %v6685, 4
        %v6688 = vshll.u32 %v6568, 16
        %v6690 = vrot.slane %v6688, 5
        %v6691 = vsel %vm1116, %v6686, %v6690
        %v6692 = vshrl.u32 %v6568, 16
        %v6694 = vrot.slane %v6692, 4
        %v6695 = vor.u32 %v6694, %v6690
        %v6696 = vrot.slane %v6695, 4
        %v6698 = vshll.u32 %v6569, 16
        %v6700 = vrot.slane %v6698, 5
        %v6701 = vsel %vm1116, %v6696, %v6700
        %v6703 = vshrl.u32 %v6570, 16
        %v6705 = vrot.slane %v6703, 4
        %v6706 = vshll.u32 %v6570, 16
        %v6708 = vrot.slane %v6706, 5
        %v6709 = vor.u32 %v6705, %v6708
        %v6710 = vrot.slane %v6709, 4
        %v6712 = vshll.u32 %v6571, 16
        %v6714 = vrot.slane %v6712, 5
        %v6715 = vsel %vm1116, %v6710, %v6714
        %v6716 = vshrl.u32 %v6571, 16
        %v6718 = vrot.slane %v6716, 4
        %v6719 = vor.u32 %v6718, %v6714
        %v6720 = vrot.slane %v6719, 4
        %v6722 = vshll.u32 %v6572, 16
        %v6724 = vrot.slane %v6722, 5
        %v6725 = vsel %vm1116, %v6720, %v6724
        %v6727 = vshrl.u32 %v6573, 16
        %v6729 = vrot.slane %v6727, 4
        %v6730 = vshll.u32 %v6573, 16
        %v6732 = vrot.slane %v6730, 5
        %v6733 = vor.u32 %v6729, %v6732
        %v6734 = vrot.slane %v6733, 4
        %v6736 = vshll.u32 %v6574, 16
        %v6738 = vrot.slane %v6736, 5
        %v6739 = vsel %vm1116, %v6734, %v6738
        %v6740 = vshrl.u32 %v6574, 16
        %v6742 = vrot.slane %v6740, 4
        %v6743 = vor.u32 %v6742, %v6738
        %v6744 = vrot.slane %v6743, 4
        %v6746 = vshll.u32 %v6575, 16
        %v6748 = vrot.slane %v6746, 5
        %v6749 = vsel %vm1116, %v6744, %v6748
        %v6751 = vshrl.u32 %v6576, 16
        %v6753 = vrot.slane %v6751, 4
        %v6754 = vshll.u32 %v6576, 16
        %v6756 = vrot.slane %v6754, 5
        %v6757 = vor.u32 %v6753, %v6756
        %v6758 = vrot.slane %v6757, 4
        %v6760 = vshll.u32 %v6577, 16
        %v6762 = vrot.slane %v6760, 5
        %v6763 = vsel %vm1116, %v6758, %v6762
        %v6764 = vshrl.u32 %v6577, 16
        %v6766 = vrot.slane %v6764, 4
        %v6767 = vor.u32 %v6766, %v6762
        %v6768 = vrot.slane %v6767, 4
        %v6770 = vshll.u32 %v6578, 16
        %v6772 = vrot.slane %v6770, 5
        %v6773 = vsel %vm1116, %v6768, %v6772
        %v6775 = vshrl.u32 %v6579, 16
        %v6777 = vrot.slane %v6775, 4
        %v6778 = vshll.u32 %v6579, 16
        %v6780 = vrot.slane %v6778, 5
        %v6781 = vor.u32 %v6777, %v6780
        %v6782 = vrot.slane %v6781, 4
        %v6784 = vshll.u32 %v6580, 16
        %v6786 = vrot.slane %v6784, 5
        %v6787 = vsel %vm1116, %v6782, %v6786
        %v6788 = vshrl.u32 %v6580, 16
        %v6790 = vrot.slane %v6788, 4
        %v6791 = vor.u32 %v6790, %v6786
        %v6792 = vrot.slane %v6791, 4
        %v6794 = vshll.u32 %v6581, 16
        %v6796 = vrot.slane %v6794, 5
        %v6797 = vsel %vm1116, %v6792, %v6796
        %v6799 = vshrl.u32 %v6582, 16
        %v6801 = vrot.slane %v6799, 4
        %v6802 = vshll.u32 %v6582, 16
        %v6804 = vrot.slane %v6802, 5
        %v6805 = vor.u32 %v6801, %v6804
        %v6806 = vrot.slane %v6805, 4
        %v6808 = vshll.u32 %v6583, 16
        %v6810 = vrot.slane %v6808, 5
        %v6811 = vsel %vm1116, %v6806, %v6810
        %v6812 = vshrl.u32 %v6583, 16
        %v6814 = vrot.slane %v6812, 4
        %v6815 = vor.u32 %v6814, %v6810
        %v6816 = vrot.slane %v6815, 4
        %v6818 = vshll.u32 %v6584, 16
        %v6820 = vrot.slane %v6818, 5
        %v6821 = vsel %vm1116, %v6816, %v6820
        %v6823 = vshrl.u32 %v6585, 16
        %v6825 = vrot.slane %v6823, 4
        %v6826 = vshll.u32 %v6585, 16
        %v6828 = vrot.slane %v6826, 5
        %v6829 = vor.u32 %v6825, %v6828
        %v6830 = vrot.slane %v6829, 4
        %v6832 = vshll.u32 %v6586, 16
        %v6834 = vrot.slane %v6832, 5
        %v6835 = vsel %vm1116, %v6830, %v6834
        %v6836 = vshrl.u32 %v6586, 16
        %v6838 = vrot.slane %v6836, 4
        %v6839 = vor.u32 %v6838, %v6834
        %v6840 = vrot.slane %v6839, 4
        %v6842 = vshll.u32 %v6587, 16
        %v6844 = vrot.slane %v6842, 5
        %v6845 = vsel %vm1116, %v6840, %v6844
        %v6847 = vshrl.u32 %v6588, 16
        %v6849 = vrot.slane %v6847, 4
        %v6850 = vshll.u32 %v6588, 16
        %v6852 = vrot.slane %v6850, 5
        %v6853 = vor.u32 %v6849, %v6852
        %v6854 = vrot.slane %v6853, 4
        %v6856 = vshll.u32 %v6589, 16
        %v6858 = vrot.slane %v6856, 5
        %v6859 = vsel %vm1116, %v6854, %v6858
        %v6860 = vshrl.u32 %v6589, 16
        %v6862 = vrot.slane %v6860, 4
        %v6863 = vor.u32 %v6862, %v6858
        %v6864 = vrot.slane %v6863, 4
        %v6866 = vshll.u32 %v6590, 16
        %v6868 = vrot.slane %v6866, 5
        %v6869 = vsel %vm1116, %v6864, %v6868
        %v6871 = vshrl.u32 %v6591, 16
        %v6873 = vrot.slane %v6871, 4
        %v6874 = vshll.u32 %v6591, 16
        %v6876 = vrot.slane %v6874, 5
        %v6877 = vor.u32 %v6873, %v6876
        %v6878 = vrot.slane %v6877, 4
        %v6880 = vshll.u32 %v6592, 16
        %v6882 = vrot.slane %v6880, 5
        %v6883 = vsel %vm1116, %v6878, %v6882
        %v6884 = vshrl.u32 %v6592, 16
        %v6886 = vrot.slane %v6884, 4
        %v6887 = vor.u32 %v6886, %v6882
        %v6888 = vrot.slane %v6887, 4
        %v6890 = vshll.u32 %v6593, 16
        %v6892 = vrot.slane %v6890, 5
        %v6893 = vsel %vm1116, %v6888, %v6892
        %v6895 = vshrl.u32 %v6594, 16
        %v6897 = vrot.slane %v6895, 4
        %v6898 = vshll.u32 %v6594, 16
        %v6900 = vrot.slane %v6898, 5
        %v6901 = vor.u32 %v6897, %v6900
        %v6902 = vrot.slane %v6901, 4
        %v6904 = vshll.u32 %v6595, 16
        %v6906 = vrot.slane %v6904, 5
        %v6907 = vsel %vm1116, %v6902, %v6906
        %v6908 = vshrl.u32 %v6595, 16
        %v6910 = vrot.slane %v6908, 4
        %v6911 = vor.u32 %v6910, %v6906
        %v6912 = vrot.slane %v6911, 4
        %v6914 = vshll.u32 %v6596, 16
        %v6916 = vrot.slane %v6914, 5
        %v6917 = vsel %vm1116, %v6912, %v6916
        %v6919 = vshrl.u32 %v6597, 16
        %v6921 = vrot.slane %v6919, 4
        %v6922 = vshll.u32 %v6597, 16
        %v6924 = vrot.slane %v6922, 5
        %v6925 = vor.u32 %v6921, %v6924
        %v6926 = vrot.slane %v6925, 4
        %v6928 = vshll.u32 %v6598, 16
        %v6930 = vrot.slane %v6928, 5
        %v6931 = vsel %vm1116, %v6926, %v6930
        %v6932 = vshrl.u32 %v6598, 16
        %v6934 = vrot.slane %v6932, 4
        %v6935 = vor.u32 %v6934, %v6930
        %v6936 = vrot.slane %v6935, 4
        %v6938 = vshll.u32 %v6599, 16
        %v6940 = vrot.slane %v6938, 5
        %v6941 = vsel %vm1116, %v6936, %v6940
        %v6943 = vshrl.u32 %v6600, 16
        %v6945 = vrot.slane %v6943, 4
        %v6946 = vshll.u32 %v6600, 16
        %v6948 = vrot.slane %v6946, 5
        %v6949 = vor.u32 %v6945, %v6948
        %v6950 = vrot.slane %v6949, 4
        %v6952 = vshll.u32 %v6601, 16
        %v6954 = vrot.slane %v6952, 5
        %v6955 = vsel %vm1116, %v6950, %v6954
        %v6956 = vshrl.u32 %v6601, 16
        %v6958 = vrot.slane %v6956, 4
        %v6959 = vor.u32 %v6958, %v6954
        %v6960 = vrot.slane %v6959, 4
        %v6962 = vshll.u32 %v6602, 16
        %v6964 = vrot.slane %v6962, 5
        %v6965 = vsel %vm1116, %v6960, %v6964
        %v6967 = vshrl.u32 %v6603, 16
        %v6969 = vrot.slane %v6967, 4
        %v6970 = vshll.u32 %v6603, 16
        %v6972 = vrot.slane %v6970, 5
        %v6973 = vor.u32 %v6969, %v6972
        %v6974 = vrot.slane %v6973, 4
        %v6976 = vshll.u32 %v6604, 16
        %v6978 = vrot.slane %v6976, 5
        %v6979 = vsel %vm1116, %v6974, %v6978
        %v6980 = vshrl.u32 %v6604, 16
        %v6982 = vrot.slane %v6980, 4
        %v6983 = vor.u32 %v6982, %v6978
        %v6984 = vrot.slane %v6983, 4
        %v6986 = vshll.u32 %v6605, 16
        %v6988 = vrot.slane %v6986, 5
        %v6989 = vsel %vm1116, %v6984, %v6988
        %7022 = vst.msk [vmem:[#allocation3 + $0x4] sm:$0xf] %vm890, %v6619
        %7023 = vst.msk [vmem:[#allocation3 + $0x10] sm:$0xf] %vm890, %v6629
        %7024 = vst.msk [vmem:[#allocation3 + $0x1c] sm:$0xf] %vm890, %v6643
        %7025 = vst.msk [vmem:[#allocation3 + $0x28] sm:$0xf] %vm890, %v6653
        %7026 = vst.msk [vmem:[#allocation3 + $0x34] sm:$0xf] %vm890, %v6667
        %7027 = vst.msk [vmem:[#allocation3 + $0x40] sm:$0xf] %vm890, %v6677
        %7028 = vst.msk [vmem:[#allocation3 + $0x4c] sm:$0xf] %vm890, %v6691
        %7029 = vst.msk [vmem:[#allocation3 + $0x58] sm:$0xf] %vm890, %v6701
        %7030 = vst.msk [vmem:[#allocation3 + $0x64] sm:$0xf] %vm890, %v6715
        %7031 = vst.msk [vmem:[#allocation3 + $0x70] sm:$0xf] %vm890, %v6725
        %7032 = vst.msk [vmem:[#allocation3 + $0x7c] sm:$0xf] %vm890, %v6739
        %7033 = vst.msk [vmem:[#allocation3 + $0x88] sm:$0xf] %vm890, %v6749
        %7034 = vst.msk [vmem:[#allocation3 + $0x94] sm:$0xf] %vm890, %v6763
        %7035 = vst.msk [vmem:[#allocation3 + $0xa0] sm:$0xf] %vm890, %v6773
        %7036 = vst.msk [vmem:[#allocation3 + $0xac] sm:$0xf] %vm890, %v6787
        %7037 = vst.msk [vmem:[#allocation3 + $0xb8] sm:$0xf] %vm890, %v6797
        %7038 = vst.msk [vmem:[#allocation3 + $0xc4] sm:$0xf] %vm890, %v6811
        %7039 = vst.msk [vmem:[#allocation3 + $0xd0] sm:$0xf] %vm890, %v6821
        %7040 = vst.msk [vmem:[#allocation3 + $0xdc] sm:$0xf] %vm890, %v6835
        %7041 = vst.msk [vmem:[#allocation3 + $0xe8] sm:$0xf] %vm890, %v6845
        %7042 = vst.msk [vmem:[#allocation3 + $0xf4] sm:$0xf] %vm890, %v6859
        %7043 = vst.msk [vmem:[#allocation3 + $0x100] sm:$0xf] %vm890, %v6869
        %7044 = vst.msk [vmem:[#allocation3 + $0x10c] sm:$0xf] %vm890, %v6883
        %7045 = vst.msk [vmem:[#allocation3 + $0x118] sm:$0xf] %vm890, %v6893
        %7046 = vst.msk [vmem:[#allocation3 + $0x124] sm:$0xf] %vm890, %v6907
        %7047 = vst.msk [vmem:[#allocation3 + $0x130] sm:$0xf] %vm890, %v6917
        %7048 = vst.msk [vmem:[#allocation3 + $0x13c] sm:$0xf] %vm890, %v6931
        %7049 = vst.msk [vmem:[#allocation3 + $0x148] sm:$0xf] %vm890, %v6941
        %7050 = vst.msk [vmem:[#allocation3 + $0x154] sm:$0xf] %vm890, %v6955
        %7051 = vst.msk [vmem:[#allocation3 + $0x160] sm:$0xf] %vm890, %v6965
        %7052 = vst.msk [vmem:[#allocation3 + $0x16c] sm:$0xf] %vm890, %v6979
        %7053 = vst.msk [vmem:[#allocation3 + $0x178] sm:$0xf] %vm890, %v6989
        %v7054 = vld [vmem:[%s883] sm:$0xe]
        %v7055 = vld [vmem:[%s883 + $0x4] sm:$0xf]
        %v7056 = vld [vmem:[%s883 + $0x8] sm:$0x1]
        %v7057 = vld [vmem:[%s883 + $0xc] sm:$0xe]
        %v7058 = vld [vmem:[%s883 + $0x10] sm:$0xf]
        %v7059 = vld [vmem:[%s883 + $0x14] sm:$0x1]
        %v7060 = vld [vmem:[%s883 + $0x18] sm:$0xe]
        %v7061 = vld [vmem:[%s883 + $0x1c] sm:$0xf]
        %v7062 = vld [vmem:[%s883 + $0x20] sm:$0x1]
        %v7063 = vld [vmem:[%s883 + $0x24] sm:$0xe]
        %v7064 = vld [vmem:[%s883 + $0x28] sm:$0xf]
        %v7065 = vld [vmem:[%s883 + $0x2c] sm:$0x1]
        %v7066 = vld [vmem:[%s883 + $0x30] sm:$0xe]
        %v7067 = vld [vmem:[%s883 + $0x34] sm:$0xf]
        %v7068 = vld [vmem:[%s883 + $0x38] sm:$0x1]
        %v7069 = vld [vmem:[%s883 + $0x3c] sm:$0xe]
        %v7070 = vld [vmem:[%s883 + $0x40] sm:$0xf]
        %v7071 = vld [vmem:[%s883 + $0x44] sm:$0x1]
        %v7072 = vld [vmem:[%s883 + $0x48] sm:$0xe]
        %v7073 = vld [vmem:[%s883 + $0x4c] sm:$0xf]
        %v7074 = vld [vmem:[%s883 + $0x50] sm:$0x1]
        %v7075 = vld [vmem:[%s883 + $0x54] sm:$0xe]
        %v7076 = vld [vmem:[%s883 + $0x58] sm:$0xf]
        %v7077 = vld [vmem:[%s883 + $0x5c] sm:$0x1]
        %v7078 = vld [vmem:[%s883 + $0x60] sm:$0xe]
        %v7079 = vld [vmem:[%s883 + $0x64] sm:$0xf]
        %v7080 = vld [vmem:[%s883 + $0x68] sm:$0x1]
        %v7081 = vld [vmem:[%s883 + $0x6c] sm:$0xe]
        %v7082 = vld [vmem:[%s883 + $0x70] sm:$0xf]
        %v7083 = vld [vmem:[%s883 + $0x74] sm:$0x1]
        %v7084 = vld [vmem:[%s883 + $0x78] sm:$0xe]
        %v7085 = vld [vmem:[%s883 + $0x7c] sm:$0xf]
        %v7086 = vld [vmem:[%s883 + $0x80] sm:$0x1]
        %v7087 = vld [vmem:[%s883 + $0x84] sm:$0xe]
        %v7088 = vld [vmem:[%s883 + $0x88] sm:$0xf]
        %v7089 = vld [vmem:[%s883 + $0x8c] sm:$0x1]
        %v7090 = vld [vmem:[%s883 + $0x90] sm:$0xe]
        %v7091 = vld [vmem:[%s883 + $0x94] sm:$0xf]
        %v7092 = vld [vmem:[%s883 + $0x98] sm:$0x1]
        %v7093 = vld [vmem:[%s883 + $0x9c] sm:$0xe]
        %v7094 = vld [vmem:[%s883 + $0xa0] sm:$0xf]
        %v7095 = vld [vmem:[%s883 + $0xa4] sm:$0x1]
        %v7096 = vld [vmem:[%s883 + $0xa8] sm:$0xe]
        %v7097 = vld [vmem:[%s883 + $0xac] sm:$0xf]
        %v7098 = vld [vmem:[%s883 + $0xb0] sm:$0x1]
        %v7099 = vld [vmem:[%s883 + $0xb4] sm:$0xe]
        %v7100 = vld [vmem:[%s883 + $0xb8] sm:$0xf]
        %v7101 = vld [vmem:[%s883 + $0xbc] sm:$0x1]
        %v7150 = vrot.slane %v7054, 5
        %v7151 = vrot.slane %v7150, 4
        %v7152 = vrot.slane %v7055, 5
        %v7153 = vsel %vm1728, %v7151, %v7152
        %v7154 = vrot.slane %v7152, 4
        %v7155 = vrot.slane %v7056, 5
        %v7156 = vsel %vm1728, %v7154, %v7155
        %v7157 = vrot.slane %v7057, 5
        %v7158 = vrot.slane %v7157, 4
        %v7159 = vrot.slane %v7058, 5
        %v7160 = vsel %vm1728, %v7158, %v7159
        %v7161 = vrot.slane %v7159, 4
        %v7162 = vrot.slane %v7059, 5
        %v7163 = vsel %vm1728, %v7161, %v7162
        %v7164 = vrot.slane %v7060, 5
        %v7165 = vrot.slane %v7164, 4
        %v7166 = vrot.slane %v7061, 5
        %v7167 = vsel %vm1728, %v7165, %v7166
        %v7168 = vrot.slane %v7166, 4
        %v7169 = vrot.slane %v7062, 5
        %v7170 = vsel %vm1728, %v7168, %v7169
        %v7171 = vrot.slane %v7063, 5
        %v7172 = vrot.slane %v7171, 4
        %v7173 = vrot.slane %v7064, 5
        %v7174 = vsel %vm1728, %v7172, %v7173
        %v7175 = vrot.slane %v7173, 4
        %v7176 = vrot.slane %v7065, 5
        %v7177 = vsel %vm1728, %v7175, %v7176
        %v7178 = vrot.slane %v7066, 5
        %v7179 = vrot.slane %v7178, 4
        %v7180 = vrot.slane %v7067, 5
        %v7181 = vsel %vm1728, %v7179, %v7180
        %v7182 = vrot.slane %v7180, 4
        %v7183 = vrot.slane %v7068, 5
        %v7184 = vsel %vm1728, %v7182, %v7183
        %v7185 = vrot.slane %v7069, 5
        %v7186 = vrot.slane %v7185, 4
        %v7187 = vrot.slane %v7070, 5
        %v7188 = vsel %vm1728, %v7186, %v7187
        %v7189 = vrot.slane %v7187, 4
        %v7190 = vrot.slane %v7071, 5
        %v7191 = vsel %vm1728, %v7189, %v7190
        %v7192 = vrot.slane %v7072, 5
        %v7193 = vrot.slane %v7192, 4
        %v7194 = vrot.slane %v7073, 5
        %v7195 = vsel %vm1728, %v7193, %v7194
        %v7196 = vrot.slane %v7194, 4
        %v7197 = vrot.slane %v7074, 5
        %v7198 = vsel %vm1728, %v7196, %v7197
        %v7199 = vrot.slane %v7075, 5
        %v7200 = vrot.slane %v7199, 4
        %v7201 = vrot.slane %v7076, 5
        %v7202 = vsel %vm1728, %v7200, %v7201
        %v7203 = vrot.slane %v7201, 4
        %v7204 = vrot.slane %v7077, 5
        %v7205 = vsel %vm1728, %v7203, %v7204
        %v7206 = vrot.slane %v7078, 5
        %v7207 = vrot.slane %v7206, 4
        %v7208 = vrot.slane %v7079, 5
        %v7209 = vsel %vm1728, %v7207, %v7208
        %v7210 = vrot.slane %v7208, 4
        %v7211 = vrot.slane %v7080, 5
        %v7212 = vsel %vm1728, %v7210, %v7211
        %v7213 = vrot.slane %v7081, 5
        %v7214 = vrot.slane %v7213, 4
        %v7215 = vrot.slane %v7082, 5
        %v7216 = vsel %vm1728, %v7214, %v7215
        %v7217 = vrot.slane %v7215, 4
        %v7218 = vrot.slane %v7083, 5
        %v7219 = vsel %vm1728, %v7217, %v7218
        %v7220 = vrot.slane %v7084, 5
        %v7221 = vrot.slane %v7220, 4
        %v7222 = vrot.slane %v7085, 5
        %v7223 = vsel %vm1728, %v7221, %v7222
        %v7224 = vrot.slane %v7222, 4
        %v7225 = vrot.slane %v7086, 5
        %v7226 = vsel %vm1728, %v7224, %v7225
        %v7227 = vrot.slane %v7087, 5
        %v7228 = vrot.slane %v7227, 4
        %v7229 = vrot.slane %v7088, 5
        %v7230 = vsel %vm1728, %v7228, %v7229
        %v7231 = vrot.slane %v7229, 4
        %v7232 = vrot.slane %v7089, 5
        %v7233 = vsel %vm1728, %v7231, %v7232
        %v7234 = vrot.slane %v7090, 5
        %v7235 = vrot.slane %v7234, 4
        %v7236 = vrot.slane %v7091, 5
        %v7237 = vsel %vm1728, %v7235, %v7236
        %v7238 = vrot.slane %v7236, 4
        %v7239 = vrot.slane %v7092, 5
        %v7240 = vsel %vm1728, %v7238, %v7239
        %v7241 = vrot.slane %v7093, 5
        %v7242 = vrot.slane %v7241, 4
        %v7243 = vrot.slane %v7094, 5
        %v7244 = vsel %vm1728, %v7242, %v7243
        %v7245 = vrot.slane %v7243, 4
        %v7246 = vrot.slane %v7095, 5
        %v7247 = vsel %vm1728, %v7245, %v7246
        %v7248 = vrot.slane %v7096, 5
        %v7249 = vrot.slane %v7248, 4
        %v7250 = vrot.slane %v7097, 5
        %v7251 = vsel %vm1728, %v7249, %v7250
        %v7252 = vrot.slane %v7250, 4
        %v7253 = vrot.slane %v7098, 5
        %v7254 = vsel %vm1728, %v7252, %v7253
        %v7255 = vrot.slane %v7099, 5
        %v7256 = vrot.slane %v7255, 4
        %v7257 = vrot.slane %v7100, 5
        %v7258 = vsel %vm1728, %v7256, %v7257
        %v7259 = vrot.slane %v7257, 4
        %v7260 = vrot.slane %v7101, 5
        %v7261 = vsel %vm1728, %v7259, %v7260
        %7262 = vrot.lane.b32.xlu0 %v7153, 32
        %v7263 = vpop.permute.xlu0 %7262
        %7264 = vrot.lane.b32.xlu0 %v7156, 32
        %v7265 = vpop.permute.xlu0 %7264
        %7266 = vrot.lane.b32.xlu0 %v7160, 32
        %v7267 = vpop.permute.xlu0 %7266
        %7268 = vrot.lane.b32.xlu0 %v7163, 32
        %v7269 = vpop.permute.xlu0 %7268
        %7270 = vrot.lane.b32.xlu0 %v7167, 32
        %v7271 = vpop.permute.xlu0 %7270
        %7272 = vrot.lane.b32.xlu0 %v7170, 32
        %v7273 = vpop.permute.xlu0 %7272
        %7274 = vrot.lane.b32.xlu0 %v7174, 32
        %v7275 = vpop.permute.xlu0 %7274
        %7276 = vrot.lane.b32.xlu0 %v7177, 32
        %v7277 = vpop.permute.xlu0 %7276
        %7278 = vrot.lane.b32.xlu0 %v7181, 32
        %v7279 = vpop.permute.xlu0 %7278
        %7280 = vrot.lane.b32.xlu0 %v7184, 32
        %v7281 = vpop.permute.xlu0 %7280
        %7282 = vrot.lane.b32.xlu0 %v7188, 32
        %v7283 = vpop.permute.xlu0 %7282
        %7284 = vrot.lane.b32.xlu0 %v7191, 32
        %v7285 = vpop.permute.xlu0 %7284
        %7286 = vrot.lane.b32.xlu0 %v7195, 32
        %v7287 = vpop.permute.xlu0 %7286
        %7288 = vrot.lane.b32.xlu0 %v7198, 32
        %v7289 = vpop.permute.xlu0 %7288
        %7290 = vrot.lane.b32.xlu0 %v7202, 32
        %v7291 = vpop.permute.xlu0 %7290
        %7292 = vrot.lane.b32.xlu0 %v7205, 32
        %v7293 = vpop.permute.xlu0 %7292
        %7294 = vrot.lane.b32.xlu0 %v7209, 32
        %v7295 = vpop.permute.xlu0 %7294
        %7296 = vrot.lane.b32.xlu0 %v7212, 32
        %v7297 = vpop.permute.xlu0 %7296
        %7298 = vrot.lane.b32.xlu0 %v7216, 32
        %v7299 = vpop.permute.xlu0 %7298
        %7300 = vrot.lane.b32.xlu0 %v7219, 32
        %v7301 = vpop.permute.xlu0 %7300
        %7302 = vrot.lane.b32.xlu0 %v7223, 32
        %v7303 = vpop.permute.xlu0 %7302
        %7304 = vrot.lane.b32.xlu0 %v7226, 32
        %v7305 = vpop.permute.xlu0 %7304
        %7306 = vrot.lane.b32.xlu0 %v7230, 32
        %v7307 = vpop.permute.xlu0 %7306
        %7308 = vrot.lane.b32.xlu0 %v7233, 32
        %v7309 = vpop.permute.xlu0 %7308
        %7310 = vrot.lane.b32.xlu0 %v7237, 32
        %v7311 = vpop.permute.xlu0 %7310
        %7312 = vrot.lane.b32.xlu0 %v7240, 32
        %v7313 = vpop.permute.xlu0 %7312
        %7314 = vrot.lane.b32.xlu0 %v7244, 32
        %v7315 = vpop.permute.xlu0 %7314
        %7316 = vrot.lane.b32.xlu0 %v7247, 32
        %v7317 = vpop.permute.xlu0 %7316
        %7318 = vrot.lane.b32.xlu0 %v7251, 32
        %v7319 = vpop.permute.xlu0 %7318
        %7320 = vrot.lane.b32.xlu0 %v7254, 32
        %v7321 = vpop.permute.xlu0 %7320
        %7322 = vrot.lane.b32.xlu0 %v7258, 32
        %v7323 = vpop.permute.xlu0 %7322
        %7324 = vrot.lane.b32.xlu0 %v7261, 32
        %v7325 = vpop.permute.xlu0 %7324
        %7358 = vst.msk [vmem:[#allocation3 + $0x4] sm:$0xf] %vm1597, %v7263
        %7359 = vst.msk [vmem:[#allocation3 + $0x10] sm:$0xf] %vm1597, %v7265
        %7360 = vst.msk [vmem:[#allocation3 + $0x1c] sm:$0xf] %vm1597, %v7267
        %7361 = vst.msk [vmem:[#allocation3 + $0x28] sm:$0xf] %vm1597, %v7269
        %7362 = vst.msk [vmem:[#allocation3 + $0x34] sm:$0xf] %vm1597, %v7271
        %7363 = vst.msk [vmem:[#allocation3 + $0x40] sm:$0xf] %vm1597, %v7273
        %7364 = vst.msk [vmem:[#allocation3 + $0x4c] sm:$0xf] %vm1597, %v7275
        %7365 = vst.msk [vmem:[#allocation3 + $0x58] sm:$0xf] %vm1597, %v7277
        %7366 = vst.msk [vmem:[#allocation3 + $0x64] sm:$0xf] %vm1597, %v7279
        %7367 = vst.msk [vmem:[#allocation3 + $0x70] sm:$0xf] %vm1597, %v7281
        %7368 = vst.msk [vmem:[#allocation3 + $0x7c] sm:$0xf] %vm1597, %v7283
        %7369 = vst.msk [vmem:[#allocation3 + $0x88] sm:$0xf] %vm1597, %v7285
        %7370 = vst.msk [vmem:[#allocation3 + $0x94] sm:$0xf] %vm1597, %v7287
        %7371 = vst.msk [vmem:[#allocation3 + $0xa0] sm:$0xf] %vm1597, %v7289
        %7372 = vst.msk [vmem:[#allocation3 + $0xac] sm:$0xf] %vm1597, %v7291
        %7373 = vst.msk [vmem:[#allocation3 + $0xb8] sm:$0xf] %vm1597, %v7293
        %7374 = vst.msk [vmem:[#allocation3 + $0xc4] sm:$0xf] %vm1597, %v7295
        %7375 = vst.msk [vmem:[#allocation3 + $0xd0] sm:$0xf] %vm1597, %v7297
        %7376 = vst.msk [vmem:[#allocation3 + $0xdc] sm:$0xf] %vm1597, %v7299
        %7377 = vst.msk [vmem:[#allocation3 + $0xe8] sm:$0xf] %vm1597, %v7301
        %7378 = vst.msk [vmem:[#allocation3 + $0xf4] sm:$0xf] %vm1597, %v7303
        %7379 = vst.msk [vmem:[#allocation3 + $0x100] sm:$0xf] %vm1597, %v7305
        %7380 = vst.msk [vmem:[#allocation3 + $0x10c] sm:$0xf] %vm1597, %v7307
        %7381 = vst.msk [vmem:[#allocation3 + $0x118] sm:$0xf] %vm1597, %v7309
        %7382 = vst.msk [vmem:[#allocation3 + $0x124] sm:$0xf] %vm1597, %v7311
        %7383 = vst.msk [vmem:[#allocation3 + $0x130] sm:$0xf] %vm1597, %v7313
        %7384 = vst.msk [vmem:[#allocation3 + $0x13c] sm:$0xf] %vm1597, %v7315
        %7385 = vst.msk [vmem:[#allocation3 + $0x148] sm:$0xf] %vm1597, %v7317
        %7386 = vst.msk [vmem:[#allocation3 + $0x154] sm:$0xf] %vm1597, %v7319
        %7387 = vst.msk [vmem:[#allocation3 + $0x160] sm:$0xf] %vm1597, %v7321
        %7388 = vst.msk [vmem:[#allocation3 + $0x16c] sm:$0xf] %vm1597, %v7323
        %7389 = vst.msk [vmem:[#allocation3 + $0x178] sm:$0xf] %vm1597, %v7325
        %v7390 = vld [vmem:[%s2995] sm:$0xf]
        %v7391 = vld [vmem:[%s2995 + $0x4] sm:$0xf]
        %v7392 = vld [vmem:[%s2995 + $0xc] sm:$0xf]
        %v7393 = vld [vmem:[%s2995 + $0x10] sm:$0xf]
        %v7394 = vld [vmem:[%s2995 + $0x18] sm:$0xf]
        %v7395 = vld [vmem:[%s2995 + $0x1c] sm:$0xf]
        %v7396 = vld [vmem:[%s2995 + $0x24] sm:$0xf]
        %v7397 = vld [vmem:[%s2995 + $0x28] sm:$0xf]
        %v7398 = vld [vmem:[%s2995 + $0x30] sm:$0xf]
        %v7399 = vld [vmem:[%s2995 + $0x34] sm:$0xf]
        %v7400 = vld [vmem:[%s2995 + $0x3c] sm:$0xf]
        %v7401 = vld [vmem:[%s2995 + $0x40] sm:$0xf]
        %v7402 = vld [vmem:[%s2995 + $0x48] sm:$0xf]
        %v7403 = vld [vmem:[%s2995 + $0x4c] sm:$0xf]
        %v7404 = vld [vmem:[%s2995 + $0x54] sm:$0xf]
        %v7405 = vld [vmem:[%s2995 + $0x58] sm:$0xf]
        %v7406 = vld [vmem:[%s2995 + $0x60] sm:$0xf]
        %v7407 = vld [vmem:[%s2995 + $0x64] sm:$0xf]
        %v7408 = vld [vmem:[%s2995 + $0x6c] sm:$0xf]
        %v7409 = vld [vmem:[%s2995 + $0x70] sm:$0xf]
        %v7410 = vld [vmem:[%s2995 + $0x78] sm:$0xf]
        %v7411 = vld [vmem:[%s2995 + $0x7c] sm:$0xf]
        %v7412 = vld [vmem:[%s2995 + $0x84] sm:$0xf]
        %v7413 = vld [vmem:[%s2995 + $0x88] sm:$0xf]
        %v7414 = vld [vmem:[%s2995 + $0x90] sm:$0xf]
        %v7415 = vld [vmem:[%s2995 + $0x94] sm:$0xf]
        %v7416 = vld [vmem:[%s2995 + $0x9c] sm:$0xf]
        %v7417 = vld [vmem:[%s2995 + $0xa0] sm:$0xf]
        %v7418 = vld [vmem:[%s2995 + $0xa8] sm:$0xf]
        %v7419 = vld [vmem:[%s2995 + $0xac] sm:$0xf]
        %v7420 = vld [vmem:[%s2995 + $0xb4] sm:$0xf]
        %v7421 = vld [vmem:[%s2995 + $0xb8] sm:$0xf]
        %7454 = vrot.lane.b32.xlu0 %v7390, 64
        %v7455 = vpop.permute.xlu0 %7454
        %7456 = vrot.lane.b32.xlu0 %v7391, 64
        %v7457 = vpop.permute.xlu0 %7456
        %7458 = vrot.lane.b32.xlu0 %v7392, 64
        %v7459 = vpop.permute.xlu0 %7458
        %7460 = vrot.lane.b32.xlu0 %v7393, 64
        %v7461 = vpop.permute.xlu0 %7460
        %7462 = vrot.lane.b32.xlu0 %v7394, 64
        %v7463 = vpop.permute.xlu0 %7462
        %7464 = vrot.lane.b32.xlu0 %v7395, 64
        %v7465 = vpop.permute.xlu0 %7464
        %7466 = vrot.lane.b32.xlu0 %v7396, 64
        %v7467 = vpop.permute.xlu0 %7466
        %7468 = vrot.lane.b32.xlu0 %v7397, 64
        %v7469 = vpop.permute.xlu0 %7468
        %7470 = vrot.lane.b32.xlu0 %v7398, 64
        %v7471 = vpop.permute.xlu0 %7470
        %7472 = vrot.lane.b32.xlu0 %v7399, 64
        %v7473 = vpop.permute.xlu0 %7472
        %7474 = vrot.lane.b32.xlu0 %v7400, 64
        %v7475 = vpop.permute.xlu0 %7474
        %7476 = vrot.lane.b32.xlu0 %v7401, 64
        %v7477 = vpop.permute.xlu0 %7476
        %7478 = vrot.lane.b32.xlu0 %v7402, 64
        %v7479 = vpop.permute.xlu0 %7478
        %7480 = vrot.lane.b32.xlu0 %v7403, 64
        %v7481 = vpop.permute.xlu0 %7480
        %7482 = vrot.lane.b32.xlu0 %v7404, 64
        %v7483 = vpop.permute.xlu0 %7482
        %7484 = vrot.lane.b32.xlu0 %v7405, 64
        %v7485 = vpop.permute.xlu0 %7484
        %7486 = vrot.lane.b32.xlu0 %v7406, 64
        %v7487 = vpop.permute.xlu0 %7486
        %7488 = vrot.lane.b32.xlu0 %v7407, 64
        %v7489 = vpop.permute.xlu0 %7488
        %7490 = vrot.lane.b32.xlu0 %v7408, 64
        %v7491 = vpop.permute.xlu0 %7490
        %7492 = vrot.lane.b32.xlu0 %v7409, 64
        %v7493 = vpop.permute.xlu0 %7492
        %7494 = vrot.lane.b32.xlu0 %v7410, 64
        %v7495 = vpop.permute.xlu0 %7494
        %7496 = vrot.lane.b32.xlu0 %v7411, 64
        %v7497 = vpop.permute.xlu0 %7496
        %7498 = vrot.lane.b32.xlu0 %v7412, 64
        %v7499 = vpop.permute.xlu0 %7498
        %7500 = vrot.lane.b32.xlu0 %v7413, 64
        %v7501 = vpop.permute.xlu0 %7500
        %7502 = vrot.lane.b32.xlu0 %v7414, 64
        %v7503 = vpop.permute.xlu0 %7502
        %7504 = vrot.lane.b32.xlu0 %v7415, 64
        %v7505 = vpop.permute.xlu0 %7504
        %7506 = vrot.lane.b32.xlu0 %v7416, 64
        %v7507 = vpop.permute.xlu0 %7506
        %7508 = vrot.lane.b32.xlu0 %v7417, 64
        %v7509 = vpop.permute.xlu0 %7508
        %7510 = vrot.lane.b32.xlu0 %v7418, 64
        %v7511 = vpop.permute.xlu0 %7510
        %7512 = vrot.lane.b32.xlu0 %v7419, 64
        %v7513 = vpop.permute.xlu0 %7512
        %7514 = vrot.lane.b32.xlu0 %v7420, 64
        %v7515 = vpop.permute.xlu0 %7514
        %7516 = vrot.lane.b32.xlu0 %v7421, 64
        %v7517 = vpop.permute.xlu0 %7516
        %7550 = vst.msk [vmem:[#allocation3 + $0x4] sm:$0xf] %vm1937, %v7455
        %7551 = vst.msk [vmem:[#allocation3 + $0x10] sm:$0xf] %vm1937, %v7457
        %7552 = vst.msk [vmem:[#allocation3 + $0x1c] sm:$0xf] %vm1937, %v7459
        %7553 = vst.msk [vmem:[#allocation3 + $0x28] sm:$0xf] %vm1937, %v7461
        %7554 = vst.msk [vmem:[#allocation3 + $0x34] sm:$0xf] %vm1937, %v7463
        %7555 = vst.msk [vmem:[#allocation3 + $0x40] sm:$0xf] %vm1937, %v7465
        %7556 = vst.msk [vmem:[#allocation3 + $0x4c] sm:$0xf] %vm1937, %v7467
        %7557 = vst.msk [vmem:[#allocation3 + $0x58] sm:$0xf] %vm1937, %v7469
        %7558 = vst.msk [vmem:[#allocation3 + $0x64] sm:$0xf] %vm1937, %v7471
        %7559 = vst.msk [vmem:[#allocation3 + $0x70] sm:$0xf] %vm1937, %v7473
        %7560 = vst.msk [vmem:[#allocation3 + $0x7c] sm:$0xf] %vm1937, %v7475
        %7561 = vst.msk [vmem:[#allocation3 + $0x88] sm:$0xf] %vm1937, %v7477
        %7562 = vst.msk [vmem:[#allocation3 + $0x94] sm:$0xf] %vm1937, %v7479
        %7563 = vst.msk [vmem:[#allocation3 + $0xa0] sm:$0xf] %vm1937, %v7481
        %7564 = vst.msk [vmem:[#allocation3 + $0xac] sm:$0xf] %vm1937, %v7483
        %7565 = vst.msk [vmem:[#allocation3 + $0xb8] sm:$0xf] %vm1937, %v7485
        %7566 = vst.msk [vmem:[#allocation3 + $0xc4] sm:$0xf] %vm1937, %v7487
        %7567 = vst.msk [vmem:[#allocation3 + $0xd0] sm:$0xf] %vm1937, %v7489
        %7568 = vst.msk [vmem:[#allocation3 + $0xdc] sm:$0xf] %vm1937, %v7491
        %7569 = vst.msk [vmem:[#allocation3 + $0xe8] sm:$0xf] %vm1937, %v7493
        %7570 = vst.msk [vmem:[#allocation3 + $0xf4] sm:$0xf] %vm1937, %v7495
        %7571 = vst.msk [vmem:[#allocation3 + $0x100] sm:$0xf] %vm1937, %v7497
        %7572 = vst.msk [vmem:[#allocation3 + $0x10c] sm:$0xf] %vm1937, %v7499
        %7573 = vst.msk [vmem:[#allocation3 + $0x118] sm:$0xf] %vm1937, %v7501
        %7574 = vst.msk [vmem:[#allocation3 + $0x124] sm:$0xf] %vm1937, %v7503
        %7575 = vst.msk [vmem:[#allocation3 + $0x130] sm:$0xf] %vm1937, %v7505
        %7576 = vst.msk [vmem:[#allocation3 + $0x13c] sm:$0xf] %vm1937, %v7507
        %7577 = vst.msk [vmem:[#allocation3 + $0x148] sm:$0xf] %vm1937, %v7509
        %7578 = vst.msk [vmem:[#allocation3 + $0x154] sm:$0xf] %vm1937, %v7511
        %7579 = vst.msk [vmem:[#allocation3 + $0x160] sm:$0xf] %vm1937, %v7513
        %7580 = vst.msk [vmem:[#allocation3 + $0x16c] sm:$0xf] %vm1937, %v7515
        %7581 = vst.msk [vmem:[#allocation3 + $0x178] sm:$0xf] %vm1937, %v7517
        %v7582 = vld [vmem:[%s2995] sm:$0xf]
        %v7583 = vld [vmem:[%s2995 + $0x4] sm:$0xf]
        %v7584 = vld [vmem:[%s2995 + $0x8] sm:$0x1]
        %v7585 = vld [vmem:[%s2995 + $0xc] sm:$0xf]
        %v7586 = vld [vmem:[%s2995 + $0x10] sm:$0xf]
        %v7587 = vld [vmem:[%s2995 + $0x14] sm:$0x1]
        %v7588 = vld [vmem:[%s2995 + $0x18] sm:$0xf]
        %v7589 = vld [vmem:[%s2995 + $0x1c] sm:$0xf]
        %v7590 = vld [vmem:[%s2995 + $0x20] sm:$0x1]
        %v7591 = vld [vmem:[%s2995 + $0x24] sm:$0xf]
        %v7592 = vld [vmem:[%s2995 + $0x28] sm:$0xf]
        %v7593 = vld [vmem:[%s2995 + $0x2c] sm:$0x1]
        %v7594 = vld [vmem:[%s2995 + $0x30] sm:$0xf]
        %v7595 = vld [vmem:[%s2995 + $0x34] sm:$0xf]
        %v7596 = vld [vmem:[%s2995 + $0x38] sm:$0x1]
        %v7597 = vld [vmem:[%s2995 + $0x3c] sm:$0xf]
        %v7598 = vld [vmem:[%s2995 + $0x40] sm:$0xf]
        %v7599 = vld [vmem:[%s2995 + $0x44] sm:$0x1]
        %v7600 = vld [vmem:[%s2995 + $0x48] sm:$0xf]
        %v7601 = vld [vmem:[%s2995 + $0x4c] sm:$0xf]
        %v7602 = vld [vmem:[%s2995 + $0x50] sm:$0x1]
        %v7603 = vld [vmem:[%s2995 + $0x54] sm:$0xf]
        %v7604 = vld [vmem:[%s2995 + $0x58] sm:$0xf]
        %v7605 = vld [vmem:[%s2995 + $0x5c] sm:$0x1]
        %v7606 = vld [vmem:[%s2995 + $0x60] sm:$0xf]
        %v7607 = vld [vmem:[%s2995 + $0x64] sm:$0xf]
        %v7608 = vld [vmem:[%s2995 + $0x68] sm:$0x1]
        %v7609 = vld [vmem:[%s2995 + $0x6c] sm:$0xf]
        %v7610 = vld [vmem:[%s2995 + $0x70] sm:$0xf]
        %v7611 = vld [vmem:[%s2995 + $0x74] sm:$0x1]
        %v7612 = vld [vmem:[%s2995 + $0x78] sm:$0xf]
        %v7613 = vld [vmem:[%s2995 + $0x7c] sm:$0xf]
        %v7614 = vld [vmem:[%s2995 + $0x80] sm:$0x1]
        %v7615 = vld [vmem:[%s2995 + $0x84] sm:$0xf]
        %v7616 = vld [vmem:[%s2995 + $0x88] sm:$0xf]
        %v7617 = vld [vmem:[%s2995 + $0x8c] sm:$0x1]
        %v7618 = vld [vmem:[%s2995 + $0x90] sm:$0xf]
        %v7619 = vld [vmem:[%s2995 + $0x94] sm:$0xf]
        %v7620 = vld [vmem:[%s2995 + $0x98] sm:$0x1]
        %v7621 = vld [vmem:[%s2995 + $0x9c] sm:$0xf]
        %v7622 = vld [vmem:[%s2995 + $0xa0] sm:$0xf]
        %v7623 = vld [vmem:[%s2995 + $0xa4] sm:$0x1]
        %v7624 = vld [vmem:[%s2995 + $0xa8] sm:$0xf]
        %v7625 = vld [vmem:[%s2995 + $0xac] sm:$0xf]
        %v7626 = vld [vmem:[%s2995 + $0xb0] sm:$0x1]
        %v7627 = vld [vmem:[%s2995 + $0xb4] sm:$0xf]
        %v7628 = vld [vmem:[%s2995 + $0xb8] sm:$0xf]
        %v7629 = vld [vmem:[%s2995 + $0xbc] sm:$0x1]
        %v7631 = vshrl.u32 %v7582, 16
        %v7633 = vrot.slane %v7631, 4
        %v7634 = vshll.u32 %v7582, 16
        %v7636 = vrot.slane %v7634, 5
        %v7637 = vor.u32 %v7633, %v7636
        %v7638 = vrot.slane %v7637, 4
        %v7640 = vshll.u32 %v7583, 16
        %v7642 = vrot.slane %v7640, 5
        %v7643 = vsel %vm1116, %v7638, %v7642
        %v7644 = vshrl.u32 %v7583, 16
        %v7646 = vrot.slane %v7644, 4
        %v7647 = vor.u32 %v7646, %v7642
        %v7648 = vrot.slane %v7647, 4
        %v7650 = vshll.u32 %v7584, 16
        %v7652 = vrot.slane %v7650, 5
        %v7653 = vsel %vm1116, %v7648, %v7652
        %v7655 = vshrl.u32 %v7585, 16
        %v7657 = vrot.slane %v7655, 4
        %v7658 = vshll.u32 %v7585, 16
        %v7660 = vrot.slane %v7658, 5
        %v7661 = vor.u32 %v7657, %v7660
        %v7662 = vrot.slane %v7661, 4
        %v7664 = vshll.u32 %v7586, 16
        %v7666 = vrot.slane %v7664, 5
        %v7667 = vsel %vm1116, %v7662, %v7666
        %v7668 = vshrl.u32 %v7586, 16
        %v7670 = vrot.slane %v7668, 4
        %v7671 = vor.u32 %v7670, %v7666
        %v7672 = vrot.slane %v7671, 4
        %v7674 = vshll.u32 %v7587, 16
        %v7676 = vrot.slane %v7674, 5
        %v7677 = vsel %vm1116, %v7672, %v7676
        %v7679 = vshrl.u32 %v7588, 16
        %v7681 = vrot.slane %v7679, 4
        %v7682 = vshll.u32 %v7588, 16
        %v7684 = vrot.slane %v7682, 5
        %v7685 = vor.u32 %v7681, %v7684
        %v7686 = vrot.slane %v7685, 4
        %v7688 = vshll.u32 %v7589, 16
        %v7690 = vrot.slane %v7688, 5
        %v7691 = vsel %vm1116, %v7686, %v7690
        %v7692 = vshrl.u32 %v7589, 16
        %v7694 = vrot.slane %v7692, 4
        %v7695 = vor.u32 %v7694, %v7690
        %v7696 = vrot.slane %v7695, 4
        %v7698 = vshll.u32 %v7590, 16
        %v7700 = vrot.slane %v7698, 5
        %v7701 = vsel %vm1116, %v7696, %v7700
        %v7703 = vshrl.u32 %v7591, 16
        %v7705 = vrot.slane %v7703, 4
        %v7706 = vshll.u32 %v7591, 16
        %v7708 = vrot.slane %v7706, 5
        %v7709 = vor.u32 %v7705, %v7708
        %v7710 = vrot.slane %v7709, 4
        %v7712 = vshll.u32 %v7592, 16
        %v7714 = vrot.slane %v7712, 5
        %v7715 = vsel %vm1116, %v7710, %v7714
        %v7716 = vshrl.u32 %v7592, 16
        %v7718 = vrot.slane %v7716, 4
        %v7719 = vor.u32 %v7718, %v7714
        %v7720 = vrot.slane %v7719, 4
        %v7722 = vshll.u32 %v7593, 16
        %v7724 = vrot.slane %v7722, 5
        %v7725 = vsel %vm1116, %v7720, %v7724
        %v7727 = vshrl.u32 %v7594, 16
        %v7729 = vrot.slane %v7727, 4
        %v7730 = vshll.u32 %v7594, 16
        %v7732 = vrot.slane %v7730, 5
        %v7733 = vor.u32 %v7729, %v7732
        %v7734 = vrot.slane %v7733, 4
        %v7736 = vshll.u32 %v7595, 16
        %v7738 = vrot.slane %v7736, 5
        %v7739 = vsel %vm1116, %v7734, %v7738
        %v7740 = vshrl.u32 %v7595, 16
        %v7742 = vrot.slane %v7740, 4
        %v7743 = vor.u32 %v7742, %v7738
        %v7744 = vrot.slane %v7743, 4
        %v7746 = vshll.u32 %v7596, 16
        %v7748 = vrot.slane %v7746, 5
        %v7749 = vsel %vm1116, %v7744, %v7748
        %v7751 = vshrl.u32 %v7597, 16
        %v7753 = vrot.slane %v7751, 4
        %v7754 = vshll.u32 %v7597, 16
        %v7756 = vrot.slane %v7754, 5
        %v7757 = vor.u32 %v7753, %v7756
        %v7758 = vrot.slane %v7757, 4
        %v7760 = vshll.u32 %v7598, 16
        %v7762 = vrot.slane %v7760, 5
        %v7763 = vsel %vm1116, %v7758, %v7762
        %v7764 = vshrl.u32 %v7598, 16
        %v7766 = vrot.slane %v7764, 4
        %v7767 = vor.u32 %v7766, %v7762
        %v7768 = vrot.slane %v7767, 4
        %v7770 = vshll.u32 %v7599, 16
        %v7772 = vrot.slane %v7770, 5
        %v7773 = vsel %vm1116, %v7768, %v7772
        %v7775 = vshrl.u32 %v7600, 16
        %v7777 = vrot.slane %v7775, 4
        %v7778 = vshll.u32 %v7600, 16
        %v7780 = vrot.slane %v7778, 5
        %v7781 = vor.u32 %v7777, %v7780
        %v7782 = vrot.slane %v7781, 4
        %v7784 = vshll.u32 %v7601, 16
        %v7786 = vrot.slane %v7784, 5
        %v7787 = vsel %vm1116, %v7782, %v7786
        %v7788 = vshrl.u32 %v7601, 16
        %v7790 = vrot.slane %v7788, 4
        %v7791 = vor.u32 %v7790, %v7786
        %v7792 = vrot.slane %v7791, 4
        %v7794 = vshll.u32 %v7602, 16
        %v7796 = vrot.slane %v7794, 5
        %v7797 = vsel %vm1116, %v7792, %v7796
        %v7799 = vshrl.u32 %v7603, 16
        %v7801 = vrot.slane %v7799, 4
        %v7802 = vshll.u32 %v7603, 16
        %v7804 = vrot.slane %v7802, 5
        %v7805 = vor.u32 %v7801, %v7804
        %v7806 = vrot.slane %v7805, 4
        %v7808 = vshll.u32 %v7604, 16
        %v7810 = vrot.slane %v7808, 5
        %v7811 = vsel %vm1116, %v7806, %v7810
        %v7812 = vshrl.u32 %v7604, 16
        %v7814 = vrot.slane %v7812, 4
        %v7815 = vor.u32 %v7814, %v7810
        %v7816 = vrot.slane %v7815, 4
        %v7818 = vshll.u32 %v7605, 16
        %v7820 = vrot.slane %v7818, 5
        %v7821 = vsel %vm1116, %v7816, %v7820
        %v7823 = vshrl.u32 %v7606, 16
        %v7825 = vrot.slane %v7823, 4
        %v7826 = vshll.u32 %v7606, 16
        %v7828 = vrot.slane %v7826, 5
        %v7829 = vor.u32 %v7825, %v7828
        %v7830 = vrot.slane %v7829, 4
        %v7832 = vshll.u32 %v7607, 16
        %v7834 = vrot.slane %v7832, 5
        %v7835 = vsel %vm1116, %v7830, %v7834
        %v7836 = vshrl.u32 %v7607, 16
        %v7838 = vrot.slane %v7836, 4
        %v7839 = vor.u32 %v7838, %v7834
        %v7840 = vrot.slane %v7839, 4
        %v7842 = vshll.u32 %v7608, 16
        %v7844 = vrot.slane %v7842, 5
        %v7845 = vsel %vm1116, %v7840, %v7844
        %v7847 = vshrl.u32 %v7609, 16
        %v7849 = vrot.slane %v7847, 4
        %v7850 = vshll.u32 %v7609, 16
        %v7852 = vrot.slane %v7850, 5
        %v7853 = vor.u32 %v7849, %v7852
        %v7854 = vrot.slane %v7853, 4
        %v7856 = vshll.u32 %v7610, 16
        %v7858 = vrot.slane %v7856, 5
        %v7859 = vsel %vm1116, %v7854, %v7858
        %v7860 = vshrl.u32 %v7610, 16
        %v7862 = vrot.slane %v7860, 4
        %v7863 = vor.u32 %v7862, %v7858
        %v7864 = vrot.slane %v7863, 4
        %v7866 = vshll.u32 %v7611, 16
        %v7868 = vrot.slane %v7866, 5
        %v7869 = vsel %vm1116, %v7864, %v7868
        %v7871 = vshrl.u32 %v7612, 16
        %v7873 = vrot.slane %v7871, 4
        %v7874 = vshll.u32 %v7612, 16
        %v7876 = vrot.slane %v7874, 5
        %v7877 = vor.u32 %v7873, %v7876
        %v7878 = vrot.slane %v7877, 4
        %v7880 = vshll.u32 %v7613, 16
        %v7882 = vrot.slane %v7880, 5
        %v7883 = vsel %vm1116, %v7878, %v7882
        %v7884 = vshrl.u32 %v7613, 16
        %v7886 = vrot.slane %v7884, 4
        %v7887 = vor.u32 %v7886, %v7882
        %v7888 = vrot.slane %v7887, 4
        %v7890 = vshll.u32 %v7614, 16
        %v7892 = vrot.slane %v7890, 5
        %v7893 = vsel %vm1116, %v7888, %v7892
        %v7895 = vshrl.u32 %v7615, 16
        %v7897 = vrot.slane %v7895, 4
        %v7898 = vshll.u32 %v7615, 16
        %v7900 = vrot.slane %v7898, 5
        %v7901 = vor.u32 %v7897, %v7900
        %v7902 = vrot.slane %v7901, 4
        %v7904 = vshll.u32 %v7616, 16
        %v7906 = vrot.slane %v7904, 5
        %v7907 = vsel %vm1116, %v7902, %v7906
        %v7908 = vshrl.u32 %v7616, 16
        %v7910 = vrot.slane %v7908, 4
        %v7911 = vor.u32 %v7910, %v7906
        %v7912 = vrot.slane %v7911, 4
        %v7914 = vshll.u32 %v7617, 16
        %v7916 = vrot.slane %v7914, 5
        %v7917 = vsel %vm1116, %v7912, %v7916
        %v7919 = vshrl.u32 %v7618, 16
        %v7921 = vrot.slane %v7919, 4
        %v7922 = vshll.u32 %v7618, 16
        %v7924 = vrot.slane %v7922, 5
        %v7925 = vor.u32 %v7921, %v7924
        %v7926 = vrot.slane %v7925, 4
        %v7928 = vshll.u32 %v7619, 16
        %v7930 = vrot.slane %v7928, 5
        %v7931 = vsel %vm1116, %v7926, %v7930
        %v7932 = vshrl.u32 %v7619, 16
        %v7934 = vrot.slane %v7932, 4
        %v7935 = vor.u32 %v7934, %v7930
        %v7936 = vrot.slane %v7935, 4
        %v7938 = vshll.u32 %v7620, 16
        %v7940 = vrot.slane %v7938, 5
        %v7941 = vsel %vm1116, %v7936, %v7940
        %v7943 = vshrl.u32 %v7621, 16
        %v7945 = vrot.slane %v7943, 4
        %v7946 = vshll.u32 %v7621, 16
        %v7948 = vrot.slane %v7946, 5
        %v7949 = vor.u32 %v7945, %v7948
        %v7950 = vrot.slane %v7949, 4
        %v7952 = vshll.u32 %v7622, 16
        %v7954 = vrot.slane %v7952, 5
        %v7955 = vsel %vm1116, %v7950, %v7954
        %v7956 = vshrl.u32 %v7622, 16
        %v7958 = vrot.slane %v7956, 4
        %v7959 = vor.u32 %v7958, %v7954
        %v7960 = vrot.slane %v7959, 4
        %v7962 = vshll.u32 %v7623, 16
        %v7964 = vrot.slane %v7962, 5
        %v7965 = vsel %vm1116, %v7960, %v7964
        %v7967 = vshrl.u32 %v7624, 16
        %v7969 = vrot.slane %v7967, 4
        %v7970 = vshll.u32 %v7624, 16
        %v7972 = vrot.slane %v7970, 5
        %v7973 = vor.u32 %v7969, %v7972
        %v7974 = vrot.slane %v7973, 4
        %v7976 = vshll.u32 %v7625, 16
        %v7978 = vrot.slane %v7976, 5
        %v7979 = vsel %vm1116, %v7974, %v7978
        %v7980 = vshrl.u32 %v7625, 16
        %v7982 = vrot.slane %v7980, 4
        %v7983 = vor.u32 %v7982, %v7978
        %v7984 = vrot.slane %v7983, 4
        %v7986 = vshll.u32 %v7626, 16
        %v7988 = vrot.slane %v7986, 5
        %v7989 = vsel %vm1116, %v7984, %v7988
        %v7991 = vshrl.u32 %v7627, 16
        %v7993 = vrot.slane %v7991, 4
        %v7994 = vshll.u32 %v7627, 16
        %v7996 = vrot.slane %v7994, 5
        %v7997 = vor.u32 %v7993, %v7996
        %v7998 = vrot.slane %v7997, 4
        %v8000 = vshll.u32 %v7628, 16
        %v8002 = vrot.slane %v8000, 5
        %v8003 = vsel %vm1116, %v7998, %v8002
        %v8004 = vshrl.u32 %v7628, 16
        %v8006 = vrot.slane %v8004, 4
        %v8007 = vor.u32 %v8006, %v8002
        %v8008 = vrot.slane %v8007, 4
        %v8010 = vshll.u32 %v7629, 16
        %v8012 = vrot.slane %v8010, 5
        %v8013 = vsel %vm1116, %v8008, %v8012
        %8014 = vrot.lane.b32.xlu0 %v7643, 96
        %v8015 = vpop.permute.xlu0 %8014
        %8016 = vrot.lane.b32.xlu0 %v7653, 96
        %v8017 = vpop.permute.xlu0 %8016
        %8018 = vrot.lane.b32.xlu0 %v7667, 96
        %v8019 = vpop.permute.xlu0 %8018
        %8020 = vrot.lane.b32.xlu0 %v7677, 96
        %v8021 = vpop.permute.xlu0 %8020
        %8022 = vrot.lane.b32.xlu0 %v7691, 96
        %v8023 = vpop.permute.xlu0 %8022
        %8024 = vrot.lane.b32.xlu0 %v7701, 96
        %v8025 = vpop.permute.xlu0 %8024
        %8026 = vrot.lane.b32.xlu0 %v7715, 96
        %v8027 = vpop.permute.xlu0 %8026
        %8028 = vrot.lane.b32.xlu0 %v7725, 96
        %v8029 = vpop.permute.xlu0 %8028
        %8030 = vrot.lane.b32.xlu0 %v7739, 96
        %v8031 = vpop.permute.xlu0 %8030
        %8032 = vrot.lane.b32.xlu0 %v7749, 96
        %v8033 = vpop.permute.xlu0 %8032
        %8034 = vrot.lane.b32.xlu0 %v7763, 96
        %v8035 = vpop.permute.xlu0 %8034
        %8036 = vrot.lane.b32.xlu0 %v7773, 96
        %v8037 = vpop.permute.xlu0 %8036
        %8038 = vrot.lane.b32.xlu0 %v7787, 96
        %v8039 = vpop.permute.xlu0 %8038
        %8040 = vrot.lane.b32.xlu0 %v7797, 96
        %v8041 = vpop.permute.xlu0 %8040
        %8042 = vrot.lane.b32.xlu0 %v7811, 96
        %v8043 = vpop.permute.xlu0 %8042
        %8044 = vrot.lane.b32.xlu0 %v7821, 96
        %v8045 = vpop.permute.xlu0 %8044
        %8046 = vrot.lane.b32.xlu0 %v7835, 96
        %v8047 = vpop.permute.xlu0 %8046
        %8048 = vrot.lane.b32.xlu0 %v7845, 96
        %v8049 = vpop.permute.xlu0 %8048
        %8050 = vrot.lane.b32.xlu0 %v7859, 96
        %v8051 = vpop.permute.xlu0 %8050
        %8052 = vrot.lane.b32.xlu0 %v7869, 96
        %v8053 = vpop.permute.xlu0 %8052
        %8054 = vrot.lane.b32.xlu0 %v7883, 96
        %v8055 = vpop.permute.xlu0 %8054
        %8056 = vrot.lane.b32.xlu0 %v7893, 96
        %v8057 = vpop.permute.xlu0 %8056
        %8058 = vrot.lane.b32.xlu0 %v7907, 96
        %v8059 = vpop.permute.xlu0 %8058
        %8060 = vrot.lane.b32.xlu0 %v7917, 96
        %v8061 = vpop.permute.xlu0 %8060
        %8062 = vrot.lane.b32.xlu0 %v7931, 96
        %v8063 = vpop.permute.xlu0 %8062
        %8064 = vrot.lane.b32.xlu0 %v7941, 96
        %v8065 = vpop.permute.xlu0 %8064
        %8066 = vrot.lane.b32.xlu0 %v7955, 96
        %v8067 = vpop.permute.xlu0 %8066
        %8068 = vrot.lane.b32.xlu0 %v7965, 96
        %v8069 = vpop.permute.xlu0 %8068
        %8070 = vrot.lane.b32.xlu0 %v7979, 96
        %v8071 = vpop.permute.xlu0 %8070
        %8072 = vrot.lane.b32.xlu0 %v7989, 96
        %v8073 = vpop.permute.xlu0 %8072
        %8074 = vrot.lane.b32.xlu0 %v8003, 96
        %v8075 = vpop.permute.xlu0 %8074
        %8076 = vrot.lane.b32.xlu0 %v8013, 96
        %v8077 = vpop.permute.xlu0 %8076
        %8110 = vst.msk [vmem:[#allocation3 + $0x4] sm:$0xf] %vm2130, %v8015
        %8111 = vst.msk [vmem:[#allocation3 + $0x10] sm:$0xf] %vm2130, %v8017
        %8112 = vst.msk [vmem:[#allocation3 + $0x1c] sm:$0xf] %vm2130, %v8019
        %8113 = vst.msk [vmem:[#allocation3 + $0x28] sm:$0xf] %vm2130, %v8021
        %8114 = vst.msk [vmem:[#allocation3 + $0x34] sm:$0xf] %vm2130, %v8023
        %8115 = vst.msk [vmem:[#allocation3 + $0x40] sm:$0xf] %vm2130, %v8025
        %8116 = vst.msk [vmem:[#allocation3 + $0x4c] sm:$0xf] %vm2130, %v8027
        %8117 = vst.msk [vmem:[#allocation3 + $0x58] sm:$0xf] %vm2130, %v8029
        %8118 = vst.msk [vmem:[#allocation3 + $0x64] sm:$0xf] %vm2130, %v8031
        %8119 = vst.msk [vmem:[#allocation3 + $0x70] sm:$0xf] %vm2130, %v8033
        %8120 = vst.msk [vmem:[#allocation3 + $0x7c] sm:$0xf] %vm2130, %v8035
        %8121 = vst.msk [vmem:[#allocation3 + $0x88] sm:$0xf] %vm2130, %v8037
        %8122 = vst.msk [vmem:[#allocation3 + $0x94] sm:$0xf] %vm2130, %v8039
        %8123 = vst.msk [vmem:[#allocation3 + $0xa0] sm:$0xf] %vm2130, %v8041
        %8124 = vst.msk [vmem:[#allocation3 + $0xac] sm:$0xf] %vm2130, %v8043
        %8125 = vst.msk [vmem:[#allocation3 + $0xb8] sm:$0xf] %vm2130, %v8045
        %8126 = vst.msk [vmem:[#allocation3 + $0xc4] sm:$0xf] %vm2130, %v8047
        %8127 = vst.msk [vmem:[#allocation3 + $0xd0] sm:$0xf] %vm2130, %v8049
        %8128 = vst.msk [vmem:[#allocation3 + $0xdc] sm:$0xf] %vm2130, %v8051
        %8129 = vst.msk [vmem:[#allocation3 + $0xe8] sm:$0xf] %vm2130, %v8053
        %8130 = vst.msk [vmem:[#allocation3 + $0xf4] sm:$0xf] %vm2130, %v8055
        %8131 = vst.msk [vmem:[#allocation3 + $0x100] sm:$0xf] %vm2130, %v8057
        %8132 = vst.msk [vmem:[#allocation3 + $0x10c] sm:$0xf] %vm2130, %v8059
        %8133 = vst.msk [vmem:[#allocation3 + $0x118] sm:$0xf] %vm2130, %v8061
        %8134 = vst.msk [vmem:[#allocation3 + $0x124] sm:$0xf] %vm2130, %v8063
        %8135 = vst.msk [vmem:[#allocation3 + $0x130] sm:$0xf] %vm2130, %v8065
        %8136 = vst.msk [vmem:[#allocation3 + $0x13c] sm:$0xf] %vm2130, %v8067
        %8137 = vst.msk [vmem:[#allocation3 + $0x148] sm:$0xf] %vm2130, %v8069
        %8138 = vst.msk [vmem:[#allocation3 + $0x154] sm:$0xf] %vm2130, %v8071
        %8139 = vst.msk [vmem:[#allocation3 + $0x160] sm:$0xf] %vm2130, %v8073
        %8140 = vst.msk [vmem:[#allocation3 + $0x16c] sm:$0xf] %vm2130, %v8075
        %8141 = vst.msk [vmem:[#allocation3 + $0x178] sm:$0xf] %vm2130, %v8077
        %v8142 = vld [vmem:[%s2995] sm:$0xe]
        %v8143 = vld [vmem:[%s2995 + $0x4] sm:$0xf]
        %v8144 = vld [vmem:[%s2995 + $0x8] sm:$0x1]
        %v8145 = vld [vmem:[%s2995 + $0xc] sm:$0xe]
        %v8146 = vld [vmem:[%s2995 + $0x10] sm:$0xf]
        %v8147 = vld [vmem:[%s2995 + $0x14] sm:$0x1]
        %v8148 = vld [vmem:[%s2995 + $0x18] sm:$0xe]
        %v8149 = vld [vmem:[%s2995 + $0x1c] sm:$0xf]
        %v8150 = vld [vmem:[%s2995 + $0x20] sm:$0x1]
        %v8151 = vld [vmem:[%s2995 + $0x24] sm:$0xe]
        %v8152 = vld [vmem:[%s2995 + $0x28] sm:$0xf]
        %v8153 = vld [vmem:[%s2995 + $0x2c] sm:$0x1]
        %v8154 = vld [vmem:[%s2995 + $0x30] sm:$0xe]
        %v8155 = vld [vmem:[%s2995 + $0x34] sm:$0xf]
        %v8156 = vld [vmem:[%s2995 + $0x38] sm:$0x1]
        %v8157 = vld [vmem:[%s2995 + $0x3c] sm:$0xe]
        %v8158 = vld [vmem:[%s2995 + $0x40] sm:$0xf]
        %v8159 = vld [vmem:[%s2995 + $0x44] sm:$0x1]
        %v8160 = vld [vmem:[%s2995 + $0x48] sm:$0xe]
        %v8161 = vld [vmem:[%s2995 + $0x4c] sm:$0xf]
        %v8162 = vld [vmem:[%s2995 + $0x50] sm:$0x1]
        %v8163 = vld [vmem:[%s2995 + $0x54] sm:$0xe]
        %v8164 = vld [vmem:[%s2995 + $0x58] sm:$0xf]
        %v8165 = vld [vmem:[%s2995 + $0x5c] sm:$0x1]
        %v8166 = vld [vmem:[%s2995 + $0x60] sm:$0xe]
        %v8167 = vld [vmem:[%s2995 + $0x64] sm:$0xf]
        %v8168 = vld [vmem:[%s2995 + $0x68] sm:$0x1]
        %v8169 = vld [vmem:[%s2995 + $0x6c] sm:$0xe]
        %v8170 = vld [vmem:[%s2995 + $0x70] sm:$0xf]
        %v8171 = vld [vmem:[%s2995 + $0x74] sm:$0x1]
        %v8172 = vld [vmem:[%s2995 + $0x78] sm:$0xe]
        %v8173 = vld [vmem:[%s2995 + $0x7c] sm:$0xf]
        %v8174 = vld [vmem:[%s2995 + $0x80] sm:$0x1]
        %v8175 = vld [vmem:[%s2995 + $0x84] sm:$0xe]
        %v8176 = vld [vmem:[%s2995 + $0x88] sm:$0xf]
        %v8177 = vld [vmem:[%s2995 + $0x8c] sm:$0x1]
        %v8178 = vld [vmem:[%s2995 + $0x90] sm:$0xe]
        %v8179 = vld [vmem:[%s2995 + $0x94] sm:$0xf]
        %v8180 = vld [vmem:[%s2995 + $0x98] sm:$0x1]
        %v8181 = vld [vmem:[%s2995 + $0x9c] sm:$0xe]
        %v8182 = vld [vmem:[%s2995 + $0xa0] sm:$0xf]
        %v8183 = vld [vmem:[%s2995 + $0xa4] sm:$0x1]
        %v8184 = vld [vmem:[%s2995 + $0xa8] sm:$0xe]
        %v8185 = vld [vmem:[%s2995 + $0xac] sm:$0xf]
        %v8186 = vld [vmem:[%s2995 + $0xb0] sm:$0x1]
        %v8187 = vld [vmem:[%s2995 + $0xb4] sm:$0xe]
        %v8188 = vld [vmem:[%s2995 + $0xb8] sm:$0xf]
        %v8189 = vld [vmem:[%s2995 + $0xbc] sm:$0x1]
        %v8238 = vrot.slane %v8142, 5
        %v8239 = vrot.slane %v8238, 4
        %v8240 = vrot.slane %v8143, 5
        %v8241 = vsel %vm1728, %v8239, %v8240
        %v8242 = vrot.slane %v8240, 4
        %v8243 = vrot.slane %v8144, 5
        %v8244 = vsel %vm1728, %v8242, %v8243
        %v8245 = vrot.slane %v8145, 5
        %v8246 = vrot.slane %v8245, 4
        %v8247 = vrot.slane %v8146, 5
        %v8248 = vsel %vm1728, %v8246, %v8247
        %v8249 = vrot.slane %v8247, 4
        %v8250 = vrot.slane %v8147, 5
        %v8251 = vsel %vm1728, %v8249, %v8250
        %v8252 = vrot.slane %v8148, 5
        %v8253 = vrot.slane %v8252, 4
        %v8254 = vrot.slane %v8149, 5
        %v8255 = vsel %vm1728, %v8253, %v8254
        %v8256 = vrot.slane %v8254, 4
        %v8257 = vrot.slane %v8150, 5
        %v8258 = vsel %vm1728, %v8256, %v8257
        %v8259 = vrot.slane %v8151, 5
        %v8260 = vrot.slane %v8259, 4
        %v8261 = vrot.slane %v8152, 5
        %v8262 = vsel %vm1728, %v8260, %v8261
        %v8263 = vrot.slane %v8261, 4
        %v8264 = vrot.slane %v8153, 5
        %v8265 = vsel %vm1728, %v8263, %v8264
        %v8266 = vrot.slane %v8154, 5
        %v8267 = vrot.slane %v8266, 4
        %v8268 = vrot.slane %v8155, 5
        %v8269 = vsel %vm1728, %v8267, %v8268
        %v8270 = vrot.slane %v8268, 4
        %v8271 = vrot.slane %v8156, 5
        %v8272 = vsel %vm1728, %v8270, %v8271
        %v8273 = vrot.slane %v8157, 5
        %v8274 = vrot.slane %v8273, 4
        %v8275 = vrot.slane %v8158, 5
        %v8276 = vsel %vm1728, %v8274, %v8275
        %v8277 = vrot.slane %v8275, 4
        %v8278 = vrot.slane %v8159, 5
        %v8279 = vsel %vm1728, %v8277, %v8278
        %v8280 = vrot.slane %v8160, 5
        %v8281 = vrot.slane %v8280, 4
        %v8282 = vrot.slane %v8161, 5
        %v8283 = vsel %vm1728, %v8281, %v8282
        %v8284 = vrot.slane %v8282, 4
        %v8285 = vrot.slane %v8162, 5
        %v8286 = vsel %vm1728, %v8284, %v8285
        %v8287 = vrot.slane %v8163, 5
        %v8288 = vrot.slane %v8287, 4
        %v8289 = vrot.slane %v8164, 5
        %v8290 = vsel %vm1728, %v8288, %v8289
        %v8291 = vrot.slane %v8289, 4
        %v8292 = vrot.slane %v8165, 5
        %v8293 = vsel %vm1728, %v8291, %v8292
        %v8294 = vrot.slane %v8166, 5
        %v8295 = vrot.slane %v8294, 4
        %v8296 = vrot.slane %v8167, 5
        %v8297 = vsel %vm1728, %v8295, %v8296
        %v8298 = vrot.slane %v8296, 4
        %v8299 = vrot.slane %v8168, 5
        %v8300 = vsel %vm1728, %v8298, %v8299
        %v8301 = vrot.slane %v8169, 5
        %v8302 = vrot.slane %v8301, 4
        %v8303 = vrot.slane %v8170, 5
        %v8304 = vsel %vm1728, %v8302, %v8303
        %v8305 = vrot.slane %v8303, 4
        %v8306 = vrot.slane %v8171, 5
        %v8307 = vsel %vm1728, %v8305, %v8306
        %v8308 = vrot.slane %v8172, 5
        %v8309 = vrot.slane %v8308, 4
        %v8310 = vrot.slane %v8173, 5
        %v8311 = vsel %vm1728, %v8309, %v8310
        %v8312 = vrot.slane %v8310, 4
        %v8313 = vrot.slane %v8174, 5
        %v8314 = vsel %vm1728, %v8312, %v8313
        %v8315 = vrot.slane %v8175, 5
        %v8316 = vrot.slane %v8315, 4
        %v8317 = vrot.slane %v8176, 5
        %v8318 = vsel %vm1728, %v8316, %v8317
        %v8319 = vrot.slane %v8317, 4
        %v8320 = vrot.slane %v8177, 5
        %v8321 = vsel %vm1728, %v8319, %v8320
        %v8322 = vrot.slane %v8178, 5
        %v8323 = vrot.slane %v8322, 4
        %v8324 = vrot.slane %v8179, 5
        %v8325 = vsel %vm1728, %v8323, %v8324
        %v8326 = vrot.slane %v8324, 4
        %v8327 = vrot.slane %v8180, 5
        %v8328 = vsel %vm1728, %v8326, %v8327
        %v8329 = vrot.slane %v8181, 5
        %v8330 = vrot.slane %v8329, 4
        %v8331 = vrot.slane %v8182, 5
        %v8332 = vsel %vm1728, %v8330, %v8331
        %v8333 = vrot.slane %v8331, 4
        %v8334 = vrot.slane %v8183, 5
        %v8335 = vsel %vm1728, %v8333, %v8334
        %v8336 = vrot.slane %v8184, 5
        %v8337 = vrot.slane %v8336, 4
        %v8338 = vrot.slane %v8185, 5
        %v8339 = vsel %vm1728, %v8337, %v8338
        %v8340 = vrot.slane %v8338, 4
        %v8341 = vrot.slane %v8186, 5
        %v8342 = vsel %vm1728, %v8340, %v8341
        %v8343 = vrot.slane %v8187, 5
        %v8344 = vrot.slane %v8343, 4
        %v8345 = vrot.slane %v8188, 5
        %v8346 = vsel %vm1728, %v8344, %v8345
        %v8347 = vrot.slane %v8345, 4
        %v8348 = vrot.slane %v8189, 5
        %v8349 = vsel %vm1728, %v8347, %v8348
        %8382 = vst.msk [vmem:[#allocation3 + $0x8] sm:$0xf] %vm890, %v8241
        %8383 = vst.msk [vmem:[#allocation3 + $0x14] sm:$0xf] %vm890, %v8244
        %8384 = vst.msk [vmem:[#allocation3 + $0x20] sm:$0xf] %vm890, %v8248
        %8385 = vst.msk [vmem:[#allocation3 + $0x2c] sm:$0xf] %vm890, %v8251
        %8386 = vst.msk [vmem:[#allocation3 + $0x38] sm:$0xf] %vm890, %v8255
        %8387 = vst.msk [vmem:[#allocation3 + $0x44] sm:$0xf] %vm890, %v8258
        %8388 = vst.msk [vmem:[#allocation3 + $0x50] sm:$0xf] %vm890, %v8262
        %8389 = vst.msk [vmem:[#allocation3 + $0x5c] sm:$0xf] %vm890, %v8265
        %8390 = vst.msk [vmem:[#allocation3 + $0x68] sm:$0xf] %vm890, %v8269
        %8391 = vst.msk [vmem:[#allocation3 + $0x74] sm:$0xf] %vm890, %v8272
        %8392 = vst.msk [vmem:[#allocation3 + $0x80] sm:$0xf] %vm890, %v8276
        %8393 = vst.msk [vmem:[#allocation3 + $0x8c] sm:$0xf] %vm890, %v8279
        %8394 = vst.msk [vmem:[#allocation3 + $0x98] sm:$0xf] %vm890, %v8283
        %8395 = vst.msk [vmem:[#allocation3 + $0xa4] sm:$0xf] %vm890, %v8286
        %8396 = vst.msk [vmem:[#allocation3 + $0xb0] sm:$0xf] %vm890, %v8290
        %8397 = vst.msk [vmem:[#allocation3 + $0xbc] sm:$0xf] %vm890, %v8293
        %8398 = vst.msk [vmem:[#allocation3 + $0xc8] sm:$0xf] %vm890, %v8297
        %8399 = vst.msk [vmem:[#allocation3 + $0xd4] sm:$0xf] %vm890, %v8300
        %8400 = vst.msk [vmem:[#allocation3 + $0xe0] sm:$0xf] %vm890, %v8304
        %8401 = vst.msk [vmem:[#allocation3 + $0xec] sm:$0xf] %vm890, %v8307
        %8402 = vst.msk [vmem:[#allocation3 + $0xf8] sm:$0xf] %vm890, %v8311
        %8403 = vst.msk [vmem:[#allocation3 + $0x104] sm:$0xf] %vm890, %v8314
        %8404 = vst.msk [vmem:[#allocation3 + $0x110] sm:$0xf] %vm890, %v8318
        %8405 = vst.msk [vmem:[#allocation3 + $0x11c] sm:$0xf] %vm890, %v8321
        %8406 = vst.msk [vmem:[#allocation3 + $0x128] sm:$0xf] %vm890, %v8325
        %8407 = vst.msk [vmem:[#allocation3 + $0x134] sm:$0xf] %vm890, %v8328
        %8408 = vst.msk [vmem:[#allocation3 + $0x140] sm:$0xf] %vm890, %v8332
        %8409 = vst.msk [vmem:[#allocation3 + $0x14c] sm:$0xf] %vm890, %v8335
        %8410 = vst.msk [vmem:[#allocation3 + $0x158] sm:$0xf] %vm890, %v8339
        %8411 = vst.msk [vmem:[#allocation3 + $0x164] sm:$0xf] %vm890, %v8342
        %8412 = vst.msk [vmem:[#allocation3 + $0x170] sm:$0xf] %vm890, %v8346
        %8413 = vst.msk [vmem:[#allocation3 + $0x17c] sm:$0xf] %vm890, %v8349
        %v8414 = vld [vmem:[#allocation3] sm:$0xff]
        %v8415 = vld [vmem:[#allocation3 + $0x8] sm:$0xf]
        %v8416 = vld [vmem:[#allocation3 + $0xc] sm:$0xff]
        %v8417 = vld [vmem:[#allocation3 + $0x14] sm:$0xf]
        %v8418 = vld [vmem:[#allocation3 + $0x18] sm:$0xff]
        %v8419 = vld [vmem:[#allocation3 + $0x20] sm:$0xf]
        %v8420 = vld [vmem:[#allocation3 + $0x24] sm:$0xff]
        %v8421 = vld [vmem:[#allocation3 + $0x2c] sm:$0xf]
        %v8422 = vld [vmem:[#allocation3 + $0x30] sm:$0xff]
        %v8423 = vld [vmem:[#allocation3 + $0x38] sm:$0xf]
        %v8424 = vld [vmem:[#allocation3 + $0x3c] sm:$0xff]
        %v8425 = vld [vmem:[#allocation3 + $0x44] sm:$0xf]
        %v8426 = vld [vmem:[#allocation3 + $0x48] sm:$0xff]
        %v8427 = vld [vmem:[#allocation3 + $0x50] sm:$0xf]
        %v8428 = vld [vmem:[#allocation3 + $0x54] sm:$0xff]
        %v8429 = vld [vmem:[#allocation3 + $0x5c] sm:$0xf]
        %v8430 = vld [vmem:[#allocation3 + $0x60] sm:$0xff]
        %v8431 = vld [vmem:[#allocation3 + $0x68] sm:$0xf]
        %v8432 = vld [vmem:[#allocation3 + $0x6c] sm:$0xff]
        %v8433 = vld [vmem:[#allocation3 + $0x74] sm:$0xf]
        %v8434 = vld [vmem:[#allocation3 + $0x78] sm:$0xff]
        %v8435 = vld [vmem:[#allocation3 + $0x80] sm:$0xf]
        %v8436 = vld [vmem:[#allocation3 + $0x84] sm:$0xff]
        %v8437 = vld [vmem:[#allocation3 + $0x8c] sm:$0xf]
        %v8438 = vld [vmem:[#allocation3 + $0x90] sm:$0xff]
        %v8439 = vld [vmem:[#allocation3 + $0x98] sm:$0xf]
        %v8440 = vld [vmem:[#allocation3 + $0x9c] sm:$0xff]
        %v8441 = vld [vmem:[#allocation3 + $0xa4] sm:$0xf]
        %v8442 = vld [vmem:[#allocation3 + $0xa8] sm:$0xff]
        %v8443 = vld [vmem:[#allocation3 + $0xb0] sm:$0xf]
        %v8444 = vld [vmem:[#allocation3 + $0xb4] sm:$0xff]
        %v8445 = vld [vmem:[#allocation3 + $0xbc] sm:$0xf]
        %v8446 = vld [vmem:[#allocation3 + $0xc0] sm:$0xff]
        %v8447 = vld [vmem:[#allocation3 + $0xc8] sm:$0xf]
        %v8448 = vld [vmem:[#allocation3 + $0xcc] sm:$0xff]
        %v8449 = vld [vmem:[#allocation3 + $0xd4] sm:$0xf]
        %v8450 = vld [vmem:[#allocation3 + $0xd8] sm:$0xff]
        %v8451 = vld [vmem:[#allocation3 + $0xe0] sm:$0xf]
        %v8452 = vld [vmem:[#allocation3 + $0xe4] sm:$0xff]
        %v8453 = vld [vmem:[#allocation3 + $0xec] sm:$0xf]
        %v8454 = vld [vmem:[#allocation3 + $0xf0] sm:$0xff]
        %v8455 = vld [vmem:[#allocation3 + $0xf8] sm:$0xf]
        %v8456 = vld [vmem:[#allocation3 + $0xfc] sm:$0xff]
        %v8457 = vld [vmem:[#allocation3 + $0x104] sm:$0xf]
        %v8458 = vld [vmem:[#allocation3 + $0x108] sm:$0xff]
        %v8459 = vld [vmem:[#allocation3 + $0x110] sm:$0xf]
        %v8460 = vld [vmem:[#allocation3 + $0x114] sm:$0xff]
        %v8461 = vld [vmem:[#allocation3 + $0x11c] sm:$0xf]
        %v8462 = vld [vmem:[#allocation3 + $0x120] sm:$0xff]
        %v8463 = vld [vmem:[#allocation3 + $0x128] sm:$0xf]
        %v8464 = vld [vmem:[#allocation3 + $0x12c] sm:$0xff]
        %v8465 = vld [vmem:[#allocation3 + $0x134] sm:$0xf]
        %v8466 = vld [vmem:[#allocation3 + $0x138] sm:$0xff]
        %v8467 = vld [vmem:[#allocation3 + $0x140] sm:$0xf]
        %v8468 = vld [vmem:[#allocation3 + $0x144] sm:$0xff]
        %v8469 = vld [vmem:[#allocation3 + $0x14c] sm:$0xf]
        %v8470 = vld [vmem:[#allocation3 + $0x150] sm:$0xff]
        %v8471 = vld [vmem:[#allocation3 + $0x158] sm:$0xf]
        %v8472 = vld [vmem:[#allocation3 + $0x15c] sm:$0xff]
        %v8473 = vld [vmem:[#allocation3 + $0x164] sm:$0xf]
        %v8474 = vld [vmem:[#allocation3 + $0x168] sm:$0xff]
        %v8475 = vld [vmem:[#allocation3 + $0x170] sm:$0xf]
        %v8476 = vld [vmem:[#allocation3 + $0x174] sm:$0xff]
        %v8477 = vld [vmem:[#allocation3 + $0x17c] sm:$0xf]
        %v8478 = vld [vmem:[%s3] sm:$0xf]
        %v8479 = vld [vmem:[%s3 + $0x4] sm:$0xf]
        %v8480 = vld [vmem:[%s3 + $0x8] sm:$0xf]
        %v8481 = vld [vmem:[%s3 + $0xc] sm:$0xf]
        %v8482 = vld [vmem:[%s3 + $0x10] sm:$0xf]
        %v8483 = vld [vmem:[%s3 + $0x14] sm:$0xf]
        %v8484 = vld [vmem:[%s3 + $0x18] sm:$0xf]
        %v8485 = vld [vmem:[%s3 + $0x1c] sm:$0xf]
        %v8486 = vld [vmem:[%s3 + $0x20] sm:$0xf]
        %v8487 = vld [vmem:[%s3 + $0x24] sm:$0xf]
        %v8488 = vld [vmem:[%s3 + $0x28] sm:$0xf]
        %v8489 = vld [vmem:[%s3 + $0x2c] sm:$0xf]
        %v8490 = vld [vmem:[%s3 + $0x30] sm:$0xf]
        %v8491 = vld [vmem:[%s3 + $0x34] sm:$0xf]
        %v8492 = vld [vmem:[%s3 + $0x38] sm:$0xf]
        %v8493 = vld [vmem:[%s3 + $0x3c] sm:$0xf]
        %v8494 = vld [vmem:[%s3 + $0x40] sm:$0xf]
        %v8495 = vld [vmem:[%s3 + $0x44] sm:$0xf]
        %v8496 = vld [vmem:[%s3 + $0x48] sm:$0xf]
        %v8497 = vld [vmem:[%s3 + $0x4c] sm:$0xf]
        %v8498 = vld [vmem:[%s3 + $0x50] sm:$0xf]
        %v8499 = vld [vmem:[%s3 + $0x54] sm:$0xf]
        %v8500 = vld [vmem:[%s3 + $0x58] sm:$0xf]
        %v8501 = vld [vmem:[%s3 + $0x5c] sm:$0xf]
        %v8502 = vld [vmem:[%s3 + $0x60] sm:$0xf]
        %v8503 = vld [vmem:[%s3 + $0x64] sm:$0xf]
        %v8504 = vld [vmem:[%s3 + $0x68] sm:$0xf]
        %v8505 = vld [vmem:[%s3 + $0x6c] sm:$0xf]
        %v8506 = vld [vmem:[%s3 + $0x70] sm:$0xf]
        %v8507 = vld [vmem:[%s3 + $0x74] sm:$0xf]
        %v8508 = vld [vmem:[%s3 + $0x78] sm:$0xf]
        %v8509 = vld [vmem:[%s3 + $0x7c] sm:$0xf]
        %v8510 = vld [vmem:[%s3 + $0x80] sm:$0xf]
        %v8511 = vld [vmem:[%s3 + $0x84] sm:$0xf]
        %v8512 = vld [vmem:[%s3 + $0x88] sm:$0xf]
        %v8513 = vld [vmem:[%s3 + $0x8c] sm:$0xf]
        %v8514 = vld [vmem:[%s4] sm:$0x1]
        %v8516 = vlaneseq
        %v8517 = vshrl.u32 %v8516, 7
        %v8518 = vsub.s32 0, %v8517
        %v8519 = vrot.slane %v8514, %v8518
        %v8585 = vunpack.c.l.b16 %v8414
        %v8586 = vunpack.c.h.b16 %v8414
        %v8587 = vunpack.c.l.b16 %v8415
        %v8588 = vunpack.c.l.b16 %v8416
        %v8589 = vunpack.c.h.b16 %v8416
        %v8590 = vunpack.c.l.b16 %v8417
        %v8591 = vunpack.c.l.b16 %v8418
        %v8592 = vunpack.c.h.b16 %v8418
        %v8593 = vunpack.c.l.b16 %v8419
        %v8594 = vunpack.c.l.b16 %v8420
        %v8595 = vunpack.c.h.b16 %v8420
        %v8596 = vunpack.c.l.b16 %v8421
        %v8597 = vunpack.c.l.b16 %v8422
        %v8598 = vunpack.c.h.b16 %v8422
        %v8599 = vunpack.c.l.b16 %v8423
        %v8600 = vunpack.c.l.b16 %v8424
        %v8601 = vunpack.c.h.b16 %v8424
        %v8602 = vunpack.c.l.b16 %v8425
        %v8603 = vunpack.c.l.b16 %v8426
        %v8604 = vunpack.c.h.b16 %v8426
        %v8605 = vunpack.c.l.b16 %v8427
        %v8606 = vunpack.c.l.b16 %v8428
        %v8607 = vunpack.c.h.b16 %v8428
        %v8608 = vunpack.c.l.b16 %v8429
        %v8609 = vunpack.c.l.b16 %v8430
        %v8610 = vunpack.c.h.b16 %v8430
        %v8611 = vunpack.c.l.b16 %v8431
        %v8612 = vunpack.c.l.b16 %v8432
        %v8613 = vunpack.c.h.b16 %v8432
        %v8614 = vunpack.c.l.b16 %v8433
        %v8615 = vunpack.c.l.b16 %v8434
        %v8616 = vunpack.c.h.b16 %v8434
        %v8617 = vunpack.c.l.b16 %v8435
        %v8618 = vunpack.c.l.b16 %v8436
        %v8619 = vunpack.c.h.b16 %v8436
        %v8620 = vunpack.c.l.b16 %v8437
        %v8621 = vunpack.c.l.b16 %v8438
        %v8622 = vunpack.c.h.b16 %v8438
        %v8623 = vunpack.c.l.b16 %v8439
        %v8624 = vunpack.c.l.b16 %v8440
        %v8625 = vunpack.c.h.b16 %v8440
        %v8626 = vunpack.c.l.b16 %v8441
        %v8627 = vunpack.c.l.b16 %v8442
        %v8628 = vunpack.c.h.b16 %v8442
        %v8629 = vunpack.c.l.b16 %v8443
        %v8630 = vunpack.c.l.b16 %v8444
        %v8631 = vunpack.c.h.b16 %v8444
        %v8632 = vunpack.c.l.b16 %v8445
        %v8633 = vunpack.c.l.b16 %v8446
        %v8634 = vunpack.c.h.b16 %v8446
        %v8635 = vunpack.c.l.b16 %v8447
        %v8636 = vunpack.c.l.b16 %v8448
        %v8637 = vunpack.c.h.b16 %v8448
        %v8638 = vunpack.c.l.b16 %v8449
        %v8639 = vunpack.c.l.b16 %v8450
        %v8640 = vunpack.c.h.b16 %v8450
        %v8641 = vunpack.c.l.b16 %v8451
        %v8642 = vunpack.c.l.b16 %v8452
        %v8643 = vunpack.c.h.b16 %v8452
        %v8644 = vunpack.c.l.b16 %v8453
        %v8645 = vunpack.c.l.b16 %v8454
        %v8646 = vunpack.c.h.b16 %v8454
        %v8647 = vunpack.c.l.b16 %v8455
        %v8648 = vunpack.c.l.b16 %v8456
        %v8649 = vunpack.c.h.b16 %v8456
        %v8650 = vunpack.c.l.b16 %v8457
        %v8651 = vunpack.c.l.b16 %v8458
        %v8652 = vunpack.c.h.b16 %v8458
        %v8653 = vunpack.c.l.b16 %v8459
        %v8654 = vunpack.c.l.b16 %v8460
        %v8655 = vunpack.c.h.b16 %v8460
        %v8656 = vunpack.c.l.b16 %v8461
        %v8657 = vunpack.c.l.b16 %v8462
        %v8658 = vunpack.c.h.b16 %v8462
        %v8659 = vunpack.c.l.b16 %v8463
        %v8660 = vunpack.c.l.b16 %v8464
        %v8661 = vunpack.c.h.b16 %v8464
        %v8662 = vunpack.c.l.b16 %v8465
        %v8663 = vunpack.c.l.b16 %v8466
        %v8664 = vunpack.c.h.b16 %v8466
        %v8665 = vunpack.c.l.b16 %v8467
        %v8666 = vunpack.c.l.b16 %v8468
        %v8667 = vunpack.c.h.b16 %v8468
        %v8668 = vunpack.c.l.b16 %v8469
        %v8669 = vunpack.c.l.b16 %v8470
        %v8670 = vunpack.c.h.b16 %v8470
        %v8671 = vunpack.c.l.b16 %v8471
        %v8672 = vunpack.c.l.b16 %v8472
        %v8673 = vunpack.c.h.b16 %v8472
        %v8674 = vunpack.c.l.b16 %v8473
        %v8675 = vunpack.c.l.b16 %v8474
        %v8676 = vunpack.c.h.b16 %v8474
        %v8677 = vunpack.c.l.b16 %v8475
        %v8678 = vunpack.c.l.b16 %v8476
        %v8679 = vunpack.c.h.b16 %v8476
        %v8680 = vunpack.c.l.b16 %v8477
        %v8681 = vpack.c.b16 %v8588, %v8585
        %v8682 = vpack.c.b16 %v8589, %v8586
        %v8683 = vpack.c.b16 %v8590, %v8587
        %v8684 = vpack.c.b16 %v8594, %v8591
        %v8685 = vpack.c.b16 %v8595, %v8592
        %v8686 = vpack.c.b16 %v8596, %v8593
        %v8687 = vpack.c.b16 %v8600, %v8597
        %v8688 = vpack.c.b16 %v8601, %v8598
        %v8689 = vpack.c.b16 %v8602, %v8599
        %v8690 = vpack.c.b16 %v8606, %v8603
        %v8691 = vpack.c.b16 %v8607, %v8604
        %v8692 = vpack.c.b16 %v8608, %v8605
        %v8693 = vpack.c.b16 %v8612, %v8609
        %v8694 = vpack.c.b16 %v8613, %v8610
        %v8695 = vpack.c.b16 %v8614, %v8611
        %v8696 = vpack.c.b16 %v8618, %v8615
        %v8697 = vpack.c.b16 %v8619, %v8616
        %v8698 = vpack.c.b16 %v8620, %v8617
        %v8699 = vpack.c.b16 %v8624, %v8621
        %v8700 = vpack.c.b16 %v8625, %v8622
        %v8701 = vpack.c.b16 %v8626, %v8623
        %v8702 = vpack.c.b16 %v8630, %v8627
        %v8703 = vpack.c.b16 %v8631, %v8628
        %v8704 = vpack.c.b16 %v8632, %v8629
        %v8705 = vpack.c.b16 %v8636, %v8633
        %v8706 = vpack.c.b16 %v8637, %v8634
        %v8707 = vpack.c.b16 %v8638, %v8635
        %v8708 = vpack.c.b16 %v8642, %v8639
        %v8709 = vpack.c.b16 %v8643, %v8640
        %v8710 = vpack.c.b16 %v8644, %v8641
        %v8711 = vpack.c.b16 %v8648, %v8645
        %v8712 = vpack.c.b16 %v8649, %v8646
        %v8713 = vpack.c.b16 %v8650, %v8647
        %v8714 = vpack.c.b16 %v8654, %v8651
        %v8715 = vpack.c.b16 %v8655, %v8652
        %v8716 = vpack.c.b16 %v8656, %v8653
        %v8717 = vpack.c.b16 %v8660, %v8657
        %v8718 = vpack.c.b16 %v8661, %v8658
        %v8719 = vpack.c.b16 %v8662, %v8659
        %v8720 = vpack.c.b16 %v8666, %v8663
        %v8721 = vpack.c.b16 %v8667, %v8664
        %v8722 = vpack.c.b16 %v8668, %v8665
        %v8723 = vpack.c.b16 %v8672, %v8669
        %v8724 = vpack.c.b16 %v8673, %v8670
        %v8725 = vpack.c.b16 %v8674, %v8671
        %v8726 = vpack.c.b16 %v8678, %v8675
        %v8727 = vpack.c.b16 %v8679, %v8676
        %v8728 = vpack.c.b16 %v8680, %v8677
        %v8797 = vunpack.c.l.b16 %v8478
        %v8798 = vunpack.c.l.b16 %v8479
        %v8799 = vunpack.c.l.b16 %v8480
        %v8800 = vunpack.c.l.b16 %v8481
        %v8801 = vunpack.c.l.b16 %v8482
        %v8802 = vunpack.c.l.b16 %v8483
        %v8803 = vunpack.c.l.b16 %v8484
        %v8804 = vunpack.c.l.b16 %v8485
        %v8805 = vunpack.c.l.b16 %v8486
        %v8806 = vunpack.c.l.b16 %v8487
        %v8807 = vunpack.c.l.b16 %v8488
        %v8808 = vunpack.c.l.b16 %v8489
        %v8809 = vunpack.c.l.b16 %v8490
        %v8810 = vunpack.c.l.b16 %v8491
        %v8811 = vunpack.c.l.b16 %v8492
        %v8812 = vunpack.c.l.b16 %v8493
        %v8813 = vunpack.c.l.b16 %v8494
        %v8814 = vunpack.c.l.b16 %v8495
        %v8815 = vunpack.c.l.b16 %v8496
        %v8816 = vunpack.c.l.b16 %v8497
        %v8817 = vunpack.c.l.b16 %v8498
        %v8818 = vunpack.c.l.b16 %v8499
        %v8819 = vunpack.c.l.b16 %v8500
        %v8820 = vunpack.c.l.b16 %v8501
        %v8821 = vunpack.c.l.b16 %v8502
        %v8822 = vunpack.c.l.b16 %v8503
        %v8823 = vunpack.c.l.b16 %v8504
        %v8824 = vunpack.c.l.b16 %v8505
        %v8825 = vunpack.c.l.b16 %v8506
        %v8826 = vunpack.c.l.b16 %v8507
        %v8827 = vunpack.c.l.b16 %v8508
        %v8828 = vunpack.c.l.b16 %v8509
        %v8829 = vunpack.c.l.b16 %v8510
        %v8830 = vunpack.c.l.b16 %v8511
        %v8831 = vunpack.c.l.b16 %v8512
        %v8832 = vunpack.c.l.b16 %v8513
        %v8833 = vpack.c.b16 %v8798, %v8797
        %v8834 = vpack.c.b16 %v8800, %v8799
        %v8835 = vpack.c.b16 %v8802, %v8801
        %v8836 = vpack.c.b16 %v8804, %v8803
        %v8837 = vpack.c.b16 %v8806, %v8805
        %v8838 = vpack.c.b16 %v8808, %v8807
        %v8839 = vpack.c.b16 %v8810, %v8809
        %v8840 = vpack.c.b16 %v8812, %v8811
        %v8841 = vpack.c.b16 %v8814, %v8813
        %v8842 = vpack.c.b16 %v8816, %v8815
        %v8843 = vpack.c.b16 %v8818, %v8817
        %v8844 = vpack.c.b16 %v8820, %v8819
        %v8845 = vpack.c.b16 %v8822, %v8821
        %v8846 = vpack.c.b16 %v8824, %v8823
        %v8847 = vpack.c.b16 %v8826, %v8825
        %v8848 = vpack.c.b16 %v8828, %v8827
        %v8849 = vpack.c.b16 %v8830, %v8829
        %v8850 = vpack.c.b16 %v8832, %v8831
        %v8870 = vsel %vm4475, %v8683, 0
        %v8873 = vsel %vm4475, %v8686, 0
        %v8876 = vsel %vm4475, %v8689, 0
        %v8879 = vsel %vm4475, %v8692, 0
        %v8882 = vsel %vm4475, %v8695, 0
        %v8885 = vsel %vm4475, %v8698, 0
        %v8888 = vsel %vm4475, %v8701, 0
        %v8891 = vsel %vm4475, %v8704, 0
        %v8894 = vsel %vm4475, %v8707, 0
        %v8897 = vsel %vm4475, %v8710, 0
        %v8900 = vsel %vm4475, %v8713, 0
        %v8903 = vsel %vm4475, %v8716, 0
        %v8906 = vsel %vm4475, %v8719, 0
        %v8909 = vsel %vm4475, %v8722, 0
        %v8912 = vsel %vm4475, %v8725, 0
        %v8915 = vsel %vm4475, %v8728, 0
        %8917 = vmatprep.subr.bf16.mxu0 0
        %8918 = vmatpush1.bf16.msra.mxu0 %v8840
        %8919 = vmatprep.subr.bf16.mxu0 0
        %8920 = vmatpush1.bf16.msra.mxu0 %v8839
        %8921 = vmatprep.subr.bf16.mxu0 0
        %8922 = vmatpush1.bf16.msra.mxu0 %v8838
        %8923 = vmatprep.subr.bf16.mxu0 0
        %8924 = vmatpush1.bf16.msra.mxu0 %v8837
        %8925 = vmatprep.subr.bf16.mxu0 0
        %8926 = vmatpush1.bf16.msra.mxu0 %v8836
        %8927 = vmatprep.subr.bf16.mxu0 0
        %8928 = vmatpush1.bf16.msra.mxu0 %v8835
        %8929 = vmatprep.subr.bf16.mxu0 0
        %8930 = vmatpush1.bf16.msra.mxu0 %v8834
        %8931 = vmatprep.subr.bf16.mxu0 0
        %8932 = vmatpush1.bf16.msra.mxu0 %v8833
        %8933 = vmatprep.subr.bf16.mxu0 0
        %8934 = vmatpush2.bf16.msra.mxu0 %v8848
        %8935 = vmatprep.subr.bf16.mxu0 0
        %8936 = vmatpush2.bf16.msra.mxu0 %v8847
        %8937 = vmatprep.subr.bf16.mxu0 0
        %8938 = vmatpush2.bf16.msra.mxu0 %v8846
        %8939 = vmatprep.subr.bf16.mxu0 0
        %8940 = vmatpush2.bf16.msra.mxu0 %v8845
        %8941 = vmatprep.subr.bf16.mxu0 0
        %8942 = vmatpush2.bf16.msra.mxu0 %v8844
        %8943 = vmatprep.subr.bf16.mxu0 0
        %8944 = vmatpush2.bf16.msra.mxu0 %v8843
        %8945 = vmatprep.subr.bf16.mxu0 0
        %8946 = vmatpush2.bf16.msra.mxu0 %v8842
        %8947 = vmatprep.subr.bf16.mxu0 0
        %8948 = vmatpush2.bf16.msra.mxu0 %v8841
        %8949 = vmatprep.mubr.bf16.mxu0 %v8682
        %8950 = vmatmul.mubr.bf16.gmra.mxu0 %v8681
        %v8951 = vpop.f32.mrf.mxu0
        %v8952 = vadd.f32 %v8519, %v8951
        %v8953 = vpop.f32.mrf.mxu0
        %v8954 = vpop.f32.mrf.mxu0
        %v8955 = vadd.f32 %v8519, %v8954
        %v8956 = vpop.f32.mrf.mxu0
        %8957 = vmatprep.mubr.bf16.mxu0 %v8685
        %8958 = vmatmul.mubr.bf16.gmra.mxu0 %v8684
        %v8959 = vpop.f32.mrf.mxu0
        %v8960 = vadd.f32 %v8519, %v8959
        %v8961 = vpop.f32.mrf.mxu0
        %v8962 = vpop.f32.mrf.mxu0
        %v8963 = vadd.f32 %v8519, %v8962
        %v8964 = vpop.f32.mrf.mxu0
        %8965 = vmatprep.mubr.bf16.mxu0 %v8688
        %8966 = vmatmul.mubr.bf16.gmra.mxu0 %v8687
        %v8967 = vpop.f32.mrf.mxu0
        %v8968 = vadd.f32 %v8519, %v8967
        %v8969 = vpop.f32.mrf.mxu0
        %v8970 = vpop.f32.mrf.mxu0
        %v8971 = vadd.f32 %v8519, %v8970
        %v8972 = vpop.f32.mrf.mxu0
        %8973 = vmatprep.mubr.bf16.mxu0 %v8691
        %8974 = vmatmul.mubr.bf16.gmra.mxu0 %v8690
        %v8975 = vpop.f32.mrf.mxu0
        %v8976 = vadd.f32 %v8519, %v8975
        %v8977 = vpop.f32.mrf.mxu0
        %v8978 = vpop.f32.mrf.mxu0
        %v8979 = vadd.f32 %v8519, %v8978
        %v8980 = vpop.f32.mrf.mxu0
        %8981 = vmatprep.mubr.bf16.mxu0 %v8694
        %8982 = vmatmul.mubr.bf16.gmra.mxu0 %v8693
        %v8983 = vpop.f32.mrf.mxu0
        %v8984 = vadd.f32 %v8519, %v8983
        %v8985 = vpop.f32.mrf.mxu0
        %v8986 = vpop.f32.mrf.mxu0
        %v8987 = vadd.f32 %v8519, %v8986
        %v8988 = vpop.f32.mrf.mxu0
        %8989 = vmatprep.mubr.bf16.mxu0 %v8697
        %8990 = vmatmul.mubr.bf16.gmra.mxu0 %v8696
        %v8991 = vpop.f32.mrf.mxu0
        %v8992 = vadd.f32 %v8519, %v8991
        %v8993 = vpop.f32.mrf.mxu0
        %v8994 = vpop.f32.mrf.mxu0
        %v8995 = vadd.f32 %v8519, %v8994
        %v8996 = vpop.f32.mrf.mxu0
        %8997 = vmatprep.mubr.bf16.mxu0 %v8700
        %8998 = vmatmul.mubr.bf16.gmra.mxu0 %v8699
        %v8999 = vpop.f32.mrf.mxu0
        %v9000 = vadd.f32 %v8519, %v8999
        %v9001 = vpop.f32.mrf.mxu0
        %v9002 = vpop.f32.mrf.mxu0
        %v9003 = vadd.f32 %v8519, %v9002
        %v9004 = vpop.f32.mrf.mxu0
        %9005 = vmatprep.mubr.bf16.mxu0 %v8703
        %9006 = vmatmul.mubr.bf16.gmra.mxu0 %v8702
        %v9007 = vpop.f32.mrf.mxu0
        %v9008 = vadd.f32 %v8519, %v9007
        %v9009 = vpop.f32.mrf.mxu0
        %v9010 = vpop.f32.mrf.mxu0
        %v9011 = vadd.f32 %v8519, %v9010
        %v9012 = vpop.f32.mrf.mxu0
        %9013 = vmatprep.mubr.bf16.mxu0 %v8706
        %9014 = vmatmul.mubr.bf16.gmra.mxu0 %v8705
        %v9015 = vpop.f32.mrf.mxu0
        %v9016 = vadd.f32 %v8519, %v9015
        %v9017 = vpop.f32.mrf.mxu0
        %v9018 = vpop.f32.mrf.mxu0
        %v9019 = vadd.f32 %v8519, %v9018
        %v9020 = vpop.f32.mrf.mxu0
        %9021 = vmatprep.mubr.bf16.mxu0 %v8709
        %9022 = vmatmul.mubr.bf16.gmra.mxu0 %v8708
        %v9023 = vpop.f32.mrf.mxu0
        %v9024 = vadd.f32 %v8519, %v9023
        %v9025 = vpop.f32.mrf.mxu0
        %v9026 = vpop.f32.mrf.mxu0
        %v9027 = vadd.f32 %v8519, %v9026
        %v9028 = vpop.f32.mrf.mxu0
        %9029 = vmatprep.mubr.bf16.mxu0 %v8712
        %9030 = vmatmul.mubr.bf16.gmra.mxu0 %v8711
        %v9031 = vpop.f32.mrf.mxu0
        %v9032 = vadd.f32 %v8519, %v9031
        %v9033 = vpop.f32.mrf.mxu0
        %v9034 = vpop.f32.mrf.mxu0
        %v9035 = vadd.f32 %v8519, %v9034
        %v9036 = vpop.f32.mrf.mxu0
        %9037 = vmatprep.mubr.bf16.mxu0 %v8715
        %9038 = vmatmul.mubr.bf16.gmra.mxu0 %v8714
        %v9039 = vpop.f32.mrf.mxu0
        %v9040 = vadd.f32 %v8519, %v9039
        %v9041 = vpop.f32.mrf.mxu0
        %v9042 = vpop.f32.mrf.mxu0
        %v9043 = vadd.f32 %v8519, %v9042
        %v9044 = vpop.f32.mrf.mxu0
        %9045 = vmatprep.mubr.bf16.mxu0 %v8718
        %9046 = vmatmul.mubr.bf16.gmra.mxu0 %v8717
        %v9047 = vpop.f32.mrf.mxu0
        %v9048 = vadd.f32 %v8519, %v9047
        %v9049 = vpop.f32.mrf.mxu0
        %v9050 = vpop.f32.mrf.mxu0
        %v9051 = vadd.f32 %v8519, %v9050
        %v9052 = vpop.f32.mrf.mxu0
        %9053 = vmatprep.mubr.bf16.mxu0 %v8721
        %9054 = vmatmul.mubr.bf16.gmra.mxu0 %v8720
        %v9055 = vpop.f32.mrf.mxu0
        %v9056 = vadd.f32 %v8519, %v9055
        %v9057 = vpop.f32.mrf.mxu0
        %v9058 = vpop.f32.mrf.mxu0
        %v9059 = vadd.f32 %v8519, %v9058
        %v9060 = vpop.f32.mrf.mxu0
        %9061 = vmatprep.mubr.bf16.mxu0 %v8724
        %9062 = vmatmul.mubr.bf16.gmra.mxu0 %v8723
        %v9063 = vpop.f32.mrf.mxu0
        %v9064 = vadd.f32 %v8519, %v9063
        %v9065 = vpop.f32.mrf.mxu0
        %v9066 = vpop.f32.mrf.mxu0
        %v9067 = vadd.f32 %v8519, %v9066
        %v9068 = vpop.f32.mrf.mxu0
        %9069 = vmatprep.mubr.bf16.mxu0 %v8727
        %9070 = vmatmul.mubr.bf16.gmra.mxu0 %v8726
        %v9071 = vpop.f32.mrf.mxu0
        %v9072 = vadd.f32 %v8519, %v9071
        %v9073 = vpop.f32.mrf.mxu0
        %v9074 = vpop.f32.mrf.mxu0
        %v9075 = vadd.f32 %v8519, %v9074
        %v9076 = vpop.f32.mrf.mxu0
        %9077 = vdwg.mxu0
        %9078 = vmatprep.subr.bf16.mxu0 0
        %9079 = vmatpush1.bf16.msra.mxu0 0
        %9080 = vmatprep.subr.bf16.mxu0 0
        %9081 = vmatpush1.bf16.msra.mxu0 0
        %9082 = vmatprep.subr.bf16.mxu0 0
        %9083 = vmatpush1.bf16.msra.mxu0 0
        %9084 = vmatprep.subr.bf16.mxu0 0
        %9085 = vmatpush1.bf16.msra.mxu0 0
        %9086 = vmatprep.subr.bf16.mxu0 0
        %9087 = vmatpush1.bf16.msra.mxu0 0
        %9088 = vmatprep.subr.bf16.mxu0 0
        %9089 = vmatpush1.bf16.msra.mxu0 0
        %9090 = vmatprep.subr.bf16.mxu0 0
        %9091 = vmatpush1.bf16.msra.mxu0 %v8850
        %9092 = vmatprep.subr.bf16.mxu0 0
        %9093 = vmatpush1.bf16.msra.mxu0 %v8849
        %9094 = vmatprep.subr.bf16.mxu0 0
        %9095 = vmatpush2.bf16.msra.mxu0 0
        %9096 = vmatprep.subr.bf16.mxu0 0
        %9097 = vmatpush2.bf16.msra.mxu0 0
        %9098 = vmatprep.subr.bf16.mxu0 0
        %9099 = vmatpush2.bf16.msra.mxu0 0
        %9100 = vmatprep.subr.bf16.mxu0 0
        %9101 = vmatpush2.bf16.msra.mxu0 0
        %9102 = vmatprep.subr.bf16.mxu0 0
        %9103 = vmatpush2.bf16.msra.mxu0 0
        %9104 = vmatprep.subr.bf16.mxu0 0
        %9105 = vmatpush2.bf16.msra.mxu0 0
        %9106 = vmatprep.subr.bf16.mxu0 0
        %9107 = vmatpush2.bf16.msra.mxu0 0
        %9108 = vmatprep.subr.bf16.mxu0 0
        %9109 = vmatpush2.bf16.msra.mxu0 0
        %9110 = vmatprep.mubr.bf16.mxu0 0
        %9111 = vmatmul.mubr.bf16.gmra.mxu0 %v8870
        %v9112 = vpop.f32.mrf.mxu0
        %v9113 = vadd.f32 %v8952, %v9112
        %v9114 = vpop.f32.mrf.mxu0
        %v9115 = vpop.f32.mrf.mxu0
        %v9116 = vadd.f32 %v8955, %v9115
        %v9117 = vpop.f32.mrf.mxu0
        %9118 = vmatprep.mubr.bf16.mxu0 0
        %9119 = vmatmul.mubr.bf16.gmra.mxu0 %v8873
        %v9120 = vpop.f32.mrf.mxu0
        %v9121 = vadd.f32 %v8960, %v9120
        %v9122 = vpop.f32.mrf.mxu0
        %v9123 = vpop.f32.mrf.mxu0
        %v9124 = vadd.f32 %v8963, %v9123
        %v9125 = vpop.f32.mrf.mxu0
        %9126 = vmatprep.mubr.bf16.mxu0 0
        %9127 = vmatmul.mubr.bf16.gmra.mxu0 %v8876
        %v9128 = vpop.f32.mrf.mxu0
        %v9129 = vadd.f32 %v8968, %v9128
        %v9130 = vpop.f32.mrf.mxu0
        %v9131 = vpop.f32.mrf.mxu0
        %v9132 = vadd.f32 %v8971, %v9131
        %v9133 = vpop.f32.mrf.mxu0
        %9134 = vmatprep.mubr.bf16.mxu0 0
        %9135 = vmatmul.mubr.bf16.gmra.mxu0 %v8879
        %v9136 = vpop.f32.mrf.mxu0
        %v9137 = vadd.f32 %v8976, %v9136
        %v9138 = vpop.f32.mrf.mxu0
        %v9139 = vpop.f32.mrf.mxu0
        %v9140 = vadd.f32 %v8979, %v9139
        %v9141 = vpop.f32.mrf.mxu0
        %9142 = vmatprep.mubr.bf16.mxu0 0
        %9143 = vmatmul.mubr.bf16.gmra.mxu0 %v8882
        %v9144 = vpop.f32.mrf.mxu0
        %v9145 = vadd.f32 %v8984, %v9144
        %v9146 = vpop.f32.mrf.mxu0
        %v9147 = vpop.f32.mrf.mxu0
        %v9148 = vadd.f32 %v8987, %v9147
        %v9149 = vpop.f32.mrf.mxu0
        %9150 = vmatprep.mubr.bf16.mxu0 0
        %9151 = vmatmul.mubr.bf16.gmra.mxu0 %v8885
        %v9152 = vpop.f32.mrf.mxu0
        %v9153 = vadd.f32 %v8992, %v9152
        %v9154 = vpop.f32.mrf.mxu0
        %v9155 = vpop.f32.mrf.mxu0
        %v9156 = vadd.f32 %v8995, %v9155
        %v9157 = vpop.f32.mrf.mxu0
        %9158 = vmatprep.mubr.bf16.mxu0 0
        %9159 = vmatmul.mubr.bf16.gmra.mxu0 %v8888
        %v9160 = vpop.f32.mrf.mxu0
        %v9161 = vadd.f32 %v9000, %v9160
        %v9162 = vpop.f32.mrf.mxu0
        %v9163 = vpop.f32.mrf.mxu0
        %v9164 = vadd.f32 %v9003, %v9163
        %v9165 = vpop.f32.mrf.mxu0
        %9166 = vmatprep.mubr.bf16.mxu0 0
        %9167 = vmatmul.mubr.bf16.gmra.mxu0 %v8891
        %v9168 = vpop.f32.mrf.mxu0
        %v9169 = vadd.f32 %v9008, %v9168
        %v9170 = vpop.f32.mrf.mxu0
        %v9171 = vpop.f32.mrf.mxu0
        %v9172 = vadd.f32 %v9011, %v9171
        %v9173 = vpop.f32.mrf.mxu0
        %9174 = vmatprep.mubr.bf16.mxu0 0
        %9175 = vmatmul.mubr.bf16.gmra.mxu0 %v8894
        %v9176 = vpop.f32.mrf.mxu0
        %v9177 = vadd.f32 %v9016, %v9176
        %v9178 = vpop.f32.mrf.mxu0
        %v9179 = vpop.f32.mrf.mxu0
        %v9180 = vadd.f32 %v9019, %v9179
        %v9181 = vpop.f32.mrf.mxu0
        %9182 = vmatprep.mubr.bf16.mxu0 0
        %9183 = vmatmul.mubr.bf16.gmra.mxu0 %v8897
        %v9184 = vpop.f32.mrf.mxu0
        %v9185 = vadd.f32 %v9024, %v9184
        %v9186 = vpop.f32.mrf.mxu0
        %v9187 = vpop.f32.mrf.mxu0
        %v9188 = vadd.f32 %v9027, %v9187
        %v9189 = vpop.f32.mrf.mxu0
        %9190 = vmatprep.mubr.bf16.mxu0 0
        %9191 = vmatmul.mubr.bf16.gmra.mxu0 %v8900
        %v9192 = vpop.f32.mrf.mxu0
        %v9193 = vadd.f32 %v9032, %v9192
        %v9194 = vpop.f32.mrf.mxu0
        %v9195 = vpop.f32.mrf.mxu0
        %v9196 = vadd.f32 %v9035, %v9195
        %v9197 = vpop.f32.mrf.mxu0
        %9198 = vmatprep.mubr.bf16.mxu0 0
        %9199 = vmatmul.mubr.bf16.gmra.mxu0 %v8903
        %v9200 = vpop.f32.mrf.mxu0
        %v9201 = vadd.f32 %v9040, %v9200
        %v9202 = vpop.f32.mrf.mxu0
        %v9203 = vpop.f32.mrf.mxu0
        %v9204 = vadd.f32 %v9043, %v9203
        %v9205 = vpop.f32.mrf.mxu0
        %9206 = vmatprep.mubr.bf16.mxu0 0
        %9207 = vmatmul.mubr.bf16.gmra.mxu0 %v8906
        %v9208 = vpop.f32.mrf.mxu0
        %v9209 = vadd.f32 %v9048, %v9208
        %v9210 = vpop.f32.mrf.mxu0
        %v9211 = vpop.f32.mrf.mxu0
        %v9212 = vadd.f32 %v9051, %v9211
        %v9213 = vpop.f32.mrf.mxu0
        %9214 = vmatprep.mubr.bf16.mxu0 0
        %9215 = vmatmul.mubr.bf16.gmra.mxu0 %v8909
        %v9216 = vpop.f32.mrf.mxu0
        %v9217 = vadd.f32 %v9056, %v9216
        %v9218 = vpop.f32.mrf.mxu0
        %v9219 = vpop.f32.mrf.mxu0
        %v9220 = vadd.f32 %v9059, %v9219
        %v9221 = vpop.f32.mrf.mxu0
        %9222 = vmatprep.mubr.bf16.mxu0 0
        %9223 = vmatmul.mubr.bf16.gmra.mxu0 %v8912
        %v9224 = vpop.f32.mrf.mxu0
        %v9225 = vadd.f32 %v9064, %v9224
        %v9226 = vpop.f32.mrf.mxu0
        %v9227 = vpop.f32.mrf.mxu0
        %v9228 = vadd.f32 %v9067, %v9227
        %v9229 = vpop.f32.mrf.mxu0
        %9230 = vmatprep.mubr.bf16.mxu0 0
        %9231 = vmatmul.mubr.bf16.gmra.mxu0 %v8915
        %v9232 = vpop.f32.mrf.mxu0
        %v9233 = vadd.f32 %v9072, %v9232
        %v9234 = vpop.f32.mrf.mxu0
        %v9235 = vpop.f32.mrf.mxu0
        %v9236 = vadd.f32 %v9075, %v9235
        %v9237 = vpop.f32.mrf.mxu0
        %9238 = vdwg.mxu0
        %v9239 = vsel %vm4475, %v9113, 0.0
        %v9240 = vsel %vm4475, %v9116, 0.0
        %v9241 = vadd.f32 %v9239, %v9240
        %v9242 = vsel %vm4475, %v9121, 0.0
        %v9243 = vadd.f32 %v9241, %v9242
        %v9244 = vsel %vm4475, %v9124, 0.0
        %v9245 = vadd.f32 %v9243, %v9244
        %v9246 = vsel %vm4475, %v9129, 0.0
        %v9247 = vadd.f32 %v9245, %v9246
        %v9248 = vsel %vm4475, %v9132, 0.0
        %v9249 = vadd.f32 %v9247, %v9248
        %v9250 = vsel %vm4475, %v9137, 0.0
        %v9251 = vadd.f32 %v9249, %v9250
        %v9252 = vsel %vm4475, %v9140, 0.0
        %v9253 = vadd.f32 %v9251, %v9252
        %v9254 = vsel %vm4475, %v9145, 0.0
        %v9255 = vadd.f32 %v9253, %v9254
        %v9256 = vsel %vm4475, %v9148, 0.0
        %v9257 = vadd.f32 %v9255, %v9256
        %v9258 = vsel %vm4475, %v9153, 0.0
        %v9259 = vadd.f32 %v9257, %v9258
        %v9260 = vsel %vm4475, %v9156, 0.0
        %v9261 = vadd.f32 %v9259, %v9260
        %v9262 = vsel %vm4475, %v9161, 0.0
        %v9263 = vadd.f32 %v9261, %v9262
        %v9264 = vsel %vm4475, %v9164, 0.0
        %v9265 = vadd.f32 %v9263, %v9264
        %v9266 = vsel %vm4475, %v9169, 0.0
        %v9267 = vadd.f32 %v9265, %v9266
        %v9268 = vsel %vm4475, %v9172, 0.0
        %v9269 = vadd.f32 %v9267, %v9268
        %v9270 = vsel %vm4475, %v9177, 0.0
        %v9271 = vadd.f32 %v9269, %v9270
        %v9272 = vsel %vm4475, %v9180, 0.0
        %v9273 = vadd.f32 %v9271, %v9272
        %v9274 = vsel %vm4475, %v9185, 0.0
        %v9275 = vadd.f32 %v9273, %v9274
        %v9276 = vsel %vm4475, %v9188, 0.0
        %v9277 = vadd.f32 %v9275, %v9276
        %v9278 = vsel %vm4475, %v9193, 0.0
        %v9279 = vadd.f32 %v9277, %v9278
        %v9280 = vsel %vm4475, %v9196, 0.0
        %v9281 = vadd.f32 %v9279, %v9280
        %v9282 = vsel %vm4475, %v9201, 0.0
        %v9283 = vadd.f32 %v9281, %v9282
        %v9284 = vsel %vm4475, %v9204, 0.0
        %v9285 = vadd.f32 %v9283, %v9284
        %v9286 = vsel %vm4475, %v9209, 0.0
        %v9287 = vadd.f32 %v9285, %v9286
        %v9288 = vsel %vm4475, %v9212, 0.0
        %v9289 = vadd.f32 %v9287, %v9288
        %v9290 = vsel %vm4475, %v9217, 0.0
        %v9291 = vadd.f32 %v9289, %v9290
        %v9292 = vsel %vm4475, %v9220, 0.0
        %v9293 = vadd.f32 %v9291, %v9292
        %v9294 = vsel %vm4475, %v9225, 0.0
        %v9295 = vadd.f32 %v9293, %v9294
        %v9296 = vsel %vm4475, %v9228, 0.0
        %v9297 = vadd.f32 %v9295, %v9296
        %v9298 = vsel %vm4475, %v9233, 0.0
        %v9299 = vadd.f32 %v9297, %v9298
        %v9300 = vsel %vm4475, %v9236, 0.0
        %v9301 = vadd.f32 %v9299, %v9300
        %v9302 = vrot.slane %v9301, 4
        %v9303 = vadd.f32 %v9301, %v9302
        %v9304 = vrot.slane %v9303, 2
        %v9305 = vadd.f32 %v9303, %v9304
        %v9306 = vrot.slane %v9305, 1
        %v9307 = vadd.f32 %v9305, %v9306
        %v9308 = vrcp.pop 256.0
        %v9309 = vmul.f32 %v9307, %v9308
        %v9310 = vld [vmem:[%s5] sm:$0xff]
        %v9311 = vld [vmem:[%s5 + $0x8] sm:$0xff]
        %v9312 = vld [vmem:[%s5 + $0x10] sm:$0xff]
        %v9313 = vld [vmem:[%s5 + $0x18] sm:$0xff]
        %v9314 = vld [vmem:[%s6] sm:$0x1]
        %v9316 = vsel %vm4475, %v9309, 0
        %9318 = vmatprep.subr.mxu0 0.0
        %9319 = vmatpush1.msra.mxu0 0.0
        %9320 = vmatprep.subr.mxu0 0.0
        %9321 = vmatpush1.msra.mxu0 0.0
        %9322 = vmatprep.subr.mxu0 0.0
        %9323 = vmatpush1.msra.mxu0 0.0
        %9324 = vmatprep.subr.mxu0 0.0
        %9325 = vmatpush1.msra.mxu0 0.0
        %9326 = vmatprep.subr.mxu0 0.0
        %9327 = vmatpush1.msra.mxu0 0.0
        %9328 = vmatprep.subr.mxu0 0.0
        %9329 = vmatpush1.msra.mxu0 0.0
        %9330 = vmatprep.subr.mxu0 0.0
        %9331 = vmatpush1.msra.mxu0 0.0
        %9332 = vmatprep.subr.mxu0 0.0
        %9333 = vmatpush1.msra.mxu0 0.0
        %9334 = vmatprep.subr.mxu0 0.0
        %9335 = vmatpush1.msra.mxu0 0.0
        %9336 = vmatprep.subr.mxu0 0.0
        %9337 = vmatpush1.msra.mxu0 0.0
        %9338 = vmatprep.subr.mxu0 0.0
        %9339 = vmatpush1.msra.mxu0 0.0
        %9340 = vmatprep.subr.mxu0 0.0
        %9341 = vmatpush1.msra.mxu0 0.0
        %9342 = vmatprep.subr.mxu0 0.0
        %9343 = vmatpush1.msra.mxu0 %v9313
        %9344 = vmatprep.subr.mxu0 0.0
        %9345 = vmatpush1.msra.mxu0 %v9312
        %9346 = vmatprep.subr.mxu0 0.0
        %9347 = vmatpush1.msra.mxu0 %v9311
        %9348 = vmatprep.subr.mxu0 0.0
        %9349 = vmatpush1.msra.mxu0 %v9310
        %9350 = vmatprep.subr.mxu0 0.0
        %9351 = vmatpush2.msra.mxu0 0.0
        %9352 = vmatprep.subr.mxu0 0.0
        %9353 = vmatpush2.msra.mxu0 0.0
        %9354 = vmatprep.subr.mxu0 0.0
        %9355 = vmatpush2.msra.mxu0 0.0
        %9356 = vmatprep.subr.mxu0 0.0
        %9357 = vmatpush2.msra.mxu0 0.0
        %9358 = vmatprep.subr.mxu0 0.0
        %9359 = vmatpush2.msra.mxu0 0.0
        %9360 = vmatprep.subr.mxu0 0.0
        %9361 = vmatpush2.msra.mxu0 0.0
        %9362 = vmatprep.subr.mxu0 0.0
        %9363 = vmatpush2.msra.mxu0 0.0
        %9364 = vmatprep.subr.mxu0 0.0
        %9365 = vmatpush2.msra.mxu0 0.0
        %9366 = vmatprep.subr.mxu0 0.0
        %9367 = vmatpush2.msra.mxu0 0.0
        %9368 = vmatprep.subr.mxu0 0.0
        %9369 = vmatpush2.msra.mxu0 0.0
        %9370 = vmatprep.subr.mxu0 0.0
        %9371 = vmatpush2.msra.mxu0 0.0
        %9372 = vmatprep.subr.mxu0 0.0
        %9373 = vmatpush2.msra.mxu0 0.0
        %9374 = vmatprep.subr.mxu0 0.0
        %9375 = vmatpush2.msra.mxu0 0.0
        %9376 = vmatprep.subr.mxu0 0.0
        %9377 = vmatpush2.msra.mxu0 0.0
        %9378 = vmatprep.subr.mxu0 0.0
        %9379 = vmatpush2.msra.mxu0 0.0
        %9380 = vmatprep.subr.mxu0 0.0
        %9381 = vmatpush2.msra.mxu0 0.0
        %9382 = vmatprep.mubr.f32.mxu0 0.0
        %9383 = vmatmul.mubr.f32.gmra.mxu0 %v9316
        %v9384 = vpop.f32.mrf.mxu0
        %v9385 = vadd.f32 %v9314, %v9384
        %v9386 = vpop.f32.mrf.mxu0
        %9387 = vdwg.mxu0
        %v9388 = vmax.f32 %v9385, 0.0
        %v9389 = vld [vmem:[%s7] sm:$0x3]
        %v9390 = vld [vmem:[%s8] sm:$0x1]
        %vm9391 = vcmask 15360
        %v9393 = vsel %vm9391, %v9388, 0
        %vm9395 = vcmask 1041408
        %v9397 = vsel %vm9395, %v9389, 0
        %9399 = vmatprep.subr.mxu0 0.0
        %9400 = vmatpush1.msra.mxu0 0.0
        %9401 = vmatprep.subr.mxu0 0.0
        %9402 = vmatpush1.msra.mxu0 0.0
        %9403 = vmatprep.subr.mxu0 0.0
        %9404 = vmatpush1.msra.mxu0 0.0
        %9405 = vmatprep.subr.mxu0 0.0
        %9406 = vmatpush1.msra.mxu0 0.0
        %9407 = vmatprep.subr.mxu0 0.0
        %9408 = vmatpush1.msra.mxu0 0.0
        %9409 = vmatprep.subr.mxu0 0.0
        %9410 = vmatpush1.msra.mxu0 0.0
        %9411 = vmatprep.subr.mxu0 0.0
        %9412 = vmatpush1.msra.mxu0 0.0
        %9413 = vmatprep.subr.mxu0 0.0
        %9414 = vmatpush1.msra.mxu0 0.0
        %9415 = vmatprep.subr.mxu0 0.0
        %9416 = vmatpush1.msra.mxu0 0.0
        %9417 = vmatprep.subr.mxu0 0.0
        %9418 = vmatpush1.msra.mxu0 0.0
        %9419 = vmatprep.subr.mxu0 0.0
        %9420 = vmatpush1.msra.mxu0 0.0
        %9421 = vmatprep.subr.mxu0 0.0
        %9422 = vmatpush1.msra.mxu0 0.0
        %9423 = vmatprep.subr.mxu0 0.0
        %9424 = vmatpush1.msra.mxu0 0.0
        %9425 = vmatprep.subr.mxu0 0.0
        %9426 = vmatpush1.msra.mxu0 0.0
        %9427 = vmatprep.subr.mxu0 0.0
        %9428 = vmatpush1.msra.mxu0 0.0
        %9429 = vmatprep.subr.mxu0 0.0
        %9430 = vmatpush1.msra.mxu0 %v9397
        %9431 = vmatprep.subr.mxu0 0.0
        %9432 = vmatpush2.msra.mxu0 0.0
        %9433 = vmatprep.subr.mxu0 0.0
        %9434 = vmatpush2.msra.mxu0 0.0
        %9435 = vmatprep.subr.mxu0 0.0
        %9436 = vmatpush2.msra.mxu0 0.0
        %9437 = vmatprep.subr.mxu0 0.0
        %9438 = vmatpush2.msra.mxu0 0.0
        %9439 = vmatprep.subr.mxu0 0.0
        %9440 = vmatpush2.msra.mxu0 0.0
        %9441 = vmatprep.subr.mxu0 0.0
        %9442 = vmatpush2.msra.mxu0 0.0
        %9443 = vmatprep.subr.mxu0 0.0
        %9444 = vmatpush2.msra.mxu0 0.0
        %9445 = vmatprep.subr.mxu0 0.0
        %9446 = vmatpush2.msra.mxu0 0.0
        %9447 = vmatprep.subr.mxu0 0.0
        %9448 = vmatpush2.msra.mxu0 0.0
        %9449 = vmatprep.subr.mxu0 0.0
        %9450 = vmatpush2.msra.mxu0 0.0
        %9451 = vmatprep.subr.mxu0 0.0
        %9452 = vmatpush2.msra.mxu0 0.0
        %9453 = vmatprep.subr.mxu0 0.0
        %9454 = vmatpush2.msra.mxu0 0.0
        %9455 = vmatprep.subr.mxu0 0.0
        %9456 = vmatpush2.msra.mxu0 0.0
        %9457 = vmatprep.subr.mxu0 0.0
        %9458 = vmatpush2.msra.mxu0 0.0
        %9459 = vmatprep.subr.mxu0 0.0
        %9460 = vmatpush2.msra.mxu0 0.0
        %9461 = vmatprep.subr.mxu0 0.0
        %9462 = vmatpush2.msra.mxu0 0.0
        %9463 = vmatprep.mubr.f32.mxu0 0.0
        %9464 = vmatmul.mubr.f32.gmra.mxu0 %v9393
        %v9465 = vpop.f32.mrf.mxu0
        %v9466 = vadd.f32 %v9390, %v9465
        %v9467 = vpop.f32.mrf.mxu0
        %9468 = vdwg.mxu0
        %v9469 = vsub.f32 0.0, %v9466
        %v9470 = vmul.f32 %v9469, 1.442695
        %v9471 = vpow.pop %v9470
        %v9472 = vadd.f32 %v9471, 1.0
        %v9473 = vrcp.pop %v9472
        %v9474 = vmul.f32 1.0, %v9473
        %v9475 = vlaneseq
        %v9476 = vshrl.u32 %v9475, 7
        %v9477 = vsub.s32 0, %v9476
        %v9478 = vrot.slane %v9474, %v9477
        %v9479 = vmul.f32 %v9113, %v9478
        %v9480 = vmul.f32 %v9116, %v9478
        %v9481 = vmul.f32 %v9121, %v9478
        %v9482 = vmul.f32 %v9124, %v9478
        %v9483 = vmul.f32 %v9129, %v9478
        %v9484 = vmul.f32 %v9132, %v9478
        %v9485 = vmul.f32 %v9137, %v9478
        %v9486 = vmul.f32 %v9140, %v9478
        %v9487 = vmul.f32 %v9145, %v9478
        %v9488 = vmul.f32 %v9148, %v9478
        %v9489 = vmul.f32 %v9153, %v9478
        %v9490 = vmul.f32 %v9156, %v9478
        %v9491 = vmul.f32 %v9161, %v9478
        %v9492 = vmul.f32 %v9164, %v9478
        %v9493 = vmul.f32 %v9169, %v9478
        %v9494 = vmul.f32 %v9172, %v9478
        %v9495 = vmul.f32 %v9177, %v9478
        %v9496 = vmul.f32 %v9180, %v9478
        %v9497 = vmul.f32 %v9185, %v9478
        %v9498 = vmul.f32 %v9188, %v9478
        %v9499 = vmul.f32 %v9193, %v9478
        %v9500 = vmul.f32 %v9196, %v9478
        %v9501 = vmul.f32 %v9201, %v9478
        %v9502 = vmul.f32 %v9204, %v9478
        %v9503 = vmul.f32 %v9209, %v9478
        %v9504 = vmul.f32 %v9212, %v9478
        %v9505 = vmul.f32 %v9217, %v9478
        %v9506 = vmul.f32 %v9220, %v9478
        %v9507 = vmul.f32 %v9225, %v9478
        %v9508 = vmul.f32 %v9228, %v9478
        %v9509 = vmul.f32 %v9233, %v9478
        %v9510 = vmul.f32 %v9236, %v9478
        %9511 = vxpose.xlu0.b32.start [1/16] %v9479, 128
        %9512 = vxpose.xlu0.b32.cont [2/16] %v9480, 128
        %9513 = vxpose.xlu0.b32.cont [3/16] %v9481, 128
        %9514 = vxpose.xlu0.b32.cont [4/16] %v9482, 128
        %9515 = vxpose.xlu0.b32.cont [5/16] %v9483, 128
        %9516 = vxpose.xlu0.b32.cont [6/16] %v9484, 128
        %9517 = vxpose.xlu0.b32.cont [7/16] %v9485, 128
        %9518 = vxpose.xlu0.b32.cont [8/16] %v9486, 128
        %9519 = vxpose.xlu0.b32.cont [9/16] %v9487, 128
        %9520 = vxpose.xlu0.b32.cont [10/16] %v9488, 128
        %9521 = vxpose.xlu0.b32.cont [11/16] %v9489, 128
        %9522 = vxpose.xlu0.b32.cont [12/16] %v9490, 128
        %9523 = vxpose.xlu0.b32.cont [13/16] %v9491, 128
        %9524 = vxpose.xlu0.b32.cont [14/16] %v9492, 128
        %9525 = vxpose.xlu0.b32.cont [15/16] %v9493, 128
        %9526 = vxpose.xlu0.b32.end [16/16] %v9494, 128
        %v9527 = vpop.trf.xlu0
        %v9528 = vpop.trf.xlu0
        %v9529 = vpop.trf.xlu0
        %v9530 = vpop.trf.xlu0
        %v9531 = vpop.trf.xlu0
        %v9532 = vpop.trf.xlu0
        %v9533 = vpop.trf.xlu0
        %v9534 = vpop.trf.xlu0
        %v9535 = vpop.trf.xlu0
        %v9536 = vpop.trf.xlu0
        %v9537 = vpop.trf.xlu0
        %v9538 = vpop.trf.xlu0
        %v9539 = vpop.trf.xlu0
        %v9540 = vpop.trf.xlu0
        %v9541 = vpop.trf.xlu0
        %v9542 = vpop.trf.xlu0
        %9543 = vxpose.xlu0.b32.start [1/16] %v9495, 128
        %9544 = vxpose.xlu0.b32.cont [2/16] %v9496, 128
        %9545 = vxpose.xlu0.b32.cont [3/16] %v9497, 128
        %9546 = vxpose.xlu0.b32.cont [4/16] %v9498, 128
        %9547 = vxpose.xlu0.b32.cont [5/16] %v9499, 128
        %9548 = vxpose.xlu0.b32.cont [6/16] %v9500, 128
        %9549 = vxpose.xlu0.b32.cont [7/16] %v9501, 128
        %9550 = vxpose.xlu0.b32.cont [8/16] %v9502, 128
        %9551 = vxpose.xlu0.b32.cont [9/16] %v9503, 128
        %9552 = vxpose.xlu0.b32.cont [10/16] %v9504, 128
        %9553 = vxpose.xlu0.b32.cont [11/16] %v9505, 128
        %9554 = vxpose.xlu0.b32.cont [12/16] %v9506, 128
        %9555 = vxpose.xlu0.b32.cont [13/16] %v9507, 128
        %9556 = vxpose.xlu0.b32.cont [14/16] %v9508, 128
        %9557 = vxpose.xlu0.b32.cont [15/16] %v9509, 128
        %9558 = vxpose.xlu0.b32.end [16/16] %v9510, 128
        %v9559 = vpop.trf.xlu0
        %v9560 = vpop.trf.xlu0
        %v9561 = vpop.trf.xlu0
        %v9562 = vpop.trf.xlu0
        %v9563 = vpop.trf.xlu0
        %v9564 = vpop.trf.xlu0
        %v9565 = vpop.trf.xlu0
        %v9566 = vpop.trf.xlu0
        %v9567 = vpop.trf.xlu0
        %v9568 = vpop.trf.xlu0
        %v9569 = vpop.trf.xlu0
        %v9570 = vpop.trf.xlu0
        %v9571 = vpop.trf.xlu0
        %v9572 = vpop.trf.xlu0
        %v9573 = vpop.trf.xlu0
        %v9574 = vpop.trf.xlu0
        %v9575 = vld [vmem:[%s330] sm:$0xff]
        %v9576 = vld [vmem:[%s330 + $0x8] sm:$0xff]
        %v9577 = vld [vmem:[%s330 + $0x10] sm:$0xff]
        %v9578 = vld [vmem:[%s330 + $0x18] sm:$0xff]
        %v9579 = vld [vmem:[%s330 + $0x20] sm:$0xff]
        %v9580 = vld [vmem:[%s330 + $0x28] sm:$0xff]
        %v9581 = vld [vmem:[%s330 + $0x30] sm:$0xff]
        %v9582 = vld [vmem:[%s330 + $0x38] sm:$0xff]
        %v9583 = vadd.f32 %v9527, %v9575
        %v9584 = vadd.f32 %v9559, %v9576
        %v9585 = vadd.f32 %v9528, %v9577
        %v9586 = vadd.f32 %v9560, %v9578
        %v9587 = vadd.f32 %v9529, %v9579
        %v9588 = vadd.f32 %v9561, %v9580
        %v9589 = vadd.f32 %v9530, %v9581
        %v9590 = vadd.f32 %v9562, %v9582
        %9591 = vst [vmem:[%s325] sm:$0xff] %v9583
        %9592 = vst [vmem:[%s325 + $0x8] sm:$0xff] %v9584
        %9593 = vst [vmem:[%s325 + $0x10] sm:$0xff] %v9585
        %9594 = vst [vmem:[%s325 + $0x18] sm:$0xff] %v9586
        %9595 = vst [vmem:[%s325 + $0x20] sm:$0xff] %v9587
        %9596 = vst [vmem:[%s325 + $0x28] sm:$0xff] %v9588
        %9597 = vst [vmem:[%s325 + $0x30] sm:$0xff] %v9589
        %9598 = vst [vmem:[%s325 + $0x38] sm:$0xff] %v9590
        %s9599 = sand.u32 %s225, 1
        %s9600 = scalar_lea.sflag [#allocation5], %s9599
        %s9601 = sand.u32 %s225, 1
        %s9602 = smul.addr %s9601, 64
        %s9603 = scalar_lea.vmem [#allocation4], %s9602
        // Predicated region
        $region61: #{tpu_custom_call.1} parent=55 // pred_check
          %p9604 = pneg %p235
        $region62: #{tpu_custom_call.1} parent=55 // pred_check_branch
          %9606 = sbr.rel (%p9604) target = $region64
        $region63: #{tpu_custom_call.1} parent=55 // pred_region
          %s9608 = ssub.s32 1024, 1024
          %9609 = vsyncadd %s9600, %s9608
          %s9610 = smul.addr %s23, 8
          %s9611 = smul.addr %s9610, 128
          %s9612 = scalar_lea.hbm %s9, %s9611
          %s9613 = sshll.u32 %s9603, 4
          %s9614 = int_to_ptr.vmem [resolvable:$true] %s9613
          %9619 = dma.vmem_to_hbm [thread:$0]  %s9614, 1024, %s9612, %s9600, 256, 256, 16
        $region64: #{tpu_custom_call.1} parent=55 // pred_fallthru
          _
      $region56: #{tpu_custom_call.1} parent=5 // pred_fallthru
        _
      %p9620 = scmp.le.s32.totalorder 2, %s18
      // Predicated region
      $region65: #{tpu_custom_call.1} parent=5 // pred_check
        %p9621 = pneg %p9620
      $region66: #{tpu_custom_call.1} parent=5 // pred_check_branch
        %9623 = sbr.rel (%p9621) target = $region68
      $region67: #{tpu_custom_call.1} parent=5 // pred_region
        %s9624 = ssub.s32 %s18, 2
        // Predicated region
        $region69: #{tpu_custom_call.1} parent=67 // pred_check
          %p9625 = pneg %p241
        $region70: #{tpu_custom_call.1} parent=67 // pred_check_branch
          %9627 = sbr.rel (%p9625) target = $region72
        $region71: #{tpu_custom_call.1} parent=67 // pred_region
          %s9628 = sand.u32 %s226, 1
          %s9629 = scalar_lea.sflag [#allocation5], %s9628
          %s9630 = sand.u32 %s226, 1
          %s9631 = smul.addr %s9630, 64
          %s9632 = scalar_lea.vmem [#allocation4], %s9631
          %9633 = dma.done %s9629, 1024
        $region72: #{tpu_custom_call.1} parent=67 // pred_fallthru
          _
      $region68: #{tpu_custom_call.1} parent=5 // pred_fallthru
        _
    $region6: #{tpu_custom_call.1} parent=1 // loop_footer
      %s22 = sadd.s32 1, %s18
    $region7: #{tpu_custom_call.1} parent=1 // loop_footer_branch
      %17 = sbr.rel target = $region3
    $region8: #{tpu_custom_call.1} parent=1 // loop_exit
      _
    %9634 = vsyncpa [#allocation5], 1
    %s9635 = scalar_lea.sflag [#allocation5], 1
    %9636 = vsyncpa %s9635, 1

</llo_original>
